<compile_context>
chip_gen: v6e
topology: v6e:2x2x1
jax: 0.10.0
libtpu: 0.0.40
codegen_flags: <defaults>
</compile_context>

<pallas_src>
import numpy as np
import jax
import jax.numpy as jnp
from jax import lax
from jax.experimental import pallas as pl
from jax.experimental.pallas import tpu as pltpu

# ----- hyperparameters (fixed by the module) ---------------------------------
D_MODEL   = 32
CONV_DIM1 = 16
CONV_DIM2 = 8
HIDDEN    = 32
SEQ       = 47            # position_encoding(47, d_model)
K1, K2    = 4, 3
L1  = SEQ - K1 + 1        # 44  conv1 output length
L1P = L1 // 2             # 22  after avgpool k=2
L2  = L1P - K2 + 1        # 20  conv2 output length
L2P = L2 // 2             # 10  after avgpool k=2  -> 10 * conv_dim2 flatten
N_FEAT = 6                # 5 one-hot nucleotide lanes + 1 segment lane


def _round_up(x, m):
    return (x + m - 1) // m * m


def position_encoding(n_pos, d_model):
    pos = np.arange(n_pos, dtype=np.float32)[:, None]
    i = np.arange(d_model, dtype=np.float32)[None, :]
    angle = pos / np.power(10000.0, (2.0 * np.floor(i / 2.0)) / d_model)
    pe = np.zeros((n_pos, d_model), dtype=np.float32)
    pe[:, 0::2] = np.sin(angle[:, 0::2])
    pe[:, 1::2] = np.cos(angle[:, 1::2])
    return jnp.asarray(pe)


# ----- Pallas kernel ----------------------------------------------------------
def cnnpe_kernel(feat_ref, pe_ref, w0_ref, w1_ref, b1_ref, w2_ref, b2_ref,
                 wf1_ref, bf1_ref, wf2_ref, bf2_ref, out_ref, y_scr, z_scr):
    f32 = jnp.float32
    TB = out_ref.shape[0]                      # batch elements per grid step

    # embedding + segment fused into one matmul ([one-hot | seg] @ [emb; ones]), + pe
    x2d = jnp.dot(feat_ref[...], w0_ref[...], preferred_element_type=f32)   # (TB*47, 32)
    x3 = x2d.reshape(TB, SEQ, D_MODEL) + pe_ref[...]                        # (TB, 47, 32)

    # conv1 (valid, k=4) as im2col: contraction K1*D_MODEL = 128
    xc = jnp.concatenate([x3[:, t:t + L1, :] for t in range(K1)], axis=2)   # (TB, 44, 128)
    y2d = jnp.dot(xc.reshape(TB * L1, K1 * D_MODEL), w1_ref[...],
                  preferred_element_type=f32)                               # (TB*44, 16)
    y2d = jnp.maximum(y2d + b1_ref[...], 0.0)

    # avgpool1 (k=2): stride-2 sublane reads from VMEM scratch
    y_scr[...] = y2d
    yp2d = (y_scr[pl.ds(0, TB * L1P, stride=2), :] +
            y_scr[pl.ds(1, TB * L1P, stride=2), :]) * 0.5                   # (TB*22, 16)

    # conv2 (valid, k=3) as im2col: contraction K2*CONV_DIM1 = 48
    yp3 = yp2d.reshape(TB, L1P, CONV_DIM1)
    yc = jnp.concatenate([yp3[:, t:t + L2, :] for t in range(K2)], axis=2)  # (TB, 20, 48)
    z2d = jnp.dot(yc.reshape(TB * L2, K2 * CONV_DIM1), w2_ref[...],
                  preferred_element_type=f32)                               # (TB*20, 8)
    z2d = jnp.maximum(z2d + b2_ref[...], 0.0)

    # avgpool2 (k=2)
    z_scr[...] = z2d
    zp2d = (z_scr[pl.ds(0, TB * L2P, stride=2), :] +
            z_scr[pl.ds(1, TB * L2P, stride=2), :]) * 0.5                   # (TB*10, 8)
    zp3 = zp2d.reshape(TB, L2P, CONV_DIM2)

    # fc1 (+ReLU): torch channel-major Flatten handled via per-position weight slabs
    h = jnp.dot(zp3[:, 0, :], wf1_ref[0], preferred_element_type=f32)       # (TB, 32)
    for p in range(1, L2P):
        h = h + jnp.dot(zp3[:, p, :], wf1_ref[p], preferred_element_type=f32)
    h = jnp.maximum(h + bf1_ref[...], 0.0)

    # fc2 -> one scalar per batch element
    out_ref[...] = jnp.dot(h, wf2_ref[...], preferred_element_type=f32) + bf2_ref[...]


# ----- wrapper ---------------------------------------------------------------
def cnnpe_forward(enc_input, params, block_b=128):
    B = enc_input.shape[0]
    TB = min(block_b, _round_up(B, 8))       # batch elements per grid step
    Bp = _round_up(B, TB)                    # padded batch
    nb = Bp // TB

    # glue: indices -> one-hot, segment as one extra feature lane
    rna_ids = enc_input[:, 0, :].astype(jnp.int32)
    seg = enc_input[:, 1, :].astype(jnp.float32)
    onehot = jax.nn.one_hot(rna_ids, 5, dtype=jnp.float32)                  # (B, 47, 5)
    feat = jnp.concatenate([onehot, seg[:, :, None]], axis=2)               # (B, 47, 6)
    if Bp != B:
        feat = jnp.concatenate(
            [feat, jnp.zeros((Bp - B, SEQ, N_FEAT), jnp.float32)], axis=0)
    feat2d = feat.reshape(Bp * SEQ, N_FEAT)                                 # (Bp*47, 6)

    def const2(shape):
        return pl.BlockSpec(shape, lambda i: (0, 0))

    in_specs = [
        pl.BlockSpec((TB * SEQ, N_FEAT), lambda i: (i, 0)),   # features, per batch block
        const2((SEQ, D_MODEL)),                               # positional encoding
        const2((N_FEAT, D_MODEL)),                            # [emb; ones]
        const2((K1 * D_MODEL, CONV_DIM1)),                    # conv1 im2col weights (128,16)
        const2((1, CONV_DIM1)),                               # conv1 bias
        const2((K2 * CONV_DIM1, CONV_DIM2)),                  # conv2 im2col weights (48,8)
        const2((1, CONV_DIM2)),                               # conv2 bias
        pl.BlockSpec((L2P, CONV_DIM2, HIDDEN), lambda i: (0, 0, 0)),  # fc1 per-pos slabs
        const2((1, HIDDEN)),                                  # fc1 bias
        const2((HIDDEN, 1)),                                  # fc2 weight
        const2((1, 1)),                                       # fc2 bias
    ]

    out = pl.pallas_call(
        cnnpe_kernel,
        out_shape=jax.ShapeDtypeStruct((Bp, 1), jnp.float32),
        grid=(nb,),
        in_specs=in_specs,
        out_specs=pl.BlockSpec((TB, 1), lambda i: (i, 0)),
        scratch_shapes=[pltpu.VMEM((TB * L1, CONV_DIM1), jnp.float32),
                        pltpu.VMEM((TB * L2, CONV_DIM2), jnp.float32)],
        compiler_params=pltpu.CompilerParams(
            dimension_semantics=("parallel",),
            vmem_limit_bytes=32 * 1024 * 1024),
    )(feat2d, params["pe"], params["w0"], params["w1cat"], params["b1_row"],
      params["w2cat"], params["b2_row"], params["wf1_taps"], params["bf1_row"],
      params["wf2_col"], params["bf2_row"])
    return out[:B]


# ----- deterministic parameter init (PyTorch-layout + kernel-layout views) ---
def init_params(key):
    ks = jax.random.split(key, 9)
    emb = jax.random.normal(ks[0], (5, D_MODEL), jnp.float32)
    w1_t = jax.random.normal(ks[1], (CONV_DIM1, D_MODEL, K1), jnp.float32) / np.sqrt(D_MODEL * K1)
    b1 = jax.random.normal(ks[2], (CONV_DIM1,), jnp.float32) * 0.1
    w2_t = jax.random.normal(ks[3], (CONV_DIM2, CONV_DIM1, K2), jnp.float32) / np.sqrt(CONV_DIM1 * K2)
    b2 = jax.random.normal(ks[4], (CONV_DIM2,), jnp.float32) * 0.1
    wf1_t = jax.random.normal(ks[5], (HIDDEN, L2P * CONV_DIM2), jnp.float32) / np.sqrt(L2P * CONV_DIM2)
    bf1 = jax.random.normal(ks[6], (HIDDEN,), jnp.float32) * 0.1
    wf2_t = jax.random.normal(ks[7], (1, HIDDEN), jnp.float32) / np.sqrt(HIDDEN)
    bf2 = jax.random.normal(ks[8], (1,), jnp.float32) * 0.1
    pe = position_encoding(SEQ, D_MODEL)

    params = dict(
        # kernel-layout parameters
        pe=pe,
        w0=jnp.concatenate([emb, jnp.ones((1, D_MODEL), jnp.float32)], axis=0),   # (6, 32)
        w1cat=jnp.transpose(w1_t, (2, 1, 0)).reshape(K1 * D_MODEL, CONV_DIM1),    # (128, 16)
        b1_row=b1.reshape(1, CONV_DIM1),
        w2cat=jnp.transpose(w2_t, (2, 1, 0)).reshape(K2 * CONV_DIM1, CONV_DIM2),  # (48, 8)
        b2_row=b2.reshape(1, CONV_DIM2),
        # torch flatten index = c*10 + p  ->  (10, C2, H) per-position slabs
        wf1_taps=jnp.transpose(wf1_t.reshape(HIDDEN, CONV_DIM2, L2P), (2, 1, 0)),
        bf1_row=bf1.reshape(1, HIDDEN),
        wf2_col=jnp.transpose(wf2_t),                                             # (32, 1)
        bf2_row=bf2.reshape(1, 1),
        # torch-layout parameters (for the pure-JAX reference check)
        emb=emb, w1_torch=w1_t, b1=b1, w2_torch=w2_t, b2=b2,
        wf1_torch=wf1_t, bf1=bf1, wf2_torch=wf2_t, bf2=bf2,
    )
    return params


# ----- pure-JAX reference (mirrors the PyTorch NCL forward exactly) ----------
def reference_forward(enc_input, params):
    B = enc_input.shape[0]
    rna = enc_input[:, 0, :].astype(jnp.int32)
    seg = enc_input[:, 1, :]
    x = params["emb"][rna] + params["pe"][None] + seg[:, :, None]            # (B, 47, D)
    x = jnp.transpose(x, (0, 2, 1))                                          # (B, D, 47)
    dn = ("NCH", "OIH", "NCH")
    y = lax.conv_general_dilated(x, params["w1_torch"], (1,), "VALID", dimension_numbers=dn)
    y = jax.nn.relu(y + params["b1"][None, :, None])
    y = y.reshape(B, CONV_DIM1, L1P, 2).mean(-1)
    z = lax.conv_general_dilated(y, params["w2_torch"], (1,), "VALID", dimension_numbers=dn)
    z = jax.nn.relu(z + params["b2"][None, :, None])
    z = z.reshape(B, CONV_DIM2, L2P, 2).mean(-1)
    flat = z.reshape(B, CONV_DIM2 * L2P)                                     # torch Flatten
    h = jax.nn.relu(flat @ params["wf1_torch"].T + params["bf1"])
    return h @ params["wf2_torch"].T + params["bf2"]


if __name__ == "__main__":
    key = jax.random.PRNGKey(0)
    kp, kd1, kd2 = jax.random.split(key, 3)
    params = init_params(kp)

    B = 2
    rna_ids = jax.random.randint(kd1, (B, SEQ), 0, 5)         # nucleotide ids in [0, 5)
    seg_bits = jax.random.randint(kd2, (B, SEQ), 0, 2)        # segment indicator 0/1
    enc_input = jnp.stack([rna_ids.astype(jnp.float32),
                           seg_bits.astype(jnp.float32)], axis=1)            # (B, 2, 47)

    out = cnnpe_forward(enc_input, params)
    out = jax.block_until_ready(out)
    assert out.shape == (B, 1)

    ref = reference_forward(enc_input, params)
    np.testing.assert_allclose(np.asarray(out), np.asarray(ref), rtol=1e-4, atol=1e-4)
    print("KERNEL_OK")
</pallas_src>

<mosaic_0001>
module attributes {stable_mosaic.version = 11 : i64} {
  func.func @cnnpe_kernel(%arg0: i32, %arg1: memref<376x6xf32, #tpu.memory_space<vmem>>, %arg2: memref<47x32xf32, #tpu.memory_space<vmem>>, %arg3: memref<6x32xf32, #tpu.memory_space<vmem>>, %arg4: memref<128x16xf32, #tpu.memory_space<vmem>>, %arg5: memref<1x16xf32, #tpu.memory_space<vmem>>, %arg6: memref<48x8xf32, #tpu.memory_space<vmem>>, %arg7: memref<1x8xf32, #tpu.memory_space<vmem>>, %arg8: memref<10x8x32xf32, #tpu.memory_space<vmem>>, %arg9: memref<1x32xf32, #tpu.memory_space<vmem>>, %arg10: memref<32x1xf32, #tpu.memory_space<vmem>>, %arg11: memref<1x1xf32, #tpu.memory_space<vmem>>, %arg12: memref<8x1xf32, #tpu.memory_space<vmem>>, %arg13: memref<352x16xf32, #tpu.memory_space<vmem>>, %arg14: memref<160x8xf32, #tpu.memory_space<vmem>>) attributes {dimension_semantics = [#tpu.dimension_semantics<parallel>], iteration_bounds = array<i64: 1>, scalar_prefetch = 0 : i64, scratch_operands = 2 : i64, tpu.core_type = #tpu.core_type<tc>, window_params = [{transform_indices = @transform_0, window_bounds = array<i64: 376, 6>}, {pipeline_mode = #tpu.pipeline_mode<synchronous>, transform_indices = @transform_1, window_bounds = array<i64: 47, 32>}, {pipeline_mode = #tpu.pipeline_mode<synchronous>, transform_indices = @transform_2, window_bounds = array<i64: 6, 32>}, {pipeline_mode = #tpu.pipeline_mode<synchronous>, transform_indices = @transform_3, window_bounds = array<i64: 128, 16>}, {pipeline_mode = #tpu.pipeline_mode<synchronous>, transform_indices = @transform_4, window_bounds = array<i64: 1, 16>}, {pipeline_mode = #tpu.pipeline_mode<synchronous>, transform_indices = @transform_5, window_bounds = array<i64: 48, 8>}, {pipeline_mode = #tpu.pipeline_mode<synchronous>, transform_indices = @transform_6, window_bounds = array<i64: 1, 8>}, {pipeline_mode = #tpu.pipeline_mode<synchronous>, transform_indices = @transform_7, window_bounds = array<i64: 10, 8, 32>}, {pipeline_mode = #tpu.pipeline_mode<synchronous>, transform_indices = @transform_8, window_bounds = array<i64: 1, 32>}, {pipeline_mode = #tpu.pipeline_mode<synchronous>, transform_indices = @transform_9, window_bounds = array<i64: 32, 1>}, {pipeline_mode = #tpu.pipeline_mode<synchronous>, transform_indices = @transform_10, window_bounds = array<i64: 1, 1>}, {transform_indices = @transform_11, window_bounds = array<i64: 8, 1>}]} {
    %c0 = arith.constant 0 : index
    %c0_0 = arith.constant 0 : index
    %0 = vector.load %arg1[%c0, %c0_0] : memref<376x6xf32, #tpu.memory_space<vmem>>, vector<376x6xf32>
    %c0_1 = arith.constant 0 : index
    %c0_2 = arith.constant 0 : index
    %1 = vector.load %arg3[%c0_1, %c0_2] : memref<6x32xf32, #tpu.memory_space<vmem>>, vector<6x32xf32>
    %cst = arith.constant dense<0.000000e+00> : vector<376x32xf32>
    %2 = tpu.matmul %0, %1, %cst {dimension_numbers = #tpu.dot_dimension_numbers<[1], [0], [0], [1], [0, 0, 1, 1], [], []>} : vector<376x6xf32>, vector<6x32xf32>, vector<376x32xf32> -> vector<376x32xf32>
    %3 = vector.shape_cast %2 : vector<376x32xf32> to vector<8x47x32xf32>
    %c0_3 = arith.constant 0 : index
    %c0_4 = arith.constant 0 : index
    %4 = vector.load %arg2[%c0_3, %c0_4] : memref<47x32xf32, #tpu.memory_space<vmem>>, vector<47x32xf32>
    %5 = vector.shape_cast %4 : vector<47x32xf32> to vector<1x47x32xf32>
    %6 = vector.broadcast %5 : vector<1x47x32xf32> to vector<8x47x32xf32>
    %7 = arith.addf %3, %6 : vector<8x47x32xf32>
    %8 = vector.extract_strided_slice %7 {offsets = [0, 0, 0], sizes = [8, 44, 32], strides = [1, 1, 1]} : vector<8x47x32xf32> to vector<8x44x32xf32>
    %9 = vector.extract_strided_slice %7 {offsets = [0, 1, 0], sizes = [8, 44, 32], strides = [1, 1, 1]} : vector<8x47x32xf32> to vector<8x44x32xf32>
    %10 = vector.extract_strided_slice %7 {offsets = [0, 2, 0], sizes = [8, 44, 32], strides = [1, 1, 1]} : vector<8x47x32xf32> to vector<8x44x32xf32>
    %11 = vector.extract_strided_slice %7 {offsets = [0, 3, 0], sizes = [8, 44, 32], strides = [1, 1, 1]} : vector<8x47x32xf32> to vector<8x44x32xf32>
    %12 = tpu.concatenate %8, %9, %10, %11 in 2 : vector<8x44x32xf32>, vector<8x44x32xf32>, vector<8x44x32xf32>, vector<8x44x32xf32> -> vector<8x44x128xf32>
    %13 = vector.shape_cast %12 : vector<8x44x128xf32> to vector<352x128xf32>
    %c0_5 = arith.constant 0 : index
    %c0_6 = arith.constant 0 : index
    %14 = vector.load %arg4[%c0_5, %c0_6] : memref<128x16xf32, #tpu.memory_space<vmem>>, vector<128x16xf32>
    %cst_7 = arith.constant dense<0.000000e+00> : vector<352x16xf32>
    %15 = tpu.matmul %13, %14, %cst_7 {dimension_numbers = #tpu.dot_dimension_numbers<[1], [0], [0], [1], [0, 0, 1, 1], [], []>} : vector<352x128xf32>, vector<128x16xf32>, vector<352x16xf32> -> vector<352x16xf32>
    %c0_8 = arith.constant 0 : index
    %c0_9 = arith.constant 0 : index
    %16 = vector.load %arg5[%c0_8, %c0_9] : memref<1x16xf32, #tpu.memory_space<vmem>>, vector<1x16xf32>
    %17 = vector.broadcast %16 : vector<1x16xf32> to vector<352x16xf32>
    %18 = arith.addf %15, %17 : vector<352x16xf32>
    %cst_10 = arith.constant 0.000000e+00 : f32
    %19 = vector.broadcast %cst_10 : f32 to vector<352x16xf32>
    %20 = arith.maximumf %18, %19 : vector<352x16xf32>
    %c0_11 = arith.constant 0 : index
    %c0_12 = arith.constant 0 : index
    %21 = vector.load %arg13[%c0_11, %c0_12] : memref<352x16xf32, #tpu.memory_space<vmem>>, vector<352x16xf32>
    tpu.vector_store %arg13[%c0_11, %c0_12], %20 {strides = array<i32>} : memref<352x16xf32, #tpu.memory_space<vmem>>, vector<352x16xf32>,
    %c0_13 = arith.constant 0 : index
    %c0_14 = arith.constant 0 : index
    %22 = tpu.strided_load %arg13[%c0_13, %c0_14] {strides = array<i32: 2, 1>} : memref<352x16xf32, #tpu.memory_space<vmem>>, vector<176x16xf32>
    %c1 = arith.constant 1 : index
    %c0_15 = arith.constant 0 : index
    %23 = tpu.strided_load %arg13[%c1, %c0_15] {strides = array<i32: 2, 1>} : memref<352x16xf32, #tpu.memory_space<vmem>>, vector<176x16xf32>
    %24 = arith.addf %22, %23 : vector<176x16xf32>
    %cst_16 = arith.constant 5.000000e-01 : f32
    %25 = vector.broadcast %cst_16 : f32 to vector<176x16xf32>
    %26 = arith.mulf %24, %25 : vector<176x16xf32>
    %27 = vector.shape_cast %26 : vector<176x16xf32> to vector<8x22x16xf32>
    %28 = vector.extract_strided_slice %27 {offsets = [0, 0, 0], sizes = [8, 20, 16], strides = [1, 1, 1]} : vector<8x22x16xf32> to vector<8x20x16xf32>
    %29 = vector.extract_strided_slice %27 {offsets = [0, 1, 0], sizes = [8, 20, 16], strides = [1, 1, 1]} : vector<8x22x16xf32> to vector<8x20x16xf32>
    %30 = vector.extract_strided_slice %27 {offsets = [0, 2, 0], sizes = [8, 20, 16], strides = [1, 1, 1]} : vector<8x22x16xf32> to vector<8x20x16xf32>
    %31 = tpu.concatenate %28, %29, %30 in 2 : vector<8x20x16xf32>, vector<8x20x16xf32>, vector<8x20x16xf32> -> vector<8x20x48xf32>
    %32 = vector.shape_cast %31 : vector<8x20x48xf32> to vector<160x48xf32>
    %c0_17 = arith.constant 0 : index
    %c0_18 = arith.constant 0 : index
    %33 = vector.load %arg6[%c0_17, %c0_18] : memref<48x8xf32, #tpu.memory_space<vmem>>, vector<48x8xf32>
    %cst_19 = arith.constant dense<0.000000e+00> : vector<160x8xf32>
    %34 = tpu.matmul %32, %33, %cst_19 {dimension_numbers = #tpu.dot_dimension_numbers<[1], [0], [0], [1], [0, 0, 1, 1], [], []>} : vector<160x48xf32>, vector<48x8xf32>, vector<160x8xf32> -> vector<160x8xf32>
    %c0_20 = arith.constant 0 : index
    %c0_21 = arith.constant 0 : index
    %35 = vector.load %arg7[%c0_20, %c0_21] : memref<1x8xf32, #tpu.memory_space<vmem>>, vector<1x8xf32>
    %36 = vector.broadcast %35 : vector<1x8xf32> to vector<160x8xf32>
    %37 = arith.addf %34, %36 : vector<160x8xf32>
    %cst_22 = arith.constant 0.000000e+00 : f32
    %38 = vector.broadcast %cst_22 : f32 to vector<160x8xf32>
    %39 = arith.maximumf %37, %38 : vector<160x8xf32>
    %c0_23 = arith.constant 0 : index
    %c0_24 = arith.constant 0 : index
    %40 = vector.load %arg14[%c0_23, %c0_24] : memref<160x8xf32, #tpu.memory_space<vmem>>, vector<160x8xf32>
    tpu.vector_store %arg14[%c0_23, %c0_24], %39 {strides = array<i32>} : memref<160x8xf32, #tpu.memory_space<vmem>>, vector<160x8xf32>,
    %c0_25 = arith.constant 0 : index
    %c0_26 = arith.constant 0 : index
    %41 = tpu.strided_load %arg14[%c0_25, %c0_26] {strides = array<i32: 2, 1>} : memref<160x8xf32, #tpu.memory_space<vmem>>, vector<80x8xf32>
    %c1_27 = arith.constant 1 : index
    %c0_28 = arith.constant 0 : index
    %42 = tpu.strided_load %arg14[%c1_27, %c0_28] {strides = array<i32: 2, 1>} : memref<160x8xf32, #tpu.memory_space<vmem>>, vector<80x8xf32>
    %43 = arith.addf %41, %42 : vector<80x8xf32>
    %cst_29 = arith.constant 5.000000e-01 : f32
    %44 = vector.broadcast %cst_29 : f32 to vector<80x8xf32>
    %45 = arith.mulf %43, %44 : vector<80x8xf32>
    %46 = vector.shape_cast %45 : vector<80x8xf32> to vector<8x10x8xf32>
    %47 = vector.extract_strided_slice %46 {offsets = [0, 0, 0], sizes = [8, 1, 8], strides = [1, 1, 1]} : vector<8x10x8xf32> to vector<8x1x8xf32>
    %48 = vector.shape_cast %47 : vector<8x1x8xf32> to vector<8x8xf32>
    %c0_30 = arith.constant 0 : index
    %c0_31 = arith.constant 0 : index
    %c0_32 = arith.constant 0 : index
    %49 = vector.load %arg8[%c0_30, %c0_31, %c0_32] : memref<10x8x32xf32, #tpu.memory_space<vmem>>, vector<1x8x32xf32>
    %50 = vector.shape_cast %49 : vector<1x8x32xf32> to vector<8x32xf32>
    %cst_33 = arith.constant dense<0.000000e+00> : vector<8x32xf32>
    %51 = tpu.matmul %48, %50, %cst_33 {dimension_numbers = #tpu.dot_dimension_numbers<[1], [0], [0], [1], [0, 0, 1, 1], [], []>} : vector<8x8xf32>, vector<8x32xf32>, vector<8x32xf32> -> vector<8x32xf32>
    %52 = vector.extract_strided_slice %46 {offsets = [0, 1, 0], sizes = [8, 1, 8], strides = [1, 1, 1]} : vector<8x10x8xf32> to vector<8x1x8xf32>
    %53 = vector.shape_cast %52 : vector<8x1x8xf32> to vector<8x8xf32>
    %c1_34 = arith.constant 1 : index
    %c0_35 = arith.constant 0 : index
    %c0_36 = arith.constant 0 : index
    %54 = vector.load %arg8[%c1_34, %c0_35, %c0_36] : memref<10x8x32xf32, #tpu.memory_space<vmem>>, vector<1x8x32xf32>
    %55 = vector.shape_cast %54 : vector<1x8x32xf32> to vector<8x32xf32>
    %cst_37 = arith.constant dense<0.000000e+00> : vector<8x32xf32>
    %56 = tpu.matmul %53, %55, %cst_37 {dimension_numbers = #tpu.dot_dimension_numbers<[1], [0], [0], [1], [0, 0, 1, 1], [], []>} : vector<8x8xf32>, vector<8x32xf32>, vector<8x32xf32> -> vector<8x32xf32>
    %57 = arith.addf %51, %56 : vector<8x32xf32>
    %58 = vector.extract_strided_slice %46 {offsets = [0, 2, 0], sizes = [8, 1, 8], strides = [1, 1, 1]} : vector<8x10x8xf32> to vector<8x1x8xf32>
    %59 = vector.shape_cast %58 : vector<8x1x8xf32> to vector<8x8xf32>
    %c2 = arith.constant 2 : index
    %c0_38 = arith.constant 0 : index
    %c0_39 = arith.constant 0 : index
    %60 = vector.load %arg8[%c2, %c0_38, %c0_39] : memref<10x8x32xf32, #tpu.memory_space<vmem>>, vector<1x8x32xf32>
    %61 = vector.shape_cast %60 : vector<1x8x32xf32> to vector<8x32xf32>
    %cst_40 = arith.constant dense<0.000000e+00> : vector<8x32xf32>
    %62 = tpu.matmul %59, %61, %cst_40 {dimension_numbers = #tpu.dot_dimension_numbers<[1], [0], [0], [1], [0, 0, 1, 1], [], []>} : vector<8x8xf32>, vector<8x32xf32>, vector<8x32xf32> -> vector<8x32xf32>
    %63 = arith.addf %57, %62 : vector<8x32xf32>
    %64 = vector.extract_strided_slice %46 {offsets = [0, 3, 0], sizes = [8, 1, 8], strides = [1, 1, 1]} : vector<8x10x8xf32> to vector<8x1x8xf32>
    %65 = vector.shape_cast %64 : vector<8x1x8xf32> to vector<8x8xf32>
    %c3 = arith.constant 3 : index
    %c0_41 = arith.constant 0 : index
    %c0_42 = arith.constant 0 : index
    %66 = vector.load %arg8[%c3, %c0_41, %c0_42] : memref<10x8x32xf32, #tpu.memory_space<vmem>>, vector<1x8x32xf32>
    %67 = vector.shape_cast %66 : vector<1x8x32xf32> to vector<8x32xf32>
    %cst_43 = arith.constant dense<0.000000e+00> : vector<8x32xf32>
    %68 = tpu.matmul %65, %67, %cst_43 {dimension_numbers = #tpu.dot_dimension_numbers<[1], [0], [0], [1], [0, 0, 1, 1], [], []>} : vector<8x8xf32>, vector<8x32xf32>, vector<8x32xf32> -> vector<8x32xf32>
    %69 = arith.addf %63, %68 : vector<8x32xf32>
    %70 = vector.extract_strided_slice %46 {offsets = [0, 4, 0], sizes = [8, 1, 8], strides = [1, 1, 1]} : vector<8x10x8xf32> to vector<8x1x8xf32>
    %71 = vector.shape_cast %70 : vector<8x1x8xf32> to vector<8x8xf32>
    %c4 = arith.constant 4 : index
    %c0_44 = arith.constant 0 : index
    %c0_45 = arith.constant 0 : index
    %72 = vector.load %arg8[%c4, %c0_44, %c0_45] : memref<10x8x32xf32, #tpu.memory_space<vmem>>, vector<1x8x32xf32>
    %73 = vector.shape_cast %72 : vector<1x8x32xf32> to vector<8x32xf32>
    %cst_46 = arith.constant dense<0.000000e+00> : vector<8x32xf32>
    %74 = tpu.matmul %71, %73, %cst_46 {dimension_numbers = #tpu.dot_dimension_numbers<[1], [0], [0], [1], [0, 0, 1, 1], [], []>} : vector<8x8xf32>, vector<8x32xf32>, vector<8x32xf32> -> vector<8x32xf32>
    %75 = arith.addf %69, %74 : vector<8x32xf32>
    %76 = vector.extract_strided_slice %46 {offsets = [0, 5, 0], sizes = [8, 1, 8], strides = [1, 1, 1]} : vector<8x10x8xf32> to vector<8x1x8xf32>
    %77 = vector.shape_cast %76 : vector<8x1x8xf32> to vector<8x8xf32>
    %c5 = arith.constant 5 : index
    %c0_47 = arith.constant 0 : index
    %c0_48 = arith.constant 0 : index
    %78 = vector.load %arg8[%c5, %c0_47, %c0_48] : memref<10x8x32xf32, #tpu.memory_space<vmem>>, vector<1x8x32xf32>
    %79 = vector.shape_cast %78 : vector<1x8x32xf32> to vector<8x32xf32>
    %cst_49 = arith.constant dense<0.000000e+00> : vector<8x32xf32>
    %80 = tpu.matmul %77, %79, %cst_49 {dimension_numbers = #tpu.dot_dimension_numbers<[1], [0], [0], [1], [0, 0, 1, 1], [], []>} : vector<8x8xf32>, vector<8x32xf32>, vector<8x32xf32> -> vector<8x32xf32>
    %81 = arith.addf %75, %80 : vector<8x32xf32>
    %82 = vector.extract_strided_slice %46 {offsets = [0, 6, 0], sizes = [8, 1, 8], strides = [1, 1, 1]} : vector<8x10x8xf32> to vector<8x1x8xf32>
    %83 = vector.shape_cast %82 : vector<8x1x8xf32> to vector<8x8xf32>
    %c6 = arith.constant 6 : index
    %c0_50 = arith.constant 0 : index
    %c0_51 = arith.constant 0 : index
    %84 = vector.load %arg8[%c6, %c0_50, %c0_51] : memref<10x8x32xf32, #tpu.memory_space<vmem>>, vector<1x8x32xf32>
    %85 = vector.shape_cast %84 : vector<1x8x32xf32> to vector<8x32xf32>
    %cst_52 = arith.constant dense<0.000000e+00> : vector<8x32xf32>
    %86 = tpu.matmul %83, %85, %cst_52 {dimension_numbers = #tpu.dot_dimension_numbers<[1], [0], [0], [1], [0, 0, 1, 1], [], []>} : vector<8x8xf32>, vector<8x32xf32>, vector<8x32xf32> -> vector<8x32xf32>
    %87 = arith.addf %81, %86 : vector<8x32xf32>
    %88 = vector.extract_strided_slice %46 {offsets = [0, 7, 0], sizes = [8, 1, 8], strides = [1, 1, 1]} : vector<8x10x8xf32> to vector<8x1x8xf32>
    %89 = vector.shape_cast %88 : vector<8x1x8xf32> to vector<8x8xf32>
    %c7 = arith.constant 7 : index
    %c0_53 = arith.constant 0 : index
    %c0_54 = arith.constant 0 : index
    %90 = vector.load %arg8[%c7, %c0_53, %c0_54] : memref<10x8x32xf32, #tpu.memory_space<vmem>>, vector<1x8x32xf32>
    %91 = vector.shape_cast %90 : vector<1x8x32xf32> to vector<8x32xf32>
    %cst_55 = arith.constant dense<0.000000e+00> : vector<8x32xf32>
    %92 = tpu.matmul %89, %91, %cst_55 {dimension_numbers = #tpu.dot_dimension_numbers<[1], [0], [0], [1], [0, 0, 1, 1], [], []>} : vector<8x8xf32>, vector<8x32xf32>, vector<8x32xf32> -> vector<8x32xf32>
    %93 = arith.addf %87, %92 : vector<8x32xf32>
    %94 = vector.extract_strided_slice %46 {offsets = [0, 8, 0], sizes = [8, 1, 8], strides = [1, 1, 1]} : vector<8x10x8xf32> to vector<8x1x8xf32>
    %95 = vector.shape_cast %94 : vector<8x1x8xf32> to vector<8x8xf32>
    %c8 = arith.constant 8 : index
    %c0_56 = arith.constant 0 : index
    %c0_57 = arith.constant 0 : index
    %96 = vector.load %arg8[%c8, %c0_56, %c0_57] : memref<10x8x32xf32, #tpu.memory_space<vmem>>, vector<1x8x32xf32>
    %97 = vector.shape_cast %96 : vector<1x8x32xf32> to vector<8x32xf32>
    %cst_58 = arith.constant dense<0.000000e+00> : vector<8x32xf32>
    %98 = tpu.matmul %95, %97, %cst_58 {dimension_numbers = #tpu.dot_dimension_numbers<[1], [0], [0], [1], [0, 0, 1, 1], [], []>} : vector<8x8xf32>, vector<8x32xf32>, vector<8x32xf32> -> vector<8x32xf32>
    %99 = arith.addf %93, %98 : vector<8x32xf32>
    %100 = vector.extract_strided_slice %46 {offsets = [0, 9, 0], sizes = [8, 1, 8], strides = [1, 1, 1]} : vector<8x10x8xf32> to vector<8x1x8xf32>
    %101 = vector.shape_cast %100 : vector<8x1x8xf32> to vector<8x8xf32>
    %c9 = arith.constant 9 : index
    %c0_59 = arith.constant 0 : index
    %c0_60 = arith.constant 0 : index
    %102 = vector.load %arg8[%c9, %c0_59, %c0_60] : memref<10x8x32xf32, #tpu.memory_space<vmem>>, vector<1x8x32xf32>
    %103 = vector.shape_cast %102 : vector<1x8x32xf32> to vector<8x32xf32>
    %cst_61 = arith.constant dense<0.000000e+00> : vector<8x32xf32>
    %104 = tpu.matmul %101, %103, %cst_61 {dimension_numbers = #tpu.dot_dimension_numbers<[1], [0], [0], [1], [0, 0, 1, 1], [], []>} : vector<8x8xf32>, vector<8x32xf32>, vector<8x32xf32> -> vector<8x32xf32>
    %105 = arith.addf %99, %104 : vector<8x32xf32>
    %c0_62 = arith.constant 0 : index
    %c0_63 = arith.constant 0 : index
    %106 = vector.load %arg9[%c0_62, %c0_63] : memref<1x32xf32, #tpu.memory_space<vmem>>, vector<1x32xf32>
    %107 = vector.broadcast %106 : vector<1x32xf32> to vector<8x32xf32>
    %108 = arith.addf %105, %107 : vector<8x32xf32>
    %cst_64 = arith.constant 0.000000e+00 : f32
    %109 = vector.broadcast %cst_64 : f32 to vector<8x32xf32>
    %110 = arith.maximumf %108, %109 : vector<8x32xf32>
    %c0_65 = arith.constant 0 : index
    %c0_66 = arith.constant 0 : index
    %111 = vector.load %arg10[%c0_65, %c0_66] : memref<32x1xf32, #tpu.memory_space<vmem>>, vector<32x1xf32>
    %cst_67 = arith.constant dense<0.000000e+00> : vector<8x1xf32>
    %112 = tpu.matmul %110, %111, %cst_67 {dimension_numbers = #tpu.dot_dimension_numbers<[1], [0], [0], [1], [0, 0, 1, 1], [], []>} : vector<8x32xf32>, vector<32x1xf32>, vector<8x1xf32> -> vector<8x1xf32>
    %c0_68 = arith.constant 0 : index
    %c0_69 = arith.constant 0 : index
    %113 = vector.load %arg11[%c0_68, %c0_69] : memref<1x1xf32, #tpu.memory_space<vmem>>, vector<1x1xf32>
    %114 = vector.broadcast %113 : vector<1x1xf32> to vector<8x1xf32>
    %115 = arith.addf %112, %114 : vector<8x1xf32>
    %c0_70 = arith.constant 0 : index
    %c0_71 = arith.constant 0 : index
    %116 = vector.load %arg12[%c0_70, %c0_71] : memref<8x1xf32, #tpu.memory_space<vmem>>, vector<8x1xf32>
    tpu.vector_store %arg12[%c0_70, %c0_71], %115 {strides = array<i32>} : memref<8x1xf32, #tpu.memory_space<vmem>>, vector<8x1xf32>,
    return
  }
  func.func @transform_0(%arg0: i32) -> (i32, i32) {
    %c0_i32 = arith.constant 0 : i32
    %c0_i32_0 = arith.constant 0 : i32
    return %arg0, %c0_i32 : i32, i32
  }
  func.func @transform_1(%arg0: i32) -> (i32, i32) {
    %c0_i32 = arith.constant 0 : i32
    %c0_i32_0 = arith.constant 0 : i32
    %c0_i32_1 = arith.constant 0 : i32
    return %c0_i32, %c0_i32_0 : i32, i32
  }
  func.func @transform_2(%arg0: i32) -> (i32, i32) {
    %c0_i32 = arith.constant 0 : i32
    %c0_i32_0 = arith.constant 0 : i32
    %c0_i32_1 = arith.constant 0 : i32
    return %c0_i32, %c0_i32_0 : i32, i32
  }
  func.func @transform_3(%arg0: i32) -> (i32, i32) {
    %c0_i32 = arith.constant 0 : i32
    %c0_i32_0 = arith.constant 0 : i32
    %c0_i32_1 = arith.constant 0 : i32
    return %c0_i32, %c0_i32_0 : i32, i32
  }
  func.func @transform_4(%arg0: i32) -> (i32, i32) {
    %c0_i32 = arith.constant 0 : i32
    %c0_i32_0 = arith.constant 0 : i32
    %c0_i32_1 = arith.constant 0 : i32
    return %c0_i32, %c0_i32_0 : i32, i32
  }
  func.func @transform_5(%arg0: i32) -> (i32, i32) {
    %c0_i32 = arith.constant 0 : i32
    %c0_i32_0 = arith.constant 0 : i32
    %c0_i32_1 = arith.constant 0 : i32
    return %c0_i32, %c0_i32_0 : i32, i32
  }
  func.func @transform_6(%arg0: i32) -> (i32, i32) {
    %c0_i32 = arith.constant 0 : i32
    %c0_i32_0 = arith.constant 0 : i32
    %c0_i32_1 = arith.constant 0 : i32
    return %c0_i32, %c0_i32_0 : i32, i32
  }
  func.func @transform_7(%arg0: i32) -> (i32, i32, i32) {
    %c0_i32 = arith.constant 0 : i32
    %c0_i32_0 = arith.constant 0 : i32
    %c0_i32_1 = arith.constant 0 : i32
    %c0_i32_2 = arith.constant 0 : i32
    return %c0_i32, %c0_i32_0, %c0_i32_1 : i32, i32, i32
  }
  func.func @transform_8(%arg0: i32) -> (i32, i32) {
    %c0_i32 = arith.constant 0 : i32
    %c0_i32_0 = arith.constant 0 : i32
    %c0_i32_1 = arith.constant 0 : i32
    return %c0_i32, %c0_i32_0 : i32, i32
  }
  func.func @transform_9(%arg0: i32) -> (i32, i32) {
    %c0_i32 = arith.constant 0 : i32
    %c0_i32_0 = arith.constant 0 : i32
    %c0_i32_1 = arith.constant 0 : i32
    return %c0_i32, %c0_i32_0 : i32, i32
  }
  func.func @transform_10(%arg0: i32) -> (i32, i32) {
    %c0_i32 = arith.constant 0 : i32
    %c0_i32_0 = arith.constant 0 : i32
    %c0_i32_1 = arith.constant 0 : i32
    return %c0_i32, %c0_i32_0 : i32, i32
  }
  func.func @transform_11(%arg0: i32) -> (i32, i32) {
    %c0_i32 = arith.constant 0 : i32
    %c0_i32_0 = arith.constant 0 : i32
    return %arg0, %c0_i32 : i32, i32
  }
}

</mosaic_0001>

<llo_original>
// kernel: tpu_custom_call.1
$region0: #{tpu_custom_call.1}
  #allocation0 [shape = 'u32[]', space=smem, size = 0x4, offset = 0x4, fixed_abs, tag = 'smem constant byte address 0x4 - core index']
  #allocation1 [shape = 'u32[144,128]{1,0:T(1,128)}', space=vmem, size = 0x12000, scoped, tag = 'internal scratch']
  #allocation2 [shape = 'f32[352,16]{1,0:T(8,128)}', space=vmem, size = 0x2c000, scoped, tag = 'scratch operand']
  #allocation3 [shape = 'f32[160,8]{1,0:T(8,128)}', space=vmem, size = 0x14000, scoped, tag = 'scratch operand']
  #allocation4 [shape = 'f32[1,1]{1,0:T(1,128)S(1)}', space=vmem, size = 0x200, scoped, tag = 'scoped memory for tpu_custom_call.1']
  %s0 = inlined_call_operand.vmem [shape: f32[376,6], index: 0, kind: input, shape index: {}]
  %s1 = inlined_call_operand.vmem [shape: f32[47,32], index: 1, kind: input, shape index: {}]
  %s2 = inlined_call_operand.vmem [shape: f32[6,32], index: 2, kind: input, shape index: {}]
  %s3 = inlined_call_operand.vmem [shape: f32[128,16], index: 3, kind: input, shape index: {}]
  %s4 = inlined_call_operand.vmem [shape: f32[1,16], index: 4, kind: input, shape index: {}]
  %s5 = inlined_call_operand.vmem [shape: f32[48,8], index: 5, kind: input, shape index: {}]
  %s6 = inlined_call_operand.vmem [shape: f32[1,8], index: 6, kind: input, shape index: {}]
  %s7 = inlined_call_operand.vmem [shape: f32[10,8,32], index: 7, kind: input, shape index: {}]
  %s8 = inlined_call_operand.vmem [shape: f32[1,32], index: 8, kind: input, shape index: {}]
  %s9 = inlined_call_operand.vmem [shape: f32[32,1], index: 9, kind: input, shape index: {}]
  %s10 = inlined_call_operand.<no memory space> [shape: f32[1,1], index: 10, kind: input, shape index: {}]
  %s11 = inlined_call_operand.vmem [shape: f32[8,1], index: 11, kind: output, shape index: {}]
  %s12 = sld [smem:[#allocation0]]
  $region54: #{tpu_custom_call.1} parent=0
    _
  %s14 = ssub.s32 1, %s12
  %s15 = scalar_select 0, %s14, %s12
  %v16 = vstv %s10
  %17 = vst [vmem:[#allocation4] sm:$0x1] %v16
  // Predicated region
  $region2: #{tpu_custom_call.1} parent=0 // pred_check
    _
  $region3: #{tpu_custom_call.1} parent=0 // pred_check_branch
    %19 = sbr.rel (0) target = $region5
  $region4: #{tpu_custom_call.1} parent=0 // pred_region
    _
  $region5: #{tpu_custom_call.1} parent=0 // pred_fallthru
    _
  // Predicated region
  $region6: #{tpu_custom_call.1} parent=0 // pred_check
    _
  $region7: #{tpu_custom_call.1} parent=0 // pred_check_branch
    %21 = sbr.rel (0) target = $region9
  $region8: #{tpu_custom_call.1} parent=0 // pred_region
    _
  $region9: #{tpu_custom_call.1} parent=0 // pred_fallthru
    _
  // Predicated region
  $region10: #{tpu_custom_call.1} parent=0 // pred_check
    _
  $region11: #{tpu_custom_call.1} parent=0 // pred_check_branch
    %23 = sbr.rel (0) target = $region13
  $region12: #{tpu_custom_call.1} parent=0 // pred_region
    _
  $region13: #{tpu_custom_call.1} parent=0 // pred_fallthru
    _
  // Predicated region
  $region14: #{tpu_custom_call.1} parent=0 // pred_check
    _
  $region15: #{tpu_custom_call.1} parent=0 // pred_check_branch
    %25 = sbr.rel (0) target = $region17
  $region16: #{tpu_custom_call.1} parent=0 // pred_region
    _
  $region17: #{tpu_custom_call.1} parent=0 // pred_fallthru
    _
  // Predicated region
  $region18: #{tpu_custom_call.1} parent=0 // pred_check
    _
  $region19: #{tpu_custom_call.1} parent=0 // pred_check_branch
    %27 = sbr.rel (0) target = $region21
  $region20: #{tpu_custom_call.1} parent=0 // pred_region
    _
  $region21: #{tpu_custom_call.1} parent=0 // pred_fallthru
    _
  // Predicated region
  $region22: #{tpu_custom_call.1} parent=0 // pred_check
    _
  $region23: #{tpu_custom_call.1} parent=0 // pred_check_branch
    %29 = sbr.rel (0) target = $region25
  $region24: #{tpu_custom_call.1} parent=0 // pred_region
    _
  $region25: #{tpu_custom_call.1} parent=0 // pred_fallthru
    _
  // Predicated region
  $region26: #{tpu_custom_call.1} parent=0 // pred_check
    _
  $region27: #{tpu_custom_call.1} parent=0 // pred_check_branch
    %31 = sbr.rel (0) target = $region29
  $region28: #{tpu_custom_call.1} parent=0 // pred_region
    _
  $region29: #{tpu_custom_call.1} parent=0 // pred_fallthru
    _
  // Predicated region
  $region30: #{tpu_custom_call.1} parent=0 // pred_check
    _
  $region31: #{tpu_custom_call.1} parent=0 // pred_check_branch
    %33 = sbr.rel (0) target = $region33
  $region32: #{tpu_custom_call.1} parent=0 // pred_region
    _
  $region33: #{tpu_custom_call.1} parent=0 // pred_fallthru
    _
  // Predicated region
  $region34: #{tpu_custom_call.1} parent=0 // pred_check
    _
  $region35: #{tpu_custom_call.1} parent=0 // pred_check_branch
    %35 = sbr.rel (0) target = $region37
  $region36: #{tpu_custom_call.1} parent=0 // pred_region
    _
  $region37: #{tpu_custom_call.1} parent=0 // pred_fallthru
    _
  // Predicated region
  $region38: #{tpu_custom_call.1} parent=0 // pred_check
    _
  $region39: #{tpu_custom_call.1} parent=0 // pred_check_branch
    %37 = sbr.rel (0) target = $region41
  $region40: #{tpu_custom_call.1} parent=0 // pred_region
    _
  $region41: #{tpu_custom_call.1} parent=0 // pred_fallthru
    _
  // Predicated region
  $region42: #{tpu_custom_call.1} parent=0 // pred_check
    _
  $region43: #{tpu_custom_call.1} parent=0 // pred_check_branch
    %39 = sbr.rel (0) target = $region45
  $region44: #{tpu_custom_call.1} parent=0 // pred_region
    _
  $region45: #{tpu_custom_call.1} parent=0 // pred_fallthru
    _
  %v40 = vld [vmem:[%s0] sm:$0xff]
  %v41 = vld [vmem:[%s0 + $0x8] sm:$0xff]
  %v42 = vld [vmem:[%s0 + $0x10] sm:$0xff]
  %v43 = vld [vmem:[%s0 + $0x18] sm:$0xff]
  %v44 = vld [vmem:[%s0 + $0x20] sm:$0xff]
  %v45 = vld [vmem:[%s0 + $0x28] sm:$0xff]
  %v46 = vld [vmem:[%s0 + $0x30] sm:$0xff]
  %v47 = vld [vmem:[%s0 + $0x38] sm:$0xff]
  %v48 = vld [vmem:[%s0 + $0x40] sm:$0xff]
  %v49 = vld [vmem:[%s0 + $0x48] sm:$0xff]
  %v50 = vld [vmem:[%s0 + $0x50] sm:$0xff]
  %v51 = vld [vmem:[%s0 + $0x58] sm:$0xff]
  %v52 = vld [vmem:[%s0 + $0x60] sm:$0xff]
  %v53 = vld [vmem:[%s0 + $0x68] sm:$0xff]
  %v54 = vld [vmem:[%s0 + $0x70] sm:$0xff]
  %v55 = vld [vmem:[%s0 + $0x78] sm:$0xff]
  %v56 = vld [vmem:[%s0 + $0x80] sm:$0xff]
  %v57 = vld [vmem:[%s0 + $0x88] sm:$0xff]
  %v58 = vld [vmem:[%s0 + $0x90] sm:$0xff]
  %v59 = vld [vmem:[%s0 + $0x98] sm:$0xff]
  %v60 = vld [vmem:[%s0 + $0xa0] sm:$0xff]
  %v61 = vld [vmem:[%s0 + $0xa8] sm:$0xff]
  %v62 = vld [vmem:[%s0 + $0xb0] sm:$0xff]
  %v63 = vld [vmem:[%s0 + $0xb8] sm:$0xff]
  %v64 = vld [vmem:[%s0 + $0xc0] sm:$0xff]
  %v65 = vld [vmem:[%s0 + $0xc8] sm:$0xff]
  %v66 = vld [vmem:[%s0 + $0xd0] sm:$0xff]
  %v67 = vld [vmem:[%s0 + $0xd8] sm:$0xff]
  %v68 = vld [vmem:[%s0 + $0xe0] sm:$0xff]
  %v69 = vld [vmem:[%s0 + $0xe8] sm:$0xff]
  %v70 = vld [vmem:[%s0 + $0xf0] sm:$0xff]
  %v71 = vld [vmem:[%s0 + $0xf8] sm:$0xff]
  %v72 = vld [vmem:[%s0 + $0x100] sm:$0xff]
  %v73 = vld [vmem:[%s0 + $0x108] sm:$0xff]
  %v74 = vld [vmem:[%s0 + $0x110] sm:$0xff]
  %v75 = vld [vmem:[%s0 + $0x118] sm:$0xff]
  %v76 = vld [vmem:[%s0 + $0x120] sm:$0xff]
  %v77 = vld [vmem:[%s0 + $0x128] sm:$0xff]
  %v78 = vld [vmem:[%s0 + $0x130] sm:$0xff]
  %v79 = vld [vmem:[%s0 + $0x138] sm:$0xff]
  %v80 = vld [vmem:[%s0 + $0x140] sm:$0xff]
  %v81 = vld [vmem:[%s0 + $0x148] sm:$0xff]
  %v82 = vld [vmem:[%s0 + $0x150] sm:$0xff]
  %v83 = vld [vmem:[%s0 + $0x158] sm:$0xff]
  %v84 = vld [vmem:[%s0 + $0x160] sm:$0xff]
  %v85 = vld [vmem:[%s0 + $0x168] sm:$0xff]
  %v86 = vld [vmem:[%s0 + $0x170] sm:$0xff]
  %v87 = vld [vmem:[%s2] sm:$0x3f]
  %vm88 = vcmask 48128
  %v90 = vsel %vm88, %v40, 0
  %v93 = vsel %vm88, %v41, 0
  %v96 = vsel %vm88, %v42, 0
  %v99 = vsel %vm88, %v43, 0
  %v102 = vsel %vm88, %v44, 0
  %v105 = vsel %vm88, %v45, 0
  %v108 = vsel %vm88, %v46, 0
  %v111 = vsel %vm88, %v47, 0
  %v114 = vsel %vm88, %v48, 0
  %v117 = vsel %vm88, %v49, 0
  %v120 = vsel %vm88, %v50, 0
  %v123 = vsel %vm88, %v51, 0
  %v126 = vsel %vm88, %v52, 0
  %v129 = vsel %vm88, %v53, 0
  %v132 = vsel %vm88, %v54, 0
  %v135 = vsel %vm88, %v55, 0
  %v138 = vsel %vm88, %v56, 0
  %v141 = vsel %vm88, %v57, 0
  %v144 = vsel %vm88, %v58, 0
  %v147 = vsel %vm88, %v59, 0
  %v150 = vsel %vm88, %v60, 0
  %v153 = vsel %vm88, %v61, 0
  %v156 = vsel %vm88, %v62, 0
  %v159 = vsel %vm88, %v63, 0
  %v162 = vsel %vm88, %v64, 0
  %v165 = vsel %vm88, %v65, 0
  %v168 = vsel %vm88, %v66, 0
  %v171 = vsel %vm88, %v67, 0
  %v174 = vsel %vm88, %v68, 0
  %v177 = vsel %vm88, %v69, 0
  %v180 = vsel %vm88, %v70, 0
  %v183 = vsel %vm88, %v71, 0
  %v186 = vsel %vm88, %v72, 0
  %v189 = vsel %vm88, %v73, 0
  %v192 = vsel %vm88, %v74, 0
  %v195 = vsel %vm88, %v75, 0
  %v198 = vsel %vm88, %v76, 0
  %v201 = vsel %vm88, %v77, 0
  %v204 = vsel %vm88, %v78, 0
  %v207 = vsel %vm88, %v79, 0
  %v210 = vsel %vm88, %v80, 0
  %v213 = vsel %vm88, %v81, 0
  %v216 = vsel %vm88, %v82, 0
  %v219 = vsel %vm88, %v83, 0
  %v222 = vsel %vm88, %v84, 0
  %v225 = vsel %vm88, %v85, 0
  %v228 = vsel %vm88, %v86, 0
  %vm230 = vcmask 1045504
  %v232 = vsel %vm230, %v87, 0
  %234 = vmatprep.subr.mxu0 0.0
  %235 = vmatpush1.msra.mxu0 0.0
  %236 = vmatprep.subr.mxu0 0.0
  %237 = vmatpush1.msra.mxu0 0.0
  %238 = vmatprep.subr.mxu0 0.0
  %239 = vmatpush1.msra.mxu0 0.0
  %240 = vmatprep.subr.mxu0 0.0
  %241 = vmatpush1.msra.mxu0 0.0
  %242 = vmatprep.subr.mxu0 0.0
  %243 = vmatpush1.msra.mxu0 0.0
  %244 = vmatprep.subr.mxu0 0.0
  %245 = vmatpush1.msra.mxu0 0.0
  %246 = vmatprep.subr.mxu0 0.0
  %247 = vmatpush1.msra.mxu0 0.0
  %248 = vmatprep.subr.mxu0 0.0
  %249 = vmatpush1.msra.mxu0 0.0
  %250 = vmatprep.subr.mxu0 0.0
  %251 = vmatpush1.msra.mxu0 0.0
  %252 = vmatprep.subr.mxu0 0.0
  %253 = vmatpush1.msra.mxu0 0.0
  %254 = vmatprep.subr.mxu0 0.0
  %255 = vmatpush1.msra.mxu0 0.0
  %256 = vmatprep.subr.mxu0 0.0
  %257 = vmatpush1.msra.mxu0 0.0
  %258 = vmatprep.subr.mxu0 0.0
  %259 = vmatpush1.msra.mxu0 0.0
  %260 = vmatprep.subr.mxu0 0.0
  %261 = vmatpush1.msra.mxu0 0.0
  %262 = vmatprep.subr.mxu0 0.0
  %263 = vmatpush1.msra.mxu0 0.0
  %264 = vmatprep.subr.mxu0 0.0
  %265 = vmatpush1.msra.mxu0 %v232
  %266 = vmatprep.subr.mxu0 0.0
  %267 = vmatpush2.msra.mxu0 0.0
  %268 = vmatprep.subr.mxu0 0.0
  %269 = vmatpush2.msra.mxu0 0.0
  %270 = vmatprep.subr.mxu0 0.0
  %271 = vmatpush2.msra.mxu0 0.0
  %272 = vmatprep.subr.mxu0 0.0
  %273 = vmatpush2.msra.mxu0 0.0
  %274 = vmatprep.subr.mxu0 0.0
  %275 = vmatpush2.msra.mxu0 0.0
  %276 = vmatprep.subr.mxu0 0.0
  %277 = vmatpush2.msra.mxu0 0.0
  %278 = vmatprep.subr.mxu0 0.0
  %279 = vmatpush2.msra.mxu0 0.0
  %280 = vmatprep.subr.mxu0 0.0
  %281 = vmatpush2.msra.mxu0 0.0
  %282 = vmatprep.subr.mxu0 0.0
  %283 = vmatpush2.msra.mxu0 0.0
  %284 = vmatprep.subr.mxu0 0.0
  %285 = vmatpush2.msra.mxu0 0.0
  %286 = vmatprep.subr.mxu0 0.0
  %287 = vmatpush2.msra.mxu0 0.0
  %288 = vmatprep.subr.mxu0 0.0
  %289 = vmatpush2.msra.mxu0 0.0
  %290 = vmatprep.subr.mxu0 0.0
  %291 = vmatpush2.msra.mxu0 0.0
  %292 = vmatprep.subr.mxu0 0.0
  %293 = vmatpush2.msra.mxu0 0.0
  %294 = vmatprep.subr.mxu0 0.0
  %295 = vmatpush2.msra.mxu0 0.0
  %296 = vmatprep.subr.mxu0 0.0
  %297 = vmatpush2.msra.mxu0 0.0
  %298 = vmatprep.mubr.f32.mxu0 0.0
  %299 = vmatmul.mubr.f32.gmra.mxu0 %v90
  %v300 = vpop.f32.mrf.mxu0
  %v301 = vadd.f32 0.0, %v300
  %v302 = vpop.f32.mrf.mxu0
  %303 = vmatprep.mubr.f32.mxu0 0.0
  %304 = vmatmul.mubr.f32.gmra.mxu0 %v93
  %v305 = vpop.f32.mrf.mxu0
  %v306 = vadd.f32 0.0, %v305
  %v307 = vpop.f32.mrf.mxu0
  %308 = vmatprep.mubr.f32.mxu0 0.0
  %309 = vmatmul.mubr.f32.gmra.mxu0 %v96
  %v310 = vpop.f32.mrf.mxu0
  %v311 = vadd.f32 0.0, %v310
  %v312 = vpop.f32.mrf.mxu0
  %313 = vmatprep.mubr.f32.mxu0 0.0
  %314 = vmatmul.mubr.f32.gmra.mxu0 %v99
  %v315 = vpop.f32.mrf.mxu0
  %v316 = vadd.f32 0.0, %v315
  %v317 = vpop.f32.mrf.mxu0
  %318 = vmatprep.mubr.f32.mxu0 0.0
  %319 = vmatmul.mubr.f32.gmra.mxu0 %v102
  %v320 = vpop.f32.mrf.mxu0
  %v321 = vadd.f32 0.0, %v320
  %v322 = vpop.f32.mrf.mxu0
  %323 = vmatprep.mubr.f32.mxu0 0.0
  %324 = vmatmul.mubr.f32.gmra.mxu0 %v105
  %v325 = vpop.f32.mrf.mxu0
  %v326 = vadd.f32 0.0, %v325
  %v327 = vpop.f32.mrf.mxu0
  %328 = vmatprep.mubr.f32.mxu0 0.0
  %329 = vmatmul.mubr.f32.gmra.mxu0 %v108
  %v330 = vpop.f32.mrf.mxu0
  %v331 = vadd.f32 0.0, %v330
  %v332 = vpop.f32.mrf.mxu0
  %333 = vmatprep.mubr.f32.mxu0 0.0
  %334 = vmatmul.mubr.f32.gmra.mxu0 %v111
  %v335 = vpop.f32.mrf.mxu0
  %v336 = vadd.f32 0.0, %v335
  %v337 = vpop.f32.mrf.mxu0
  %338 = vmatprep.mubr.f32.mxu0 0.0
  %339 = vmatmul.mubr.f32.gmra.mxu0 %v114
  %v340 = vpop.f32.mrf.mxu0
  %v341 = vadd.f32 0.0, %v340
  %v342 = vpop.f32.mrf.mxu0
  %343 = vmatprep.mubr.f32.mxu0 0.0
  %344 = vmatmul.mubr.f32.gmra.mxu0 %v117
  %v345 = vpop.f32.mrf.mxu0
  %v346 = vadd.f32 0.0, %v345
  %v347 = vpop.f32.mrf.mxu0
  %348 = vmatprep.mubr.f32.mxu0 0.0
  %349 = vmatmul.mubr.f32.gmra.mxu0 %v120
  %v350 = vpop.f32.mrf.mxu0
  %v351 = vadd.f32 0.0, %v350
  %v352 = vpop.f32.mrf.mxu0
  %353 = vmatprep.mubr.f32.mxu0 0.0
  %354 = vmatmul.mubr.f32.gmra.mxu0 %v123
  %v355 = vpop.f32.mrf.mxu0
  %v356 = vadd.f32 0.0, %v355
  %v357 = vpop.f32.mrf.mxu0
  %358 = vmatprep.mubr.f32.mxu0 0.0
  %359 = vmatmul.mubr.f32.gmra.mxu0 %v126
  %v360 = vpop.f32.mrf.mxu0
  %v361 = vadd.f32 0.0, %v360
  %v362 = vpop.f32.mrf.mxu0
  %363 = vmatprep.mubr.f32.mxu0 0.0
  %364 = vmatmul.mubr.f32.gmra.mxu0 %v129
  %v365 = vpop.f32.mrf.mxu0
  %v366 = vadd.f32 0.0, %v365
  %v367 = vpop.f32.mrf.mxu0
  %368 = vmatprep.mubr.f32.mxu0 0.0
  %369 = vmatmul.mubr.f32.gmra.mxu0 %v132
  %v370 = vpop.f32.mrf.mxu0
  %v371 = vadd.f32 0.0, %v370
  %v372 = vpop.f32.mrf.mxu0
  %373 = vmatprep.mubr.f32.mxu0 0.0
  %374 = vmatmul.mubr.f32.gmra.mxu0 %v135
  %v375 = vpop.f32.mrf.mxu0
  %v376 = vadd.f32 0.0, %v375
  %v377 = vpop.f32.mrf.mxu0
  %378 = vmatprep.mubr.f32.mxu0 0.0
  %379 = vmatmul.mubr.f32.gmra.mxu0 %v138
  %v380 = vpop.f32.mrf.mxu0
  %v381 = vadd.f32 0.0, %v380
  %v382 = vpop.f32.mrf.mxu0
  %383 = vmatprep.mubr.f32.mxu0 0.0
  %384 = vmatmul.mubr.f32.gmra.mxu0 %v141
  %v385 = vpop.f32.mrf.mxu0
  %v386 = vadd.f32 0.0, %v385
  %v387 = vpop.f32.mrf.mxu0
  %388 = vmatprep.mubr.f32.mxu0 0.0
  %389 = vmatmul.mubr.f32.gmra.mxu0 %v144
  %v390 = vpop.f32.mrf.mxu0
  %v391 = vadd.f32 0.0, %v390
  %v392 = vpop.f32.mrf.mxu0
  %393 = vmatprep.mubr.f32.mxu0 0.0
  %394 = vmatmul.mubr.f32.gmra.mxu0 %v147
  %v395 = vpop.f32.mrf.mxu0
  %v396 = vadd.f32 0.0, %v395
  %v397 = vpop.f32.mrf.mxu0
  %398 = vmatprep.mubr.f32.mxu0 0.0
  %399 = vmatmul.mubr.f32.gmra.mxu0 %v150
  %v400 = vpop.f32.mrf.mxu0
  %v401 = vadd.f32 0.0, %v400
  %v402 = vpop.f32.mrf.mxu0
  %403 = vmatprep.mubr.f32.mxu0 0.0
  %404 = vmatmul.mubr.f32.gmra.mxu0 %v153
  %v405 = vpop.f32.mrf.mxu0
  %v406 = vadd.f32 0.0, %v405
  %v407 = vpop.f32.mrf.mxu0
  %408 = vmatprep.mubr.f32.mxu0 0.0
  %409 = vmatmul.mubr.f32.gmra.mxu0 %v156
  %v410 = vpop.f32.mrf.mxu0
  %v411 = vadd.f32 0.0, %v410
  %v412 = vpop.f32.mrf.mxu0
  %413 = vmatprep.mubr.f32.mxu0 0.0
  %414 = vmatmul.mubr.f32.gmra.mxu0 %v159
  %v415 = vpop.f32.mrf.mxu0
  %v416 = vadd.f32 0.0, %v415
  %v417 = vpop.f32.mrf.mxu0
  %418 = vmatprep.mubr.f32.mxu0 0.0
  %419 = vmatmul.mubr.f32.gmra.mxu0 %v162
  %v420 = vpop.f32.mrf.mxu0
  %v421 = vadd.f32 0.0, %v420
  %v422 = vpop.f32.mrf.mxu0
  %423 = vmatprep.mubr.f32.mxu0 0.0
  %424 = vmatmul.mubr.f32.gmra.mxu0 %v165
  %v425 = vpop.f32.mrf.mxu0
  %v426 = vadd.f32 0.0, %v425
  %v427 = vpop.f32.mrf.mxu0
  %428 = vmatprep.mubr.f32.mxu0 0.0
  %429 = vmatmul.mubr.f32.gmra.mxu0 %v168
  %v430 = vpop.f32.mrf.mxu0
  %v431 = vadd.f32 0.0, %v430
  %v432 = vpop.f32.mrf.mxu0
  %433 = vmatprep.mubr.f32.mxu0 0.0
  %434 = vmatmul.mubr.f32.gmra.mxu0 %v171
  %v435 = vpop.f32.mrf.mxu0
  %v436 = vadd.f32 0.0, %v435
  %v437 = vpop.f32.mrf.mxu0
  %438 = vmatprep.mubr.f32.mxu0 0.0
  %439 = vmatmul.mubr.f32.gmra.mxu0 %v174
  %v440 = vpop.f32.mrf.mxu0
  %v441 = vadd.f32 0.0, %v440
  %v442 = vpop.f32.mrf.mxu0
  %443 = vmatprep.mubr.f32.mxu0 0.0
  %444 = vmatmul.mubr.f32.gmra.mxu0 %v177
  %v445 = vpop.f32.mrf.mxu0
  %v446 = vadd.f32 0.0, %v445
  %v447 = vpop.f32.mrf.mxu0
  %448 = vmatprep.mubr.f32.mxu0 0.0
  %449 = vmatmul.mubr.f32.gmra.mxu0 %v180
  %v450 = vpop.f32.mrf.mxu0
  %v451 = vadd.f32 0.0, %v450
  %v452 = vpop.f32.mrf.mxu0
  %453 = vmatprep.mubr.f32.mxu0 0.0
  %454 = vmatmul.mubr.f32.gmra.mxu0 %v183
  %v455 = vpop.f32.mrf.mxu0
  %v456 = vadd.f32 0.0, %v455
  %v457 = vpop.f32.mrf.mxu0
  %458 = vmatprep.mubr.f32.mxu0 0.0
  %459 = vmatmul.mubr.f32.gmra.mxu0 %v186
  %v460 = vpop.f32.mrf.mxu0
  %v461 = vadd.f32 0.0, %v460
  %v462 = vpop.f32.mrf.mxu0
  %463 = vmatprep.mubr.f32.mxu0 0.0
  %464 = vmatmul.mubr.f32.gmra.mxu0 %v189
  %v465 = vpop.f32.mrf.mxu0
  %v466 = vadd.f32 0.0, %v465
  %v467 = vpop.f32.mrf.mxu0
  %468 = vmatprep.mubr.f32.mxu0 0.0
  %469 = vmatmul.mubr.f32.gmra.mxu0 %v192
  %v470 = vpop.f32.mrf.mxu0
  %v471 = vadd.f32 0.0, %v470
  %v472 = vpop.f32.mrf.mxu0
  %473 = vmatprep.mubr.f32.mxu0 0.0
  %474 = vmatmul.mubr.f32.gmra.mxu0 %v195
  %v475 = vpop.f32.mrf.mxu0
  %v476 = vadd.f32 0.0, %v475
  %v477 = vpop.f32.mrf.mxu0
  %478 = vmatprep.mubr.f32.mxu0 0.0
  %479 = vmatmul.mubr.f32.gmra.mxu0 %v198
  %v480 = vpop.f32.mrf.mxu0
  %v481 = vadd.f32 0.0, %v480
  %v482 = vpop.f32.mrf.mxu0
  %483 = vmatprep.mubr.f32.mxu0 0.0
  %484 = vmatmul.mubr.f32.gmra.mxu0 %v201
  %v485 = vpop.f32.mrf.mxu0
  %v486 = vadd.f32 0.0, %v485
  %v487 = vpop.f32.mrf.mxu0
  %488 = vmatprep.mubr.f32.mxu0 0.0
  %489 = vmatmul.mubr.f32.gmra.mxu0 %v204
  %v490 = vpop.f32.mrf.mxu0
  %v491 = vadd.f32 0.0, %v490
  %v492 = vpop.f32.mrf.mxu0
  %493 = vmatprep.mubr.f32.mxu0 0.0
  %494 = vmatmul.mubr.f32.gmra.mxu0 %v207
  %v495 = vpop.f32.mrf.mxu0
  %v496 = vadd.f32 0.0, %v495
  %v497 = vpop.f32.mrf.mxu0
  %498 = vmatprep.mubr.f32.mxu0 0.0
  %499 = vmatmul.mubr.f32.gmra.mxu0 %v210
  %v500 = vpop.f32.mrf.mxu0
  %v501 = vadd.f32 0.0, %v500
  %v502 = vpop.f32.mrf.mxu0
  %503 = vmatprep.mubr.f32.mxu0 0.0
  %504 = vmatmul.mubr.f32.gmra.mxu0 %v213
  %v505 = vpop.f32.mrf.mxu0
  %v506 = vadd.f32 0.0, %v505
  %v507 = vpop.f32.mrf.mxu0
  %508 = vmatprep.mubr.f32.mxu0 0.0
  %509 = vmatmul.mubr.f32.gmra.mxu0 %v216
  %v510 = vpop.f32.mrf.mxu0
  %v511 = vadd.f32 0.0, %v510
  %v512 = vpop.f32.mrf.mxu0
  %513 = vmatprep.mubr.f32.mxu0 0.0
  %514 = vmatmul.mubr.f32.gmra.mxu0 %v219
  %v515 = vpop.f32.mrf.mxu0
  %v516 = vadd.f32 0.0, %v515
  %v517 = vpop.f32.mrf.mxu0
  %518 = vmatprep.mubr.f32.mxu0 0.0
  %519 = vmatmul.mubr.f32.gmra.mxu0 %v222
  %v520 = vpop.f32.mrf.mxu0
  %v521 = vadd.f32 0.0, %v520
  %v522 = vpop.f32.mrf.mxu0
  %523 = vmatprep.mubr.f32.mxu0 0.0
  %524 = vmatmul.mubr.f32.gmra.mxu0 %v225
  %v525 = vpop.f32.mrf.mxu0
  %v526 = vadd.f32 0.0, %v525
  %v527 = vpop.f32.mrf.mxu0
  %528 = vmatprep.mubr.f32.mxu0 0.0
  %529 = vmatmul.mubr.f32.gmra.mxu0 %v228
  %v530 = vpop.f32.mrf.mxu0
  %v531 = vadd.f32 0.0, %v530
  %v532 = vpop.f32.mrf.mxu0
  %533 = vdwg.mxu0
  %v581 = vcombine.high %v301, %v301
  %v583 = vunpack.c.l.s4 1966171168
  %v584 = vunpack.c.0.s8 %v583
  %v585 = vlaneseq
  %v586 = vshrl.u32 %v585, 7
  %v587 = vsub.s32 %v584, %v586
  %v588 = vrot.slane %v301, %v587
  %v590 = vunpack.c.l.s4 1966171168
  %v591 = vunpack.c.0.s8 %v590
  %v592 = vlaneseq
  %v593 = vshrl.u32 %v592, 7
  %v594 = vsub.s32 %v591, %v593
  %v595 = vrot.slane %v581, %v594
  %v596 = vcombine.high %v588, %v588
  %v597 = vcombine.high %v595, %v595
  %v599 = vunpack.c.l.s4 1966171168
  %v600 = vunpack.c.0.s8 %v599
  %v601 = vlaneseq
  %v602 = vshrl.u32 %v601, 7
  %v603 = vsub.s32 %v600, %v602
  %v604 = vrot.slane %v588, %v603
  %v606 = vunpack.c.l.s4 1966171168
  %v607 = vunpack.c.0.s8 %v606
  %v608 = vlaneseq
  %v609 = vshrl.u32 %v608, 7
  %v610 = vsub.s32 %v607, %v609
  %v611 = vrot.slane %v595, %v610
  %v613 = vunpack.c.l.s4 1966171168
  %v614 = vunpack.c.0.s8 %v613
  %v615 = vlaneseq
  %v616 = vshrl.u32 %v615, 7
  %v617 = vsub.s32 %v614, %v616
  %v618 = vrot.slane %v596, %v617
  %v620 = vunpack.c.l.s4 1966171168
  %v621 = vunpack.c.0.s8 %v620
  %v622 = vlaneseq
  %v623 = vshrl.u32 %v622, 7
  %v624 = vsub.s32 %v621, %v623
  %v625 = vrot.slane %v597, %v624
  %v626 = vcombine.high %v604, %v604
  %v627 = vcombine.high %v611, %v611
  %v628 = vcombine.high %v618, %v618
  %v629 = vcombine.high %v625, %v625
  %v630 = vcombine.high %v306, %v306
  %v632 = vunpack.c.l.s4 1966171168
  %v633 = vunpack.c.0.s8 %v632
  %v634 = vlaneseq
  %v635 = vshrl.u32 %v634, 7
  %v636 = vsub.s32 %v633, %v635
  %v637 = vrot.slane %v306, %v636
  %v639 = vunpack.c.l.s4 1966171168
  %v640 = vunpack.c.0.s8 %v639
  %v641 = vlaneseq
  %v642 = vshrl.u32 %v641, 7
  %v643 = vsub.s32 %v640, %v642
  %v644 = vrot.slane %v630, %v643
  %v645 = vcombine.high %v637, %v637
  %v646 = vcombine.high %v644, %v644
  %v648 = vunpack.c.l.s4 1966171168
  %v649 = vunpack.c.0.s8 %v648
  %v650 = vlaneseq
  %v651 = vshrl.u32 %v650, 7
  %v652 = vsub.s32 %v649, %v651
  %v653 = vrot.slane %v637, %v652
  %v655 = vunpack.c.l.s4 1966171168
  %v656 = vunpack.c.0.s8 %v655
  %v657 = vlaneseq
  %v658 = vshrl.u32 %v657, 7
  %v659 = vsub.s32 %v656, %v658
  %v660 = vrot.slane %v644, %v659
  %v662 = vunpack.c.l.s4 1966171168
  %v663 = vunpack.c.0.s8 %v662
  %v664 = vlaneseq
  %v665 = vshrl.u32 %v664, 7
  %v666 = vsub.s32 %v663, %v665
  %v667 = vrot.slane %v645, %v666
  %v669 = vunpack.c.l.s4 1966171168
  %v670 = vunpack.c.0.s8 %v669
  %v671 = vlaneseq
  %v672 = vshrl.u32 %v671, 7
  %v673 = vsub.s32 %v670, %v672
  %v674 = vrot.slane %v646, %v673
  %v675 = vcombine.high %v653, %v653
  %v676 = vcombine.high %v660, %v660
  %v677 = vcombine.high %v667, %v667
  %v678 = vcombine.high %v674, %v674
  %v679 = vcombine.high %v311, %v311
  %v681 = vunpack.c.l.s4 1966171168
  %v682 = vunpack.c.0.s8 %v681
  %v683 = vlaneseq
  %v684 = vshrl.u32 %v683, 7
  %v685 = vsub.s32 %v682, %v684
  %v686 = vrot.slane %v311, %v685
  %v688 = vunpack.c.l.s4 1966171168
  %v689 = vunpack.c.0.s8 %v688
  %v690 = vlaneseq
  %v691 = vshrl.u32 %v690, 7
  %v692 = vsub.s32 %v689, %v691
  %v693 = vrot.slane %v679, %v692
  %v694 = vcombine.high %v686, %v686
  %v695 = vcombine.high %v693, %v693
  %v697 = vunpack.c.l.s4 1966171168
  %v698 = vunpack.c.0.s8 %v697
  %v699 = vlaneseq
  %v700 = vshrl.u32 %v699, 7
  %v701 = vsub.s32 %v698, %v700
  %v702 = vrot.slane %v686, %v701
  %v704 = vunpack.c.l.s4 1966171168
  %v705 = vunpack.c.0.s8 %v704
  %v706 = vlaneseq
  %v707 = vshrl.u32 %v706, 7
  %v708 = vsub.s32 %v705, %v707
  %v709 = vrot.slane %v693, %v708
  %v711 = vunpack.c.l.s4 1966171168
  %v712 = vunpack.c.0.s8 %v711
  %v713 = vlaneseq
  %v714 = vshrl.u32 %v713, 7
  %v715 = vsub.s32 %v712, %v714
  %v716 = vrot.slane %v694, %v715
  %v718 = vunpack.c.l.s4 1966171168
  %v719 = vunpack.c.0.s8 %v718
  %v720 = vlaneseq
  %v721 = vshrl.u32 %v720, 7
  %v722 = vsub.s32 %v719, %v721
  %v723 = vrot.slane %v695, %v722
  %v724 = vcombine.high %v702, %v702
  %v725 = vcombine.high %v709, %v709
  %v726 = vcombine.high %v716, %v716
  %v727 = vcombine.high %v723, %v723
  %v728 = vcombine.high %v316, %v316
  %v730 = vunpack.c.l.s4 1966171168
  %v731 = vunpack.c.0.s8 %v730
  %v732 = vlaneseq
  %v733 = vshrl.u32 %v732, 7
  %v734 = vsub.s32 %v731, %v733
  %v735 = vrot.slane %v316, %v734
  %v737 = vunpack.c.l.s4 1966171168
  %v738 = vunpack.c.0.s8 %v737
  %v739 = vlaneseq
  %v740 = vshrl.u32 %v739, 7
  %v741 = vsub.s32 %v738, %v740
  %v742 = vrot.slane %v728, %v741
  %v743 = vcombine.high %v735, %v735
  %v744 = vcombine.high %v742, %v742
  %v746 = vunpack.c.l.s4 1966171168
  %v747 = vunpack.c.0.s8 %v746
  %v748 = vlaneseq
  %v749 = vshrl.u32 %v748, 7
  %v750 = vsub.s32 %v747, %v749
  %v751 = vrot.slane %v735, %v750
  %v753 = vunpack.c.l.s4 1966171168
  %v754 = vunpack.c.0.s8 %v753
  %v755 = vlaneseq
  %v756 = vshrl.u32 %v755, 7
  %v757 = vsub.s32 %v754, %v756
  %v758 = vrot.slane %v742, %v757
  %v760 = vunpack.c.l.s4 1966171168
  %v761 = vunpack.c.0.s8 %v760
  %v762 = vlaneseq
  %v763 = vshrl.u32 %v762, 7
  %v764 = vsub.s32 %v761, %v763
  %v765 = vrot.slane %v743, %v764
  %v767 = vunpack.c.l.s4 1966171168
  %v768 = vunpack.c.0.s8 %v767
  %v769 = vlaneseq
  %v770 = vshrl.u32 %v769, 7
  %v771 = vsub.s32 %v768, %v770
  %v772 = vrot.slane %v744, %v771
  %v773 = vcombine.high %v751, %v751
  %v774 = vcombine.high %v758, %v758
  %v775 = vcombine.high %v765, %v765
  %v776 = vcombine.high %v772, %v772
  %v777 = vcombine.high %v321, %v321
  %v779 = vunpack.c.l.s4 1966171168
  %v780 = vunpack.c.0.s8 %v779
  %v781 = vlaneseq
  %v782 = vshrl.u32 %v781, 7
  %v783 = vsub.s32 %v780, %v782
  %v784 = vrot.slane %v321, %v783
  %v786 = vunpack.c.l.s4 1966171168
  %v787 = vunpack.c.0.s8 %v786
  %v788 = vlaneseq
  %v789 = vshrl.u32 %v788, 7
  %v790 = vsub.s32 %v787, %v789
  %v791 = vrot.slane %v777, %v790
  %v792 = vcombine.high %v784, %v784
  %v793 = vcombine.high %v791, %v791
  %v795 = vunpack.c.l.s4 1966171168
  %v796 = vunpack.c.0.s8 %v795
  %v797 = vlaneseq
  %v798 = vshrl.u32 %v797, 7
  %v799 = vsub.s32 %v796, %v798
  %v800 = vrot.slane %v784, %v799
  %v802 = vunpack.c.l.s4 1966171168
  %v803 = vunpack.c.0.s8 %v802
  %v804 = vlaneseq
  %v805 = vshrl.u32 %v804, 7
  %v806 = vsub.s32 %v803, %v805
  %v807 = vrot.slane %v791, %v806
  %v809 = vunpack.c.l.s4 1966171168
  %v810 = vunpack.c.0.s8 %v809
  %v811 = vlaneseq
  %v812 = vshrl.u32 %v811, 7
  %v813 = vsub.s32 %v810, %v812
  %v814 = vrot.slane %v792, %v813
  %v816 = vunpack.c.l.s4 1966171168
  %v817 = vunpack.c.0.s8 %v816
  %v818 = vlaneseq
  %v819 = vshrl.u32 %v818, 7
  %v820 = vsub.s32 %v817, %v819
  %v821 = vrot.slane %v793, %v820
  %v822 = vcombine.high %v800, %v800
  %v823 = vcombine.high %v807, %v807
  %v824 = vcombine.high %v814, %v814
  %v825 = vcombine.high %v821, %v821
  %v826 = vcombine.high %v326, %v326
  %v828 = vunpack.c.l.s4 1966171168
  %v829 = vunpack.c.0.s8 %v828
  %v830 = vlaneseq
  %v831 = vshrl.u32 %v830, 7
  %v832 = vsub.s32 %v829, %v831
  %v833 = vrot.slane %v326, %v832
  %v835 = vunpack.c.l.s4 1966171168
  %v836 = vunpack.c.0.s8 %v835
  %v837 = vlaneseq
  %v838 = vshrl.u32 %v837, 7
  %v839 = vsub.s32 %v836, %v838
  %v840 = vrot.slane %v826, %v839
  %v841 = vcombine.high %v833, %v833
  %v842 = vcombine.high %v840, %v840
  %v844 = vunpack.c.l.s4 1966171168
  %v845 = vunpack.c.0.s8 %v844
  %v846 = vlaneseq
  %v847 = vshrl.u32 %v846, 7
  %v848 = vsub.s32 %v845, %v847
  %v849 = vrot.slane %v833, %v848
  %v851 = vunpack.c.l.s4 1966171168
  %v852 = vunpack.c.0.s8 %v851
  %v853 = vlaneseq
  %v854 = vshrl.u32 %v853, 7
  %v855 = vsub.s32 %v852, %v854
  %v856 = vrot.slane %v840, %v855
  %v858 = vunpack.c.l.s4 1966171168
  %v859 = vunpack.c.0.s8 %v858
  %v860 = vlaneseq
  %v861 = vshrl.u32 %v860, 7
  %v862 = vsub.s32 %v859, %v861
  %v863 = vrot.slane %v841, %v862
  %v865 = vunpack.c.l.s4 1966171168
  %v866 = vunpack.c.0.s8 %v865
  %v867 = vlaneseq
  %v868 = vshrl.u32 %v867, 7
  %v869 = vsub.s32 %v866, %v868
  %v870 = vrot.slane %v842, %v869
  %v871 = vcombine.high %v849, %v849
  %v872 = vcombine.high %v856, %v856
  %v873 = vcombine.high %v863, %v863
  %v874 = vcombine.high %v870, %v870
  %v875 = vcombine.high %v331, %v331
  %v877 = vunpack.c.l.s4 1966171168
  %v878 = vunpack.c.0.s8 %v877
  %v879 = vlaneseq
  %v880 = vshrl.u32 %v879, 7
  %v881 = vsub.s32 %v878, %v880
  %v882 = vrot.slane %v331, %v881
  %v884 = vunpack.c.l.s4 1966171168
  %v885 = vunpack.c.0.s8 %v884
  %v886 = vlaneseq
  %v887 = vshrl.u32 %v886, 7
  %v888 = vsub.s32 %v885, %v887
  %v889 = vrot.slane %v875, %v888
  %v890 = vcombine.high %v882, %v882
  %v891 = vcombine.high %v889, %v889
  %v893 = vunpack.c.l.s4 1966171168
  %v894 = vunpack.c.0.s8 %v893
  %v895 = vlaneseq
  %v896 = vshrl.u32 %v895, 7
  %v897 = vsub.s32 %v894, %v896
  %v898 = vrot.slane %v882, %v897
  %v900 = vunpack.c.l.s4 1966171168
  %v901 = vunpack.c.0.s8 %v900
  %v902 = vlaneseq
  %v903 = vshrl.u32 %v902, 7
  %v904 = vsub.s32 %v901, %v903
  %v905 = vrot.slane %v889, %v904
  %v907 = vunpack.c.l.s4 1966171168
  %v908 = vunpack.c.0.s8 %v907
  %v909 = vlaneseq
  %v910 = vshrl.u32 %v909, 7
  %v911 = vsub.s32 %v908, %v910
  %v912 = vrot.slane %v890, %v911
  %v914 = vunpack.c.l.s4 1966171168
  %v915 = vunpack.c.0.s8 %v914
  %v916 = vlaneseq
  %v917 = vshrl.u32 %v916, 7
  %v918 = vsub.s32 %v915, %v917
  %v919 = vrot.slane %v891, %v918
  %v920 = vcombine.high %v898, %v898
  %v921 = vcombine.high %v905, %v905
  %v922 = vcombine.high %v912, %v912
  %v923 = vcombine.high %v919, %v919
  %v924 = vcombine.high %v336, %v336
  %v926 = vunpack.c.l.s4 1966171168
  %v927 = vunpack.c.0.s8 %v926
  %v928 = vlaneseq
  %v929 = vshrl.u32 %v928, 7
  %v930 = vsub.s32 %v927, %v929
  %v931 = vrot.slane %v336, %v930
  %v933 = vunpack.c.l.s4 1966171168
  %v934 = vunpack.c.0.s8 %v933
  %v935 = vlaneseq
  %v936 = vshrl.u32 %v935, 7
  %v937 = vsub.s32 %v934, %v936
  %v938 = vrot.slane %v924, %v937
  %v939 = vcombine.high %v931, %v931
  %v940 = vcombine.high %v938, %v938
  %v942 = vunpack.c.l.s4 1966171168
  %v943 = vunpack.c.0.s8 %v942
  %v944 = vlaneseq
  %v945 = vshrl.u32 %v944, 7
  %v946 = vsub.s32 %v943, %v945
  %v947 = vrot.slane %v931, %v946
  %v949 = vunpack.c.l.s4 1966171168
  %v950 = vunpack.c.0.s8 %v949
  %v951 = vlaneseq
  %v952 = vshrl.u32 %v951, 7
  %v953 = vsub.s32 %v950, %v952
  %v954 = vrot.slane %v938, %v953
  %v956 = vunpack.c.l.s4 1966171168
  %v957 = vunpack.c.0.s8 %v956
  %v958 = vlaneseq
  %v959 = vshrl.u32 %v958, 7
  %v960 = vsub.s32 %v957, %v959
  %v961 = vrot.slane %v939, %v960
  %v963 = vunpack.c.l.s4 1966171168
  %v964 = vunpack.c.0.s8 %v963
  %v965 = vlaneseq
  %v966 = vshrl.u32 %v965, 7
  %v967 = vsub.s32 %v964, %v966
  %v968 = vrot.slane %v940, %v967
  %v969 = vcombine.high %v947, %v947
  %v970 = vcombine.high %v954, %v954
  %v971 = vcombine.high %v961, %v961
  %v972 = vcombine.high %v968, %v968
  %v973 = vcombine.high %v341, %v341
  %v975 = vunpack.c.l.s4 1966171168
  %v976 = vunpack.c.0.s8 %v975
  %v977 = vlaneseq
  %v978 = vshrl.u32 %v977, 7
  %v979 = vsub.s32 %v976, %v978
  %v980 = vrot.slane %v341, %v979
  %v982 = vunpack.c.l.s4 1966171168
  %v983 = vunpack.c.0.s8 %v982
  %v984 = vlaneseq
  %v985 = vshrl.u32 %v984, 7
  %v986 = vsub.s32 %v983, %v985
  %v987 = vrot.slane %v973, %v986
  %v988 = vcombine.high %v980, %v980
  %v989 = vcombine.high %v987, %v987
  %v991 = vunpack.c.l.s4 1966171168
  %v992 = vunpack.c.0.s8 %v991
  %v993 = vlaneseq
  %v994 = vshrl.u32 %v993, 7
  %v995 = vsub.s32 %v992, %v994
  %v996 = vrot.slane %v980, %v995
  %v998 = vunpack.c.l.s4 1966171168
  %v999 = vunpack.c.0.s8 %v998
  %v1000 = vlaneseq
  %v1001 = vshrl.u32 %v1000, 7
  %v1002 = vsub.s32 %v999, %v1001
  %v1003 = vrot.slane %v987, %v1002
  %v1005 = vunpack.c.l.s4 1966171168
  %v1006 = vunpack.c.0.s8 %v1005
  %v1007 = vlaneseq
  %v1008 = vshrl.u32 %v1007, 7
  %v1009 = vsub.s32 %v1006, %v1008
  %v1010 = vrot.slane %v988, %v1009
  %v1012 = vunpack.c.l.s4 1966171168
  %v1013 = vunpack.c.0.s8 %v1012
  %v1014 = vlaneseq
  %v1015 = vshrl.u32 %v1014, 7
  %v1016 = vsub.s32 %v1013, %v1015
  %v1017 = vrot.slane %v989, %v1016
  %v1018 = vcombine.high %v996, %v996
  %v1019 = vcombine.high %v1003, %v1003
  %v1020 = vcombine.high %v1010, %v1010
  %v1021 = vcombine.high %v1017, %v1017
  %v1022 = vcombine.high %v346, %v346
  %v1024 = vunpack.c.l.s4 1966171168
  %v1025 = vunpack.c.0.s8 %v1024
  %v1026 = vlaneseq
  %v1027 = vshrl.u32 %v1026, 7
  %v1028 = vsub.s32 %v1025, %v1027
  %v1029 = vrot.slane %v346, %v1028
  %v1031 = vunpack.c.l.s4 1966171168
  %v1032 = vunpack.c.0.s8 %v1031
  %v1033 = vlaneseq
  %v1034 = vshrl.u32 %v1033, 7
  %v1035 = vsub.s32 %v1032, %v1034
  %v1036 = vrot.slane %v1022, %v1035
  %v1037 = vcombine.high %v1029, %v1029
  %v1038 = vcombine.high %v1036, %v1036
  %v1040 = vunpack.c.l.s4 1966171168
  %v1041 = vunpack.c.0.s8 %v1040
  %v1042 = vlaneseq
  %v1043 = vshrl.u32 %v1042, 7
  %v1044 = vsub.s32 %v1041, %v1043
  %v1045 = vrot.slane %v1029, %v1044
  %v1047 = vunpack.c.l.s4 1966171168
  %v1048 = vunpack.c.0.s8 %v1047
  %v1049 = vlaneseq
  %v1050 = vshrl.u32 %v1049, 7
  %v1051 = vsub.s32 %v1048, %v1050
  %v1052 = vrot.slane %v1036, %v1051
  %v1054 = vunpack.c.l.s4 1966171168
  %v1055 = vunpack.c.0.s8 %v1054
  %v1056 = vlaneseq
  %v1057 = vshrl.u32 %v1056, 7
  %v1058 = vsub.s32 %v1055, %v1057
  %v1059 = vrot.slane %v1037, %v1058
  %v1061 = vunpack.c.l.s4 1966171168
  %v1062 = vunpack.c.0.s8 %v1061
  %v1063 = vlaneseq
  %v1064 = vshrl.u32 %v1063, 7
  %v1065 = vsub.s32 %v1062, %v1064
  %v1066 = vrot.slane %v1038, %v1065
  %v1067 = vcombine.high %v1045, %v1045
  %v1068 = vcombine.high %v1052, %v1052
  %v1069 = vcombine.high %v1059, %v1059
  %v1070 = vcombine.high %v1066, %v1066
  %v1071 = vcombine.high %v351, %v351
  %v1073 = vunpack.c.l.s4 1966171168
  %v1074 = vunpack.c.0.s8 %v1073
  %v1075 = vlaneseq
  %v1076 = vshrl.u32 %v1075, 7
  %v1077 = vsub.s32 %v1074, %v1076
  %v1078 = vrot.slane %v351, %v1077
  %v1080 = vunpack.c.l.s4 1966171168
  %v1081 = vunpack.c.0.s8 %v1080
  %v1082 = vlaneseq
  %v1083 = vshrl.u32 %v1082, 7
  %v1084 = vsub.s32 %v1081, %v1083
  %v1085 = vrot.slane %v1071, %v1084
  %v1086 = vcombine.high %v1078, %v1078
  %v1087 = vcombine.high %v1085, %v1085
  %v1089 = vunpack.c.l.s4 1966171168
  %v1090 = vunpack.c.0.s8 %v1089
  %v1091 = vlaneseq
  %v1092 = vshrl.u32 %v1091, 7
  %v1093 = vsub.s32 %v1090, %v1092
  %v1094 = vrot.slane %v1078, %v1093
  %v1096 = vunpack.c.l.s4 1966171168
  %v1097 = vunpack.c.0.s8 %v1096
  %v1098 = vlaneseq
  %v1099 = vshrl.u32 %v1098, 7
  %v1100 = vsub.s32 %v1097, %v1099
  %v1101 = vrot.slane %v1085, %v1100
  %v1103 = vunpack.c.l.s4 1966171168
  %v1104 = vunpack.c.0.s8 %v1103
  %v1105 = vlaneseq
  %v1106 = vshrl.u32 %v1105, 7
  %v1107 = vsub.s32 %v1104, %v1106
  %v1108 = vrot.slane %v1086, %v1107
  %v1110 = vunpack.c.l.s4 1966171168
  %v1111 = vunpack.c.0.s8 %v1110
  %v1112 = vlaneseq
  %v1113 = vshrl.u32 %v1112, 7
  %v1114 = vsub.s32 %v1111, %v1113
  %v1115 = vrot.slane %v1087, %v1114
  %v1116 = vcombine.high %v1094, %v1094
  %v1117 = vcombine.high %v1101, %v1101
  %v1118 = vcombine.high %v1108, %v1108
  %v1119 = vcombine.high %v1115, %v1115
  %v1120 = vcombine.high %v356, %v356
  %v1122 = vunpack.c.l.s4 1966171168
  %v1123 = vunpack.c.0.s8 %v1122
  %v1124 = vlaneseq
  %v1125 = vshrl.u32 %v1124, 7
  %v1126 = vsub.s32 %v1123, %v1125
  %v1127 = vrot.slane %v356, %v1126
  %v1129 = vunpack.c.l.s4 1966171168
  %v1130 = vunpack.c.0.s8 %v1129
  %v1131 = vlaneseq
  %v1132 = vshrl.u32 %v1131, 7
  %v1133 = vsub.s32 %v1130, %v1132
  %v1134 = vrot.slane %v1120, %v1133
  %v1135 = vcombine.high %v1127, %v1127
  %v1136 = vcombine.high %v1134, %v1134
  %v1138 = vunpack.c.l.s4 1966171168
  %v1139 = vunpack.c.0.s8 %v1138
  %v1140 = vlaneseq
  %v1141 = vshrl.u32 %v1140, 7
  %v1142 = vsub.s32 %v1139, %v1141
  %v1143 = vrot.slane %v1127, %v1142
  %v1145 = vunpack.c.l.s4 1966171168
  %v1146 = vunpack.c.0.s8 %v1145
  %v1147 = vlaneseq
  %v1148 = vshrl.u32 %v1147, 7
  %v1149 = vsub.s32 %v1146, %v1148
  %v1150 = vrot.slane %v1134, %v1149
  %v1152 = vunpack.c.l.s4 1966171168
  %v1153 = vunpack.c.0.s8 %v1152
  %v1154 = vlaneseq
  %v1155 = vshrl.u32 %v1154, 7
  %v1156 = vsub.s32 %v1153, %v1155
  %v1157 = vrot.slane %v1135, %v1156
  %v1159 = vunpack.c.l.s4 1966171168
  %v1160 = vunpack.c.0.s8 %v1159
  %v1161 = vlaneseq
  %v1162 = vshrl.u32 %v1161, 7
  %v1163 = vsub.s32 %v1160, %v1162
  %v1164 = vrot.slane %v1136, %v1163
  %v1165 = vcombine.high %v1143, %v1143
  %v1166 = vcombine.high %v1150, %v1150
  %v1167 = vcombine.high %v1157, %v1157
  %v1168 = vcombine.high %v1164, %v1164
  %v1169 = vcombine.high %v361, %v361
  %v1171 = vunpack.c.l.s4 1966171168
  %v1172 = vunpack.c.0.s8 %v1171
  %v1173 = vlaneseq
  %v1174 = vshrl.u32 %v1173, 7
  %v1175 = vsub.s32 %v1172, %v1174
  %v1176 = vrot.slane %v361, %v1175
  %v1178 = vunpack.c.l.s4 1966171168
  %v1179 = vunpack.c.0.s8 %v1178
  %v1180 = vlaneseq
  %v1181 = vshrl.u32 %v1180, 7
  %v1182 = vsub.s32 %v1179, %v1181
  %v1183 = vrot.slane %v1169, %v1182
  %v1184 = vcombine.high %v1176, %v1176
  %v1185 = vcombine.high %v1183, %v1183
  %v1187 = vunpack.c.l.s4 1966171168
  %v1188 = vunpack.c.0.s8 %v1187
  %v1189 = vlaneseq
  %v1190 = vshrl.u32 %v1189, 7
  %v1191 = vsub.s32 %v1188, %v1190
  %v1192 = vrot.slane %v1176, %v1191
  %v1194 = vunpack.c.l.s4 1966171168
  %v1195 = vunpack.c.0.s8 %v1194
  %v1196 = vlaneseq
  %v1197 = vshrl.u32 %v1196, 7
  %v1198 = vsub.s32 %v1195, %v1197
  %v1199 = vrot.slane %v1183, %v1198
  %v1201 = vunpack.c.l.s4 1966171168
  %v1202 = vunpack.c.0.s8 %v1201
  %v1203 = vlaneseq
  %v1204 = vshrl.u32 %v1203, 7
  %v1205 = vsub.s32 %v1202, %v1204
  %v1206 = vrot.slane %v1184, %v1205
  %v1208 = vunpack.c.l.s4 1966171168
  %v1209 = vunpack.c.0.s8 %v1208
  %v1210 = vlaneseq
  %v1211 = vshrl.u32 %v1210, 7
  %v1212 = vsub.s32 %v1209, %v1211
  %v1213 = vrot.slane %v1185, %v1212
  %v1214 = vcombine.high %v1192, %v1192
  %v1215 = vcombine.high %v1199, %v1199
  %v1216 = vcombine.high %v1206, %v1206
  %v1217 = vcombine.high %v1213, %v1213
  %v1218 = vcombine.high %v366, %v366
  %v1220 = vunpack.c.l.s4 1966171168
  %v1221 = vunpack.c.0.s8 %v1220
  %v1222 = vlaneseq
  %v1223 = vshrl.u32 %v1222, 7
  %v1224 = vsub.s32 %v1221, %v1223
  %v1225 = vrot.slane %v366, %v1224
  %v1227 = vunpack.c.l.s4 1966171168
  %v1228 = vunpack.c.0.s8 %v1227
  %v1229 = vlaneseq
  %v1230 = vshrl.u32 %v1229, 7
  %v1231 = vsub.s32 %v1228, %v1230
  %v1232 = vrot.slane %v1218, %v1231
  %v1233 = vcombine.high %v1225, %v1225
  %v1234 = vcombine.high %v1232, %v1232
  %v1236 = vunpack.c.l.s4 1966171168
  %v1237 = vunpack.c.0.s8 %v1236
  %v1238 = vlaneseq
  %v1239 = vshrl.u32 %v1238, 7
  %v1240 = vsub.s32 %v1237, %v1239
  %v1241 = vrot.slane %v1225, %v1240
  %v1243 = vunpack.c.l.s4 1966171168
  %v1244 = vunpack.c.0.s8 %v1243
  %v1245 = vlaneseq
  %v1246 = vshrl.u32 %v1245, 7
  %v1247 = vsub.s32 %v1244, %v1246
  %v1248 = vrot.slane %v1232, %v1247
  %v1250 = vunpack.c.l.s4 1966171168
  %v1251 = vunpack.c.0.s8 %v1250
  %v1252 = vlaneseq
  %v1253 = vshrl.u32 %v1252, 7
  %v1254 = vsub.s32 %v1251, %v1253
  %v1255 = vrot.slane %v1233, %v1254
  %v1257 = vunpack.c.l.s4 1966171168
  %v1258 = vunpack.c.0.s8 %v1257
  %v1259 = vlaneseq
  %v1260 = vshrl.u32 %v1259, 7
  %v1261 = vsub.s32 %v1258, %v1260
  %v1262 = vrot.slane %v1234, %v1261
  %v1263 = vcombine.high %v1241, %v1241
  %v1264 = vcombine.high %v1248, %v1248
  %v1265 = vcombine.high %v1255, %v1255
  %v1266 = vcombine.high %v1262, %v1262
  %v1267 = vcombine.high %v371, %v371
  %v1269 = vunpack.c.l.s4 1966171168
  %v1270 = vunpack.c.0.s8 %v1269
  %v1271 = vlaneseq
  %v1272 = vshrl.u32 %v1271, 7
  %v1273 = vsub.s32 %v1270, %v1272
  %v1274 = vrot.slane %v371, %v1273
  %v1276 = vunpack.c.l.s4 1966171168
  %v1277 = vunpack.c.0.s8 %v1276
  %v1278 = vlaneseq
  %v1279 = vshrl.u32 %v1278, 7
  %v1280 = vsub.s32 %v1277, %v1279
  %v1281 = vrot.slane %v1267, %v1280
  %v1282 = vcombine.high %v1274, %v1274
  %v1283 = vcombine.high %v1281, %v1281
  %v1285 = vunpack.c.l.s4 1966171168
  %v1286 = vunpack.c.0.s8 %v1285
  %v1287 = vlaneseq
  %v1288 = vshrl.u32 %v1287, 7
  %v1289 = vsub.s32 %v1286, %v1288
  %v1290 = vrot.slane %v1274, %v1289
  %v1292 = vunpack.c.l.s4 1966171168
  %v1293 = vunpack.c.0.s8 %v1292
  %v1294 = vlaneseq
  %v1295 = vshrl.u32 %v1294, 7
  %v1296 = vsub.s32 %v1293, %v1295
  %v1297 = vrot.slane %v1281, %v1296
  %v1299 = vunpack.c.l.s4 1966171168
  %v1300 = vunpack.c.0.s8 %v1299
  %v1301 = vlaneseq
  %v1302 = vshrl.u32 %v1301, 7
  %v1303 = vsub.s32 %v1300, %v1302
  %v1304 = vrot.slane %v1282, %v1303
  %v1306 = vunpack.c.l.s4 1966171168
  %v1307 = vunpack.c.0.s8 %v1306
  %v1308 = vlaneseq
  %v1309 = vshrl.u32 %v1308, 7
  %v1310 = vsub.s32 %v1307, %v1309
  %v1311 = vrot.slane %v1283, %v1310
  %v1312 = vcombine.high %v1290, %v1290
  %v1313 = vcombine.high %v1297, %v1297
  %v1314 = vcombine.high %v1304, %v1304
  %v1315 = vcombine.high %v1311, %v1311
  %v1316 = vcombine.high %v376, %v376
  %v1318 = vunpack.c.l.s4 1966171168
  %v1319 = vunpack.c.0.s8 %v1318
  %v1320 = vlaneseq
  %v1321 = vshrl.u32 %v1320, 7
  %v1322 = vsub.s32 %v1319, %v1321
  %v1323 = vrot.slane %v376, %v1322
  %v1325 = vunpack.c.l.s4 1966171168
  %v1326 = vunpack.c.0.s8 %v1325
  %v1327 = vlaneseq
  %v1328 = vshrl.u32 %v1327, 7
  %v1329 = vsub.s32 %v1326, %v1328
  %v1330 = vrot.slane %v1316, %v1329
  %v1331 = vcombine.high %v1323, %v1323
  %v1332 = vcombine.high %v1330, %v1330
  %v1334 = vunpack.c.l.s4 1966171168
  %v1335 = vunpack.c.0.s8 %v1334
  %v1336 = vlaneseq
  %v1337 = vshrl.u32 %v1336, 7
  %v1338 = vsub.s32 %v1335, %v1337
  %v1339 = vrot.slane %v1323, %v1338
  %v1341 = vunpack.c.l.s4 1966171168
  %v1342 = vunpack.c.0.s8 %v1341
  %v1343 = vlaneseq
  %v1344 = vshrl.u32 %v1343, 7
  %v1345 = vsub.s32 %v1342, %v1344
  %v1346 = vrot.slane %v1330, %v1345
  %v1348 = vunpack.c.l.s4 1966171168
  %v1349 = vunpack.c.0.s8 %v1348
  %v1350 = vlaneseq
  %v1351 = vshrl.u32 %v1350, 7
  %v1352 = vsub.s32 %v1349, %v1351
  %v1353 = vrot.slane %v1331, %v1352
  %v1355 = vunpack.c.l.s4 1966171168
  %v1356 = vunpack.c.0.s8 %v1355
  %v1357 = vlaneseq
  %v1358 = vshrl.u32 %v1357, 7
  %v1359 = vsub.s32 %v1356, %v1358
  %v1360 = vrot.slane %v1332, %v1359
  %v1361 = vcombine.high %v1339, %v1339
  %v1362 = vcombine.high %v1346, %v1346
  %v1363 = vcombine.high %v1353, %v1353
  %v1364 = vcombine.high %v1360, %v1360
  %v1365 = vcombine.high %v381, %v381
  %v1367 = vunpack.c.l.s4 1966171168
  %v1368 = vunpack.c.0.s8 %v1367
  %v1369 = vlaneseq
  %v1370 = vshrl.u32 %v1369, 7
  %v1371 = vsub.s32 %v1368, %v1370
  %v1372 = vrot.slane %v381, %v1371
  %v1374 = vunpack.c.l.s4 1966171168
  %v1375 = vunpack.c.0.s8 %v1374
  %v1376 = vlaneseq
  %v1377 = vshrl.u32 %v1376, 7
  %v1378 = vsub.s32 %v1375, %v1377
  %v1379 = vrot.slane %v1365, %v1378
  %v1380 = vcombine.high %v1372, %v1372
  %v1381 = vcombine.high %v1379, %v1379
  %v1383 = vunpack.c.l.s4 1966171168
  %v1384 = vunpack.c.0.s8 %v1383
  %v1385 = vlaneseq
  %v1386 = vshrl.u32 %v1385, 7
  %v1387 = vsub.s32 %v1384, %v1386
  %v1388 = vrot.slane %v1372, %v1387
  %v1390 = vunpack.c.l.s4 1966171168
  %v1391 = vunpack.c.0.s8 %v1390
  %v1392 = vlaneseq
  %v1393 = vshrl.u32 %v1392, 7
  %v1394 = vsub.s32 %v1391, %v1393
  %v1395 = vrot.slane %v1379, %v1394
  %v1397 = vunpack.c.l.s4 1966171168
  %v1398 = vunpack.c.0.s8 %v1397
  %v1399 = vlaneseq
  %v1400 = vshrl.u32 %v1399, 7
  %v1401 = vsub.s32 %v1398, %v1400
  %v1402 = vrot.slane %v1380, %v1401
  %v1404 = vunpack.c.l.s4 1966171168
  %v1405 = vunpack.c.0.s8 %v1404
  %v1406 = vlaneseq
  %v1407 = vshrl.u32 %v1406, 7
  %v1408 = vsub.s32 %v1405, %v1407
  %v1409 = vrot.slane %v1381, %v1408
  %v1410 = vcombine.high %v1388, %v1388
  %v1411 = vcombine.high %v1395, %v1395
  %v1412 = vcombine.high %v1402, %v1402
  %v1413 = vcombine.high %v1409, %v1409
  %v1414 = vcombine.high %v386, %v386
  %v1416 = vunpack.c.l.s4 1966171168
  %v1417 = vunpack.c.0.s8 %v1416
  %v1418 = vlaneseq
  %v1419 = vshrl.u32 %v1418, 7
  %v1420 = vsub.s32 %v1417, %v1419
  %v1421 = vrot.slane %v386, %v1420
  %v1423 = vunpack.c.l.s4 1966171168
  %v1424 = vunpack.c.0.s8 %v1423
  %v1425 = vlaneseq
  %v1426 = vshrl.u32 %v1425, 7
  %v1427 = vsub.s32 %v1424, %v1426
  %v1428 = vrot.slane %v1414, %v1427
  %v1429 = vcombine.high %v1421, %v1421
  %v1430 = vcombine.high %v1428, %v1428
  %v1432 = vunpack.c.l.s4 1966171168
  %v1433 = vunpack.c.0.s8 %v1432
  %v1434 = vlaneseq
  %v1435 = vshrl.u32 %v1434, 7
  %v1436 = vsub.s32 %v1433, %v1435
  %v1437 = vrot.slane %v1421, %v1436
  %v1439 = vunpack.c.l.s4 1966171168
  %v1440 = vunpack.c.0.s8 %v1439
  %v1441 = vlaneseq
  %v1442 = vshrl.u32 %v1441, 7
  %v1443 = vsub.s32 %v1440, %v1442
  %v1444 = vrot.slane %v1428, %v1443
  %v1446 = vunpack.c.l.s4 1966171168
  %v1447 = vunpack.c.0.s8 %v1446
  %v1448 = vlaneseq
  %v1449 = vshrl.u32 %v1448, 7
  %v1450 = vsub.s32 %v1447, %v1449
  %v1451 = vrot.slane %v1429, %v1450
  %v1453 = vunpack.c.l.s4 1966171168
  %v1454 = vunpack.c.0.s8 %v1453
  %v1455 = vlaneseq
  %v1456 = vshrl.u32 %v1455, 7
  %v1457 = vsub.s32 %v1454, %v1456
  %v1458 = vrot.slane %v1430, %v1457
  %v1459 = vcombine.high %v1437, %v1437
  %v1460 = vcombine.high %v1444, %v1444
  %v1461 = vcombine.high %v1451, %v1451
  %v1462 = vcombine.high %v1458, %v1458
  %v1463 = vcombine.high %v391, %v391
  %v1465 = vunpack.c.l.s4 1966171168
  %v1466 = vunpack.c.0.s8 %v1465
  %v1467 = vlaneseq
  %v1468 = vshrl.u32 %v1467, 7
  %v1469 = vsub.s32 %v1466, %v1468
  %v1470 = vrot.slane %v391, %v1469
  %v1472 = vunpack.c.l.s4 1966171168
  %v1473 = vunpack.c.0.s8 %v1472
  %v1474 = vlaneseq
  %v1475 = vshrl.u32 %v1474, 7
  %v1476 = vsub.s32 %v1473, %v1475
  %v1477 = vrot.slane %v1463, %v1476
  %v1478 = vcombine.high %v1470, %v1470
  %v1479 = vcombine.high %v1477, %v1477
  %v1481 = vunpack.c.l.s4 1966171168
  %v1482 = vunpack.c.0.s8 %v1481
  %v1483 = vlaneseq
  %v1484 = vshrl.u32 %v1483, 7
  %v1485 = vsub.s32 %v1482, %v1484
  %v1486 = vrot.slane %v1470, %v1485
  %v1488 = vunpack.c.l.s4 1966171168
  %v1489 = vunpack.c.0.s8 %v1488
  %v1490 = vlaneseq
  %v1491 = vshrl.u32 %v1490, 7
  %v1492 = vsub.s32 %v1489, %v1491
  %v1493 = vrot.slane %v1477, %v1492
  %v1495 = vunpack.c.l.s4 1966171168
  %v1496 = vunpack.c.0.s8 %v1495
  %v1497 = vlaneseq
  %v1498 = vshrl.u32 %v1497, 7
  %v1499 = vsub.s32 %v1496, %v1498
  %v1500 = vrot.slane %v1478, %v1499
  %v1502 = vunpack.c.l.s4 1966171168
  %v1503 = vunpack.c.0.s8 %v1502
  %v1504 = vlaneseq
  %v1505 = vshrl.u32 %v1504, 7
  %v1506 = vsub.s32 %v1503, %v1505
  %v1507 = vrot.slane %v1479, %v1506
  %v1508 = vcombine.high %v1486, %v1486
  %v1509 = vcombine.high %v1493, %v1493
  %v1510 = vcombine.high %v1500, %v1500
  %v1511 = vcombine.high %v1507, %v1507
  %v1512 = vcombine.high %v396, %v396
  %v1514 = vunpack.c.l.s4 1966171168
  %v1515 = vunpack.c.0.s8 %v1514
  %v1516 = vlaneseq
  %v1517 = vshrl.u32 %v1516, 7
  %v1518 = vsub.s32 %v1515, %v1517
  %v1519 = vrot.slane %v396, %v1518
  %v1521 = vunpack.c.l.s4 1966171168
  %v1522 = vunpack.c.0.s8 %v1521
  %v1523 = vlaneseq
  %v1524 = vshrl.u32 %v1523, 7
  %v1525 = vsub.s32 %v1522, %v1524
  %v1526 = vrot.slane %v1512, %v1525
  %v1527 = vcombine.high %v1519, %v1519
  %v1528 = vcombine.high %v1526, %v1526
  %v1530 = vunpack.c.l.s4 1966171168
  %v1531 = vunpack.c.0.s8 %v1530
  %v1532 = vlaneseq
  %v1533 = vshrl.u32 %v1532, 7
  %v1534 = vsub.s32 %v1531, %v1533
  %v1535 = vrot.slane %v1519, %v1534
  %v1537 = vunpack.c.l.s4 1966171168
  %v1538 = vunpack.c.0.s8 %v1537
  %v1539 = vlaneseq
  %v1540 = vshrl.u32 %v1539, 7
  %v1541 = vsub.s32 %v1538, %v1540
  %v1542 = vrot.slane %v1526, %v1541
  %v1544 = vunpack.c.l.s4 1966171168
  %v1545 = vunpack.c.0.s8 %v1544
  %v1546 = vlaneseq
  %v1547 = vshrl.u32 %v1546, 7
  %v1548 = vsub.s32 %v1545, %v1547
  %v1549 = vrot.slane %v1527, %v1548
  %v1551 = vunpack.c.l.s4 1966171168
  %v1552 = vunpack.c.0.s8 %v1551
  %v1553 = vlaneseq
  %v1554 = vshrl.u32 %v1553, 7
  %v1555 = vsub.s32 %v1552, %v1554
  %v1556 = vrot.slane %v1528, %v1555
  %v1557 = vcombine.high %v1535, %v1535
  %v1558 = vcombine.high %v1542, %v1542
  %v1559 = vcombine.high %v1549, %v1549
  %v1560 = vcombine.high %v1556, %v1556
  %v1561 = vcombine.high %v401, %v401
  %v1563 = vunpack.c.l.s4 1966171168
  %v1564 = vunpack.c.0.s8 %v1563
  %v1565 = vlaneseq
  %v1566 = vshrl.u32 %v1565, 7
  %v1567 = vsub.s32 %v1564, %v1566
  %v1568 = vrot.slane %v401, %v1567
  %v1570 = vunpack.c.l.s4 1966171168
  %v1571 = vunpack.c.0.s8 %v1570
  %v1572 = vlaneseq
  %v1573 = vshrl.u32 %v1572, 7
  %v1574 = vsub.s32 %v1571, %v1573
  %v1575 = vrot.slane %v1561, %v1574
  %v1576 = vcombine.high %v1568, %v1568
  %v1577 = vcombine.high %v1575, %v1575
  %v1579 = vunpack.c.l.s4 1966171168
  %v1580 = vunpack.c.0.s8 %v1579
  %v1581 = vlaneseq
  %v1582 = vshrl.u32 %v1581, 7
  %v1583 = vsub.s32 %v1580, %v1582
  %v1584 = vrot.slane %v1568, %v1583
  %v1586 = vunpack.c.l.s4 1966171168
  %v1587 = vunpack.c.0.s8 %v1586
  %v1588 = vlaneseq
  %v1589 = vshrl.u32 %v1588, 7
  %v1590 = vsub.s32 %v1587, %v1589
  %v1591 = vrot.slane %v1575, %v1590
  %v1593 = vunpack.c.l.s4 1966171168
  %v1594 = vunpack.c.0.s8 %v1593
  %v1595 = vlaneseq
  %v1596 = vshrl.u32 %v1595, 7
  %v1597 = vsub.s32 %v1594, %v1596
  %v1598 = vrot.slane %v1576, %v1597
  %v1600 = vunpack.c.l.s4 1966171168
  %v1601 = vunpack.c.0.s8 %v1600
  %v1602 = vlaneseq
  %v1603 = vshrl.u32 %v1602, 7
  %v1604 = vsub.s32 %v1601, %v1603
  %v1605 = vrot.slane %v1577, %v1604
  %v1606 = vcombine.high %v1584, %v1584
  %v1607 = vcombine.high %v1591, %v1591
  %v1608 = vcombine.high %v1598, %v1598
  %v1609 = vcombine.high %v1605, %v1605
  %v1610 = vcombine.high %v406, %v406
  %v1612 = vunpack.c.l.s4 1966171168
  %v1613 = vunpack.c.0.s8 %v1612
  %v1614 = vlaneseq
  %v1615 = vshrl.u32 %v1614, 7
  %v1616 = vsub.s32 %v1613, %v1615
  %v1617 = vrot.slane %v406, %v1616
  %v1619 = vunpack.c.l.s4 1966171168
  %v1620 = vunpack.c.0.s8 %v1619
  %v1621 = vlaneseq
  %v1622 = vshrl.u32 %v1621, 7
  %v1623 = vsub.s32 %v1620, %v1622
  %v1624 = vrot.slane %v1610, %v1623
  %v1625 = vcombine.high %v1617, %v1617
  %v1626 = vcombine.high %v1624, %v1624
  %v1628 = vunpack.c.l.s4 1966171168
  %v1629 = vunpack.c.0.s8 %v1628
  %v1630 = vlaneseq
  %v1631 = vshrl.u32 %v1630, 7
  %v1632 = vsub.s32 %v1629, %v1631
  %v1633 = vrot.slane %v1617, %v1632
  %v1635 = vunpack.c.l.s4 1966171168
  %v1636 = vunpack.c.0.s8 %v1635
  %v1637 = vlaneseq
  %v1638 = vshrl.u32 %v1637, 7
  %v1639 = vsub.s32 %v1636, %v1638
  %v1640 = vrot.slane %v1624, %v1639
  %v1642 = vunpack.c.l.s4 1966171168
  %v1643 = vunpack.c.0.s8 %v1642
  %v1644 = vlaneseq
  %v1645 = vshrl.u32 %v1644, 7
  %v1646 = vsub.s32 %v1643, %v1645
  %v1647 = vrot.slane %v1625, %v1646
  %v1649 = vunpack.c.l.s4 1966171168
  %v1650 = vunpack.c.0.s8 %v1649
  %v1651 = vlaneseq
  %v1652 = vshrl.u32 %v1651, 7
  %v1653 = vsub.s32 %v1650, %v1652
  %v1654 = vrot.slane %v1626, %v1653
  %v1655 = vcombine.high %v1633, %v1633
  %v1656 = vcombine.high %v1640, %v1640
  %v1657 = vcombine.high %v1647, %v1647
  %v1658 = vcombine.high %v1654, %v1654
  %v1659 = vcombine.high %v411, %v411
  %v1661 = vunpack.c.l.s4 1966171168
  %v1662 = vunpack.c.0.s8 %v1661
  %v1663 = vlaneseq
  %v1664 = vshrl.u32 %v1663, 7
  %v1665 = vsub.s32 %v1662, %v1664
  %v1666 = vrot.slane %v411, %v1665
  %v1668 = vunpack.c.l.s4 1966171168
  %v1669 = vunpack.c.0.s8 %v1668
  %v1670 = vlaneseq
  %v1671 = vshrl.u32 %v1670, 7
  %v1672 = vsub.s32 %v1669, %v1671
  %v1673 = vrot.slane %v1659, %v1672
  %v1674 = vcombine.high %v1666, %v1666
  %v1675 = vcombine.high %v1673, %v1673
  %v1677 = vunpack.c.l.s4 1966171168
  %v1678 = vunpack.c.0.s8 %v1677
  %v1679 = vlaneseq
  %v1680 = vshrl.u32 %v1679, 7
  %v1681 = vsub.s32 %v1678, %v1680
  %v1682 = vrot.slane %v1666, %v1681
  %v1684 = vunpack.c.l.s4 1966171168
  %v1685 = vunpack.c.0.s8 %v1684
  %v1686 = vlaneseq
  %v1687 = vshrl.u32 %v1686, 7
  %v1688 = vsub.s32 %v1685, %v1687
  %v1689 = vrot.slane %v1673, %v1688
  %v1691 = vunpack.c.l.s4 1966171168
  %v1692 = vunpack.c.0.s8 %v1691
  %v1693 = vlaneseq
  %v1694 = vshrl.u32 %v1693, 7
  %v1695 = vsub.s32 %v1692, %v1694
  %v1696 = vrot.slane %v1674, %v1695
  %v1698 = vunpack.c.l.s4 1966171168
  %v1699 = vunpack.c.0.s8 %v1698
  %v1700 = vlaneseq
  %v1701 = vshrl.u32 %v1700, 7
  %v1702 = vsub.s32 %v1699, %v1701
  %v1703 = vrot.slane %v1675, %v1702
  %v1704 = vcombine.high %v1682, %v1682
  %v1705 = vcombine.high %v1689, %v1689
  %v1706 = vcombine.high %v1696, %v1696
  %v1707 = vcombine.high %v1703, %v1703
  %v1708 = vcombine.high %v416, %v416
  %v1710 = vunpack.c.l.s4 1966171168
  %v1711 = vunpack.c.0.s8 %v1710
  %v1712 = vlaneseq
  %v1713 = vshrl.u32 %v1712, 7
  %v1714 = vsub.s32 %v1711, %v1713
  %v1715 = vrot.slane %v416, %v1714
  %v1717 = vunpack.c.l.s4 1966171168
  %v1718 = vunpack.c.0.s8 %v1717
  %v1719 = vlaneseq
  %v1720 = vshrl.u32 %v1719, 7
  %v1721 = vsub.s32 %v1718, %v1720
  %v1722 = vrot.slane %v1708, %v1721
  %v1723 = vcombine.high %v1715, %v1715
  %v1724 = vcombine.high %v1722, %v1722
  %v1726 = vunpack.c.l.s4 1966171168
  %v1727 = vunpack.c.0.s8 %v1726
  %v1728 = vlaneseq
  %v1729 = vshrl.u32 %v1728, 7
  %v1730 = vsub.s32 %v1727, %v1729
  %v1731 = vrot.slane %v1715, %v1730
  %v1733 = vunpack.c.l.s4 1966171168
  %v1734 = vunpack.c.0.s8 %v1733
  %v1735 = vlaneseq
  %v1736 = vshrl.u32 %v1735, 7
  %v1737 = vsub.s32 %v1734, %v1736
  %v1738 = vrot.slane %v1722, %v1737
  %v1740 = vunpack.c.l.s4 1966171168
  %v1741 = vunpack.c.0.s8 %v1740
  %v1742 = vlaneseq
  %v1743 = vshrl.u32 %v1742, 7
  %v1744 = vsub.s32 %v1741, %v1743
  %v1745 = vrot.slane %v1723, %v1744
  %v1747 = vunpack.c.l.s4 1966171168
  %v1748 = vunpack.c.0.s8 %v1747
  %v1749 = vlaneseq
  %v1750 = vshrl.u32 %v1749, 7
  %v1751 = vsub.s32 %v1748, %v1750
  %v1752 = vrot.slane %v1724, %v1751
  %v1753 = vcombine.high %v1731, %v1731
  %v1754 = vcombine.high %v1738, %v1738
  %v1755 = vcombine.high %v1745, %v1745
  %v1756 = vcombine.high %v1752, %v1752
  %v1757 = vcombine.high %v421, %v421
  %v1759 = vunpack.c.l.s4 1966171168
  %v1760 = vunpack.c.0.s8 %v1759
  %v1761 = vlaneseq
  %v1762 = vshrl.u32 %v1761, 7
  %v1763 = vsub.s32 %v1760, %v1762
  %v1764 = vrot.slane %v421, %v1763
  %v1766 = vunpack.c.l.s4 1966171168
  %v1767 = vunpack.c.0.s8 %v1766
  %v1768 = vlaneseq
  %v1769 = vshrl.u32 %v1768, 7
  %v1770 = vsub.s32 %v1767, %v1769
  %v1771 = vrot.slane %v1757, %v1770
  %v1772 = vcombine.high %v1764, %v1764
  %v1773 = vcombine.high %v1771, %v1771
  %v1775 = vunpack.c.l.s4 1966171168
  %v1776 = vunpack.c.0.s8 %v1775
  %v1777 = vlaneseq
  %v1778 = vshrl.u32 %v1777, 7
  %v1779 = vsub.s32 %v1776, %v1778
  %v1780 = vrot.slane %v1764, %v1779
  %v1782 = vunpack.c.l.s4 1966171168
  %v1783 = vunpack.c.0.s8 %v1782
  %v1784 = vlaneseq
  %v1785 = vshrl.u32 %v1784, 7
  %v1786 = vsub.s32 %v1783, %v1785
  %v1787 = vrot.slane %v1771, %v1786
  %v1789 = vunpack.c.l.s4 1966171168
  %v1790 = vunpack.c.0.s8 %v1789
  %v1791 = vlaneseq
  %v1792 = vshrl.u32 %v1791, 7
  %v1793 = vsub.s32 %v1790, %v1792
  %v1794 = vrot.slane %v1772, %v1793
  %v1796 = vunpack.c.l.s4 1966171168
  %v1797 = vunpack.c.0.s8 %v1796
  %v1798 = vlaneseq
  %v1799 = vshrl.u32 %v1798, 7
  %v1800 = vsub.s32 %v1797, %v1799
  %v1801 = vrot.slane %v1773, %v1800
  %v1802 = vcombine.high %v1780, %v1780
  %v1803 = vcombine.high %v1787, %v1787
  %v1804 = vcombine.high %v1794, %v1794
  %v1805 = vcombine.high %v1801, %v1801
  %v1806 = vcombine.high %v426, %v426
  %v1808 = vunpack.c.l.s4 1966171168
  %v1809 = vunpack.c.0.s8 %v1808
  %v1810 = vlaneseq
  %v1811 = vshrl.u32 %v1810, 7
  %v1812 = vsub.s32 %v1809, %v1811
  %v1813 = vrot.slane %v426, %v1812
  %v1815 = vunpack.c.l.s4 1966171168
  %v1816 = vunpack.c.0.s8 %v1815
  %v1817 = vlaneseq
  %v1818 = vshrl.u32 %v1817, 7
  %v1819 = vsub.s32 %v1816, %v1818
  %v1820 = vrot.slane %v1806, %v1819
  %v1821 = vcombine.high %v1813, %v1813
  %v1822 = vcombine.high %v1820, %v1820
  %v1824 = vunpack.c.l.s4 1966171168
  %v1825 = vunpack.c.0.s8 %v1824
  %v1826 = vlaneseq
  %v1827 = vshrl.u32 %v1826, 7
  %v1828 = vsub.s32 %v1825, %v1827
  %v1829 = vrot.slane %v1813, %v1828
  %v1831 = vunpack.c.l.s4 1966171168
  %v1832 = vunpack.c.0.s8 %v1831
  %v1833 = vlaneseq
  %v1834 = vshrl.u32 %v1833, 7
  %v1835 = vsub.s32 %v1832, %v1834
  %v1836 = vrot.slane %v1820, %v1835
  %v1838 = vunpack.c.l.s4 1966171168
  %v1839 = vunpack.c.0.s8 %v1838
  %v1840 = vlaneseq
  %v1841 = vshrl.u32 %v1840, 7
  %v1842 = vsub.s32 %v1839, %v1841
  %v1843 = vrot.slane %v1821, %v1842
  %v1845 = vunpack.c.l.s4 1966171168
  %v1846 = vunpack.c.0.s8 %v1845
  %v1847 = vlaneseq
  %v1848 = vshrl.u32 %v1847, 7
  %v1849 = vsub.s32 %v1846, %v1848
  %v1850 = vrot.slane %v1822, %v1849
  %v1851 = vcombine.high %v1829, %v1829
  %v1852 = vcombine.high %v1836, %v1836
  %v1853 = vcombine.high %v1843, %v1843
  %v1854 = vcombine.high %v1850, %v1850
  %v1855 = vcombine.high %v431, %v431
  %v1857 = vunpack.c.l.s4 1966171168
  %v1858 = vunpack.c.0.s8 %v1857
  %v1859 = vlaneseq
  %v1860 = vshrl.u32 %v1859, 7
  %v1861 = vsub.s32 %v1858, %v1860
  %v1862 = vrot.slane %v431, %v1861
  %v1864 = vunpack.c.l.s4 1966171168
  %v1865 = vunpack.c.0.s8 %v1864
  %v1866 = vlaneseq
  %v1867 = vshrl.u32 %v1866, 7
  %v1868 = vsub.s32 %v1865, %v1867
  %v1869 = vrot.slane %v1855, %v1868
  %v1870 = vcombine.high %v1862, %v1862
  %v1871 = vcombine.high %v1869, %v1869
  %v1873 = vunpack.c.l.s4 1966171168
  %v1874 = vunpack.c.0.s8 %v1873
  %v1875 = vlaneseq
  %v1876 = vshrl.u32 %v1875, 7
  %v1877 = vsub.s32 %v1874, %v1876
  %v1878 = vrot.slane %v1862, %v1877
  %v1880 = vunpack.c.l.s4 1966171168
  %v1881 = vunpack.c.0.s8 %v1880
  %v1882 = vlaneseq
  %v1883 = vshrl.u32 %v1882, 7
  %v1884 = vsub.s32 %v1881, %v1883
  %v1885 = vrot.slane %v1869, %v1884
  %v1887 = vunpack.c.l.s4 1966171168
  %v1888 = vunpack.c.0.s8 %v1887
  %v1889 = vlaneseq
  %v1890 = vshrl.u32 %v1889, 7
  %v1891 = vsub.s32 %v1888, %v1890
  %v1892 = vrot.slane %v1870, %v1891
  %v1894 = vunpack.c.l.s4 1966171168
  %v1895 = vunpack.c.0.s8 %v1894
  %v1896 = vlaneseq
  %v1897 = vshrl.u32 %v1896, 7
  %v1898 = vsub.s32 %v1895, %v1897
  %v1899 = vrot.slane %v1871, %v1898
  %v1900 = vcombine.high %v1878, %v1878
  %v1901 = vcombine.high %v1885, %v1885
  %v1902 = vcombine.high %v1892, %v1892
  %v1903 = vcombine.high %v1899, %v1899
  %v1904 = vcombine.high %v436, %v436
  %v1906 = vunpack.c.l.s4 1966171168
  %v1907 = vunpack.c.0.s8 %v1906
  %v1908 = vlaneseq
  %v1909 = vshrl.u32 %v1908, 7
  %v1910 = vsub.s32 %v1907, %v1909
  %v1911 = vrot.slane %v436, %v1910
  %v1913 = vunpack.c.l.s4 1966171168
  %v1914 = vunpack.c.0.s8 %v1913
  %v1915 = vlaneseq
  %v1916 = vshrl.u32 %v1915, 7
  %v1917 = vsub.s32 %v1914, %v1916
  %v1918 = vrot.slane %v1904, %v1917
  %v1919 = vcombine.high %v1911, %v1911
  %v1920 = vcombine.high %v1918, %v1918
  %v1922 = vunpack.c.l.s4 1966171168
  %v1923 = vunpack.c.0.s8 %v1922
  %v1924 = vlaneseq
  %v1925 = vshrl.u32 %v1924, 7
  %v1926 = vsub.s32 %v1923, %v1925
  %v1927 = vrot.slane %v1911, %v1926
  %v1929 = vunpack.c.l.s4 1966171168
  %v1930 = vunpack.c.0.s8 %v1929
  %v1931 = vlaneseq
  %v1932 = vshrl.u32 %v1931, 7
  %v1933 = vsub.s32 %v1930, %v1932
  %v1934 = vrot.slane %v1918, %v1933
  %v1936 = vunpack.c.l.s4 1966171168
  %v1937 = vunpack.c.0.s8 %v1936
  %v1938 = vlaneseq
  %v1939 = vshrl.u32 %v1938, 7
  %v1940 = vsub.s32 %v1937, %v1939
  %v1941 = vrot.slane %v1919, %v1940
  %v1943 = vunpack.c.l.s4 1966171168
  %v1944 = vunpack.c.0.s8 %v1943
  %v1945 = vlaneseq
  %v1946 = vshrl.u32 %v1945, 7
  %v1947 = vsub.s32 %v1944, %v1946
  %v1948 = vrot.slane %v1920, %v1947
  %v1949 = vcombine.high %v1927, %v1927
  %v1950 = vcombine.high %v1934, %v1934
  %v1951 = vcombine.high %v1941, %v1941
  %v1952 = vcombine.high %v1948, %v1948
  %v1953 = vcombine.high %v441, %v441
  %v1955 = vunpack.c.l.s4 1966171168
  %v1956 = vunpack.c.0.s8 %v1955
  %v1957 = vlaneseq
  %v1958 = vshrl.u32 %v1957, 7
  %v1959 = vsub.s32 %v1956, %v1958
  %v1960 = vrot.slane %v441, %v1959
  %v1962 = vunpack.c.l.s4 1966171168
  %v1963 = vunpack.c.0.s8 %v1962
  %v1964 = vlaneseq
  %v1965 = vshrl.u32 %v1964, 7
  %v1966 = vsub.s32 %v1963, %v1965
  %v1967 = vrot.slane %v1953, %v1966
  %v1968 = vcombine.high %v1960, %v1960
  %v1969 = vcombine.high %v1967, %v1967
  %v1971 = vunpack.c.l.s4 1966171168
  %v1972 = vunpack.c.0.s8 %v1971
  %v1973 = vlaneseq
  %v1974 = vshrl.u32 %v1973, 7
  %v1975 = vsub.s32 %v1972, %v1974
  %v1976 = vrot.slane %v1960, %v1975
  %v1978 = vunpack.c.l.s4 1966171168
  %v1979 = vunpack.c.0.s8 %v1978
  %v1980 = vlaneseq
  %v1981 = vshrl.u32 %v1980, 7
  %v1982 = vsub.s32 %v1979, %v1981
  %v1983 = vrot.slane %v1967, %v1982
  %v1985 = vunpack.c.l.s4 1966171168
  %v1986 = vunpack.c.0.s8 %v1985
  %v1987 = vlaneseq
  %v1988 = vshrl.u32 %v1987, 7
  %v1989 = vsub.s32 %v1986, %v1988
  %v1990 = vrot.slane %v1968, %v1989
  %v1992 = vunpack.c.l.s4 1966171168
  %v1993 = vunpack.c.0.s8 %v1992
  %v1994 = vlaneseq
  %v1995 = vshrl.u32 %v1994, 7
  %v1996 = vsub.s32 %v1993, %v1995
  %v1997 = vrot.slane %v1969, %v1996
  %v1998 = vcombine.high %v1976, %v1976
  %v1999 = vcombine.high %v1983, %v1983
  %v2000 = vcombine.high %v1990, %v1990
  %v2001 = vcombine.high %v1997, %v1997
  %v2002 = vcombine.high %v446, %v446
  %v2004 = vunpack.c.l.s4 1966171168
  %v2005 = vunpack.c.0.s8 %v2004
  %v2006 = vlaneseq
  %v2007 = vshrl.u32 %v2006, 7
  %v2008 = vsub.s32 %v2005, %v2007
  %v2009 = vrot.slane %v446, %v2008
  %v2011 = vunpack.c.l.s4 1966171168
  %v2012 = vunpack.c.0.s8 %v2011
  %v2013 = vlaneseq
  %v2014 = vshrl.u32 %v2013, 7
  %v2015 = vsub.s32 %v2012, %v2014
  %v2016 = vrot.slane %v2002, %v2015
  %v2017 = vcombine.high %v2009, %v2009
  %v2018 = vcombine.high %v2016, %v2016
  %v2020 = vunpack.c.l.s4 1966171168
  %v2021 = vunpack.c.0.s8 %v2020
  %v2022 = vlaneseq
  %v2023 = vshrl.u32 %v2022, 7
  %v2024 = vsub.s32 %v2021, %v2023
  %v2025 = vrot.slane %v2009, %v2024
  %v2027 = vunpack.c.l.s4 1966171168
  %v2028 = vunpack.c.0.s8 %v2027
  %v2029 = vlaneseq
  %v2030 = vshrl.u32 %v2029, 7
  %v2031 = vsub.s32 %v2028, %v2030
  %v2032 = vrot.slane %v2016, %v2031
  %v2034 = vunpack.c.l.s4 1966171168
  %v2035 = vunpack.c.0.s8 %v2034
  %v2036 = vlaneseq
  %v2037 = vshrl.u32 %v2036, 7
  %v2038 = vsub.s32 %v2035, %v2037
  %v2039 = vrot.slane %v2017, %v2038
  %v2041 = vunpack.c.l.s4 1966171168
  %v2042 = vunpack.c.0.s8 %v2041
  %v2043 = vlaneseq
  %v2044 = vshrl.u32 %v2043, 7
  %v2045 = vsub.s32 %v2042, %v2044
  %v2046 = vrot.slane %v2018, %v2045
  %v2047 = vcombine.high %v2025, %v2025
  %v2048 = vcombine.high %v2032, %v2032
  %v2049 = vcombine.high %v2039, %v2039
  %v2050 = vcombine.high %v2046, %v2046
  %v2051 = vcombine.high %v451, %v451
  %v2053 = vunpack.c.l.s4 1966171168
  %v2054 = vunpack.c.0.s8 %v2053
  %v2055 = vlaneseq
  %v2056 = vshrl.u32 %v2055, 7
  %v2057 = vsub.s32 %v2054, %v2056
  %v2058 = vrot.slane %v451, %v2057
  %v2060 = vunpack.c.l.s4 1966171168
  %v2061 = vunpack.c.0.s8 %v2060
  %v2062 = vlaneseq
  %v2063 = vshrl.u32 %v2062, 7
  %v2064 = vsub.s32 %v2061, %v2063
  %v2065 = vrot.slane %v2051, %v2064
  %v2066 = vcombine.high %v2058, %v2058
  %v2067 = vcombine.high %v2065, %v2065
  %v2069 = vunpack.c.l.s4 1966171168
  %v2070 = vunpack.c.0.s8 %v2069
  %v2071 = vlaneseq
  %v2072 = vshrl.u32 %v2071, 7
  %v2073 = vsub.s32 %v2070, %v2072
  %v2074 = vrot.slane %v2058, %v2073
  %v2076 = vunpack.c.l.s4 1966171168
  %v2077 = vunpack.c.0.s8 %v2076
  %v2078 = vlaneseq
  %v2079 = vshrl.u32 %v2078, 7
  %v2080 = vsub.s32 %v2077, %v2079
  %v2081 = vrot.slane %v2065, %v2080
  %v2083 = vunpack.c.l.s4 1966171168
  %v2084 = vunpack.c.0.s8 %v2083
  %v2085 = vlaneseq
  %v2086 = vshrl.u32 %v2085, 7
  %v2087 = vsub.s32 %v2084, %v2086
  %v2088 = vrot.slane %v2066, %v2087
  %v2090 = vunpack.c.l.s4 1966171168
  %v2091 = vunpack.c.0.s8 %v2090
  %v2092 = vlaneseq
  %v2093 = vshrl.u32 %v2092, 7
  %v2094 = vsub.s32 %v2091, %v2093
  %v2095 = vrot.slane %v2067, %v2094
  %v2096 = vcombine.high %v2074, %v2074
  %v2097 = vcombine.high %v2081, %v2081
  %v2098 = vcombine.high %v2088, %v2088
  %v2099 = vcombine.high %v2095, %v2095
  %v2100 = vcombine.high %v456, %v456
  %v2102 = vunpack.c.l.s4 1966171168
  %v2103 = vunpack.c.0.s8 %v2102
  %v2104 = vlaneseq
  %v2105 = vshrl.u32 %v2104, 7
  %v2106 = vsub.s32 %v2103, %v2105
  %v2107 = vrot.slane %v456, %v2106
  %v2109 = vunpack.c.l.s4 1966171168
  %v2110 = vunpack.c.0.s8 %v2109
  %v2111 = vlaneseq
  %v2112 = vshrl.u32 %v2111, 7
  %v2113 = vsub.s32 %v2110, %v2112
  %v2114 = vrot.slane %v2100, %v2113
  %v2115 = vcombine.high %v2107, %v2107
  %v2116 = vcombine.high %v2114, %v2114
  %v2118 = vunpack.c.l.s4 1966171168
  %v2119 = vunpack.c.0.s8 %v2118
  %v2120 = vlaneseq
  %v2121 = vshrl.u32 %v2120, 7
  %v2122 = vsub.s32 %v2119, %v2121
  %v2123 = vrot.slane %v2107, %v2122
  %v2125 = vunpack.c.l.s4 1966171168
  %v2126 = vunpack.c.0.s8 %v2125
  %v2127 = vlaneseq
  %v2128 = vshrl.u32 %v2127, 7
  %v2129 = vsub.s32 %v2126, %v2128
  %v2130 = vrot.slane %v2114, %v2129
  %v2132 = vunpack.c.l.s4 1966171168
  %v2133 = vunpack.c.0.s8 %v2132
  %v2134 = vlaneseq
  %v2135 = vshrl.u32 %v2134, 7
  %v2136 = vsub.s32 %v2133, %v2135
  %v2137 = vrot.slane %v2115, %v2136
  %v2139 = vunpack.c.l.s4 1966171168
  %v2140 = vunpack.c.0.s8 %v2139
  %v2141 = vlaneseq
  %v2142 = vshrl.u32 %v2141, 7
  %v2143 = vsub.s32 %v2140, %v2142
  %v2144 = vrot.slane %v2116, %v2143
  %v2145 = vcombine.high %v2123, %v2123
  %v2146 = vcombine.high %v2130, %v2130
  %v2147 = vcombine.high %v2137, %v2137
  %v2148 = vcombine.high %v2144, %v2144
  %v2149 = vcombine.high %v461, %v461
  %v2151 = vunpack.c.l.s4 1966171168
  %v2152 = vunpack.c.0.s8 %v2151
  %v2153 = vlaneseq
  %v2154 = vshrl.u32 %v2153, 7
  %v2155 = vsub.s32 %v2152, %v2154
  %v2156 = vrot.slane %v461, %v2155
  %v2158 = vunpack.c.l.s4 1966171168
  %v2159 = vunpack.c.0.s8 %v2158
  %v2160 = vlaneseq
  %v2161 = vshrl.u32 %v2160, 7
  %v2162 = vsub.s32 %v2159, %v2161
  %v2163 = vrot.slane %v2149, %v2162
  %v2164 = vcombine.high %v2156, %v2156
  %v2165 = vcombine.high %v2163, %v2163
  %v2167 = vunpack.c.l.s4 1966171168
  %v2168 = vunpack.c.0.s8 %v2167
  %v2169 = vlaneseq
  %v2170 = vshrl.u32 %v2169, 7
  %v2171 = vsub.s32 %v2168, %v2170
  %v2172 = vrot.slane %v2156, %v2171
  %v2174 = vunpack.c.l.s4 1966171168
  %v2175 = vunpack.c.0.s8 %v2174
  %v2176 = vlaneseq
  %v2177 = vshrl.u32 %v2176, 7
  %v2178 = vsub.s32 %v2175, %v2177
  %v2179 = vrot.slane %v2163, %v2178
  %v2181 = vunpack.c.l.s4 1966171168
  %v2182 = vunpack.c.0.s8 %v2181
  %v2183 = vlaneseq
  %v2184 = vshrl.u32 %v2183, 7
  %v2185 = vsub.s32 %v2182, %v2184
  %v2186 = vrot.slane %v2164, %v2185
  %v2188 = vunpack.c.l.s4 1966171168
  %v2189 = vunpack.c.0.s8 %v2188
  %v2190 = vlaneseq
  %v2191 = vshrl.u32 %v2190, 7
  %v2192 = vsub.s32 %v2189, %v2191
  %v2193 = vrot.slane %v2165, %v2192
  %v2194 = vcombine.high %v2172, %v2172
  %v2195 = vcombine.high %v2179, %v2179
  %v2196 = vcombine.high %v2186, %v2186
  %v2197 = vcombine.high %v2193, %v2193
  %v2198 = vcombine.high %v466, %v466
  %v2200 = vunpack.c.l.s4 1966171168
  %v2201 = vunpack.c.0.s8 %v2200
  %v2202 = vlaneseq
  %v2203 = vshrl.u32 %v2202, 7
  %v2204 = vsub.s32 %v2201, %v2203
  %v2205 = vrot.slane %v466, %v2204
  %v2207 = vunpack.c.l.s4 1966171168
  %v2208 = vunpack.c.0.s8 %v2207
  %v2209 = vlaneseq
  %v2210 = vshrl.u32 %v2209, 7
  %v2211 = vsub.s32 %v2208, %v2210
  %v2212 = vrot.slane %v2198, %v2211
  %v2213 = vcombine.high %v2205, %v2205
  %v2214 = vcombine.high %v2212, %v2212
  %v2216 = vunpack.c.l.s4 1966171168
  %v2217 = vunpack.c.0.s8 %v2216
  %v2218 = vlaneseq
  %v2219 = vshrl.u32 %v2218, 7
  %v2220 = vsub.s32 %v2217, %v2219
  %v2221 = vrot.slane %v2205, %v2220
  %v2223 = vunpack.c.l.s4 1966171168
  %v2224 = vunpack.c.0.s8 %v2223
  %v2225 = vlaneseq
  %v2226 = vshrl.u32 %v2225, 7
  %v2227 = vsub.s32 %v2224, %v2226
  %v2228 = vrot.slane %v2212, %v2227
  %v2230 = vunpack.c.l.s4 1966171168
  %v2231 = vunpack.c.0.s8 %v2230
  %v2232 = vlaneseq
  %v2233 = vshrl.u32 %v2232, 7
  %v2234 = vsub.s32 %v2231, %v2233
  %v2235 = vrot.slane %v2213, %v2234
  %v2237 = vunpack.c.l.s4 1966171168
  %v2238 = vunpack.c.0.s8 %v2237
  %v2239 = vlaneseq
  %v2240 = vshrl.u32 %v2239, 7
  %v2241 = vsub.s32 %v2238, %v2240
  %v2242 = vrot.slane %v2214, %v2241
  %v2243 = vcombine.high %v2221, %v2221
  %v2244 = vcombine.high %v2228, %v2228
  %v2245 = vcombine.high %v2235, %v2235
  %v2246 = vcombine.high %v2242, %v2242
  %v2247 = vcombine.high %v471, %v471
  %v2249 = vunpack.c.l.s4 1966171168
  %v2250 = vunpack.c.0.s8 %v2249
  %v2251 = vlaneseq
  %v2252 = vshrl.u32 %v2251, 7
  %v2253 = vsub.s32 %v2250, %v2252
  %v2254 = vrot.slane %v471, %v2253
  %v2256 = vunpack.c.l.s4 1966171168
  %v2257 = vunpack.c.0.s8 %v2256
  %v2258 = vlaneseq
  %v2259 = vshrl.u32 %v2258, 7
  %v2260 = vsub.s32 %v2257, %v2259
  %v2261 = vrot.slane %v2247, %v2260
  %v2262 = vcombine.high %v2254, %v2254
  %v2263 = vcombine.high %v2261, %v2261
  %v2265 = vunpack.c.l.s4 1966171168
  %v2266 = vunpack.c.0.s8 %v2265
  %v2267 = vlaneseq
  %v2268 = vshrl.u32 %v2267, 7
  %v2269 = vsub.s32 %v2266, %v2268
  %v2270 = vrot.slane %v2254, %v2269
  %v2272 = vunpack.c.l.s4 1966171168
  %v2273 = vunpack.c.0.s8 %v2272
  %v2274 = vlaneseq
  %v2275 = vshrl.u32 %v2274, 7
  %v2276 = vsub.s32 %v2273, %v2275
  %v2277 = vrot.slane %v2261, %v2276
  %v2279 = vunpack.c.l.s4 1966171168
  %v2280 = vunpack.c.0.s8 %v2279
  %v2281 = vlaneseq
  %v2282 = vshrl.u32 %v2281, 7
  %v2283 = vsub.s32 %v2280, %v2282
  %v2284 = vrot.slane %v2262, %v2283
  %v2286 = vunpack.c.l.s4 1966171168
  %v2287 = vunpack.c.0.s8 %v2286
  %v2288 = vlaneseq
  %v2289 = vshrl.u32 %v2288, 7
  %v2290 = vsub.s32 %v2287, %v2289
  %v2291 = vrot.slane %v2263, %v2290
  %v2292 = vcombine.high %v2270, %v2270
  %v2293 = vcombine.high %v2277, %v2277
  %v2294 = vcombine.high %v2284, %v2284
  %v2295 = vcombine.high %v2291, %v2291
  %v2296 = vcombine.high %v476, %v476
  %v2298 = vunpack.c.l.s4 1966171168
  %v2299 = vunpack.c.0.s8 %v2298
  %v2300 = vlaneseq
  %v2301 = vshrl.u32 %v2300, 7
  %v2302 = vsub.s32 %v2299, %v2301
  %v2303 = vrot.slane %v476, %v2302
  %v2305 = vunpack.c.l.s4 1966171168
  %v2306 = vunpack.c.0.s8 %v2305
  %v2307 = vlaneseq
  %v2308 = vshrl.u32 %v2307, 7
  %v2309 = vsub.s32 %v2306, %v2308
  %v2310 = vrot.slane %v2296, %v2309
  %v2311 = vcombine.high %v2303, %v2303
  %v2312 = vcombine.high %v2310, %v2310
  %v2314 = vunpack.c.l.s4 1966171168
  %v2315 = vunpack.c.0.s8 %v2314
  %v2316 = vlaneseq
  %v2317 = vshrl.u32 %v2316, 7
  %v2318 = vsub.s32 %v2315, %v2317
  %v2319 = vrot.slane %v2303, %v2318
  %v2321 = vunpack.c.l.s4 1966171168
  %v2322 = vunpack.c.0.s8 %v2321
  %v2323 = vlaneseq
  %v2324 = vshrl.u32 %v2323, 7
  %v2325 = vsub.s32 %v2322, %v2324
  %v2326 = vrot.slane %v2310, %v2325
  %v2328 = vunpack.c.l.s4 1966171168
  %v2329 = vunpack.c.0.s8 %v2328
  %v2330 = vlaneseq
  %v2331 = vshrl.u32 %v2330, 7
  %v2332 = vsub.s32 %v2329, %v2331
  %v2333 = vrot.slane %v2311, %v2332
  %v2335 = vunpack.c.l.s4 1966171168
  %v2336 = vunpack.c.0.s8 %v2335
  %v2337 = vlaneseq
  %v2338 = vshrl.u32 %v2337, 7
  %v2339 = vsub.s32 %v2336, %v2338
  %v2340 = vrot.slane %v2312, %v2339
  %v2341 = vcombine.high %v2319, %v2319
  %v2342 = vcombine.high %v2326, %v2326
  %v2343 = vcombine.high %v2333, %v2333
  %v2344 = vcombine.high %v2340, %v2340
  %v2345 = vcombine.high %v481, %v481
  %v2347 = vunpack.c.l.s4 1966171168
  %v2348 = vunpack.c.0.s8 %v2347
  %v2349 = vlaneseq
  %v2350 = vshrl.u32 %v2349, 7
  %v2351 = vsub.s32 %v2348, %v2350
  %v2352 = vrot.slane %v481, %v2351
  %v2354 = vunpack.c.l.s4 1966171168
  %v2355 = vunpack.c.0.s8 %v2354
  %v2356 = vlaneseq
  %v2357 = vshrl.u32 %v2356, 7
  %v2358 = vsub.s32 %v2355, %v2357
  %v2359 = vrot.slane %v2345, %v2358
  %v2360 = vcombine.high %v2352, %v2352
  %v2361 = vcombine.high %v2359, %v2359
  %v2363 = vunpack.c.l.s4 1966171168
  %v2364 = vunpack.c.0.s8 %v2363
  %v2365 = vlaneseq
  %v2366 = vshrl.u32 %v2365, 7
  %v2367 = vsub.s32 %v2364, %v2366
  %v2368 = vrot.slane %v2352, %v2367
  %v2370 = vunpack.c.l.s4 1966171168
  %v2371 = vunpack.c.0.s8 %v2370
  %v2372 = vlaneseq
  %v2373 = vshrl.u32 %v2372, 7
  %v2374 = vsub.s32 %v2371, %v2373
  %v2375 = vrot.slane %v2359, %v2374
  %v2377 = vunpack.c.l.s4 1966171168
  %v2378 = vunpack.c.0.s8 %v2377
  %v2379 = vlaneseq
  %v2380 = vshrl.u32 %v2379, 7
  %v2381 = vsub.s32 %v2378, %v2380
  %v2382 = vrot.slane %v2360, %v2381
  %v2384 = vunpack.c.l.s4 1966171168
  %v2385 = vunpack.c.0.s8 %v2384
  %v2386 = vlaneseq
  %v2387 = vshrl.u32 %v2386, 7
  %v2388 = vsub.s32 %v2385, %v2387
  %v2389 = vrot.slane %v2361, %v2388
  %v2390 = vcombine.high %v2368, %v2368
  %v2391 = vcombine.high %v2375, %v2375
  %v2392 = vcombine.high %v2382, %v2382
  %v2393 = vcombine.high %v2389, %v2389
  %v2394 = vcombine.high %v486, %v486
  %v2396 = vunpack.c.l.s4 1966171168
  %v2397 = vunpack.c.0.s8 %v2396
  %v2398 = vlaneseq
  %v2399 = vshrl.u32 %v2398, 7
  %v2400 = vsub.s32 %v2397, %v2399
  %v2401 = vrot.slane %v486, %v2400
  %v2403 = vunpack.c.l.s4 1966171168
  %v2404 = vunpack.c.0.s8 %v2403
  %v2405 = vlaneseq
  %v2406 = vshrl.u32 %v2405, 7
  %v2407 = vsub.s32 %v2404, %v2406
  %v2408 = vrot.slane %v2394, %v2407
  %v2409 = vcombine.high %v2401, %v2401
  %v2410 = vcombine.high %v2408, %v2408
  %v2412 = vunpack.c.l.s4 1966171168
  %v2413 = vunpack.c.0.s8 %v2412
  %v2414 = vlaneseq
  %v2415 = vshrl.u32 %v2414, 7
  %v2416 = vsub.s32 %v2413, %v2415
  %v2417 = vrot.slane %v2401, %v2416
  %v2419 = vunpack.c.l.s4 1966171168
  %v2420 = vunpack.c.0.s8 %v2419
  %v2421 = vlaneseq
  %v2422 = vshrl.u32 %v2421, 7
  %v2423 = vsub.s32 %v2420, %v2422
  %v2424 = vrot.slane %v2408, %v2423
  %v2426 = vunpack.c.l.s4 1966171168
  %v2427 = vunpack.c.0.s8 %v2426
  %v2428 = vlaneseq
  %v2429 = vshrl.u32 %v2428, 7
  %v2430 = vsub.s32 %v2427, %v2429
  %v2431 = vrot.slane %v2409, %v2430
  %v2433 = vunpack.c.l.s4 1966171168
  %v2434 = vunpack.c.0.s8 %v2433
  %v2435 = vlaneseq
  %v2436 = vshrl.u32 %v2435, 7
  %v2437 = vsub.s32 %v2434, %v2436
  %v2438 = vrot.slane %v2410, %v2437
  %v2439 = vcombine.high %v2417, %v2417
  %v2440 = vcombine.high %v2424, %v2424
  %v2441 = vcombine.high %v2431, %v2431
  %v2442 = vcombine.high %v2438, %v2438
  %v2443 = vcombine.high %v491, %v491
  %v2445 = vunpack.c.l.s4 1966171168
  %v2446 = vunpack.c.0.s8 %v2445
  %v2447 = vlaneseq
  %v2448 = vshrl.u32 %v2447, 7
  %v2449 = vsub.s32 %v2446, %v2448
  %v2450 = vrot.slane %v491, %v2449
  %v2452 = vunpack.c.l.s4 1966171168
  %v2453 = vunpack.c.0.s8 %v2452
  %v2454 = vlaneseq
  %v2455 = vshrl.u32 %v2454, 7
  %v2456 = vsub.s32 %v2453, %v2455
  %v2457 = vrot.slane %v2443, %v2456
  %v2458 = vcombine.high %v2450, %v2450
  %v2459 = vcombine.high %v2457, %v2457
  %v2461 = vunpack.c.l.s4 1966171168
  %v2462 = vunpack.c.0.s8 %v2461
  %v2463 = vlaneseq
  %v2464 = vshrl.u32 %v2463, 7
  %v2465 = vsub.s32 %v2462, %v2464
  %v2466 = vrot.slane %v2450, %v2465
  %v2468 = vunpack.c.l.s4 1966171168
  %v2469 = vunpack.c.0.s8 %v2468
  %v2470 = vlaneseq
  %v2471 = vshrl.u32 %v2470, 7
  %v2472 = vsub.s32 %v2469, %v2471
  %v2473 = vrot.slane %v2457, %v2472
  %v2475 = vunpack.c.l.s4 1966171168
  %v2476 = vunpack.c.0.s8 %v2475
  %v2477 = vlaneseq
  %v2478 = vshrl.u32 %v2477, 7
  %v2479 = vsub.s32 %v2476, %v2478
  %v2480 = vrot.slane %v2458, %v2479
  %v2482 = vunpack.c.l.s4 1966171168
  %v2483 = vunpack.c.0.s8 %v2482
  %v2484 = vlaneseq
  %v2485 = vshrl.u32 %v2484, 7
  %v2486 = vsub.s32 %v2483, %v2485
  %v2487 = vrot.slane %v2459, %v2486
  %v2488 = vcombine.high %v2466, %v2466
  %v2489 = vcombine.high %v2473, %v2473
  %v2490 = vcombine.high %v2480, %v2480
  %v2491 = vcombine.high %v2487, %v2487
  %v2492 = vcombine.high %v496, %v496
  %v2494 = vunpack.c.l.s4 1966171168
  %v2495 = vunpack.c.0.s8 %v2494
  %v2496 = vlaneseq
  %v2497 = vshrl.u32 %v2496, 7
  %v2498 = vsub.s32 %v2495, %v2497
  %v2499 = vrot.slane %v496, %v2498
  %v2501 = vunpack.c.l.s4 1966171168
  %v2502 = vunpack.c.0.s8 %v2501
  %v2503 = vlaneseq
  %v2504 = vshrl.u32 %v2503, 7
  %v2505 = vsub.s32 %v2502, %v2504
  %v2506 = vrot.slane %v2492, %v2505
  %v2507 = vcombine.high %v2499, %v2499
  %v2508 = vcombine.high %v2506, %v2506
  %v2510 = vunpack.c.l.s4 1966171168
  %v2511 = vunpack.c.0.s8 %v2510
  %v2512 = vlaneseq
  %v2513 = vshrl.u32 %v2512, 7
  %v2514 = vsub.s32 %v2511, %v2513
  %v2515 = vrot.slane %v2499, %v2514
  %v2517 = vunpack.c.l.s4 1966171168
  %v2518 = vunpack.c.0.s8 %v2517
  %v2519 = vlaneseq
  %v2520 = vshrl.u32 %v2519, 7
  %v2521 = vsub.s32 %v2518, %v2520
  %v2522 = vrot.slane %v2506, %v2521
  %v2524 = vunpack.c.l.s4 1966171168
  %v2525 = vunpack.c.0.s8 %v2524
  %v2526 = vlaneseq
  %v2527 = vshrl.u32 %v2526, 7
  %v2528 = vsub.s32 %v2525, %v2527
  %v2529 = vrot.slane %v2507, %v2528
  %v2531 = vunpack.c.l.s4 1966171168
  %v2532 = vunpack.c.0.s8 %v2531
  %v2533 = vlaneseq
  %v2534 = vshrl.u32 %v2533, 7
  %v2535 = vsub.s32 %v2532, %v2534
  %v2536 = vrot.slane %v2508, %v2535
  %v2537 = vcombine.high %v2515, %v2515
  %v2538 = vcombine.high %v2522, %v2522
  %v2539 = vcombine.high %v2529, %v2529
  %v2540 = vcombine.high %v2536, %v2536
  %v2541 = vcombine.high %v501, %v501
  %v2543 = vunpack.c.l.s4 1966171168
  %v2544 = vunpack.c.0.s8 %v2543
  %v2545 = vlaneseq
  %v2546 = vshrl.u32 %v2545, 7
  %v2547 = vsub.s32 %v2544, %v2546
  %v2548 = vrot.slane %v501, %v2547
  %v2550 = vunpack.c.l.s4 1966171168
  %v2551 = vunpack.c.0.s8 %v2550
  %v2552 = vlaneseq
  %v2553 = vshrl.u32 %v2552, 7
  %v2554 = vsub.s32 %v2551, %v2553
  %v2555 = vrot.slane %v2541, %v2554
  %v2556 = vcombine.high %v2548, %v2548
  %v2557 = vcombine.high %v2555, %v2555
  %v2559 = vunpack.c.l.s4 1966171168
  %v2560 = vunpack.c.0.s8 %v2559
  %v2561 = vlaneseq
  %v2562 = vshrl.u32 %v2561, 7
  %v2563 = vsub.s32 %v2560, %v2562
  %v2564 = vrot.slane %v2548, %v2563
  %v2566 = vunpack.c.l.s4 1966171168
  %v2567 = vunpack.c.0.s8 %v2566
  %v2568 = vlaneseq
  %v2569 = vshrl.u32 %v2568, 7
  %v2570 = vsub.s32 %v2567, %v2569
  %v2571 = vrot.slane %v2555, %v2570
  %v2573 = vunpack.c.l.s4 1966171168
  %v2574 = vunpack.c.0.s8 %v2573
  %v2575 = vlaneseq
  %v2576 = vshrl.u32 %v2575, 7
  %v2577 = vsub.s32 %v2574, %v2576
  %v2578 = vrot.slane %v2556, %v2577
  %v2580 = vunpack.c.l.s4 1966171168
  %v2581 = vunpack.c.0.s8 %v2580
  %v2582 = vlaneseq
  %v2583 = vshrl.u32 %v2582, 7
  %v2584 = vsub.s32 %v2581, %v2583
  %v2585 = vrot.slane %v2557, %v2584
  %v2586 = vcombine.high %v2564, %v2564
  %v2587 = vcombine.high %v2571, %v2571
  %v2588 = vcombine.high %v2578, %v2578
  %v2589 = vcombine.high %v2585, %v2585
  %v2590 = vcombine.high %v506, %v506
  %v2592 = vunpack.c.l.s4 1966171168
  %v2593 = vunpack.c.0.s8 %v2592
  %v2594 = vlaneseq
  %v2595 = vshrl.u32 %v2594, 7
  %v2596 = vsub.s32 %v2593, %v2595
  %v2597 = vrot.slane %v506, %v2596
  %v2599 = vunpack.c.l.s4 1966171168
  %v2600 = vunpack.c.0.s8 %v2599
  %v2601 = vlaneseq
  %v2602 = vshrl.u32 %v2601, 7
  %v2603 = vsub.s32 %v2600, %v2602
  %v2604 = vrot.slane %v2590, %v2603
  %v2605 = vcombine.high %v2597, %v2597
  %v2606 = vcombine.high %v2604, %v2604
  %v2608 = vunpack.c.l.s4 1966171168
  %v2609 = vunpack.c.0.s8 %v2608
  %v2610 = vlaneseq
  %v2611 = vshrl.u32 %v2610, 7
  %v2612 = vsub.s32 %v2609, %v2611
  %v2613 = vrot.slane %v2597, %v2612
  %v2615 = vunpack.c.l.s4 1966171168
  %v2616 = vunpack.c.0.s8 %v2615
  %v2617 = vlaneseq
  %v2618 = vshrl.u32 %v2617, 7
  %v2619 = vsub.s32 %v2616, %v2618
  %v2620 = vrot.slane %v2604, %v2619
  %v2622 = vunpack.c.l.s4 1966171168
  %v2623 = vunpack.c.0.s8 %v2622
  %v2624 = vlaneseq
  %v2625 = vshrl.u32 %v2624, 7
  %v2626 = vsub.s32 %v2623, %v2625
  %v2627 = vrot.slane %v2605, %v2626
  %v2629 = vunpack.c.l.s4 1966171168
  %v2630 = vunpack.c.0.s8 %v2629
  %v2631 = vlaneseq
  %v2632 = vshrl.u32 %v2631, 7
  %v2633 = vsub.s32 %v2630, %v2632
  %v2634 = vrot.slane %v2606, %v2633
  %v2635 = vcombine.high %v2613, %v2613
  %v2636 = vcombine.high %v2620, %v2620
  %v2637 = vcombine.high %v2627, %v2627
  %v2638 = vcombine.high %v2634, %v2634
  %v2639 = vcombine.high %v511, %v511
  %v2641 = vunpack.c.l.s4 1966171168
  %v2642 = vunpack.c.0.s8 %v2641
  %v2643 = vlaneseq
  %v2644 = vshrl.u32 %v2643, 7
  %v2645 = vsub.s32 %v2642, %v2644
  %v2646 = vrot.slane %v511, %v2645
  %v2648 = vunpack.c.l.s4 1966171168
  %v2649 = vunpack.c.0.s8 %v2648
  %v2650 = vlaneseq
  %v2651 = vshrl.u32 %v2650, 7
  %v2652 = vsub.s32 %v2649, %v2651
  %v2653 = vrot.slane %v2639, %v2652
  %v2654 = vcombine.high %v2646, %v2646
  %v2655 = vcombine.high %v2653, %v2653
  %v2657 = vunpack.c.l.s4 1966171168
  %v2658 = vunpack.c.0.s8 %v2657
  %v2659 = vlaneseq
  %v2660 = vshrl.u32 %v2659, 7
  %v2661 = vsub.s32 %v2658, %v2660
  %v2662 = vrot.slane %v2646, %v2661
  %v2664 = vunpack.c.l.s4 1966171168
  %v2665 = vunpack.c.0.s8 %v2664
  %v2666 = vlaneseq
  %v2667 = vshrl.u32 %v2666, 7
  %v2668 = vsub.s32 %v2665, %v2667
  %v2669 = vrot.slane %v2653, %v2668
  %v2671 = vunpack.c.l.s4 1966171168
  %v2672 = vunpack.c.0.s8 %v2671
  %v2673 = vlaneseq
  %v2674 = vshrl.u32 %v2673, 7
  %v2675 = vsub.s32 %v2672, %v2674
  %v2676 = vrot.slane %v2654, %v2675
  %v2678 = vunpack.c.l.s4 1966171168
  %v2679 = vunpack.c.0.s8 %v2678
  %v2680 = vlaneseq
  %v2681 = vshrl.u32 %v2680, 7
  %v2682 = vsub.s32 %v2679, %v2681
  %v2683 = vrot.slane %v2655, %v2682
  %v2684 = vcombine.high %v2662, %v2662
  %v2685 = vcombine.high %v2669, %v2669
  %v2686 = vcombine.high %v2676, %v2676
  %v2687 = vcombine.high %v2683, %v2683
  %v2688 = vcombine.high %v516, %v516
  %v2690 = vunpack.c.l.s4 1966171168
  %v2691 = vunpack.c.0.s8 %v2690
  %v2692 = vlaneseq
  %v2693 = vshrl.u32 %v2692, 7
  %v2694 = vsub.s32 %v2691, %v2693
  %v2695 = vrot.slane %v516, %v2694
  %v2697 = vunpack.c.l.s4 1966171168
  %v2698 = vunpack.c.0.s8 %v2697
  %v2699 = vlaneseq
  %v2700 = vshrl.u32 %v2699, 7
  %v2701 = vsub.s32 %v2698, %v2700
  %v2702 = vrot.slane %v2688, %v2701
  %v2703 = vcombine.high %v2695, %v2695
  %v2704 = vcombine.high %v2702, %v2702
  %v2706 = vunpack.c.l.s4 1966171168
  %v2707 = vunpack.c.0.s8 %v2706
  %v2708 = vlaneseq
  %v2709 = vshrl.u32 %v2708, 7
  %v2710 = vsub.s32 %v2707, %v2709
  %v2711 = vrot.slane %v2695, %v2710
  %v2713 = vunpack.c.l.s4 1966171168
  %v2714 = vunpack.c.0.s8 %v2713
  %v2715 = vlaneseq
  %v2716 = vshrl.u32 %v2715, 7
  %v2717 = vsub.s32 %v2714, %v2716
  %v2718 = vrot.slane %v2702, %v2717
  %v2720 = vunpack.c.l.s4 1966171168
  %v2721 = vunpack.c.0.s8 %v2720
  %v2722 = vlaneseq
  %v2723 = vshrl.u32 %v2722, 7
  %v2724 = vsub.s32 %v2721, %v2723
  %v2725 = vrot.slane %v2703, %v2724
  %v2727 = vunpack.c.l.s4 1966171168
  %v2728 = vunpack.c.0.s8 %v2727
  %v2729 = vlaneseq
  %v2730 = vshrl.u32 %v2729, 7
  %v2731 = vsub.s32 %v2728, %v2730
  %v2732 = vrot.slane %v2704, %v2731
  %v2733 = vcombine.high %v2711, %v2711
  %v2734 = vcombine.high %v2718, %v2718
  %v2735 = vcombine.high %v2725, %v2725
  %v2736 = vcombine.high %v2732, %v2732
  %v2737 = vcombine.high %v521, %v521
  %v2739 = vunpack.c.l.s4 1966171168
  %v2740 = vunpack.c.0.s8 %v2739
  %v2741 = vlaneseq
  %v2742 = vshrl.u32 %v2741, 7
  %v2743 = vsub.s32 %v2740, %v2742
  %v2744 = vrot.slane %v521, %v2743
  %v2746 = vunpack.c.l.s4 1966171168
  %v2747 = vunpack.c.0.s8 %v2746
  %v2748 = vlaneseq
  %v2749 = vshrl.u32 %v2748, 7
  %v2750 = vsub.s32 %v2747, %v2749
  %v2751 = vrot.slane %v2737, %v2750
  %v2752 = vcombine.high %v2744, %v2744
  %v2753 = vcombine.high %v2751, %v2751
  %v2755 = vunpack.c.l.s4 1966171168
  %v2756 = vunpack.c.0.s8 %v2755
  %v2757 = vlaneseq
  %v2758 = vshrl.u32 %v2757, 7
  %v2759 = vsub.s32 %v2756, %v2758
  %v2760 = vrot.slane %v2744, %v2759
  %v2762 = vunpack.c.l.s4 1966171168
  %v2763 = vunpack.c.0.s8 %v2762
  %v2764 = vlaneseq
  %v2765 = vshrl.u32 %v2764, 7
  %v2766 = vsub.s32 %v2763, %v2765
  %v2767 = vrot.slane %v2751, %v2766
  %v2769 = vunpack.c.l.s4 1966171168
  %v2770 = vunpack.c.0.s8 %v2769
  %v2771 = vlaneseq
  %v2772 = vshrl.u32 %v2771, 7
  %v2773 = vsub.s32 %v2770, %v2772
  %v2774 = vrot.slane %v2752, %v2773
  %v2776 = vunpack.c.l.s4 1966171168
  %v2777 = vunpack.c.0.s8 %v2776
  %v2778 = vlaneseq
  %v2779 = vshrl.u32 %v2778, 7
  %v2780 = vsub.s32 %v2777, %v2779
  %v2781 = vrot.slane %v2753, %v2780
  %v2782 = vcombine.high %v2760, %v2760
  %v2783 = vcombine.high %v2767, %v2767
  %v2784 = vcombine.high %v2774, %v2774
  %v2785 = vcombine.high %v2781, %v2781
  %v2786 = vcombine.high %v526, %v526
  %v2788 = vunpack.c.l.s4 1966171168
  %v2789 = vunpack.c.0.s8 %v2788
  %v2790 = vlaneseq
  %v2791 = vshrl.u32 %v2790, 7
  %v2792 = vsub.s32 %v2789, %v2791
  %v2793 = vrot.slane %v526, %v2792
  %v2795 = vunpack.c.l.s4 1966171168
  %v2796 = vunpack.c.0.s8 %v2795
  %v2797 = vlaneseq
  %v2798 = vshrl.u32 %v2797, 7
  %v2799 = vsub.s32 %v2796, %v2798
  %v2800 = vrot.slane %v2786, %v2799
  %v2801 = vcombine.high %v2793, %v2793
  %v2802 = vcombine.high %v2800, %v2800
  %v2804 = vunpack.c.l.s4 1966171168
  %v2805 = vunpack.c.0.s8 %v2804
  %v2806 = vlaneseq
  %v2807 = vshrl.u32 %v2806, 7
  %v2808 = vsub.s32 %v2805, %v2807
  %v2809 = vrot.slane %v2793, %v2808
  %v2811 = vunpack.c.l.s4 1966171168
  %v2812 = vunpack.c.0.s8 %v2811
  %v2813 = vlaneseq
  %v2814 = vshrl.u32 %v2813, 7
  %v2815 = vsub.s32 %v2812, %v2814
  %v2816 = vrot.slane %v2800, %v2815
  %v2818 = vunpack.c.l.s4 1966171168
  %v2819 = vunpack.c.0.s8 %v2818
  %v2820 = vlaneseq
  %v2821 = vshrl.u32 %v2820, 7
  %v2822 = vsub.s32 %v2819, %v2821
  %v2823 = vrot.slane %v2801, %v2822
  %v2825 = vunpack.c.l.s4 1966171168
  %v2826 = vunpack.c.0.s8 %v2825
  %v2827 = vlaneseq
  %v2828 = vshrl.u32 %v2827, 7
  %v2829 = vsub.s32 %v2826, %v2828
  %v2830 = vrot.slane %v2802, %v2829
  %v2831 = vcombine.high %v2809, %v2809
  %v2832 = vcombine.high %v2816, %v2816
  %v2833 = vcombine.high %v2823, %v2823
  %v2834 = vcombine.high %v2830, %v2830
  %v2835 = vcombine.high %v531, %v531
  %v2837 = vunpack.c.l.s4 1966171168
  %v2838 = vunpack.c.0.s8 %v2837
  %v2839 = vlaneseq
  %v2840 = vshrl.u32 %v2839, 7
  %v2841 = vsub.s32 %v2838, %v2840
  %v2842 = vrot.slane %v531, %v2841
  %v2844 = vunpack.c.l.s4 1966171168
  %v2845 = vunpack.c.0.s8 %v2844
  %v2846 = vlaneseq
  %v2847 = vshrl.u32 %v2846, 7
  %v2848 = vsub.s32 %v2845, %v2847
  %v2849 = vrot.slane %v2835, %v2848
  %v2850 = vcombine.high %v2842, %v2842
  %v2851 = vcombine.high %v2849, %v2849
  %v2853 = vunpack.c.l.s4 1966171168
  %v2854 = vunpack.c.0.s8 %v2853
  %v2855 = vlaneseq
  %v2856 = vshrl.u32 %v2855, 7
  %v2857 = vsub.s32 %v2854, %v2856
  %v2858 = vrot.slane %v2842, %v2857
  %v2860 = vunpack.c.l.s4 1966171168
  %v2861 = vunpack.c.0.s8 %v2860
  %v2862 = vlaneseq
  %v2863 = vshrl.u32 %v2862, 7
  %v2864 = vsub.s32 %v2861, %v2863
  %v2865 = vrot.slane %v2849, %v2864
  %v2867 = vunpack.c.l.s4 1966171168
  %v2868 = vunpack.c.0.s8 %v2867
  %v2869 = vlaneseq
  %v2870 = vshrl.u32 %v2869, 7
  %v2871 = vsub.s32 %v2868, %v2870
  %v2872 = vrot.slane %v2850, %v2871
  %v2874 = vunpack.c.l.s4 1966171168
  %v2875 = vunpack.c.0.s8 %v2874
  %v2876 = vlaneseq
  %v2877 = vshrl.u32 %v2876, 7
  %v2878 = vsub.s32 %v2875, %v2877
  %v2879 = vrot.slane %v2851, %v2878
  %v2880 = vcombine.high %v2858, %v2858
  %v2881 = vcombine.high %v2865, %v2865
  %v2882 = vcombine.high %v2872, %v2872
  %v2883 = vcombine.high %v2879, %v2879
  %v3260 = vld [vmem:[%s1] sm:$0xff]
  %v3261 = vld [vmem:[%s1 + $0x8] sm:$0xff]
  %v3262 = vld [vmem:[%s1 + $0x10] sm:$0xff]
  %v3263 = vld [vmem:[%s1 + $0x18] sm:$0xff]
  %v3264 = vld [vmem:[%s1 + $0x20] sm:$0xff]
  %v3265 = vld [vmem:[%s1 + $0x28] sm:$0x7f]
  %v3272 = vcombine.high %v3260, %v3260
  %v3274 = vunpack.c.l.s4 1966171168
  %v3275 = vunpack.c.0.s8 %v3274
  %v3276 = vlaneseq
  %v3277 = vshrl.u32 %v3276, 7
  %v3278 = vsub.s32 %v3275, %v3277
  %v3279 = vrot.slane %v3260, %v3278
  %v3281 = vunpack.c.l.s4 1966171168
  %v3282 = vunpack.c.0.s8 %v3281
  %v3283 = vlaneseq
  %v3284 = vshrl.u32 %v3283, 7
  %v3285 = vsub.s32 %v3282, %v3284
  %v3286 = vrot.slane %v3272, %v3285
  %v3287 = vcombine.high %v3279, %v3279
  %v3288 = vcombine.high %v3286, %v3286
  %v3290 = vunpack.c.l.s4 1966171168
  %v3291 = vunpack.c.0.s8 %v3290
  %v3292 = vlaneseq
  %v3293 = vshrl.u32 %v3292, 7
  %v3294 = vsub.s32 %v3291, %v3293
  %v3295 = vrot.slane %v3279, %v3294
  %v3297 = vunpack.c.l.s4 1966171168
  %v3298 = vunpack.c.0.s8 %v3297
  %v3299 = vlaneseq
  %v3300 = vshrl.u32 %v3299, 7
  %v3301 = vsub.s32 %v3298, %v3300
  %v3302 = vrot.slane %v3286, %v3301
  %v3304 = vunpack.c.l.s4 1966171168
  %v3305 = vunpack.c.0.s8 %v3304
  %v3306 = vlaneseq
  %v3307 = vshrl.u32 %v3306, 7
  %v3308 = vsub.s32 %v3305, %v3307
  %v3309 = vrot.slane %v3287, %v3308
  %v3311 = vunpack.c.l.s4 1966171168
  %v3312 = vunpack.c.0.s8 %v3311
  %v3313 = vlaneseq
  %v3314 = vshrl.u32 %v3313, 7
  %v3315 = vsub.s32 %v3312, %v3314
  %v3316 = vrot.slane %v3288, %v3315
  %v3317 = vcombine.high %v3295, %v3295
  %v3318 = vcombine.high %v3302, %v3302
  %v3319 = vcombine.high %v3309, %v3309
  %v3320 = vcombine.high %v3316, %v3316
  %v3321 = vcombine.high %v3261, %v3261
  %v3323 = vunpack.c.l.s4 1966171168
  %v3324 = vunpack.c.0.s8 %v3323
  %v3325 = vlaneseq
  %v3326 = vshrl.u32 %v3325, 7
  %v3327 = vsub.s32 %v3324, %v3326
  %v3328 = vrot.slane %v3261, %v3327
  %v3330 = vunpack.c.l.s4 1966171168
  %v3331 = vunpack.c.0.s8 %v3330
  %v3332 = vlaneseq
  %v3333 = vshrl.u32 %v3332, 7
  %v3334 = vsub.s32 %v3331, %v3333
  %v3335 = vrot.slane %v3321, %v3334
  %v3336 = vcombine.high %v3328, %v3328
  %v3337 = vcombine.high %v3335, %v3335
  %v3339 = vunpack.c.l.s4 1966171168
  %v3340 = vunpack.c.0.s8 %v3339
  %v3341 = vlaneseq
  %v3342 = vshrl.u32 %v3341, 7
  %v3343 = vsub.s32 %v3340, %v3342
  %v3344 = vrot.slane %v3328, %v3343
  %v3346 = vunpack.c.l.s4 1966171168
  %v3347 = vunpack.c.0.s8 %v3346
  %v3348 = vlaneseq
  %v3349 = vshrl.u32 %v3348, 7
  %v3350 = vsub.s32 %v3347, %v3349
  %v3351 = vrot.slane %v3335, %v3350
  %v3353 = vunpack.c.l.s4 1966171168
  %v3354 = vunpack.c.0.s8 %v3353
  %v3355 = vlaneseq
  %v3356 = vshrl.u32 %v3355, 7
  %v3357 = vsub.s32 %v3354, %v3356
  %v3358 = vrot.slane %v3336, %v3357
  %v3360 = vunpack.c.l.s4 1966171168
  %v3361 = vunpack.c.0.s8 %v3360
  %v3362 = vlaneseq
  %v3363 = vshrl.u32 %v3362, 7
  %v3364 = vsub.s32 %v3361, %v3363
  %v3365 = vrot.slane %v3337, %v3364
  %v3366 = vcombine.high %v3344, %v3344
  %v3367 = vcombine.high %v3351, %v3351
  %v3368 = vcombine.high %v3358, %v3358
  %v3369 = vcombine.high %v3365, %v3365
  %v3370 = vcombine.high %v3262, %v3262
  %v3372 = vunpack.c.l.s4 1966171168
  %v3373 = vunpack.c.0.s8 %v3372
  %v3374 = vlaneseq
  %v3375 = vshrl.u32 %v3374, 7
  %v3376 = vsub.s32 %v3373, %v3375
  %v3377 = vrot.slane %v3262, %v3376
  %v3379 = vunpack.c.l.s4 1966171168
  %v3380 = vunpack.c.0.s8 %v3379
  %v3381 = vlaneseq
  %v3382 = vshrl.u32 %v3381, 7
  %v3383 = vsub.s32 %v3380, %v3382
  %v3384 = vrot.slane %v3370, %v3383
  %v3385 = vcombine.high %v3377, %v3377
  %v3386 = vcombine.high %v3384, %v3384
  %v3388 = vunpack.c.l.s4 1966171168
  %v3389 = vunpack.c.0.s8 %v3388
  %v3390 = vlaneseq
  %v3391 = vshrl.u32 %v3390, 7
  %v3392 = vsub.s32 %v3389, %v3391
  %v3393 = vrot.slane %v3377, %v3392
  %v3395 = vunpack.c.l.s4 1966171168
  %v3396 = vunpack.c.0.s8 %v3395
  %v3397 = vlaneseq
  %v3398 = vshrl.u32 %v3397, 7
  %v3399 = vsub.s32 %v3396, %v3398
  %v3400 = vrot.slane %v3384, %v3399
  %v3402 = vunpack.c.l.s4 1966171168
  %v3403 = vunpack.c.0.s8 %v3402
  %v3404 = vlaneseq
  %v3405 = vshrl.u32 %v3404, 7
  %v3406 = vsub.s32 %v3403, %v3405
  %v3407 = vrot.slane %v3385, %v3406
  %v3409 = vunpack.c.l.s4 1966171168
  %v3410 = vunpack.c.0.s8 %v3409
  %v3411 = vlaneseq
  %v3412 = vshrl.u32 %v3411, 7
  %v3413 = vsub.s32 %v3410, %v3412
  %v3414 = vrot.slane %v3386, %v3413
  %v3415 = vcombine.high %v3393, %v3393
  %v3416 = vcombine.high %v3400, %v3400
  %v3417 = vcombine.high %v3407, %v3407
  %v3418 = vcombine.high %v3414, %v3414
  %v3419 = vcombine.high %v3263, %v3263
  %v3421 = vunpack.c.l.s4 1966171168
  %v3422 = vunpack.c.0.s8 %v3421
  %v3423 = vlaneseq
  %v3424 = vshrl.u32 %v3423, 7
  %v3425 = vsub.s32 %v3422, %v3424
  %v3426 = vrot.slane %v3263, %v3425
  %v3428 = vunpack.c.l.s4 1966171168
  %v3429 = vunpack.c.0.s8 %v3428
  %v3430 = vlaneseq
  %v3431 = vshrl.u32 %v3430, 7
  %v3432 = vsub.s32 %v3429, %v3431
  %v3433 = vrot.slane %v3419, %v3432
  %v3434 = vcombine.high %v3426, %v3426
  %v3435 = vcombine.high %v3433, %v3433
  %v3437 = vunpack.c.l.s4 1966171168
  %v3438 = vunpack.c.0.s8 %v3437
  %v3439 = vlaneseq
  %v3440 = vshrl.u32 %v3439, 7
  %v3441 = vsub.s32 %v3438, %v3440
  %v3442 = vrot.slane %v3426, %v3441
  %v3444 = vunpack.c.l.s4 1966171168
  %v3445 = vunpack.c.0.s8 %v3444
  %v3446 = vlaneseq
  %v3447 = vshrl.u32 %v3446, 7
  %v3448 = vsub.s32 %v3445, %v3447
  %v3449 = vrot.slane %v3433, %v3448
  %v3451 = vunpack.c.l.s4 1966171168
  %v3452 = vunpack.c.0.s8 %v3451
  %v3453 = vlaneseq
  %v3454 = vshrl.u32 %v3453, 7
  %v3455 = vsub.s32 %v3452, %v3454
  %v3456 = vrot.slane %v3434, %v3455
  %v3458 = vunpack.c.l.s4 1966171168
  %v3459 = vunpack.c.0.s8 %v3458
  %v3460 = vlaneseq
  %v3461 = vshrl.u32 %v3460, 7
  %v3462 = vsub.s32 %v3459, %v3461
  %v3463 = vrot.slane %v3435, %v3462
  %v3464 = vcombine.high %v3442, %v3442
  %v3465 = vcombine.high %v3449, %v3449
  %v3466 = vcombine.high %v3456, %v3456
  %v3467 = vcombine.high %v3463, %v3463
  %v3468 = vcombine.high %v3264, %v3264
  %v3470 = vunpack.c.l.s4 1966171168
  %v3471 = vunpack.c.0.s8 %v3470
  %v3472 = vlaneseq
  %v3473 = vshrl.u32 %v3472, 7
  %v3474 = vsub.s32 %v3471, %v3473
  %v3475 = vrot.slane %v3264, %v3474
  %v3477 = vunpack.c.l.s4 1966171168
  %v3478 = vunpack.c.0.s8 %v3477
  %v3479 = vlaneseq
  %v3480 = vshrl.u32 %v3479, 7
  %v3481 = vsub.s32 %v3478, %v3480
  %v3482 = vrot.slane %v3468, %v3481
  %v3483 = vcombine.high %v3475, %v3475
  %v3484 = vcombine.high %v3482, %v3482
  %v3486 = vunpack.c.l.s4 1966171168
  %v3487 = vunpack.c.0.s8 %v3486
  %v3488 = vlaneseq
  %v3489 = vshrl.u32 %v3488, 7
  %v3490 = vsub.s32 %v3487, %v3489
  %v3491 = vrot.slane %v3475, %v3490
  %v3493 = vunpack.c.l.s4 1966171168
  %v3494 = vunpack.c.0.s8 %v3493
  %v3495 = vlaneseq
  %v3496 = vshrl.u32 %v3495, 7
  %v3497 = vsub.s32 %v3494, %v3496
  %v3498 = vrot.slane %v3482, %v3497
  %v3500 = vunpack.c.l.s4 1966171168
  %v3501 = vunpack.c.0.s8 %v3500
  %v3502 = vlaneseq
  %v3503 = vshrl.u32 %v3502, 7
  %v3504 = vsub.s32 %v3501, %v3503
  %v3505 = vrot.slane %v3483, %v3504
  %v3507 = vunpack.c.l.s4 1966171168
  %v3508 = vunpack.c.0.s8 %v3507
  %v3509 = vlaneseq
  %v3510 = vshrl.u32 %v3509, 7
  %v3511 = vsub.s32 %v3508, %v3510
  %v3512 = vrot.slane %v3484, %v3511
  %v3513 = vcombine.high %v3491, %v3491
  %v3514 = vcombine.high %v3498, %v3498
  %v3515 = vcombine.high %v3505, %v3505
  %v3516 = vcombine.high %v3512, %v3512
  %v3517 = vcombine.high %v3265, %v3265
  %v3519 = vunpack.c.l.s4 1966171168
  %v3520 = vunpack.c.0.s8 %v3519
  %v3521 = vlaneseq
  %v3522 = vshrl.u32 %v3521, 7
  %v3523 = vsub.s32 %v3520, %v3522
  %v3524 = vrot.slane %v3265, %v3523
  %v3526 = vunpack.c.l.s4 1966171168
  %v3527 = vunpack.c.0.s8 %v3526
  %v3528 = vlaneseq
  %v3529 = vshrl.u32 %v3528, 7
  %v3530 = vsub.s32 %v3527, %v3529
  %v3531 = vrot.slane %v3517, %v3530
  %v3532 = vcombine.high %v3524, %v3524
  %v3533 = vcombine.high %v3531, %v3531
  %v3535 = vunpack.c.l.s4 1966171168
  %v3536 = vunpack.c.0.s8 %v3535
  %v3537 = vlaneseq
  %v3538 = vshrl.u32 %v3537, 7
  %v3539 = vsub.s32 %v3536, %v3538
  %v3540 = vrot.slane %v3524, %v3539
  %v3542 = vunpack.c.l.s4 1966171168
  %v3543 = vunpack.c.0.s8 %v3542
  %v3544 = vlaneseq
  %v3545 = vshrl.u32 %v3544, 7
  %v3546 = vsub.s32 %v3543, %v3545
  %v3547 = vrot.slane %v3531, %v3546
  %v3549 = vunpack.c.l.s4 1966171168
  %v3550 = vunpack.c.0.s8 %v3549
  %v3551 = vlaneseq
  %v3552 = vshrl.u32 %v3551, 7
  %v3553 = vsub.s32 %v3550, %v3552
  %v3554 = vrot.slane %v3532, %v3553
  %v3556 = vunpack.c.l.s4 1966171168
  %v3557 = vunpack.c.0.s8 %v3556
  %v3558 = vlaneseq
  %v3559 = vshrl.u32 %v3558, 7
  %v3560 = vsub.s32 %v3557, %v3559
  %v3561 = vrot.slane %v3533, %v3560
  %v3562 = vcombine.high %v3540, %v3540
  %v3563 = vcombine.high %v3547, %v3547
  %v3564 = vcombine.high %v3554, %v3554
  %v3612 = vadd.f32 %v604, %v3295
  %v3613 = vadd.f32 %v618, %v3309
  %v3614 = vadd.f32 %v626, %v3317
  %v3615 = vadd.f32 %v628, %v3319
  %v3616 = vadd.f32 %v611, %v3302
  %v3617 = vadd.f32 %v625, %v3316
  %v3618 = vadd.f32 %v627, %v3318
  %v3619 = vadd.f32 %v629, %v3320
  %v3620 = vadd.f32 %v653, %v3344
  %v3621 = vadd.f32 %v667, %v3358
  %v3622 = vadd.f32 %v675, %v3366
  %v3623 = vadd.f32 %v677, %v3368
  %v3624 = vadd.f32 %v660, %v3351
  %v3625 = vadd.f32 %v674, %v3365
  %v3626 = vadd.f32 %v676, %v3367
  %v3627 = vadd.f32 %v678, %v3369
  %v3628 = vadd.f32 %v702, %v3393
  %v3629 = vadd.f32 %v716, %v3407
  %v3630 = vadd.f32 %v724, %v3415
  %v3631 = vadd.f32 %v726, %v3417
  %v3632 = vadd.f32 %v709, %v3400
  %v3633 = vadd.f32 %v723, %v3414
  %v3634 = vadd.f32 %v725, %v3416
  %v3635 = vadd.f32 %v727, %v3418
  %v3636 = vadd.f32 %v751, %v3442
  %v3637 = vadd.f32 %v765, %v3456
  %v3638 = vadd.f32 %v773, %v3464
  %v3639 = vadd.f32 %v775, %v3466
  %v3640 = vadd.f32 %v758, %v3449
  %v3641 = vadd.f32 %v772, %v3463
  %v3642 = vadd.f32 %v774, %v3465
  %v3643 = vadd.f32 %v776, %v3467
  %v3644 = vadd.f32 %v800, %v3491
  %v3645 = vadd.f32 %v814, %v3505
  %v3646 = vadd.f32 %v822, %v3513
  %v3647 = vadd.f32 %v824, %v3515
  %v3648 = vadd.f32 %v807, %v3498
  %v3649 = vadd.f32 %v821, %v3512
  %v3650 = vadd.f32 %v823, %v3514
  %v3651 = vadd.f32 %v825, %v3516
  %v3652 = vadd.f32 %v849, %v3540
  %v3653 = vadd.f32 %v863, %v3554
  %v3654 = vadd.f32 %v871, %v3562
  %v3655 = vadd.f32 %v873, %v3564
  %v3656 = vadd.f32 %v856, %v3547
  %v3657 = vadd.f32 %v870, %v3561
  %v3658 = vadd.f32 %v872, %v3563
  %v3659 = vadd.f32 %v874, %v3295
  %v3660 = vadd.f32 %v898, %v3309
  %v3661 = vadd.f32 %v912, %v3317
  %v3662 = vadd.f32 %v920, %v3319
  %v3663 = vadd.f32 %v922, %v3302
  %v3664 = vadd.f32 %v905, %v3316
  %v3665 = vadd.f32 %v919, %v3318
  %v3666 = vadd.f32 %v921, %v3320
  %v3667 = vadd.f32 %v923, %v3344
  %v3668 = vadd.f32 %v947, %v3358
  %v3669 = vadd.f32 %v961, %v3366
  %v3670 = vadd.f32 %v969, %v3368
  %v3671 = vadd.f32 %v971, %v3351
  %v3672 = vadd.f32 %v954, %v3365
  %v3673 = vadd.f32 %v968, %v3367
  %v3674 = vadd.f32 %v970, %v3369
  %v3675 = vadd.f32 %v972, %v3393
  %v3676 = vadd.f32 %v996, %v3407
  %v3677 = vadd.f32 %v1010, %v3415
  %v3678 = vadd.f32 %v1018, %v3417
  %v3679 = vadd.f32 %v1020, %v3400
  %v3680 = vadd.f32 %v1003, %v3414
  %v3681 = vadd.f32 %v1017, %v3416
  %v3682 = vadd.f32 %v1019, %v3418
  %v3683 = vadd.f32 %v1021, %v3442
  %v3684 = vadd.f32 %v1045, %v3456
  %v3685 = vadd.f32 %v1059, %v3464
  %v3686 = vadd.f32 %v1067, %v3466
  %v3687 = vadd.f32 %v1069, %v3449
  %v3688 = vadd.f32 %v1052, %v3463
  %v3689 = vadd.f32 %v1066, %v3465
  %v3690 = vadd.f32 %v1068, %v3467
  %v3691 = vadd.f32 %v1070, %v3491
  %v3692 = vadd.f32 %v1094, %v3505
  %v3693 = vadd.f32 %v1108, %v3513
  %v3694 = vadd.f32 %v1116, %v3515
  %v3695 = vadd.f32 %v1118, %v3498
  %v3696 = vadd.f32 %v1101, %v3512
  %v3697 = vadd.f32 %v1115, %v3514
  %v3698 = vadd.f32 %v1117, %v3516
  %v3699 = vadd.f32 %v1119, %v3540
  %v3700 = vadd.f32 %v1143, %v3554
  %v3701 = vadd.f32 %v1157, %v3562
  %v3702 = vadd.f32 %v1165, %v3564
  %v3703 = vadd.f32 %v1167, %v3547
  %v3704 = vadd.f32 %v1150, %v3561
  %v3705 = vadd.f32 %v1164, %v3563
  %v3706 = vadd.f32 %v1166, %v3295
  %v3707 = vadd.f32 %v1168, %v3309
  %v3708 = vadd.f32 %v1192, %v3317
  %v3709 = vadd.f32 %v1206, %v3319
  %v3710 = vadd.f32 %v1214, %v3302
  %v3711 = vadd.f32 %v1216, %v3316
  %v3712 = vadd.f32 %v1199, %v3318
  %v3713 = vadd.f32 %v1213, %v3320
  %v3714 = vadd.f32 %v1215, %v3344
  %v3715 = vadd.f32 %v1217, %v3358
  %v3716 = vadd.f32 %v1241, %v3366
  %v3717 = vadd.f32 %v1255, %v3368
  %v3718 = vadd.f32 %v1263, %v3351
  %v3719 = vadd.f32 %v1265, %v3365
  %v3720 = vadd.f32 %v1248, %v3367
  %v3721 = vadd.f32 %v1262, %v3369
  %v3722 = vadd.f32 %v1264, %v3393
  %v3723 = vadd.f32 %v1266, %v3407
  %v3724 = vadd.f32 %v1290, %v3415
  %v3725 = vadd.f32 %v1304, %v3417
  %v3726 = vadd.f32 %v1312, %v3400
  %v3727 = vadd.f32 %v1314, %v3414
  %v3728 = vadd.f32 %v1297, %v3416
  %v3729 = vadd.f32 %v1311, %v3418
  %v3730 = vadd.f32 %v1313, %v3442
  %v3731 = vadd.f32 %v1315, %v3456
  %v3732 = vadd.f32 %v1339, %v3464
  %v3733 = vadd.f32 %v1353, %v3466
  %v3734 = vadd.f32 %v1361, %v3449
  %v3735 = vadd.f32 %v1363, %v3463
  %v3736 = vadd.f32 %v1346, %v3465
  %v3737 = vadd.f32 %v1360, %v3467
  %v3738 = vadd.f32 %v1362, %v3491
  %v3739 = vadd.f32 %v1364, %v3505
  %v3740 = vadd.f32 %v1388, %v3513
  %v3741 = vadd.f32 %v1402, %v3515
  %v3742 = vadd.f32 %v1410, %v3498
  %v3743 = vadd.f32 %v1412, %v3512
  %v3744 = vadd.f32 %v1395, %v3514
  %v3745 = vadd.f32 %v1409, %v3516
  %v3746 = vadd.f32 %v1411, %v3540
  %v3747 = vadd.f32 %v1413, %v3554
  %v3748 = vadd.f32 %v1437, %v3562
  %v3749 = vadd.f32 %v1451, %v3564
  %v3750 = vadd.f32 %v1459, %v3547
  %v3751 = vadd.f32 %v1461, %v3561
  %v3752 = vadd.f32 %v1444, %v3563
  %v3753 = vadd.f32 %v1458, %v3295
  %v3754 = vadd.f32 %v1460, %v3309
  %v3755 = vadd.f32 %v1462, %v3317
  %v3756 = vadd.f32 %v1486, %v3319
  %v3757 = vadd.f32 %v1500, %v3302
  %v3758 = vadd.f32 %v1508, %v3316
  %v3759 = vadd.f32 %v1510, %v3318
  %v3760 = vadd.f32 %v1493, %v3320
  %v3761 = vadd.f32 %v1507, %v3344
  %v3762 = vadd.f32 %v1509, %v3358
  %v3763 = vadd.f32 %v1511, %v3366
  %v3764 = vadd.f32 %v1535, %v3368
  %v3765 = vadd.f32 %v1549, %v3351
  %v3766 = vadd.f32 %v1557, %v3365
  %v3767 = vadd.f32 %v1559, %v3367
  %v3768 = vadd.f32 %v1542, %v3369
  %v3769 = vadd.f32 %v1556, %v3393
  %v3770 = vadd.f32 %v1558, %v3407
  %v3771 = vadd.f32 %v1560, %v3415
  %v3772 = vadd.f32 %v1584, %v3417
  %v3773 = vadd.f32 %v1598, %v3400
  %v3774 = vadd.f32 %v1606, %v3414
  %v3775 = vadd.f32 %v1608, %v3416
  %v3776 = vadd.f32 %v1591, %v3418
  %v3777 = vadd.f32 %v1605, %v3442
  %v3778 = vadd.f32 %v1607, %v3456
  %v3779 = vadd.f32 %v1609, %v3464
  %v3780 = vadd.f32 %v1633, %v3466
  %v3781 = vadd.f32 %v1647, %v3449
  %v3782 = vadd.f32 %v1655, %v3463
  %v3783 = vadd.f32 %v1657, %v3465
  %v3784 = vadd.f32 %v1640, %v3467
  %v3785 = vadd.f32 %v1654, %v3491
  %v3786 = vadd.f32 %v1656, %v3505
  %v3787 = vadd.f32 %v1658, %v3513
  %v3788 = vadd.f32 %v1682, %v3515
  %v3789 = vadd.f32 %v1696, %v3498
  %v3790 = vadd.f32 %v1704, %v3512
  %v3791 = vadd.f32 %v1706, %v3514
  %v3792 = vadd.f32 %v1689, %v3516
  %v3793 = vadd.f32 %v1703, %v3540
  %v3794 = vadd.f32 %v1705, %v3554
  %v3795 = vadd.f32 %v1707, %v3562
  %v3796 = vadd.f32 %v1731, %v3564
  %v3797 = vadd.f32 %v1745, %v3547
  %v3798 = vadd.f32 %v1753, %v3561
  %v3799 = vadd.f32 %v1755, %v3563
  %v3800 = vadd.f32 %v1738, %v3295
  %v3801 = vadd.f32 %v1752, %v3309
  %v3802 = vadd.f32 %v1754, %v3317
  %v3803 = vadd.f32 %v1756, %v3319
  %v3804 = vadd.f32 %v1780, %v3302
  %v3805 = vadd.f32 %v1794, %v3316
  %v3806 = vadd.f32 %v1802, %v3318
  %v3807 = vadd.f32 %v1804, %v3320
  %v3808 = vadd.f32 %v1787, %v3344
  %v3809 = vadd.f32 %v1801, %v3358
  %v3810 = vadd.f32 %v1803, %v3366
  %v3811 = vadd.f32 %v1805, %v3368
  %v3812 = vadd.f32 %v1829, %v3351
  %v3813 = vadd.f32 %v1843, %v3365
  %v3814 = vadd.f32 %v1851, %v3367
  %v3815 = vadd.f32 %v1853, %v3369
  %v3816 = vadd.f32 %v1836, %v3393
  %v3817 = vadd.f32 %v1850, %v3407
  %v3818 = vadd.f32 %v1852, %v3415
  %v3819 = vadd.f32 %v1854, %v3417
  %v3820 = vadd.f32 %v1878, %v3400
  %v3821 = vadd.f32 %v1892, %v3414
  %v3822 = vadd.f32 %v1900, %v3416
  %v3823 = vadd.f32 %v1902, %v3418
  %v3824 = vadd.f32 %v1885, %v3442
  %v3825 = vadd.f32 %v1899, %v3456
  %v3826 = vadd.f32 %v1901, %v3464
  %v3827 = vadd.f32 %v1903, %v3466
  %v3828 = vadd.f32 %v1927, %v3449
  %v3829 = vadd.f32 %v1941, %v3463
  %v3830 = vadd.f32 %v1949, %v3465
  %v3831 = vadd.f32 %v1951, %v3467
  %v3832 = vadd.f32 %v1934, %v3491
  %v3833 = vadd.f32 %v1948, %v3505
  %v3834 = vadd.f32 %v1950, %v3513
  %v3835 = vadd.f32 %v1952, %v3515
  %v3836 = vadd.f32 %v1976, %v3498
  %v3837 = vadd.f32 %v1990, %v3512
  %v3838 = vadd.f32 %v1998, %v3514
  %v3839 = vadd.f32 %v2000, %v3516
  %v3840 = vadd.f32 %v1983, %v3540
  %v3841 = vadd.f32 %v1997, %v3554
  %v3842 = vadd.f32 %v1999, %v3562
  %v3843 = vadd.f32 %v2001, %v3564
  %v3844 = vadd.f32 %v2025, %v3547
  %v3845 = vadd.f32 %v2039, %v3561
  %v3846 = vadd.f32 %v2047, %v3563
  %v3847 = vadd.f32 %v2049, %v3295
  %v3848 = vadd.f32 %v2032, %v3309
  %v3849 = vadd.f32 %v2046, %v3317
  %v3850 = vadd.f32 %v2048, %v3319
  %v3851 = vadd.f32 %v2050, %v3302
  %v3852 = vadd.f32 %v2074, %v3316
  %v3853 = vadd.f32 %v2088, %v3318
  %v3854 = vadd.f32 %v2096, %v3320
  %v3855 = vadd.f32 %v2098, %v3344
  %v3856 = vadd.f32 %v2081, %v3358
  %v3857 = vadd.f32 %v2095, %v3366
  %v3858 = vadd.f32 %v2097, %v3368
  %v3859 = vadd.f32 %v2099, %v3351
  %v3860 = vadd.f32 %v2123, %v3365
  %v3861 = vadd.f32 %v2137, %v3367
  %v3862 = vadd.f32 %v2145, %v3369
  %v3863 = vadd.f32 %v2147, %v3393
  %v3864 = vadd.f32 %v2130, %v3407
  %v3865 = vadd.f32 %v2144, %v3415
  %v3866 = vadd.f32 %v2146, %v3417
  %v3867 = vadd.f32 %v2148, %v3400
  %v3868 = vadd.f32 %v2172, %v3414
  %v3869 = vadd.f32 %v2186, %v3416
  %v3870 = vadd.f32 %v2194, %v3418
  %v3871 = vadd.f32 %v2196, %v3442
  %v3872 = vadd.f32 %v2179, %v3456
  %v3873 = vadd.f32 %v2193, %v3464
  %v3874 = vadd.f32 %v2195, %v3466
  %v3875 = vadd.f32 %v2197, %v3449
  %v3876 = vadd.f32 %v2221, %v3463
  %v3877 = vadd.f32 %v2235, %v3465
  %v3878 = vadd.f32 %v2243, %v3467
  %v3879 = vadd.f32 %v2245, %v3491
  %v3880 = vadd.f32 %v2228, %v3505
  %v3881 = vadd.f32 %v2242, %v3513
  %v3882 = vadd.f32 %v2244, %v3515
  %v3883 = vadd.f32 %v2246, %v3498
  %v3884 = vadd.f32 %v2270, %v3512
  %v3885 = vadd.f32 %v2284, %v3514
  %v3886 = vadd.f32 %v2292, %v3516
  %v3887 = vadd.f32 %v2294, %v3540
  %v3888 = vadd.f32 %v2277, %v3554
  %v3889 = vadd.f32 %v2291, %v3562
  %v3890 = vadd.f32 %v2293, %v3564
  %v3891 = vadd.f32 %v2295, %v3547
  %v3892 = vadd.f32 %v2319, %v3561
  %v3893 = vadd.f32 %v2333, %v3563
  %v3894 = vadd.f32 %v2341, %v3295
  %v3895 = vadd.f32 %v2343, %v3309
  %v3896 = vadd.f32 %v2326, %v3317
  %v3897 = vadd.f32 %v2340, %v3319
  %v3898 = vadd.f32 %v2342, %v3302
  %v3899 = vadd.f32 %v2344, %v3316
  %v3900 = vadd.f32 %v2368, %v3318
  %v3901 = vadd.f32 %v2382, %v3320
  %v3902 = vadd.f32 %v2390, %v3344
  %v3903 = vadd.f32 %v2392, %v3358
  %v3904 = vadd.f32 %v2375, %v3366
  %v3905 = vadd.f32 %v2389, %v3368
  %v3906 = vadd.f32 %v2391, %v3351
  %v3907 = vadd.f32 %v2393, %v3365
  %v3908 = vadd.f32 %v2417, %v3367
  %v3909 = vadd.f32 %v2431, %v3369
  %v3910 = vadd.f32 %v2439, %v3393
  %v3911 = vadd.f32 %v2441, %v3407
  %v3912 = vadd.f32 %v2424, %v3415
  %v3913 = vadd.f32 %v2438, %v3417
  %v3914 = vadd.f32 %v2440, %v3400
  %v3915 = vadd.f32 %v2442, %v3414
  %v3916 = vadd.f32 %v2466, %v3416
  %v3917 = vadd.f32 %v2480, %v3418
  %v3918 = vadd.f32 %v2488, %v3442
  %v3919 = vadd.f32 %v2490, %v3456
  %v3920 = vadd.f32 %v2473, %v3464
  %v3921 = vadd.f32 %v2487, %v3466
  %v3922 = vadd.f32 %v2489, %v3449
  %v3923 = vadd.f32 %v2491, %v3463
  %v3924 = vadd.f32 %v2515, %v3465
  %v3925 = vadd.f32 %v2529, %v3467
  %v3926 = vadd.f32 %v2537, %v3491
  %v3927 = vadd.f32 %v2539, %v3505
  %v3928 = vadd.f32 %v2522, %v3513
  %v3929 = vadd.f32 %v2536, %v3515
  %v3930 = vadd.f32 %v2538, %v3498
  %v3931 = vadd.f32 %v2540, %v3512
  %v3932 = vadd.f32 %v2564, %v3514
  %v3933 = vadd.f32 %v2578, %v3516
  %v3934 = vadd.f32 %v2586, %v3540
  %v3935 = vadd.f32 %v2588, %v3554
  %v3936 = vadd.f32 %v2571, %v3562
  %v3937 = vadd.f32 %v2585, %v3564
  %v3938 = vadd.f32 %v2587, %v3547
  %v3939 = vadd.f32 %v2589, %v3561
  %v3940 = vadd.f32 %v2613, %v3563
  %v3941 = vadd.f32 %v2627, %v3295
  %v3942 = vadd.f32 %v2635, %v3309
  %v3943 = vadd.f32 %v2637, %v3317
  %v3944 = vadd.f32 %v2620, %v3319
  %v3945 = vadd.f32 %v2634, %v3302
  %v3946 = vadd.f32 %v2636, %v3316
  %v3947 = vadd.f32 %v2638, %v3318
  %v3948 = vadd.f32 %v2662, %v3320
  %v3949 = vadd.f32 %v2676, %v3344
  %v3950 = vadd.f32 %v2684, %v3358
  %v3951 = vadd.f32 %v2686, %v3366
  %v3952 = vadd.f32 %v2669, %v3368
  %v3953 = vadd.f32 %v2683, %v3351
  %v3954 = vadd.f32 %v2685, %v3365
  %v3955 = vadd.f32 %v2687, %v3367
  %v3956 = vadd.f32 %v2711, %v3369
  %v3957 = vadd.f32 %v2725, %v3393
  %v3958 = vadd.f32 %v2733, %v3407
  %v3959 = vadd.f32 %v2735, %v3415
  %v3960 = vadd.f32 %v2718, %v3417
  %v3961 = vadd.f32 %v2732, %v3400
  %v3962 = vadd.f32 %v2734, %v3414
  %v3963 = vadd.f32 %v2736, %v3416
  %v3964 = vadd.f32 %v2760, %v3418
  %v3965 = vadd.f32 %v2774, %v3442
  %v3966 = vadd.f32 %v2782, %v3456
  %v3967 = vadd.f32 %v2784, %v3464
  %v3968 = vadd.f32 %v2767, %v3466
  %v3969 = vadd.f32 %v2781, %v3449
  %v3970 = vadd.f32 %v2783, %v3463
  %v3971 = vadd.f32 %v2785, %v3465
  %v3972 = vadd.f32 %v2809, %v3467
  %v3973 = vadd.f32 %v2823, %v3491
  %v3974 = vadd.f32 %v2831, %v3505
  %v3975 = vadd.f32 %v2833, %v3513
  %v3976 = vadd.f32 %v2816, %v3515
  %v3977 = vadd.f32 %v2830, %v3498
  %v3978 = vadd.f32 %v2832, %v3512
  %v3979 = vadd.f32 %v2834, %v3514
  %v3980 = vadd.f32 %v2858, %v3516
  %v3981 = vadd.f32 %v2872, %v3540
  %v3982 = vadd.f32 %v2880, %v3554
  %v3983 = vadd.f32 %v2882, %v3562
  %v3984 = vadd.f32 %v2865, %v3564
  %v3985 = vadd.f32 %v2879, %v3547
  %v3986 = vadd.f32 %v2881, %v3561
  %v3987 = vadd.f32 %v2883, %v3563
  %v4340 = vcombine.low %v3612, %v3613
  %v4341 = vcombine.low %v3614, %v3615
  %v4342 = vcombine.low %v3616, %v3617
  %v4343 = vcombine.low %v3618, %v3619
  %v4345 = vunpack.c.l.s4 1966171168
  %v4346 = vunpack.c.0.s8 %v4345
  %v4347 = vlaneseq
  %v4348 = vshrl.u32 %v4347, 7
  %v4349 = vsub.s32 %v4346, %v4348
  %v4350 = vrot.slane %v4340, %v4349
  %v4352 = vunpack.c.l.s4 1966171168
  %v4353 = vunpack.c.0.s8 %v4352
  %v4354 = vlaneseq
  %v4355 = vshrl.u32 %v4354, 7
  %v4356 = vsub.s32 %v4353, %v4355
  %v4357 = vrot.slane %v4341, %v4356
  %v4359 = vunpack.c.l.s4 1966171168
  %v4360 = vunpack.c.0.s8 %v4359
  %v4361 = vlaneseq
  %v4362 = vshrl.u32 %v4361, 7
  %v4363 = vsub.s32 %v4360, %v4362
  %v4364 = vrot.slane %v4342, %v4363
  %v4366 = vunpack.c.l.s4 1966171168
  %v4367 = vunpack.c.0.s8 %v4366
  %v4368 = vlaneseq
  %v4369 = vshrl.u32 %v4368, 7
  %v4370 = vsub.s32 %v4367, %v4369
  %v4371 = vrot.slane %v4343, %v4370
  %v4372 = vcombine.low %v4350, %v4357
  %v4373 = vcombine.low %v4364, %v4371
  %v4375 = vunpack.c.l.s4 1966171168
  %v4376 = vunpack.c.0.s8 %v4375
  %v4377 = vlaneseq
  %v4378 = vshrl.u32 %v4377, 7
  %v4379 = vsub.s32 %v4376, %v4378
  %v4380 = vrot.slane %v4372, %v4379
  %v4382 = vunpack.c.l.s4 1966171168
  %v4383 = vunpack.c.0.s8 %v4382
  %v4384 = vlaneseq
  %v4385 = vshrl.u32 %v4384, 7
  %v4386 = vsub.s32 %v4383, %v4385
  %v4387 = vrot.slane %v4373, %v4386
  %v4388 = vcombine.low %v4380, %v4387
  %v4389 = vcombine.low %v3620, %v3621
  %v4390 = vcombine.low %v3622, %v3623
  %v4391 = vcombine.low %v3624, %v3625
  %v4392 = vcombine.low %v3626, %v3627
  %v4394 = vunpack.c.l.s4 1966171168
  %v4395 = vunpack.c.0.s8 %v4394
  %v4396 = vlaneseq
  %v4397 = vshrl.u32 %v4396, 7
  %v4398 = vsub.s32 %v4395, %v4397
  %v4399 = vrot.slane %v4389, %v4398
  %v4401 = vunpack.c.l.s4 1966171168
  %v4402 = vunpack.c.0.s8 %v4401
  %v4403 = vlaneseq
  %v4404 = vshrl.u32 %v4403, 7
  %v4405 = vsub.s32 %v4402, %v4404
  %v4406 = vrot.slane %v4390, %v4405
  %v4408 = vunpack.c.l.s4 1966171168
  %v4409 = vunpack.c.0.s8 %v4408
  %v4410 = vlaneseq
  %v4411 = vshrl.u32 %v4410, 7
  %v4412 = vsub.s32 %v4409, %v4411
  %v4413 = vrot.slane %v4391, %v4412
  %v4415 = vunpack.c.l.s4 1966171168
  %v4416 = vunpack.c.0.s8 %v4415
  %v4417 = vlaneseq
  %v4418 = vshrl.u32 %v4417, 7
  %v4419 = vsub.s32 %v4416, %v4418
  %v4420 = vrot.slane %v4392, %v4419
  %v4421 = vcombine.low %v4399, %v4406
  %v4422 = vcombine.low %v4413, %v4420
  %v4424 = vunpack.c.l.s4 1966171168
  %v4425 = vunpack.c.0.s8 %v4424
  %v4426 = vlaneseq
  %v4427 = vshrl.u32 %v4426, 7
  %v4428 = vsub.s32 %v4425, %v4427
  %v4429 = vrot.slane %v4421, %v4428
  %v4431 = vunpack.c.l.s4 1966171168
  %v4432 = vunpack.c.0.s8 %v4431
  %v4433 = vlaneseq
  %v4434 = vshrl.u32 %v4433, 7
  %v4435 = vsub.s32 %v4432, %v4434
  %v4436 = vrot.slane %v4422, %v4435
  %v4437 = vcombine.low %v4429, %v4436
  %v4438 = vcombine.low %v3628, %v3629
  %v4439 = vcombine.low %v3630, %v3631
  %v4440 = vcombine.low %v3632, %v3633
  %v4441 = vcombine.low %v3634, %v3635
  %v4443 = vunpack.c.l.s4 1966171168
  %v4444 = vunpack.c.0.s8 %v4443
  %v4445 = vlaneseq
  %v4446 = vshrl.u32 %v4445, 7
  %v4447 = vsub.s32 %v4444, %v4446
  %v4448 = vrot.slane %v4438, %v4447
  %v4450 = vunpack.c.l.s4 1966171168
  %v4451 = vunpack.c.0.s8 %v4450
  %v4452 = vlaneseq
  %v4453 = vshrl.u32 %v4452, 7
  %v4454 = vsub.s32 %v4451, %v4453
  %v4455 = vrot.slane %v4439, %v4454
  %v4457 = vunpack.c.l.s4 1966171168
  %v4458 = vunpack.c.0.s8 %v4457
  %v4459 = vlaneseq
  %v4460 = vshrl.u32 %v4459, 7
  %v4461 = vsub.s32 %v4458, %v4460
  %v4462 = vrot.slane %v4440, %v4461
  %v4464 = vunpack.c.l.s4 1966171168
  %v4465 = vunpack.c.0.s8 %v4464
  %v4466 = vlaneseq
  %v4467 = vshrl.u32 %v4466, 7
  %v4468 = vsub.s32 %v4465, %v4467
  %v4469 = vrot.slane %v4441, %v4468
  %v4470 = vcombine.low %v4448, %v4455
  %v4471 = vcombine.low %v4462, %v4469
  %v4473 = vunpack.c.l.s4 1966171168
  %v4474 = vunpack.c.0.s8 %v4473
  %v4475 = vlaneseq
  %v4476 = vshrl.u32 %v4475, 7
  %v4477 = vsub.s32 %v4474, %v4476
  %v4478 = vrot.slane %v4470, %v4477
  %v4480 = vunpack.c.l.s4 1966171168
  %v4481 = vunpack.c.0.s8 %v4480
  %v4482 = vlaneseq
  %v4483 = vshrl.u32 %v4482, 7
  %v4484 = vsub.s32 %v4481, %v4483
  %v4485 = vrot.slane %v4471, %v4484
  %v4486 = vcombine.low %v4478, %v4485
  %v4487 = vcombine.low %v3636, %v3637
  %v4488 = vcombine.low %v3638, %v3639
  %v4489 = vcombine.low %v3640, %v3641
  %v4490 = vcombine.low %v3642, %v3643
  %v4492 = vunpack.c.l.s4 1966171168
  %v4493 = vunpack.c.0.s8 %v4492
  %v4494 = vlaneseq
  %v4495 = vshrl.u32 %v4494, 7
  %v4496 = vsub.s32 %v4493, %v4495
  %v4497 = vrot.slane %v4487, %v4496
  %v4499 = vunpack.c.l.s4 1966171168
  %v4500 = vunpack.c.0.s8 %v4499
  %v4501 = vlaneseq
  %v4502 = vshrl.u32 %v4501, 7
  %v4503 = vsub.s32 %v4500, %v4502
  %v4504 = vrot.slane %v4488, %v4503
  %v4506 = vunpack.c.l.s4 1966171168
  %v4507 = vunpack.c.0.s8 %v4506
  %v4508 = vlaneseq
  %v4509 = vshrl.u32 %v4508, 7
  %v4510 = vsub.s32 %v4507, %v4509
  %v4511 = vrot.slane %v4489, %v4510
  %v4513 = vunpack.c.l.s4 1966171168
  %v4514 = vunpack.c.0.s8 %v4513
  %v4515 = vlaneseq
  %v4516 = vshrl.u32 %v4515, 7
  %v4517 = vsub.s32 %v4514, %v4516
  %v4518 = vrot.slane %v4490, %v4517
  %v4519 = vcombine.low %v4497, %v4504
  %v4520 = vcombine.low %v4511, %v4518
  %v4522 = vunpack.c.l.s4 1966171168
  %v4523 = vunpack.c.0.s8 %v4522
  %v4524 = vlaneseq
  %v4525 = vshrl.u32 %v4524, 7
  %v4526 = vsub.s32 %v4523, %v4525
  %v4527 = vrot.slane %v4519, %v4526
  %v4529 = vunpack.c.l.s4 1966171168
  %v4530 = vunpack.c.0.s8 %v4529
  %v4531 = vlaneseq
  %v4532 = vshrl.u32 %v4531, 7
  %v4533 = vsub.s32 %v4530, %v4532
  %v4534 = vrot.slane %v4520, %v4533
  %v4535 = vcombine.low %v4527, %v4534
  %v4536 = vcombine.low %v3644, %v3645
  %v4537 = vcombine.low %v3646, %v3647
  %v4538 = vcombine.low %v3648, %v3649
  %v4539 = vcombine.low %v3650, %v3651
  %v4541 = vunpack.c.l.s4 1966171168
  %v4542 = vunpack.c.0.s8 %v4541
  %v4543 = vlaneseq
  %v4544 = vshrl.u32 %v4543, 7
  %v4545 = vsub.s32 %v4542, %v4544
  %v4546 = vrot.slane %v4536, %v4545
  %v4548 = vunpack.c.l.s4 1966171168
  %v4549 = vunpack.c.0.s8 %v4548
  %v4550 = vlaneseq
  %v4551 = vshrl.u32 %v4550, 7
  %v4552 = vsub.s32 %v4549, %v4551
  %v4553 = vrot.slane %v4537, %v4552
  %v4555 = vunpack.c.l.s4 1966171168
  %v4556 = vunpack.c.0.s8 %v4555
  %v4557 = vlaneseq
  %v4558 = vshrl.u32 %v4557, 7
  %v4559 = vsub.s32 %v4556, %v4558
  %v4560 = vrot.slane %v4538, %v4559
  %v4562 = vunpack.c.l.s4 1966171168
  %v4563 = vunpack.c.0.s8 %v4562
  %v4564 = vlaneseq
  %v4565 = vshrl.u32 %v4564, 7
  %v4566 = vsub.s32 %v4563, %v4565
  %v4567 = vrot.slane %v4539, %v4566
  %v4568 = vcombine.low %v4546, %v4553
  %v4569 = vcombine.low %v4560, %v4567
  %v4571 = vunpack.c.l.s4 1966171168
  %v4572 = vunpack.c.0.s8 %v4571
  %v4573 = vlaneseq
  %v4574 = vshrl.u32 %v4573, 7
  %v4575 = vsub.s32 %v4572, %v4574
  %v4576 = vrot.slane %v4568, %v4575
  %v4578 = vunpack.c.l.s4 1966171168
  %v4579 = vunpack.c.0.s8 %v4578
  %v4580 = vlaneseq
  %v4581 = vshrl.u32 %v4580, 7
  %v4582 = vsub.s32 %v4579, %v4581
  %v4583 = vrot.slane %v4569, %v4582
  %v4584 = vcombine.low %v4576, %v4583
  %v4585 = vcombine.low %v3652, %v3653
  %v4586 = vcombine.low %v3654, %v3655
  %v4588 = vunpack.c.l.s4 1966171168
  %v4589 = vunpack.c.0.s8 %v4588
  %v4590 = vlaneseq
  %v4591 = vshrl.u32 %v4590, 7
  %v4592 = vsub.s32 %v4589, %v4591
  %v4593 = vrot.slane %v4585, %v4592
  %v4595 = vunpack.c.l.s4 1966171168
  %v4596 = vunpack.c.0.s8 %v4595
  %v4597 = vlaneseq
  %v4598 = vshrl.u32 %v4597, 7
  %v4599 = vsub.s32 %v4596, %v4598
  %v4600 = vrot.slane %v4586, %v4599
  %v4601 = vcombine.low %v4593, %v4600
  %v4603 = vunpack.c.l.s4 1966171168
  %v4604 = vunpack.c.0.s8 %v4603
  %v4605 = vlaneseq
  %v4606 = vshrl.u32 %v4605, 7
  %v4607 = vsub.s32 %v4604, %v4606
  %v4608 = vrot.slane %v4601, %v4607
  %v4609 = vcombine.low %v3659, %v3660
  %v4610 = vcombine.low %v3661, %v3662
  %v4611 = vcombine.low %v3663, %v3664
  %v4612 = vcombine.low %v3665, %v3666
  %v4614 = vunpack.c.l.s4 1966171168
  %v4615 = vunpack.c.0.s8 %v4614
  %v4616 = vlaneseq
  %v4617 = vshrl.u32 %v4616, 7
  %v4618 = vsub.s32 %v4615, %v4617
  %v4619 = vrot.slane %v4609, %v4618
  %v4621 = vunpack.c.l.s4 1966171168
  %v4622 = vunpack.c.0.s8 %v4621
  %v4623 = vlaneseq
  %v4624 = vshrl.u32 %v4623, 7
  %v4625 = vsub.s32 %v4622, %v4624
  %v4626 = vrot.slane %v4610, %v4625
  %v4628 = vunpack.c.l.s4 1966171168
  %v4629 = vunpack.c.0.s8 %v4628
  %v4630 = vlaneseq
  %v4631 = vshrl.u32 %v4630, 7
  %v4632 = vsub.s32 %v4629, %v4631
  %v4633 = vrot.slane %v4611, %v4632
  %v4635 = vunpack.c.l.s4 1966171168
  %v4636 = vunpack.c.0.s8 %v4635
  %v4637 = vlaneseq
  %v4638 = vshrl.u32 %v4637, 7
  %v4639 = vsub.s32 %v4636, %v4638
  %v4640 = vrot.slane %v4612, %v4639
  %v4641 = vcombine.low %v4619, %v4626
  %v4642 = vcombine.low %v4633, %v4640
  %v4644 = vunpack.c.l.s4 1966171168
  %v4645 = vunpack.c.0.s8 %v4644
  %v4646 = vlaneseq
  %v4647 = vshrl.u32 %v4646, 7
  %v4648 = vsub.s32 %v4645, %v4647
  %v4649 = vrot.slane %v4641, %v4648
  %v4651 = vunpack.c.l.s4 1966171168
  %v4652 = vunpack.c.0.s8 %v4651
  %v4653 = vlaneseq
  %v4654 = vshrl.u32 %v4653, 7
  %v4655 = vsub.s32 %v4652, %v4654
  %v4656 = vrot.slane %v4642, %v4655
  %v4657 = vcombine.low %v4649, %v4656
  %v4658 = vcombine.low %v3667, %v3668
  %v4659 = vcombine.low %v3669, %v3670
  %v4660 = vcombine.low %v3671, %v3672
  %v4661 = vcombine.low %v3673, %v3674
  %v4663 = vunpack.c.l.s4 1966171168
  %v4664 = vunpack.c.0.s8 %v4663
  %v4665 = vlaneseq
  %v4666 = vshrl.u32 %v4665, 7
  %v4667 = vsub.s32 %v4664, %v4666
  %v4668 = vrot.slane %v4658, %v4667
  %v4670 = vunpack.c.l.s4 1966171168
  %v4671 = vunpack.c.0.s8 %v4670
  %v4672 = vlaneseq
  %v4673 = vshrl.u32 %v4672, 7
  %v4674 = vsub.s32 %v4671, %v4673
  %v4675 = vrot.slane %v4659, %v4674
  %v4677 = vunpack.c.l.s4 1966171168
  %v4678 = vunpack.c.0.s8 %v4677
  %v4679 = vlaneseq
  %v4680 = vshrl.u32 %v4679, 7
  %v4681 = vsub.s32 %v4678, %v4680
  %v4682 = vrot.slane %v4660, %v4681
  %v4684 = vunpack.c.l.s4 1966171168
  %v4685 = vunpack.c.0.s8 %v4684
  %v4686 = vlaneseq
  %v4687 = vshrl.u32 %v4686, 7
  %v4688 = vsub.s32 %v4685, %v4687
  %v4689 = vrot.slane %v4661, %v4688
  %v4690 = vcombine.low %v4668, %v4675
  %v4691 = vcombine.low %v4682, %v4689
  %v4693 = vunpack.c.l.s4 1966171168
  %v4694 = vunpack.c.0.s8 %v4693
  %v4695 = vlaneseq
  %v4696 = vshrl.u32 %v4695, 7
  %v4697 = vsub.s32 %v4694, %v4696
  %v4698 = vrot.slane %v4690, %v4697
  %v4700 = vunpack.c.l.s4 1966171168
  %v4701 = vunpack.c.0.s8 %v4700
  %v4702 = vlaneseq
  %v4703 = vshrl.u32 %v4702, 7
  %v4704 = vsub.s32 %v4701, %v4703
  %v4705 = vrot.slane %v4691, %v4704
  %v4706 = vcombine.low %v4698, %v4705
  %v4707 = vcombine.low %v3675, %v3676
  %v4708 = vcombine.low %v3677, %v3678
  %v4709 = vcombine.low %v3679, %v3680
  %v4710 = vcombine.low %v3681, %v3682
  %v4712 = vunpack.c.l.s4 1966171168
  %v4713 = vunpack.c.0.s8 %v4712
  %v4714 = vlaneseq
  %v4715 = vshrl.u32 %v4714, 7
  %v4716 = vsub.s32 %v4713, %v4715
  %v4717 = vrot.slane %v4707, %v4716
  %v4719 = vunpack.c.l.s4 1966171168
  %v4720 = vunpack.c.0.s8 %v4719
  %v4721 = vlaneseq
  %v4722 = vshrl.u32 %v4721, 7
  %v4723 = vsub.s32 %v4720, %v4722
  %v4724 = vrot.slane %v4708, %v4723
  %v4726 = vunpack.c.l.s4 1966171168
  %v4727 = vunpack.c.0.s8 %v4726
  %v4728 = vlaneseq
  %v4729 = vshrl.u32 %v4728, 7
  %v4730 = vsub.s32 %v4727, %v4729
  %v4731 = vrot.slane %v4709, %v4730
  %v4733 = vunpack.c.l.s4 1966171168
  %v4734 = vunpack.c.0.s8 %v4733
  %v4735 = vlaneseq
  %v4736 = vshrl.u32 %v4735, 7
  %v4737 = vsub.s32 %v4734, %v4736
  %v4738 = vrot.slane %v4710, %v4737
  %v4739 = vcombine.low %v4717, %v4724
  %v4740 = vcombine.low %v4731, %v4738
  %v4742 = vunpack.c.l.s4 1966171168
  %v4743 = vunpack.c.0.s8 %v4742
  %v4744 = vlaneseq
  %v4745 = vshrl.u32 %v4744, 7
  %v4746 = vsub.s32 %v4743, %v4745
  %v4747 = vrot.slane %v4739, %v4746
  %v4749 = vunpack.c.l.s4 1966171168
  %v4750 = vunpack.c.0.s8 %v4749
  %v4751 = vlaneseq
  %v4752 = vshrl.u32 %v4751, 7
  %v4753 = vsub.s32 %v4750, %v4752
  %v4754 = vrot.slane %v4740, %v4753
  %v4755 = vcombine.low %v4747, %v4754
  %v4756 = vcombine.low %v3683, %v3684
  %v4757 = vcombine.low %v3685, %v3686
  %v4758 = vcombine.low %v3687, %v3688
  %v4759 = vcombine.low %v3689, %v3690
  %v4761 = vunpack.c.l.s4 1966171168
  %v4762 = vunpack.c.0.s8 %v4761
  %v4763 = vlaneseq
  %v4764 = vshrl.u32 %v4763, 7
  %v4765 = vsub.s32 %v4762, %v4764
  %v4766 = vrot.slane %v4756, %v4765
  %v4768 = vunpack.c.l.s4 1966171168
  %v4769 = vunpack.c.0.s8 %v4768
  %v4770 = vlaneseq
  %v4771 = vshrl.u32 %v4770, 7
  %v4772 = vsub.s32 %v4769, %v4771
  %v4773 = vrot.slane %v4757, %v4772
  %v4775 = vunpack.c.l.s4 1966171168
  %v4776 = vunpack.c.0.s8 %v4775
  %v4777 = vlaneseq
  %v4778 = vshrl.u32 %v4777, 7
  %v4779 = vsub.s32 %v4776, %v4778
  %v4780 = vrot.slane %v4758, %v4779
  %v4782 = vunpack.c.l.s4 1966171168
  %v4783 = vunpack.c.0.s8 %v4782
  %v4784 = vlaneseq
  %v4785 = vshrl.u32 %v4784, 7
  %v4786 = vsub.s32 %v4783, %v4785
  %v4787 = vrot.slane %v4759, %v4786
  %v4788 = vcombine.low %v4766, %v4773
  %v4789 = vcombine.low %v4780, %v4787
  %v4791 = vunpack.c.l.s4 1966171168
  %v4792 = vunpack.c.0.s8 %v4791
  %v4793 = vlaneseq
  %v4794 = vshrl.u32 %v4793, 7
  %v4795 = vsub.s32 %v4792, %v4794
  %v4796 = vrot.slane %v4788, %v4795
  %v4798 = vunpack.c.l.s4 1966171168
  %v4799 = vunpack.c.0.s8 %v4798
  %v4800 = vlaneseq
  %v4801 = vshrl.u32 %v4800, 7
  %v4802 = vsub.s32 %v4799, %v4801
  %v4803 = vrot.slane %v4789, %v4802
  %v4804 = vcombine.low %v4796, %v4803
  %v4805 = vcombine.low %v3691, %v3692
  %v4806 = vcombine.low %v3693, %v3694
  %v4807 = vcombine.low %v3695, %v3696
  %v4808 = vcombine.low %v3697, %v3698
  %v4810 = vunpack.c.l.s4 1966171168
  %v4811 = vunpack.c.0.s8 %v4810
  %v4812 = vlaneseq
  %v4813 = vshrl.u32 %v4812, 7
  %v4814 = vsub.s32 %v4811, %v4813
  %v4815 = vrot.slane %v4805, %v4814
  %v4817 = vunpack.c.l.s4 1966171168
  %v4818 = vunpack.c.0.s8 %v4817
  %v4819 = vlaneseq
  %v4820 = vshrl.u32 %v4819, 7
  %v4821 = vsub.s32 %v4818, %v4820
  %v4822 = vrot.slane %v4806, %v4821
  %v4824 = vunpack.c.l.s4 1966171168
  %v4825 = vunpack.c.0.s8 %v4824
  %v4826 = vlaneseq
  %v4827 = vshrl.u32 %v4826, 7
  %v4828 = vsub.s32 %v4825, %v4827
  %v4829 = vrot.slane %v4807, %v4828
  %v4831 = vunpack.c.l.s4 1966171168
  %v4832 = vunpack.c.0.s8 %v4831
  %v4833 = vlaneseq
  %v4834 = vshrl.u32 %v4833, 7
  %v4835 = vsub.s32 %v4832, %v4834
  %v4836 = vrot.slane %v4808, %v4835
  %v4837 = vcombine.low %v4815, %v4822
  %v4838 = vcombine.low %v4829, %v4836
  %v4840 = vunpack.c.l.s4 1966171168
  %v4841 = vunpack.c.0.s8 %v4840
  %v4842 = vlaneseq
  %v4843 = vshrl.u32 %v4842, 7
  %v4844 = vsub.s32 %v4841, %v4843
  %v4845 = vrot.slane %v4837, %v4844
  %v4847 = vunpack.c.l.s4 1966171168
  %v4848 = vunpack.c.0.s8 %v4847
  %v4849 = vlaneseq
  %v4850 = vshrl.u32 %v4849, 7
  %v4851 = vsub.s32 %v4848, %v4850
  %v4852 = vrot.slane %v4838, %v4851
  %v4853 = vcombine.low %v4845, %v4852
  %v4854 = vcombine.low %v3699, %v3700
  %v4855 = vcombine.low %v3701, %v3702
  %v4857 = vunpack.c.l.s4 1966171168
  %v4858 = vunpack.c.0.s8 %v4857
  %v4859 = vlaneseq
  %v4860 = vshrl.u32 %v4859, 7
  %v4861 = vsub.s32 %v4858, %v4860
  %v4862 = vrot.slane %v4854, %v4861
  %v4864 = vunpack.c.l.s4 1966171168
  %v4865 = vunpack.c.0.s8 %v4864
  %v4866 = vlaneseq
  %v4867 = vshrl.u32 %v4866, 7
  %v4868 = vsub.s32 %v4865, %v4867
  %v4869 = vrot.slane %v4855, %v4868
  %v4870 = vcombine.low %v4862, %v4869
  %v4872 = vunpack.c.l.s4 1966171168
  %v4873 = vunpack.c.0.s8 %v4872
  %v4874 = vlaneseq
  %v4875 = vshrl.u32 %v4874, 7
  %v4876 = vsub.s32 %v4873, %v4875
  %v4877 = vrot.slane %v4870, %v4876
  %v4878 = vcombine.low %v3706, %v3707
  %v4879 = vcombine.low %v3708, %v3709
  %v4880 = vcombine.low %v3710, %v3711
  %v4881 = vcombine.low %v3712, %v3713
  %v4883 = vunpack.c.l.s4 1966171168
  %v4884 = vunpack.c.0.s8 %v4883
  %v4885 = vlaneseq
  %v4886 = vshrl.u32 %v4885, 7
  %v4887 = vsub.s32 %v4884, %v4886
  %v4888 = vrot.slane %v4878, %v4887
  %v4890 = vunpack.c.l.s4 1966171168
  %v4891 = vunpack.c.0.s8 %v4890
  %v4892 = vlaneseq
  %v4893 = vshrl.u32 %v4892, 7
  %v4894 = vsub.s32 %v4891, %v4893
  %v4895 = vrot.slane %v4879, %v4894
  %v4897 = vunpack.c.l.s4 1966171168
  %v4898 = vunpack.c.0.s8 %v4897
  %v4899 = vlaneseq
  %v4900 = vshrl.u32 %v4899, 7
  %v4901 = vsub.s32 %v4898, %v4900
  %v4902 = vrot.slane %v4880, %v4901
  %v4904 = vunpack.c.l.s4 1966171168
  %v4905 = vunpack.c.0.s8 %v4904
  %v4906 = vlaneseq
  %v4907 = vshrl.u32 %v4906, 7
  %v4908 = vsub.s32 %v4905, %v4907
  %v4909 = vrot.slane %v4881, %v4908
  %v4910 = vcombine.low %v4888, %v4895
  %v4911 = vcombine.low %v4902, %v4909
  %v4913 = vunpack.c.l.s4 1966171168
  %v4914 = vunpack.c.0.s8 %v4913
  %v4915 = vlaneseq
  %v4916 = vshrl.u32 %v4915, 7
  %v4917 = vsub.s32 %v4914, %v4916
  %v4918 = vrot.slane %v4910, %v4917
  %v4920 = vunpack.c.l.s4 1966171168
  %v4921 = vunpack.c.0.s8 %v4920
  %v4922 = vlaneseq
  %v4923 = vshrl.u32 %v4922, 7
  %v4924 = vsub.s32 %v4921, %v4923
  %v4925 = vrot.slane %v4911, %v4924
  %v4926 = vcombine.low %v4918, %v4925
  %v4927 = vcombine.low %v3714, %v3715
  %v4928 = vcombine.low %v3716, %v3717
  %v4929 = vcombine.low %v3718, %v3719
  %v4930 = vcombine.low %v3720, %v3721
  %v4932 = vunpack.c.l.s4 1966171168
  %v4933 = vunpack.c.0.s8 %v4932
  %v4934 = vlaneseq
  %v4935 = vshrl.u32 %v4934, 7
  %v4936 = vsub.s32 %v4933, %v4935
  %v4937 = vrot.slane %v4927, %v4936
  %v4939 = vunpack.c.l.s4 1966171168
  %v4940 = vunpack.c.0.s8 %v4939
  %v4941 = vlaneseq
  %v4942 = vshrl.u32 %v4941, 7
  %v4943 = vsub.s32 %v4940, %v4942
  %v4944 = vrot.slane %v4928, %v4943
  %v4946 = vunpack.c.l.s4 1966171168
  %v4947 = vunpack.c.0.s8 %v4946
  %v4948 = vlaneseq
  %v4949 = vshrl.u32 %v4948, 7
  %v4950 = vsub.s32 %v4947, %v4949
  %v4951 = vrot.slane %v4929, %v4950
  %v4953 = vunpack.c.l.s4 1966171168
  %v4954 = vunpack.c.0.s8 %v4953
  %v4955 = vlaneseq
  %v4956 = vshrl.u32 %v4955, 7
  %v4957 = vsub.s32 %v4954, %v4956
  %v4958 = vrot.slane %v4930, %v4957
  %v4959 = vcombine.low %v4937, %v4944
  %v4960 = vcombine.low %v4951, %v4958
  %v4962 = vunpack.c.l.s4 1966171168
  %v4963 = vunpack.c.0.s8 %v4962
  %v4964 = vlaneseq
  %v4965 = vshrl.u32 %v4964, 7
  %v4966 = vsub.s32 %v4963, %v4965
  %v4967 = vrot.slane %v4959, %v4966
  %v4969 = vunpack.c.l.s4 1966171168
  %v4970 = vunpack.c.0.s8 %v4969
  %v4971 = vlaneseq
  %v4972 = vshrl.u32 %v4971, 7
  %v4973 = vsub.s32 %v4970, %v4972
  %v4974 = vrot.slane %v4960, %v4973
  %v4975 = vcombine.low %v4967, %v4974
  %v4976 = vcombine.low %v3722, %v3723
  %v4977 = vcombine.low %v3724, %v3725
  %v4978 = vcombine.low %v3726, %v3727
  %v4979 = vcombine.low %v3728, %v3729
  %v4981 = vunpack.c.l.s4 1966171168
  %v4982 = vunpack.c.0.s8 %v4981
  %v4983 = vlaneseq
  %v4984 = vshrl.u32 %v4983, 7
  %v4985 = vsub.s32 %v4982, %v4984
  %v4986 = vrot.slane %v4976, %v4985
  %v4988 = vunpack.c.l.s4 1966171168
  %v4989 = vunpack.c.0.s8 %v4988
  %v4990 = vlaneseq
  %v4991 = vshrl.u32 %v4990, 7
  %v4992 = vsub.s32 %v4989, %v4991
  %v4993 = vrot.slane %v4977, %v4992
  %v4995 = vunpack.c.l.s4 1966171168
  %v4996 = vunpack.c.0.s8 %v4995
  %v4997 = vlaneseq
  %v4998 = vshrl.u32 %v4997, 7
  %v4999 = vsub.s32 %v4996, %v4998
  %v5000 = vrot.slane %v4978, %v4999
  %v5002 = vunpack.c.l.s4 1966171168
  %v5003 = vunpack.c.0.s8 %v5002
  %v5004 = vlaneseq
  %v5005 = vshrl.u32 %v5004, 7
  %v5006 = vsub.s32 %v5003, %v5005
  %v5007 = vrot.slane %v4979, %v5006
  %v5008 = vcombine.low %v4986, %v4993
  %v5009 = vcombine.low %v5000, %v5007
  %v5011 = vunpack.c.l.s4 1966171168
  %v5012 = vunpack.c.0.s8 %v5011
  %v5013 = vlaneseq
  %v5014 = vshrl.u32 %v5013, 7
  %v5015 = vsub.s32 %v5012, %v5014
  %v5016 = vrot.slane %v5008, %v5015
  %v5018 = vunpack.c.l.s4 1966171168
  %v5019 = vunpack.c.0.s8 %v5018
  %v5020 = vlaneseq
  %v5021 = vshrl.u32 %v5020, 7
  %v5022 = vsub.s32 %v5019, %v5021
  %v5023 = vrot.slane %v5009, %v5022
  %v5024 = vcombine.low %v5016, %v5023
  %v5025 = vcombine.low %v3730, %v3731
  %v5026 = vcombine.low %v3732, %v3733
  %v5027 = vcombine.low %v3734, %v3735
  %v5028 = vcombine.low %v3736, %v3737
  %v5030 = vunpack.c.l.s4 1966171168
  %v5031 = vunpack.c.0.s8 %v5030
  %v5032 = vlaneseq
  %v5033 = vshrl.u32 %v5032, 7
  %v5034 = vsub.s32 %v5031, %v5033
  %v5035 = vrot.slane %v5025, %v5034
  %v5037 = vunpack.c.l.s4 1966171168
  %v5038 = vunpack.c.0.s8 %v5037
  %v5039 = vlaneseq
  %v5040 = vshrl.u32 %v5039, 7
  %v5041 = vsub.s32 %v5038, %v5040
  %v5042 = vrot.slane %v5026, %v5041
  %v5044 = vunpack.c.l.s4 1966171168
  %v5045 = vunpack.c.0.s8 %v5044
  %v5046 = vlaneseq
  %v5047 = vshrl.u32 %v5046, 7
  %v5048 = vsub.s32 %v5045, %v5047
  %v5049 = vrot.slane %v5027, %v5048
  %v5051 = vunpack.c.l.s4 1966171168
  %v5052 = vunpack.c.0.s8 %v5051
  %v5053 = vlaneseq
  %v5054 = vshrl.u32 %v5053, 7
  %v5055 = vsub.s32 %v5052, %v5054
  %v5056 = vrot.slane %v5028, %v5055
  %v5057 = vcombine.low %v5035, %v5042
  %v5058 = vcombine.low %v5049, %v5056
  %v5060 = vunpack.c.l.s4 1966171168
  %v5061 = vunpack.c.0.s8 %v5060
  %v5062 = vlaneseq
  %v5063 = vshrl.u32 %v5062, 7
  %v5064 = vsub.s32 %v5061, %v5063
  %v5065 = vrot.slane %v5057, %v5064
  %v5067 = vunpack.c.l.s4 1966171168
  %v5068 = vunpack.c.0.s8 %v5067
  %v5069 = vlaneseq
  %v5070 = vshrl.u32 %v5069, 7
  %v5071 = vsub.s32 %v5068, %v5070
  %v5072 = vrot.slane %v5058, %v5071
  %v5073 = vcombine.low %v5065, %v5072
  %v5074 = vcombine.low %v3738, %v3739
  %v5075 = vcombine.low %v3740, %v3741
  %v5076 = vcombine.low %v3742, %v3743
  %v5077 = vcombine.low %v3744, %v3745
  %v5079 = vunpack.c.l.s4 1966171168
  %v5080 = vunpack.c.0.s8 %v5079
  %v5081 = vlaneseq
  %v5082 = vshrl.u32 %v5081, 7
  %v5083 = vsub.s32 %v5080, %v5082
  %v5084 = vrot.slane %v5074, %v5083
  %v5086 = vunpack.c.l.s4 1966171168
  %v5087 = vunpack.c.0.s8 %v5086
  %v5088 = vlaneseq
  %v5089 = vshrl.u32 %v5088, 7
  %v5090 = vsub.s32 %v5087, %v5089
  %v5091 = vrot.slane %v5075, %v5090
  %v5093 = vunpack.c.l.s4 1966171168
  %v5094 = vunpack.c.0.s8 %v5093
  %v5095 = vlaneseq
  %v5096 = vshrl.u32 %v5095, 7
  %v5097 = vsub.s32 %v5094, %v5096
  %v5098 = vrot.slane %v5076, %v5097
  %v5100 = vunpack.c.l.s4 1966171168
  %v5101 = vunpack.c.0.s8 %v5100
  %v5102 = vlaneseq
  %v5103 = vshrl.u32 %v5102, 7
  %v5104 = vsub.s32 %v5101, %v5103
  %v5105 = vrot.slane %v5077, %v5104
  %v5106 = vcombine.low %v5084, %v5091
  %v5107 = vcombine.low %v5098, %v5105
  %v5109 = vunpack.c.l.s4 1966171168
  %v5110 = vunpack.c.0.s8 %v5109
  %v5111 = vlaneseq
  %v5112 = vshrl.u32 %v5111, 7
  %v5113 = vsub.s32 %v5110, %v5112
  %v5114 = vrot.slane %v5106, %v5113
  %v5116 = vunpack.c.l.s4 1966171168
  %v5117 = vunpack.c.0.s8 %v5116
  %v5118 = vlaneseq
  %v5119 = vshrl.u32 %v5118, 7
  %v5120 = vsub.s32 %v5117, %v5119
  %v5121 = vrot.slane %v5107, %v5120
  %v5122 = vcombine.low %v5114, %v5121
  %v5123 = vcombine.low %v3746, %v3747
  %v5124 = vcombine.low %v3748, %v3749
  %v5126 = vunpack.c.l.s4 1966171168
  %v5127 = vunpack.c.0.s8 %v5126
  %v5128 = vlaneseq
  %v5129 = vshrl.u32 %v5128, 7
  %v5130 = vsub.s32 %v5127, %v5129
  %v5131 = vrot.slane %v5123, %v5130
  %v5133 = vunpack.c.l.s4 1966171168
  %v5134 = vunpack.c.0.s8 %v5133
  %v5135 = vlaneseq
  %v5136 = vshrl.u32 %v5135, 7
  %v5137 = vsub.s32 %v5134, %v5136
  %v5138 = vrot.slane %v5124, %v5137
  %v5139 = vcombine.low %v5131, %v5138
  %v5141 = vunpack.c.l.s4 1966171168
  %v5142 = vunpack.c.0.s8 %v5141
  %v5143 = vlaneseq
  %v5144 = vshrl.u32 %v5143, 7
  %v5145 = vsub.s32 %v5142, %v5144
  %v5146 = vrot.slane %v5139, %v5145
  %v5147 = vcombine.low %v3753, %v3754
  %v5148 = vcombine.low %v3755, %v3756
  %v5149 = vcombine.low %v3757, %v3758
  %v5150 = vcombine.low %v3759, %v3760
  %v5152 = vunpack.c.l.s4 1966171168
  %v5153 = vunpack.c.0.s8 %v5152
  %v5154 = vlaneseq
  %v5155 = vshrl.u32 %v5154, 7
  %v5156 = vsub.s32 %v5153, %v5155
  %v5157 = vrot.slane %v5147, %v5156
  %v5159 = vunpack.c.l.s4 1966171168
  %v5160 = vunpack.c.0.s8 %v5159
  %v5161 = vlaneseq
  %v5162 = vshrl.u32 %v5161, 7
  %v5163 = vsub.s32 %v5160, %v5162
  %v5164 = vrot.slane %v5148, %v5163
  %v5166 = vunpack.c.l.s4 1966171168
  %v5167 = vunpack.c.0.s8 %v5166
  %v5168 = vlaneseq
  %v5169 = vshrl.u32 %v5168, 7
  %v5170 = vsub.s32 %v5167, %v5169
  %v5171 = vrot.slane %v5149, %v5170
  %v5173 = vunpack.c.l.s4 1966171168
  %v5174 = vunpack.c.0.s8 %v5173
  %v5175 = vlaneseq
  %v5176 = vshrl.u32 %v5175, 7
  %v5177 = vsub.s32 %v5174, %v5176
  %v5178 = vrot.slane %v5150, %v5177
  %v5179 = vcombine.low %v5157, %v5164
  %v5180 = vcombine.low %v5171, %v5178
  %v5182 = vunpack.c.l.s4 1966171168
  %v5183 = vunpack.c.0.s8 %v5182
  %v5184 = vlaneseq
  %v5185 = vshrl.u32 %v5184, 7
  %v5186 = vsub.s32 %v5183, %v5185
  %v5187 = vrot.slane %v5179, %v5186
  %v5189 = vunpack.c.l.s4 1966171168
  %v5190 = vunpack.c.0.s8 %v5189
  %v5191 = vlaneseq
  %v5192 = vshrl.u32 %v5191, 7
  %v5193 = vsub.s32 %v5190, %v5192
  %v5194 = vrot.slane %v5180, %v5193
  %v5195 = vcombine.low %v5187, %v5194
  %v5196 = vcombine.low %v3761, %v3762
  %v5197 = vcombine.low %v3763, %v3764
  %v5198 = vcombine.low %v3765, %v3766
  %v5199 = vcombine.low %v3767, %v3768
  %v5201 = vunpack.c.l.s4 1966171168
  %v5202 = vunpack.c.0.s8 %v5201
  %v5203 = vlaneseq
  %v5204 = vshrl.u32 %v5203, 7
  %v5205 = vsub.s32 %v5202, %v5204
  %v5206 = vrot.slane %v5196, %v5205
  %v5208 = vunpack.c.l.s4 1966171168
  %v5209 = vunpack.c.0.s8 %v5208
  %v5210 = vlaneseq
  %v5211 = vshrl.u32 %v5210, 7
  %v5212 = vsub.s32 %v5209, %v5211
  %v5213 = vrot.slane %v5197, %v5212
  %v5215 = vunpack.c.l.s4 1966171168
  %v5216 = vunpack.c.0.s8 %v5215
  %v5217 = vlaneseq
  %v5218 = vshrl.u32 %v5217, 7
  %v5219 = vsub.s32 %v5216, %v5218
  %v5220 = vrot.slane %v5198, %v5219
  %v5222 = vunpack.c.l.s4 1966171168
  %v5223 = vunpack.c.0.s8 %v5222
  %v5224 = vlaneseq
  %v5225 = vshrl.u32 %v5224, 7
  %v5226 = vsub.s32 %v5223, %v5225
  %v5227 = vrot.slane %v5199, %v5226
  %v5228 = vcombine.low %v5206, %v5213
  %v5229 = vcombine.low %v5220, %v5227
  %v5231 = vunpack.c.l.s4 1966171168
  %v5232 = vunpack.c.0.s8 %v5231
  %v5233 = vlaneseq
  %v5234 = vshrl.u32 %v5233, 7
  %v5235 = vsub.s32 %v5232, %v5234
  %v5236 = vrot.slane %v5228, %v5235
  %v5238 = vunpack.c.l.s4 1966171168
  %v5239 = vunpack.c.0.s8 %v5238
  %v5240 = vlaneseq
  %v5241 = vshrl.u32 %v5240, 7
  %v5242 = vsub.s32 %v5239, %v5241
  %v5243 = vrot.slane %v5229, %v5242
  %v5244 = vcombine.low %v5236, %v5243
  %v5245 = vcombine.low %v3769, %v3770
  %v5246 = vcombine.low %v3771, %v3772
  %v5247 = vcombine.low %v3773, %v3774
  %v5248 = vcombine.low %v3775, %v3776
  %v5250 = vunpack.c.l.s4 1966171168
  %v5251 = vunpack.c.0.s8 %v5250
  %v5252 = vlaneseq
  %v5253 = vshrl.u32 %v5252, 7
  %v5254 = vsub.s32 %v5251, %v5253
  %v5255 = vrot.slane %v5245, %v5254
  %v5257 = vunpack.c.l.s4 1966171168
  %v5258 = vunpack.c.0.s8 %v5257
  %v5259 = vlaneseq
  %v5260 = vshrl.u32 %v5259, 7
  %v5261 = vsub.s32 %v5258, %v5260
  %v5262 = vrot.slane %v5246, %v5261
  %v5264 = vunpack.c.l.s4 1966171168
  %v5265 = vunpack.c.0.s8 %v5264
  %v5266 = vlaneseq
  %v5267 = vshrl.u32 %v5266, 7
  %v5268 = vsub.s32 %v5265, %v5267
  %v5269 = vrot.slane %v5247, %v5268
  %v5271 = vunpack.c.l.s4 1966171168
  %v5272 = vunpack.c.0.s8 %v5271
  %v5273 = vlaneseq
  %v5274 = vshrl.u32 %v5273, 7
  %v5275 = vsub.s32 %v5272, %v5274
  %v5276 = vrot.slane %v5248, %v5275
  %v5277 = vcombine.low %v5255, %v5262
  %v5278 = vcombine.low %v5269, %v5276
  %v5280 = vunpack.c.l.s4 1966171168
  %v5281 = vunpack.c.0.s8 %v5280
  %v5282 = vlaneseq
  %v5283 = vshrl.u32 %v5282, 7
  %v5284 = vsub.s32 %v5281, %v5283
  %v5285 = vrot.slane %v5277, %v5284
  %v5287 = vunpack.c.l.s4 1966171168
  %v5288 = vunpack.c.0.s8 %v5287
  %v5289 = vlaneseq
  %v5290 = vshrl.u32 %v5289, 7
  %v5291 = vsub.s32 %v5288, %v5290
  %v5292 = vrot.slane %v5278, %v5291
  %v5293 = vcombine.low %v5285, %v5292
  %v5294 = vcombine.low %v3777, %v3778
  %v5295 = vcombine.low %v3779, %v3780
  %v5296 = vcombine.low %v3781, %v3782
  %v5297 = vcombine.low %v3783, %v3784
  %v5299 = vunpack.c.l.s4 1966171168
  %v5300 = vunpack.c.0.s8 %v5299
  %v5301 = vlaneseq
  %v5302 = vshrl.u32 %v5301, 7
  %v5303 = vsub.s32 %v5300, %v5302
  %v5304 = vrot.slane %v5294, %v5303
  %v5306 = vunpack.c.l.s4 1966171168
  %v5307 = vunpack.c.0.s8 %v5306
  %v5308 = vlaneseq
  %v5309 = vshrl.u32 %v5308, 7
  %v5310 = vsub.s32 %v5307, %v5309
  %v5311 = vrot.slane %v5295, %v5310
  %v5313 = vunpack.c.l.s4 1966171168
  %v5314 = vunpack.c.0.s8 %v5313
  %v5315 = vlaneseq
  %v5316 = vshrl.u32 %v5315, 7
  %v5317 = vsub.s32 %v5314, %v5316
  %v5318 = vrot.slane %v5296, %v5317
  %v5320 = vunpack.c.l.s4 1966171168
  %v5321 = vunpack.c.0.s8 %v5320
  %v5322 = vlaneseq
  %v5323 = vshrl.u32 %v5322, 7
  %v5324 = vsub.s32 %v5321, %v5323
  %v5325 = vrot.slane %v5297, %v5324
  %v5326 = vcombine.low %v5304, %v5311
  %v5327 = vcombine.low %v5318, %v5325
  %v5329 = vunpack.c.l.s4 1966171168
  %v5330 = vunpack.c.0.s8 %v5329
  %v5331 = vlaneseq
  %v5332 = vshrl.u32 %v5331, 7
  %v5333 = vsub.s32 %v5330, %v5332
  %v5334 = vrot.slane %v5326, %v5333
  %v5336 = vunpack.c.l.s4 1966171168
  %v5337 = vunpack.c.0.s8 %v5336
  %v5338 = vlaneseq
  %v5339 = vshrl.u32 %v5338, 7
  %v5340 = vsub.s32 %v5337, %v5339
  %v5341 = vrot.slane %v5327, %v5340
  %v5342 = vcombine.low %v5334, %v5341
  %v5343 = vcombine.low %v3785, %v3786
  %v5344 = vcombine.low %v3787, %v3788
  %v5345 = vcombine.low %v3789, %v3790
  %v5346 = vcombine.low %v3791, %v3792
  %v5348 = vunpack.c.l.s4 1966171168
  %v5349 = vunpack.c.0.s8 %v5348
  %v5350 = vlaneseq
  %v5351 = vshrl.u32 %v5350, 7
  %v5352 = vsub.s32 %v5349, %v5351
  %v5353 = vrot.slane %v5343, %v5352
  %v5355 = vunpack.c.l.s4 1966171168
  %v5356 = vunpack.c.0.s8 %v5355
  %v5357 = vlaneseq
  %v5358 = vshrl.u32 %v5357, 7
  %v5359 = vsub.s32 %v5356, %v5358
  %v5360 = vrot.slane %v5344, %v5359
  %v5362 = vunpack.c.l.s4 1966171168
  %v5363 = vunpack.c.0.s8 %v5362
  %v5364 = vlaneseq
  %v5365 = vshrl.u32 %v5364, 7
  %v5366 = vsub.s32 %v5363, %v5365
  %v5367 = vrot.slane %v5345, %v5366
  %v5369 = vunpack.c.l.s4 1966171168
  %v5370 = vunpack.c.0.s8 %v5369
  %v5371 = vlaneseq
  %v5372 = vshrl.u32 %v5371, 7
  %v5373 = vsub.s32 %v5370, %v5372
  %v5374 = vrot.slane %v5346, %v5373
  %v5375 = vcombine.low %v5353, %v5360
  %v5376 = vcombine.low %v5367, %v5374
  %v5378 = vunpack.c.l.s4 1966171168
  %v5379 = vunpack.c.0.s8 %v5378
  %v5380 = vlaneseq
  %v5381 = vshrl.u32 %v5380, 7
  %v5382 = vsub.s32 %v5379, %v5381
  %v5383 = vrot.slane %v5375, %v5382
  %v5385 = vunpack.c.l.s4 1966171168
  %v5386 = vunpack.c.0.s8 %v5385
  %v5387 = vlaneseq
  %v5388 = vshrl.u32 %v5387, 7
  %v5389 = vsub.s32 %v5386, %v5388
  %v5390 = vrot.slane %v5376, %v5389
  %v5391 = vcombine.low %v5383, %v5390
  %v5392 = vcombine.low %v3793, %v3794
  %v5393 = vcombine.low %v3795, %v3796
  %v5395 = vunpack.c.l.s4 1966171168
  %v5396 = vunpack.c.0.s8 %v5395
  %v5397 = vlaneseq
  %v5398 = vshrl.u32 %v5397, 7
  %v5399 = vsub.s32 %v5396, %v5398
  %v5400 = vrot.slane %v5392, %v5399
  %v5402 = vunpack.c.l.s4 1966171168
  %v5403 = vunpack.c.0.s8 %v5402
  %v5404 = vlaneseq
  %v5405 = vshrl.u32 %v5404, 7
  %v5406 = vsub.s32 %v5403, %v5405
  %v5407 = vrot.slane %v5393, %v5406
  %v5408 = vcombine.low %v5400, %v5407
  %v5410 = vunpack.c.l.s4 1966171168
  %v5411 = vunpack.c.0.s8 %v5410
  %v5412 = vlaneseq
  %v5413 = vshrl.u32 %v5412, 7
  %v5414 = vsub.s32 %v5411, %v5413
  %v5415 = vrot.slane %v5408, %v5414
  %v5416 = vcombine.low %v3800, %v3801
  %v5417 = vcombine.low %v3802, %v3803
  %v5418 = vcombine.low %v3804, %v3805
  %v5419 = vcombine.low %v3806, %v3807
  %v5421 = vunpack.c.l.s4 1966171168
  %v5422 = vunpack.c.0.s8 %v5421
  %v5423 = vlaneseq
  %v5424 = vshrl.u32 %v5423, 7
  %v5425 = vsub.s32 %v5422, %v5424
  %v5426 = vrot.slane %v5416, %v5425
  %v5428 = vunpack.c.l.s4 1966171168
  %v5429 = vunpack.c.0.s8 %v5428
  %v5430 = vlaneseq
  %v5431 = vshrl.u32 %v5430, 7
  %v5432 = vsub.s32 %v5429, %v5431
  %v5433 = vrot.slane %v5417, %v5432
  %v5435 = vunpack.c.l.s4 1966171168
  %v5436 = vunpack.c.0.s8 %v5435
  %v5437 = vlaneseq
  %v5438 = vshrl.u32 %v5437, 7
  %v5439 = vsub.s32 %v5436, %v5438
  %v5440 = vrot.slane %v5418, %v5439
  %v5442 = vunpack.c.l.s4 1966171168
  %v5443 = vunpack.c.0.s8 %v5442
  %v5444 = vlaneseq
  %v5445 = vshrl.u32 %v5444, 7
  %v5446 = vsub.s32 %v5443, %v5445
  %v5447 = vrot.slane %v5419, %v5446
  %v5448 = vcombine.low %v5426, %v5433
  %v5449 = vcombine.low %v5440, %v5447
  %v5451 = vunpack.c.l.s4 1966171168
  %v5452 = vunpack.c.0.s8 %v5451
  %v5453 = vlaneseq
  %v5454 = vshrl.u32 %v5453, 7
  %v5455 = vsub.s32 %v5452, %v5454
  %v5456 = vrot.slane %v5448, %v5455
  %v5458 = vunpack.c.l.s4 1966171168
  %v5459 = vunpack.c.0.s8 %v5458
  %v5460 = vlaneseq
  %v5461 = vshrl.u32 %v5460, 7
  %v5462 = vsub.s32 %v5459, %v5461
  %v5463 = vrot.slane %v5449, %v5462
  %v5464 = vcombine.low %v5456, %v5463
  %v5465 = vcombine.low %v3808, %v3809
  %v5466 = vcombine.low %v3810, %v3811
  %v5467 = vcombine.low %v3812, %v3813
  %v5468 = vcombine.low %v3814, %v3815
  %v5470 = vunpack.c.l.s4 1966171168
  %v5471 = vunpack.c.0.s8 %v5470
  %v5472 = vlaneseq
  %v5473 = vshrl.u32 %v5472, 7
  %v5474 = vsub.s32 %v5471, %v5473
  %v5475 = vrot.slane %v5465, %v5474
  %v5477 = vunpack.c.l.s4 1966171168
  %v5478 = vunpack.c.0.s8 %v5477
  %v5479 = vlaneseq
  %v5480 = vshrl.u32 %v5479, 7
  %v5481 = vsub.s32 %v5478, %v5480
  %v5482 = vrot.slane %v5466, %v5481
  %v5484 = vunpack.c.l.s4 1966171168
  %v5485 = vunpack.c.0.s8 %v5484
  %v5486 = vlaneseq
  %v5487 = vshrl.u32 %v5486, 7
  %v5488 = vsub.s32 %v5485, %v5487
  %v5489 = vrot.slane %v5467, %v5488
  %v5491 = vunpack.c.l.s4 1966171168
  %v5492 = vunpack.c.0.s8 %v5491
  %v5493 = vlaneseq
  %v5494 = vshrl.u32 %v5493, 7
  %v5495 = vsub.s32 %v5492, %v5494
  %v5496 = vrot.slane %v5468, %v5495
  %v5497 = vcombine.low %v5475, %v5482
  %v5498 = vcombine.low %v5489, %v5496
  %v5500 = vunpack.c.l.s4 1966171168
  %v5501 = vunpack.c.0.s8 %v5500
  %v5502 = vlaneseq
  %v5503 = vshrl.u32 %v5502, 7
  %v5504 = vsub.s32 %v5501, %v5503
  %v5505 = vrot.slane %v5497, %v5504
  %v5507 = vunpack.c.l.s4 1966171168
  %v5508 = vunpack.c.0.s8 %v5507
  %v5509 = vlaneseq
  %v5510 = vshrl.u32 %v5509, 7
  %v5511 = vsub.s32 %v5508, %v5510
  %v5512 = vrot.slane %v5498, %v5511
  %v5513 = vcombine.low %v5505, %v5512
  %v5514 = vcombine.low %v3816, %v3817
  %v5515 = vcombine.low %v3818, %v3819
  %v5516 = vcombine.low %v3820, %v3821
  %v5517 = vcombine.low %v3822, %v3823
  %v5519 = vunpack.c.l.s4 1966171168
  %v5520 = vunpack.c.0.s8 %v5519
  %v5521 = vlaneseq
  %v5522 = vshrl.u32 %v5521, 7
  %v5523 = vsub.s32 %v5520, %v5522
  %v5524 = vrot.slane %v5514, %v5523
  %v5526 = vunpack.c.l.s4 1966171168
  %v5527 = vunpack.c.0.s8 %v5526
  %v5528 = vlaneseq
  %v5529 = vshrl.u32 %v5528, 7
  %v5530 = vsub.s32 %v5527, %v5529
  %v5531 = vrot.slane %v5515, %v5530
  %v5533 = vunpack.c.l.s4 1966171168
  %v5534 = vunpack.c.0.s8 %v5533
  %v5535 = vlaneseq
  %v5536 = vshrl.u32 %v5535, 7
  %v5537 = vsub.s32 %v5534, %v5536
  %v5538 = vrot.slane %v5516, %v5537
  %v5540 = vunpack.c.l.s4 1966171168
  %v5541 = vunpack.c.0.s8 %v5540
  %v5542 = vlaneseq
  %v5543 = vshrl.u32 %v5542, 7
  %v5544 = vsub.s32 %v5541, %v5543
  %v5545 = vrot.slane %v5517, %v5544
  %v5546 = vcombine.low %v5524, %v5531
  %v5547 = vcombine.low %v5538, %v5545
  %v5549 = vunpack.c.l.s4 1966171168
  %v5550 = vunpack.c.0.s8 %v5549
  %v5551 = vlaneseq
  %v5552 = vshrl.u32 %v5551, 7
  %v5553 = vsub.s32 %v5550, %v5552
  %v5554 = vrot.slane %v5546, %v5553
  %v5556 = vunpack.c.l.s4 1966171168
  %v5557 = vunpack.c.0.s8 %v5556
  %v5558 = vlaneseq
  %v5559 = vshrl.u32 %v5558, 7
  %v5560 = vsub.s32 %v5557, %v5559
  %v5561 = vrot.slane %v5547, %v5560
  %v5562 = vcombine.low %v5554, %v5561
  %v5563 = vcombine.low %v3824, %v3825
  %v5564 = vcombine.low %v3826, %v3827
  %v5565 = vcombine.low %v3828, %v3829
  %v5566 = vcombine.low %v3830, %v3831
  %v5568 = vunpack.c.l.s4 1966171168
  %v5569 = vunpack.c.0.s8 %v5568
  %v5570 = vlaneseq
  %v5571 = vshrl.u32 %v5570, 7
  %v5572 = vsub.s32 %v5569, %v5571
  %v5573 = vrot.slane %v5563, %v5572
  %v5575 = vunpack.c.l.s4 1966171168
  %v5576 = vunpack.c.0.s8 %v5575
  %v5577 = vlaneseq
  %v5578 = vshrl.u32 %v5577, 7
  %v5579 = vsub.s32 %v5576, %v5578
  %v5580 = vrot.slane %v5564, %v5579
  %v5582 = vunpack.c.l.s4 1966171168
  %v5583 = vunpack.c.0.s8 %v5582
  %v5584 = vlaneseq
  %v5585 = vshrl.u32 %v5584, 7
  %v5586 = vsub.s32 %v5583, %v5585
  %v5587 = vrot.slane %v5565, %v5586
  %v5589 = vunpack.c.l.s4 1966171168
  %v5590 = vunpack.c.0.s8 %v5589
  %v5591 = vlaneseq
  %v5592 = vshrl.u32 %v5591, 7
  %v5593 = vsub.s32 %v5590, %v5592
  %v5594 = vrot.slane %v5566, %v5593
  %v5595 = vcombine.low %v5573, %v5580
  %v5596 = vcombine.low %v5587, %v5594
  %v5598 = vunpack.c.l.s4 1966171168
  %v5599 = vunpack.c.0.s8 %v5598
  %v5600 = vlaneseq
  %v5601 = vshrl.u32 %v5600, 7
  %v5602 = vsub.s32 %v5599, %v5601
  %v5603 = vrot.slane %v5595, %v5602
  %v5605 = vunpack.c.l.s4 1966171168
  %v5606 = vunpack.c.0.s8 %v5605
  %v5607 = vlaneseq
  %v5608 = vshrl.u32 %v5607, 7
  %v5609 = vsub.s32 %v5606, %v5608
  %v5610 = vrot.slane %v5596, %v5609
  %v5611 = vcombine.low %v5603, %v5610
  %v5612 = vcombine.low %v3832, %v3833
  %v5613 = vcombine.low %v3834, %v3835
  %v5614 = vcombine.low %v3836, %v3837
  %v5615 = vcombine.low %v3838, %v3839
  %v5617 = vunpack.c.l.s4 1966171168
  %v5618 = vunpack.c.0.s8 %v5617
  %v5619 = vlaneseq
  %v5620 = vshrl.u32 %v5619, 7
  %v5621 = vsub.s32 %v5618, %v5620
  %v5622 = vrot.slane %v5612, %v5621
  %v5624 = vunpack.c.l.s4 1966171168
  %v5625 = vunpack.c.0.s8 %v5624
  %v5626 = vlaneseq
  %v5627 = vshrl.u32 %v5626, 7
  %v5628 = vsub.s32 %v5625, %v5627
  %v5629 = vrot.slane %v5613, %v5628
  %v5631 = vunpack.c.l.s4 1966171168
  %v5632 = vunpack.c.0.s8 %v5631
  %v5633 = vlaneseq
  %v5634 = vshrl.u32 %v5633, 7
  %v5635 = vsub.s32 %v5632, %v5634
  %v5636 = vrot.slane %v5614, %v5635
  %v5638 = vunpack.c.l.s4 1966171168
  %v5639 = vunpack.c.0.s8 %v5638
  %v5640 = vlaneseq
  %v5641 = vshrl.u32 %v5640, 7
  %v5642 = vsub.s32 %v5639, %v5641
  %v5643 = vrot.slane %v5615, %v5642
  %v5644 = vcombine.low %v5622, %v5629
  %v5645 = vcombine.low %v5636, %v5643
  %v5647 = vunpack.c.l.s4 1966171168
  %v5648 = vunpack.c.0.s8 %v5647
  %v5649 = vlaneseq
  %v5650 = vshrl.u32 %v5649, 7
  %v5651 = vsub.s32 %v5648, %v5650
  %v5652 = vrot.slane %v5644, %v5651
  %v5654 = vunpack.c.l.s4 1966171168
  %v5655 = vunpack.c.0.s8 %v5654
  %v5656 = vlaneseq
  %v5657 = vshrl.u32 %v5656, 7
  %v5658 = vsub.s32 %v5655, %v5657
  %v5659 = vrot.slane %v5645, %v5658
  %v5660 = vcombine.low %v5652, %v5659
  %v5661 = vcombine.low %v3840, %v3841
  %v5662 = vcombine.low %v3842, %v3843
  %v5664 = vunpack.c.l.s4 1966171168
  %v5665 = vunpack.c.0.s8 %v5664
  %v5666 = vlaneseq
  %v5667 = vshrl.u32 %v5666, 7
  %v5668 = vsub.s32 %v5665, %v5667
  %v5669 = vrot.slane %v5661, %v5668
  %v5671 = vunpack.c.l.s4 1966171168
  %v5672 = vunpack.c.0.s8 %v5671
  %v5673 = vlaneseq
  %v5674 = vshrl.u32 %v5673, 7
  %v5675 = vsub.s32 %v5672, %v5674
  %v5676 = vrot.slane %v5662, %v5675
  %v5677 = vcombine.low %v5669, %v5676
  %v5679 = vunpack.c.l.s4 1966171168
  %v5680 = vunpack.c.0.s8 %v5679
  %v5681 = vlaneseq
  %v5682 = vshrl.u32 %v5681, 7
  %v5683 = vsub.s32 %v5680, %v5682
  %v5684 = vrot.slane %v5677, %v5683
  %v5685 = vcombine.low %v3847, %v3848
  %v5686 = vcombine.low %v3849, %v3850
  %v5687 = vcombine.low %v3851, %v3852
  %v5688 = vcombine.low %v3853, %v3854
  %v5690 = vunpack.c.l.s4 1966171168
  %v5691 = vunpack.c.0.s8 %v5690
  %v5692 = vlaneseq
  %v5693 = vshrl.u32 %v5692, 7
  %v5694 = vsub.s32 %v5691, %v5693
  %v5695 = vrot.slane %v5685, %v5694
  %v5697 = vunpack.c.l.s4 1966171168
  %v5698 = vunpack.c.0.s8 %v5697
  %v5699 = vlaneseq
  %v5700 = vshrl.u32 %v5699, 7
  %v5701 = vsub.s32 %v5698, %v5700
  %v5702 = vrot.slane %v5686, %v5701
  %v5704 = vunpack.c.l.s4 1966171168
  %v5705 = vunpack.c.0.s8 %v5704
  %v5706 = vlaneseq
  %v5707 = vshrl.u32 %v5706, 7
  %v5708 = vsub.s32 %v5705, %v5707
  %v5709 = vrot.slane %v5687, %v5708
  %v5711 = vunpack.c.l.s4 1966171168
  %v5712 = vunpack.c.0.s8 %v5711
  %v5713 = vlaneseq
  %v5714 = vshrl.u32 %v5713, 7
  %v5715 = vsub.s32 %v5712, %v5714
  %v5716 = vrot.slane %v5688, %v5715
  %v5717 = vcombine.low %v5695, %v5702
  %v5718 = vcombine.low %v5709, %v5716
  %v5720 = vunpack.c.l.s4 1966171168
  %v5721 = vunpack.c.0.s8 %v5720
  %v5722 = vlaneseq
  %v5723 = vshrl.u32 %v5722, 7
  %v5724 = vsub.s32 %v5721, %v5723
  %v5725 = vrot.slane %v5717, %v5724
  %v5727 = vunpack.c.l.s4 1966171168
  %v5728 = vunpack.c.0.s8 %v5727
  %v5729 = vlaneseq
  %v5730 = vshrl.u32 %v5729, 7
  %v5731 = vsub.s32 %v5728, %v5730
  %v5732 = vrot.slane %v5718, %v5731
  %v5733 = vcombine.low %v5725, %v5732
  %v5734 = vcombine.low %v3855, %v3856
  %v5735 = vcombine.low %v3857, %v3858
  %v5736 = vcombine.low %v3859, %v3860
  %v5737 = vcombine.low %v3861, %v3862
  %v5739 = vunpack.c.l.s4 1966171168
  %v5740 = vunpack.c.0.s8 %v5739
  %v5741 = vlaneseq
  %v5742 = vshrl.u32 %v5741, 7
  %v5743 = vsub.s32 %v5740, %v5742
  %v5744 = vrot.slane %v5734, %v5743
  %v5746 = vunpack.c.l.s4 1966171168
  %v5747 = vunpack.c.0.s8 %v5746
  %v5748 = vlaneseq
  %v5749 = vshrl.u32 %v5748, 7
  %v5750 = vsub.s32 %v5747, %v5749
  %v5751 = vrot.slane %v5735, %v5750
  %v5753 = vunpack.c.l.s4 1966171168
  %v5754 = vunpack.c.0.s8 %v5753
  %v5755 = vlaneseq
  %v5756 = vshrl.u32 %v5755, 7
  %v5757 = vsub.s32 %v5754, %v5756
  %v5758 = vrot.slane %v5736, %v5757
  %v5760 = vunpack.c.l.s4 1966171168
  %v5761 = vunpack.c.0.s8 %v5760
  %v5762 = vlaneseq
  %v5763 = vshrl.u32 %v5762, 7
  %v5764 = vsub.s32 %v5761, %v5763
  %v5765 = vrot.slane %v5737, %v5764
  %v5766 = vcombine.low %v5744, %v5751
  %v5767 = vcombine.low %v5758, %v5765
  %v5769 = vunpack.c.l.s4 1966171168
  %v5770 = vunpack.c.0.s8 %v5769
  %v5771 = vlaneseq
  %v5772 = vshrl.u32 %v5771, 7
  %v5773 = vsub.s32 %v5770, %v5772
  %v5774 = vrot.slane %v5766, %v5773
  %v5776 = vunpack.c.l.s4 1966171168
  %v5777 = vunpack.c.0.s8 %v5776
  %v5778 = vlaneseq
  %v5779 = vshrl.u32 %v5778, 7
  %v5780 = vsub.s32 %v5777, %v5779
  %v5781 = vrot.slane %v5767, %v5780
  %v5782 = vcombine.low %v5774, %v5781
  %v5783 = vcombine.low %v3863, %v3864
  %v5784 = vcombine.low %v3865, %v3866
  %v5785 = vcombine.low %v3867, %v3868
  %v5786 = vcombine.low %v3869, %v3870
  %v5788 = vunpack.c.l.s4 1966171168
  %v5789 = vunpack.c.0.s8 %v5788
  %v5790 = vlaneseq
  %v5791 = vshrl.u32 %v5790, 7
  %v5792 = vsub.s32 %v5789, %v5791
  %v5793 = vrot.slane %v5783, %v5792
  %v5795 = vunpack.c.l.s4 1966171168
  %v5796 = vunpack.c.0.s8 %v5795
  %v5797 = vlaneseq
  %v5798 = vshrl.u32 %v5797, 7
  %v5799 = vsub.s32 %v5796, %v5798
  %v5800 = vrot.slane %v5784, %v5799
  %v5802 = vunpack.c.l.s4 1966171168
  %v5803 = vunpack.c.0.s8 %v5802
  %v5804 = vlaneseq
  %v5805 = vshrl.u32 %v5804, 7
  %v5806 = vsub.s32 %v5803, %v5805
  %v5807 = vrot.slane %v5785, %v5806
  %v5809 = vunpack.c.l.s4 1966171168
  %v5810 = vunpack.c.0.s8 %v5809
  %v5811 = vlaneseq
  %v5812 = vshrl.u32 %v5811, 7
  %v5813 = vsub.s32 %v5810, %v5812
  %v5814 = vrot.slane %v5786, %v5813
  %v5815 = vcombine.low %v5793, %v5800
  %v5816 = vcombine.low %v5807, %v5814
  %v5818 = vunpack.c.l.s4 1966171168
  %v5819 = vunpack.c.0.s8 %v5818
  %v5820 = vlaneseq
  %v5821 = vshrl.u32 %v5820, 7
  %v5822 = vsub.s32 %v5819, %v5821
  %v5823 = vrot.slane %v5815, %v5822
  %v5825 = vunpack.c.l.s4 1966171168
  %v5826 = vunpack.c.0.s8 %v5825
  %v5827 = vlaneseq
  %v5828 = vshrl.u32 %v5827, 7
  %v5829 = vsub.s32 %v5826, %v5828
  %v5830 = vrot.slane %v5816, %v5829
  %v5831 = vcombine.low %v5823, %v5830
  %v5832 = vcombine.low %v3871, %v3872
  %v5833 = vcombine.low %v3873, %v3874
  %v5834 = vcombine.low %v3875, %v3876
  %v5835 = vcombine.low %v3877, %v3878
  %v5837 = vunpack.c.l.s4 1966171168
  %v5838 = vunpack.c.0.s8 %v5837
  %v5839 = vlaneseq
  %v5840 = vshrl.u32 %v5839, 7
  %v5841 = vsub.s32 %v5838, %v5840
  %v5842 = vrot.slane %v5832, %v5841
  %v5844 = vunpack.c.l.s4 1966171168
  %v5845 = vunpack.c.0.s8 %v5844
  %v5846 = vlaneseq
  %v5847 = vshrl.u32 %v5846, 7
  %v5848 = vsub.s32 %v5845, %v5847
  %v5849 = vrot.slane %v5833, %v5848
  %v5851 = vunpack.c.l.s4 1966171168
  %v5852 = vunpack.c.0.s8 %v5851
  %v5853 = vlaneseq
  %v5854 = vshrl.u32 %v5853, 7
  %v5855 = vsub.s32 %v5852, %v5854
  %v5856 = vrot.slane %v5834, %v5855
  %v5858 = vunpack.c.l.s4 1966171168
  %v5859 = vunpack.c.0.s8 %v5858
  %v5860 = vlaneseq
  %v5861 = vshrl.u32 %v5860, 7
  %v5862 = vsub.s32 %v5859, %v5861
  %v5863 = vrot.slane %v5835, %v5862
  %v5864 = vcombine.low %v5842, %v5849
  %v5865 = vcombine.low %v5856, %v5863
  %v5867 = vunpack.c.l.s4 1966171168
  %v5868 = vunpack.c.0.s8 %v5867
  %v5869 = vlaneseq
  %v5870 = vshrl.u32 %v5869, 7
  %v5871 = vsub.s32 %v5868, %v5870
  %v5872 = vrot.slane %v5864, %v5871
  %v5874 = vunpack.c.l.s4 1966171168
  %v5875 = vunpack.c.0.s8 %v5874
  %v5876 = vlaneseq
  %v5877 = vshrl.u32 %v5876, 7
  %v5878 = vsub.s32 %v5875, %v5877
  %v5879 = vrot.slane %v5865, %v5878
  %v5880 = vcombine.low %v5872, %v5879
  %v5881 = vcombine.low %v3879, %v3880
  %v5882 = vcombine.low %v3881, %v3882
  %v5883 = vcombine.low %v3883, %v3884
  %v5884 = vcombine.low %v3885, %v3886
  %v5886 = vunpack.c.l.s4 1966171168
  %v5887 = vunpack.c.0.s8 %v5886
  %v5888 = vlaneseq
  %v5889 = vshrl.u32 %v5888, 7
  %v5890 = vsub.s32 %v5887, %v5889
  %v5891 = vrot.slane %v5881, %v5890
  %v5893 = vunpack.c.l.s4 1966171168
  %v5894 = vunpack.c.0.s8 %v5893
  %v5895 = vlaneseq
  %v5896 = vshrl.u32 %v5895, 7
  %v5897 = vsub.s32 %v5894, %v5896
  %v5898 = vrot.slane %v5882, %v5897
  %v5900 = vunpack.c.l.s4 1966171168
  %v5901 = vunpack.c.0.s8 %v5900
  %v5902 = vlaneseq
  %v5903 = vshrl.u32 %v5902, 7
  %v5904 = vsub.s32 %v5901, %v5903
  %v5905 = vrot.slane %v5883, %v5904
  %v5907 = vunpack.c.l.s4 1966171168
  %v5908 = vunpack.c.0.s8 %v5907
  %v5909 = vlaneseq
  %v5910 = vshrl.u32 %v5909, 7
  %v5911 = vsub.s32 %v5908, %v5910
  %v5912 = vrot.slane %v5884, %v5911
  %v5913 = vcombine.low %v5891, %v5898
  %v5914 = vcombine.low %v5905, %v5912
  %v5916 = vunpack.c.l.s4 1966171168
  %v5917 = vunpack.c.0.s8 %v5916
  %v5918 = vlaneseq
  %v5919 = vshrl.u32 %v5918, 7
  %v5920 = vsub.s32 %v5917, %v5919
  %v5921 = vrot.slane %v5913, %v5920
  %v5923 = vunpack.c.l.s4 1966171168
  %v5924 = vunpack.c.0.s8 %v5923
  %v5925 = vlaneseq
  %v5926 = vshrl.u32 %v5925, 7
  %v5927 = vsub.s32 %v5924, %v5926
  %v5928 = vrot.slane %v5914, %v5927
  %v5929 = vcombine.low %v5921, %v5928
  %v5930 = vcombine.low %v3887, %v3888
  %v5931 = vcombine.low %v3889, %v3890
  %v5933 = vunpack.c.l.s4 1966171168
  %v5934 = vunpack.c.0.s8 %v5933
  %v5935 = vlaneseq
  %v5936 = vshrl.u32 %v5935, 7
  %v5937 = vsub.s32 %v5934, %v5936
  %v5938 = vrot.slane %v5930, %v5937
  %v5940 = vunpack.c.l.s4 1966171168
  %v5941 = vunpack.c.0.s8 %v5940
  %v5942 = vlaneseq
  %v5943 = vshrl.u32 %v5942, 7
  %v5944 = vsub.s32 %v5941, %v5943
  %v5945 = vrot.slane %v5931, %v5944
  %v5946 = vcombine.low %v5938, %v5945
  %v5948 = vunpack.c.l.s4 1966171168
  %v5949 = vunpack.c.0.s8 %v5948
  %v5950 = vlaneseq
  %v5951 = vshrl.u32 %v5950, 7
  %v5952 = vsub.s32 %v5949, %v5951
  %v5953 = vrot.slane %v5946, %v5952
  %v5954 = vcombine.low %v3894, %v3895
  %v5955 = vcombine.low %v3896, %v3897
  %v5956 = vcombine.low %v3898, %v3899
  %v5957 = vcombine.low %v3900, %v3901
  %v5959 = vunpack.c.l.s4 1966171168
  %v5960 = vunpack.c.0.s8 %v5959
  %v5961 = vlaneseq
  %v5962 = vshrl.u32 %v5961, 7
  %v5963 = vsub.s32 %v5960, %v5962
  %v5964 = vrot.slane %v5954, %v5963
  %v5966 = vunpack.c.l.s4 1966171168
  %v5967 = vunpack.c.0.s8 %v5966
  %v5968 = vlaneseq
  %v5969 = vshrl.u32 %v5968, 7
  %v5970 = vsub.s32 %v5967, %v5969
  %v5971 = vrot.slane %v5955, %v5970
  %v5973 = vunpack.c.l.s4 1966171168
  %v5974 = vunpack.c.0.s8 %v5973
  %v5975 = vlaneseq
  %v5976 = vshrl.u32 %v5975, 7
  %v5977 = vsub.s32 %v5974, %v5976
  %v5978 = vrot.slane %v5956, %v5977
  %v5980 = vunpack.c.l.s4 1966171168
  %v5981 = vunpack.c.0.s8 %v5980
  %v5982 = vlaneseq
  %v5983 = vshrl.u32 %v5982, 7
  %v5984 = vsub.s32 %v5981, %v5983
  %v5985 = vrot.slane %v5957, %v5984
  %v5986 = vcombine.low %v5964, %v5971
  %v5987 = vcombine.low %v5978, %v5985
  %v5989 = vunpack.c.l.s4 1966171168
  %v5990 = vunpack.c.0.s8 %v5989
  %v5991 = vlaneseq
  %v5992 = vshrl.u32 %v5991, 7
  %v5993 = vsub.s32 %v5990, %v5992
  %v5994 = vrot.slane %v5986, %v5993
  %v5996 = vunpack.c.l.s4 1966171168
  %v5997 = vunpack.c.0.s8 %v5996
  %v5998 = vlaneseq
  %v5999 = vshrl.u32 %v5998, 7
  %v6000 = vsub.s32 %v5997, %v5999
  %v6001 = vrot.slane %v5987, %v6000
  %v6002 = vcombine.low %v5994, %v6001
  %v6003 = vcombine.low %v3902, %v3903
  %v6004 = vcombine.low %v3904, %v3905
  %v6005 = vcombine.low %v3906, %v3907
  %v6006 = vcombine.low %v3908, %v3909
  %v6008 = vunpack.c.l.s4 1966171168
  %v6009 = vunpack.c.0.s8 %v6008
  %v6010 = vlaneseq
  %v6011 = vshrl.u32 %v6010, 7
  %v6012 = vsub.s32 %v6009, %v6011
  %v6013 = vrot.slane %v6003, %v6012
  %v6015 = vunpack.c.l.s4 1966171168
  %v6016 = vunpack.c.0.s8 %v6015
  %v6017 = vlaneseq
  %v6018 = vshrl.u32 %v6017, 7
  %v6019 = vsub.s32 %v6016, %v6018
  %v6020 = vrot.slane %v6004, %v6019
  %v6022 = vunpack.c.l.s4 1966171168
  %v6023 = vunpack.c.0.s8 %v6022
  %v6024 = vlaneseq
  %v6025 = vshrl.u32 %v6024, 7
  %v6026 = vsub.s32 %v6023, %v6025
  %v6027 = vrot.slane %v6005, %v6026
  %v6029 = vunpack.c.l.s4 1966171168
  %v6030 = vunpack.c.0.s8 %v6029
  %v6031 = vlaneseq
  %v6032 = vshrl.u32 %v6031, 7
  %v6033 = vsub.s32 %v6030, %v6032
  %v6034 = vrot.slane %v6006, %v6033
  %v6035 = vcombine.low %v6013, %v6020
  %v6036 = vcombine.low %v6027, %v6034
  %v6038 = vunpack.c.l.s4 1966171168
  %v6039 = vunpack.c.0.s8 %v6038
  %v6040 = vlaneseq
  %v6041 = vshrl.u32 %v6040, 7
  %v6042 = vsub.s32 %v6039, %v6041
  %v6043 = vrot.slane %v6035, %v6042
  %v6045 = vunpack.c.l.s4 1966171168
  %v6046 = vunpack.c.0.s8 %v6045
  %v6047 = vlaneseq
  %v6048 = vshrl.u32 %v6047, 7
  %v6049 = vsub.s32 %v6046, %v6048
  %v6050 = vrot.slane %v6036, %v6049
  %v6051 = vcombine.low %v6043, %v6050
  %v6052 = vcombine.low %v3910, %v3911
  %v6053 = vcombine.low %v3912, %v3913
  %v6054 = vcombine.low %v3914, %v3915
  %v6055 = vcombine.low %v3916, %v3917
  %v6057 = vunpack.c.l.s4 1966171168
  %v6058 = vunpack.c.0.s8 %v6057
  %v6059 = vlaneseq
  %v6060 = vshrl.u32 %v6059, 7
  %v6061 = vsub.s32 %v6058, %v6060
  %v6062 = vrot.slane %v6052, %v6061
  %v6064 = vunpack.c.l.s4 1966171168
  %v6065 = vunpack.c.0.s8 %v6064
  %v6066 = vlaneseq
  %v6067 = vshrl.u32 %v6066, 7
  %v6068 = vsub.s32 %v6065, %v6067
  %v6069 = vrot.slane %v6053, %v6068
  %v6071 = vunpack.c.l.s4 1966171168
  %v6072 = vunpack.c.0.s8 %v6071
  %v6073 = vlaneseq
  %v6074 = vshrl.u32 %v6073, 7
  %v6075 = vsub.s32 %v6072, %v6074
  %v6076 = vrot.slane %v6054, %v6075
  %v6078 = vunpack.c.l.s4 1966171168
  %v6079 = vunpack.c.0.s8 %v6078
  %v6080 = vlaneseq
  %v6081 = vshrl.u32 %v6080, 7
  %v6082 = vsub.s32 %v6079, %v6081
  %v6083 = vrot.slane %v6055, %v6082
  %v6084 = vcombine.low %v6062, %v6069
  %v6085 = vcombine.low %v6076, %v6083
  %v6087 = vunpack.c.l.s4 1966171168
  %v6088 = vunpack.c.0.s8 %v6087
  %v6089 = vlaneseq
  %v6090 = vshrl.u32 %v6089, 7
  %v6091 = vsub.s32 %v6088, %v6090
  %v6092 = vrot.slane %v6084, %v6091
  %v6094 = vunpack.c.l.s4 1966171168
  %v6095 = vunpack.c.0.s8 %v6094
  %v6096 = vlaneseq
  %v6097 = vshrl.u32 %v6096, 7
  %v6098 = vsub.s32 %v6095, %v6097
  %v6099 = vrot.slane %v6085, %v6098
  %v6100 = vcombine.low %v6092, %v6099
  %v6101 = vcombine.low %v3918, %v3919
  %v6102 = vcombine.low %v3920, %v3921
  %v6103 = vcombine.low %v3922, %v3923
  %v6104 = vcombine.low %v3924, %v3925
  %v6106 = vunpack.c.l.s4 1966171168
  %v6107 = vunpack.c.0.s8 %v6106
  %v6108 = vlaneseq
  %v6109 = vshrl.u32 %v6108, 7
  %v6110 = vsub.s32 %v6107, %v6109
  %v6111 = vrot.slane %v6101, %v6110
  %v6113 = vunpack.c.l.s4 1966171168
  %v6114 = vunpack.c.0.s8 %v6113
  %v6115 = vlaneseq
  %v6116 = vshrl.u32 %v6115, 7
  %v6117 = vsub.s32 %v6114, %v6116
  %v6118 = vrot.slane %v6102, %v6117
  %v6120 = vunpack.c.l.s4 1966171168
  %v6121 = vunpack.c.0.s8 %v6120
  %v6122 = vlaneseq
  %v6123 = vshrl.u32 %v6122, 7
  %v6124 = vsub.s32 %v6121, %v6123
  %v6125 = vrot.slane %v6103, %v6124
  %v6127 = vunpack.c.l.s4 1966171168
  %v6128 = vunpack.c.0.s8 %v6127
  %v6129 = vlaneseq
  %v6130 = vshrl.u32 %v6129, 7
  %v6131 = vsub.s32 %v6128, %v6130
  %v6132 = vrot.slane %v6104, %v6131
  %v6133 = vcombine.low %v6111, %v6118
  %v6134 = vcombine.low %v6125, %v6132
  %v6136 = vunpack.c.l.s4 1966171168
  %v6137 = vunpack.c.0.s8 %v6136
  %v6138 = vlaneseq
  %v6139 = vshrl.u32 %v6138, 7
  %v6140 = vsub.s32 %v6137, %v6139
  %v6141 = vrot.slane %v6133, %v6140
  %v6143 = vunpack.c.l.s4 1966171168
  %v6144 = vunpack.c.0.s8 %v6143
  %v6145 = vlaneseq
  %v6146 = vshrl.u32 %v6145, 7
  %v6147 = vsub.s32 %v6144, %v6146
  %v6148 = vrot.slane %v6134, %v6147
  %v6149 = vcombine.low %v6141, %v6148
  %v6150 = vcombine.low %v3926, %v3927
  %v6151 = vcombine.low %v3928, %v3929
  %v6152 = vcombine.low %v3930, %v3931
  %v6153 = vcombine.low %v3932, %v3933
  %v6155 = vunpack.c.l.s4 1966171168
  %v6156 = vunpack.c.0.s8 %v6155
  %v6157 = vlaneseq
  %v6158 = vshrl.u32 %v6157, 7
  %v6159 = vsub.s32 %v6156, %v6158
  %v6160 = vrot.slane %v6150, %v6159
  %v6162 = vunpack.c.l.s4 1966171168
  %v6163 = vunpack.c.0.s8 %v6162
  %v6164 = vlaneseq
  %v6165 = vshrl.u32 %v6164, 7
  %v6166 = vsub.s32 %v6163, %v6165
  %v6167 = vrot.slane %v6151, %v6166
  %v6169 = vunpack.c.l.s4 1966171168
  %v6170 = vunpack.c.0.s8 %v6169
  %v6171 = vlaneseq
  %v6172 = vshrl.u32 %v6171, 7
  %v6173 = vsub.s32 %v6170, %v6172
  %v6174 = vrot.slane %v6152, %v6173
  %v6176 = vunpack.c.l.s4 1966171168
  %v6177 = vunpack.c.0.s8 %v6176
  %v6178 = vlaneseq
  %v6179 = vshrl.u32 %v6178, 7
  %v6180 = vsub.s32 %v6177, %v6179
  %v6181 = vrot.slane %v6153, %v6180
  %v6182 = vcombine.low %v6160, %v6167
  %v6183 = vcombine.low %v6174, %v6181
  %v6185 = vunpack.c.l.s4 1966171168
  %v6186 = vunpack.c.0.s8 %v6185
  %v6187 = vlaneseq
  %v6188 = vshrl.u32 %v6187, 7
  %v6189 = vsub.s32 %v6186, %v6188
  %v6190 = vrot.slane %v6182, %v6189
  %v6192 = vunpack.c.l.s4 1966171168
  %v6193 = vunpack.c.0.s8 %v6192
  %v6194 = vlaneseq
  %v6195 = vshrl.u32 %v6194, 7
  %v6196 = vsub.s32 %v6193, %v6195
  %v6197 = vrot.slane %v6183, %v6196
  %v6198 = vcombine.low %v6190, %v6197
  %v6199 = vcombine.low %v3934, %v3935
  %v6200 = vcombine.low %v3936, %v3937
  %v6202 = vunpack.c.l.s4 1966171168
  %v6203 = vunpack.c.0.s8 %v6202
  %v6204 = vlaneseq
  %v6205 = vshrl.u32 %v6204, 7
  %v6206 = vsub.s32 %v6203, %v6205
  %v6207 = vrot.slane %v6199, %v6206
  %v6209 = vunpack.c.l.s4 1966171168
  %v6210 = vunpack.c.0.s8 %v6209
  %v6211 = vlaneseq
  %v6212 = vshrl.u32 %v6211, 7
  %v6213 = vsub.s32 %v6210, %v6212
  %v6214 = vrot.slane %v6200, %v6213
  %v6215 = vcombine.low %v6207, %v6214
  %v6217 = vunpack.c.l.s4 1966171168
  %v6218 = vunpack.c.0.s8 %v6217
  %v6219 = vlaneseq
  %v6220 = vshrl.u32 %v6219, 7
  %v6221 = vsub.s32 %v6218, %v6220
  %v6222 = vrot.slane %v6215, %v6221
  %v6223 = vcombine.low %v3941, %v3942
  %v6224 = vcombine.low %v3943, %v3944
  %v6225 = vcombine.low %v3945, %v3946
  %v6226 = vcombine.low %v3947, %v3948
  %v6228 = vunpack.c.l.s4 1966171168
  %v6229 = vunpack.c.0.s8 %v6228
  %v6230 = vlaneseq
  %v6231 = vshrl.u32 %v6230, 7
  %v6232 = vsub.s32 %v6229, %v6231
  %v6233 = vrot.slane %v6223, %v6232
  %v6235 = vunpack.c.l.s4 1966171168
  %v6236 = vunpack.c.0.s8 %v6235
  %v6237 = vlaneseq
  %v6238 = vshrl.u32 %v6237, 7
  %v6239 = vsub.s32 %v6236, %v6238
  %v6240 = vrot.slane %v6224, %v6239
  %v6242 = vunpack.c.l.s4 1966171168
  %v6243 = vunpack.c.0.s8 %v6242
  %v6244 = vlaneseq
  %v6245 = vshrl.u32 %v6244, 7
  %v6246 = vsub.s32 %v6243, %v6245
  %v6247 = vrot.slane %v6225, %v6246
  %v6249 = vunpack.c.l.s4 1966171168
  %v6250 = vunpack.c.0.s8 %v6249
  %v6251 = vlaneseq
  %v6252 = vshrl.u32 %v6251, 7
  %v6253 = vsub.s32 %v6250, %v6252
  %v6254 = vrot.slane %v6226, %v6253
  %v6255 = vcombine.low %v6233, %v6240
  %v6256 = vcombine.low %v6247, %v6254
  %v6258 = vunpack.c.l.s4 1966171168
  %v6259 = vunpack.c.0.s8 %v6258
  %v6260 = vlaneseq
  %v6261 = vshrl.u32 %v6260, 7
  %v6262 = vsub.s32 %v6259, %v6261
  %v6263 = vrot.slane %v6255, %v6262
  %v6265 = vunpack.c.l.s4 1966171168
  %v6266 = vunpack.c.0.s8 %v6265
  %v6267 = vlaneseq
  %v6268 = vshrl.u32 %v6267, 7
  %v6269 = vsub.s32 %v6266, %v6268
  %v6270 = vrot.slane %v6256, %v6269
  %v6271 = vcombine.low %v6263, %v6270
  %v6272 = vcombine.low %v3949, %v3950
  %v6273 = vcombine.low %v3951, %v3952
  %v6274 = vcombine.low %v3953, %v3954
  %v6275 = vcombine.low %v3955, %v3956
  %v6277 = vunpack.c.l.s4 1966171168
  %v6278 = vunpack.c.0.s8 %v6277
  %v6279 = vlaneseq
  %v6280 = vshrl.u32 %v6279, 7
  %v6281 = vsub.s32 %v6278, %v6280
  %v6282 = vrot.slane %v6272, %v6281
  %v6284 = vunpack.c.l.s4 1966171168
  %v6285 = vunpack.c.0.s8 %v6284
  %v6286 = vlaneseq
  %v6287 = vshrl.u32 %v6286, 7
  %v6288 = vsub.s32 %v6285, %v6287
  %v6289 = vrot.slane %v6273, %v6288
  %v6291 = vunpack.c.l.s4 1966171168
  %v6292 = vunpack.c.0.s8 %v6291
  %v6293 = vlaneseq
  %v6294 = vshrl.u32 %v6293, 7
  %v6295 = vsub.s32 %v6292, %v6294
  %v6296 = vrot.slane %v6274, %v6295
  %v6298 = vunpack.c.l.s4 1966171168
  %v6299 = vunpack.c.0.s8 %v6298
  %v6300 = vlaneseq
  %v6301 = vshrl.u32 %v6300, 7
  %v6302 = vsub.s32 %v6299, %v6301
  %v6303 = vrot.slane %v6275, %v6302
  %v6304 = vcombine.low %v6282, %v6289
  %v6305 = vcombine.low %v6296, %v6303
  %v6307 = vunpack.c.l.s4 1966171168
  %v6308 = vunpack.c.0.s8 %v6307
  %v6309 = vlaneseq
  %v6310 = vshrl.u32 %v6309, 7
  %v6311 = vsub.s32 %v6308, %v6310
  %v6312 = vrot.slane %v6304, %v6311
  %v6314 = vunpack.c.l.s4 1966171168
  %v6315 = vunpack.c.0.s8 %v6314
  %v6316 = vlaneseq
  %v6317 = vshrl.u32 %v6316, 7
  %v6318 = vsub.s32 %v6315, %v6317
  %v6319 = vrot.slane %v6305, %v6318
  %v6320 = vcombine.low %v6312, %v6319
  %v6321 = vcombine.low %v3957, %v3958
  %v6322 = vcombine.low %v3959, %v3960
  %v6323 = vcombine.low %v3961, %v3962
  %v6324 = vcombine.low %v3963, %v3964
  %v6326 = vunpack.c.l.s4 1966171168
  %v6327 = vunpack.c.0.s8 %v6326
  %v6328 = vlaneseq
  %v6329 = vshrl.u32 %v6328, 7
  %v6330 = vsub.s32 %v6327, %v6329
  %v6331 = vrot.slane %v6321, %v6330
  %v6333 = vunpack.c.l.s4 1966171168
  %v6334 = vunpack.c.0.s8 %v6333
  %v6335 = vlaneseq
  %v6336 = vshrl.u32 %v6335, 7
  %v6337 = vsub.s32 %v6334, %v6336
  %v6338 = vrot.slane %v6322, %v6337
  %v6340 = vunpack.c.l.s4 1966171168
  %v6341 = vunpack.c.0.s8 %v6340
  %v6342 = vlaneseq
  %v6343 = vshrl.u32 %v6342, 7
  %v6344 = vsub.s32 %v6341, %v6343
  %v6345 = vrot.slane %v6323, %v6344
  %v6347 = vunpack.c.l.s4 1966171168
  %v6348 = vunpack.c.0.s8 %v6347
  %v6349 = vlaneseq
  %v6350 = vshrl.u32 %v6349, 7
  %v6351 = vsub.s32 %v6348, %v6350
  %v6352 = vrot.slane %v6324, %v6351
  %v6353 = vcombine.low %v6331, %v6338
  %v6354 = vcombine.low %v6345, %v6352
  %v6356 = vunpack.c.l.s4 1966171168
  %v6357 = vunpack.c.0.s8 %v6356
  %v6358 = vlaneseq
  %v6359 = vshrl.u32 %v6358, 7
  %v6360 = vsub.s32 %v6357, %v6359
  %v6361 = vrot.slane %v6353, %v6360
  %v6363 = vunpack.c.l.s4 1966171168
  %v6364 = vunpack.c.0.s8 %v6363
  %v6365 = vlaneseq
  %v6366 = vshrl.u32 %v6365, 7
  %v6367 = vsub.s32 %v6364, %v6366
  %v6368 = vrot.slane %v6354, %v6367
  %v6369 = vcombine.low %v6361, %v6368
  %v6370 = vcombine.low %v3965, %v3966
  %v6371 = vcombine.low %v3967, %v3968
  %v6372 = vcombine.low %v3969, %v3970
  %v6373 = vcombine.low %v3971, %v3972
  %v6375 = vunpack.c.l.s4 1966171168
  %v6376 = vunpack.c.0.s8 %v6375
  %v6377 = vlaneseq
  %v6378 = vshrl.u32 %v6377, 7
  %v6379 = vsub.s32 %v6376, %v6378
  %v6380 = vrot.slane %v6370, %v6379
  %v6382 = vunpack.c.l.s4 1966171168
  %v6383 = vunpack.c.0.s8 %v6382
  %v6384 = vlaneseq
  %v6385 = vshrl.u32 %v6384, 7
  %v6386 = vsub.s32 %v6383, %v6385
  %v6387 = vrot.slane %v6371, %v6386
  %v6389 = vunpack.c.l.s4 1966171168
  %v6390 = vunpack.c.0.s8 %v6389
  %v6391 = vlaneseq
  %v6392 = vshrl.u32 %v6391, 7
  %v6393 = vsub.s32 %v6390, %v6392
  %v6394 = vrot.slane %v6372, %v6393
  %v6396 = vunpack.c.l.s4 1966171168
  %v6397 = vunpack.c.0.s8 %v6396
  %v6398 = vlaneseq
  %v6399 = vshrl.u32 %v6398, 7
  %v6400 = vsub.s32 %v6397, %v6399
  %v6401 = vrot.slane %v6373, %v6400
  %v6402 = vcombine.low %v6380, %v6387
  %v6403 = vcombine.low %v6394, %v6401
  %v6405 = vunpack.c.l.s4 1966171168
  %v6406 = vunpack.c.0.s8 %v6405
  %v6407 = vlaneseq
  %v6408 = vshrl.u32 %v6407, 7
  %v6409 = vsub.s32 %v6406, %v6408
  %v6410 = vrot.slane %v6402, %v6409
  %v6412 = vunpack.c.l.s4 1966171168
  %v6413 = vunpack.c.0.s8 %v6412
  %v6414 = vlaneseq
  %v6415 = vshrl.u32 %v6414, 7
  %v6416 = vsub.s32 %v6413, %v6415
  %v6417 = vrot.slane %v6403, %v6416
  %v6418 = vcombine.low %v6410, %v6417
  %v6419 = vcombine.low %v3973, %v3974
  %v6420 = vcombine.low %v3975, %v3976
  %v6421 = vcombine.low %v3977, %v3978
  %v6422 = vcombine.low %v3979, %v3980
  %v6424 = vunpack.c.l.s4 1966171168
  %v6425 = vunpack.c.0.s8 %v6424
  %v6426 = vlaneseq
  %v6427 = vshrl.u32 %v6426, 7
  %v6428 = vsub.s32 %v6425, %v6427
  %v6429 = vrot.slane %v6419, %v6428
  %v6431 = vunpack.c.l.s4 1966171168
  %v6432 = vunpack.c.0.s8 %v6431
  %v6433 = vlaneseq
  %v6434 = vshrl.u32 %v6433, 7
  %v6435 = vsub.s32 %v6432, %v6434
  %v6436 = vrot.slane %v6420, %v6435
  %v6438 = vunpack.c.l.s4 1966171168
  %v6439 = vunpack.c.0.s8 %v6438
  %v6440 = vlaneseq
  %v6441 = vshrl.u32 %v6440, 7
  %v6442 = vsub.s32 %v6439, %v6441
  %v6443 = vrot.slane %v6421, %v6442
  %v6445 = vunpack.c.l.s4 1966171168
  %v6446 = vunpack.c.0.s8 %v6445
  %v6447 = vlaneseq
  %v6448 = vshrl.u32 %v6447, 7
  %v6449 = vsub.s32 %v6446, %v6448
  %v6450 = vrot.slane %v6422, %v6449
  %v6451 = vcombine.low %v6429, %v6436
  %v6452 = vcombine.low %v6443, %v6450
  %v6454 = vunpack.c.l.s4 1966171168
  %v6455 = vunpack.c.0.s8 %v6454
  %v6456 = vlaneseq
  %v6457 = vshrl.u32 %v6456, 7
  %v6458 = vsub.s32 %v6455, %v6457
  %v6459 = vrot.slane %v6451, %v6458
  %v6461 = vunpack.c.l.s4 1966171168
  %v6462 = vunpack.c.0.s8 %v6461
  %v6463 = vlaneseq
  %v6464 = vshrl.u32 %v6463, 7
  %v6465 = vsub.s32 %v6462, %v6464
  %v6466 = vrot.slane %v6452, %v6465
  %v6467 = vcombine.low %v6459, %v6466
  %v6468 = vcombine.low %v3981, %v3982
  %v6469 = vcombine.low %v3983, %v3984
  %v6471 = vunpack.c.l.s4 1966171168
  %v6472 = vunpack.c.0.s8 %v6471
  %v6473 = vlaneseq
  %v6474 = vshrl.u32 %v6473, 7
  %v6475 = vsub.s32 %v6472, %v6474
  %v6476 = vrot.slane %v6468, %v6475
  %v6478 = vunpack.c.l.s4 1966171168
  %v6479 = vunpack.c.0.s8 %v6478
  %v6480 = vlaneseq
  %v6481 = vshrl.u32 %v6480, 7
  %v6482 = vsub.s32 %v6479, %v6481
  %v6483 = vrot.slane %v6469, %v6482
  %v6484 = vcombine.low %v6476, %v6483
  %v6486 = vunpack.c.l.s4 1966171168
  %v6487 = vunpack.c.0.s8 %v6486
  %v6488 = vlaneseq
  %v6489 = vshrl.u32 %v6488, 7
  %v6490 = vsub.s32 %v6487, %v6489
  %v6491 = vrot.slane %v6484, %v6490
  %v6548 = vcombine.low %v3613, %v3614
  %v6549 = vcombine.low %v3615, %v3616
  %v6550 = vcombine.low %v3617, %v3618
  %v6551 = vcombine.low %v3619, %v3620
  %v6553 = vunpack.c.l.s4 1966171168
  %v6554 = vunpack.c.0.s8 %v6553
  %v6555 = vlaneseq
  %v6556 = vshrl.u32 %v6555, 7
  %v6557 = vsub.s32 %v6554, %v6556
  %v6558 = vrot.slane %v6548, %v6557
  %v6560 = vunpack.c.l.s4 1966171168
  %v6561 = vunpack.c.0.s8 %v6560
  %v6562 = vlaneseq
  %v6563 = vshrl.u32 %v6562, 7
  %v6564 = vsub.s32 %v6561, %v6563
  %v6565 = vrot.slane %v6549, %v6564
  %v6567 = vunpack.c.l.s4 1966171168
  %v6568 = vunpack.c.0.s8 %v6567
  %v6569 = vlaneseq
  %v6570 = vshrl.u32 %v6569, 7
  %v6571 = vsub.s32 %v6568, %v6570
  %v6572 = vrot.slane %v6550, %v6571
  %v6574 = vunpack.c.l.s4 1966171168
  %v6575 = vunpack.c.0.s8 %v6574
  %v6576 = vlaneseq
  %v6577 = vshrl.u32 %v6576, 7
  %v6578 = vsub.s32 %v6575, %v6577
  %v6579 = vrot.slane %v6551, %v6578
  %v6580 = vcombine.low %v6558, %v6565
  %v6581 = vcombine.low %v6572, %v6579
  %v6583 = vunpack.c.l.s4 1966171168
  %v6584 = vunpack.c.0.s8 %v6583
  %v6585 = vlaneseq
  %v6586 = vshrl.u32 %v6585, 7
  %v6587 = vsub.s32 %v6584, %v6586
  %v6588 = vrot.slane %v6580, %v6587
  %v6590 = vunpack.c.l.s4 1966171168
  %v6591 = vunpack.c.0.s8 %v6590
  %v6592 = vlaneseq
  %v6593 = vshrl.u32 %v6592, 7
  %v6594 = vsub.s32 %v6591, %v6593
  %v6595 = vrot.slane %v6581, %v6594
  %v6596 = vcombine.low %v6588, %v6595
  %v6597 = vcombine.low %v3621, %v3622
  %v6598 = vcombine.low %v3623, %v3624
  %v6599 = vcombine.low %v3625, %v3626
  %v6600 = vcombine.low %v3627, %v3628
  %v6602 = vunpack.c.l.s4 1966171168
  %v6603 = vunpack.c.0.s8 %v6602
  %v6604 = vlaneseq
  %v6605 = vshrl.u32 %v6604, 7
  %v6606 = vsub.s32 %v6603, %v6605
  %v6607 = vrot.slane %v6597, %v6606
  %v6609 = vunpack.c.l.s4 1966171168
  %v6610 = vunpack.c.0.s8 %v6609
  %v6611 = vlaneseq
  %v6612 = vshrl.u32 %v6611, 7
  %v6613 = vsub.s32 %v6610, %v6612
  %v6614 = vrot.slane %v6598, %v6613
  %v6616 = vunpack.c.l.s4 1966171168
  %v6617 = vunpack.c.0.s8 %v6616
  %v6618 = vlaneseq
  %v6619 = vshrl.u32 %v6618, 7
  %v6620 = vsub.s32 %v6617, %v6619
  %v6621 = vrot.slane %v6599, %v6620
  %v6623 = vunpack.c.l.s4 1966171168
  %v6624 = vunpack.c.0.s8 %v6623
  %v6625 = vlaneseq
  %v6626 = vshrl.u32 %v6625, 7
  %v6627 = vsub.s32 %v6624, %v6626
  %v6628 = vrot.slane %v6600, %v6627
  %v6629 = vcombine.low %v6607, %v6614
  %v6630 = vcombine.low %v6621, %v6628
  %v6632 = vunpack.c.l.s4 1966171168
  %v6633 = vunpack.c.0.s8 %v6632
  %v6634 = vlaneseq
  %v6635 = vshrl.u32 %v6634, 7
  %v6636 = vsub.s32 %v6633, %v6635
  %v6637 = vrot.slane %v6629, %v6636
  %v6639 = vunpack.c.l.s4 1966171168
  %v6640 = vunpack.c.0.s8 %v6639
  %v6641 = vlaneseq
  %v6642 = vshrl.u32 %v6641, 7
  %v6643 = vsub.s32 %v6640, %v6642
  %v6644 = vrot.slane %v6630, %v6643
  %v6645 = vcombine.low %v6637, %v6644
  %v6646 = vcombine.low %v3629, %v3630
  %v6647 = vcombine.low %v3631, %v3632
  %v6648 = vcombine.low %v3633, %v3634
  %v6649 = vcombine.low %v3635, %v3636
  %v6651 = vunpack.c.l.s4 1966171168
  %v6652 = vunpack.c.0.s8 %v6651
  %v6653 = vlaneseq
  %v6654 = vshrl.u32 %v6653, 7
  %v6655 = vsub.s32 %v6652, %v6654
  %v6656 = vrot.slane %v6646, %v6655
  %v6658 = vunpack.c.l.s4 1966171168
  %v6659 = vunpack.c.0.s8 %v6658
  %v6660 = vlaneseq
  %v6661 = vshrl.u32 %v6660, 7
  %v6662 = vsub.s32 %v6659, %v6661
  %v6663 = vrot.slane %v6647, %v6662
  %v6665 = vunpack.c.l.s4 1966171168
  %v6666 = vunpack.c.0.s8 %v6665
  %v6667 = vlaneseq
  %v6668 = vshrl.u32 %v6667, 7
  %v6669 = vsub.s32 %v6666, %v6668
  %v6670 = vrot.slane %v6648, %v6669
  %v6672 = vunpack.c.l.s4 1966171168
  %v6673 = vunpack.c.0.s8 %v6672
  %v6674 = vlaneseq
  %v6675 = vshrl.u32 %v6674, 7
  %v6676 = vsub.s32 %v6673, %v6675
  %v6677 = vrot.slane %v6649, %v6676
  %v6678 = vcombine.low %v6656, %v6663
  %v6679 = vcombine.low %v6670, %v6677
  %v6681 = vunpack.c.l.s4 1966171168
  %v6682 = vunpack.c.0.s8 %v6681
  %v6683 = vlaneseq
  %v6684 = vshrl.u32 %v6683, 7
  %v6685 = vsub.s32 %v6682, %v6684
  %v6686 = vrot.slane %v6678, %v6685
  %v6688 = vunpack.c.l.s4 1966171168
  %v6689 = vunpack.c.0.s8 %v6688
  %v6690 = vlaneseq
  %v6691 = vshrl.u32 %v6690, 7
  %v6692 = vsub.s32 %v6689, %v6691
  %v6693 = vrot.slane %v6679, %v6692
  %v6694 = vcombine.low %v6686, %v6693
  %v6695 = vcombine.low %v3637, %v3638
  %v6696 = vcombine.low %v3639, %v3640
  %v6697 = vcombine.low %v3641, %v3642
  %v6698 = vcombine.low %v3643, %v3644
  %v6700 = vunpack.c.l.s4 1966171168
  %v6701 = vunpack.c.0.s8 %v6700
  %v6702 = vlaneseq
  %v6703 = vshrl.u32 %v6702, 7
  %v6704 = vsub.s32 %v6701, %v6703
  %v6705 = vrot.slane %v6695, %v6704
  %v6707 = vunpack.c.l.s4 1966171168
  %v6708 = vunpack.c.0.s8 %v6707
  %v6709 = vlaneseq
  %v6710 = vshrl.u32 %v6709, 7
  %v6711 = vsub.s32 %v6708, %v6710
  %v6712 = vrot.slane %v6696, %v6711
  %v6714 = vunpack.c.l.s4 1966171168
  %v6715 = vunpack.c.0.s8 %v6714
  %v6716 = vlaneseq
  %v6717 = vshrl.u32 %v6716, 7
  %v6718 = vsub.s32 %v6715, %v6717
  %v6719 = vrot.slane %v6697, %v6718
  %v6721 = vunpack.c.l.s4 1966171168
  %v6722 = vunpack.c.0.s8 %v6721
  %v6723 = vlaneseq
  %v6724 = vshrl.u32 %v6723, 7
  %v6725 = vsub.s32 %v6722, %v6724
  %v6726 = vrot.slane %v6698, %v6725
  %v6727 = vcombine.low %v6705, %v6712
  %v6728 = vcombine.low %v6719, %v6726
  %v6730 = vunpack.c.l.s4 1966171168
  %v6731 = vunpack.c.0.s8 %v6730
  %v6732 = vlaneseq
  %v6733 = vshrl.u32 %v6732, 7
  %v6734 = vsub.s32 %v6731, %v6733
  %v6735 = vrot.slane %v6727, %v6734
  %v6737 = vunpack.c.l.s4 1966171168
  %v6738 = vunpack.c.0.s8 %v6737
  %v6739 = vlaneseq
  %v6740 = vshrl.u32 %v6739, 7
  %v6741 = vsub.s32 %v6738, %v6740
  %v6742 = vrot.slane %v6728, %v6741
  %v6743 = vcombine.low %v6735, %v6742
  %v6744 = vcombine.low %v3645, %v3646
  %v6745 = vcombine.low %v3647, %v3648
  %v6746 = vcombine.low %v3649, %v3650
  %v6747 = vcombine.low %v3651, %v3652
  %v6749 = vunpack.c.l.s4 1966171168
  %v6750 = vunpack.c.0.s8 %v6749
  %v6751 = vlaneseq
  %v6752 = vshrl.u32 %v6751, 7
  %v6753 = vsub.s32 %v6750, %v6752
  %v6754 = vrot.slane %v6744, %v6753
  %v6756 = vunpack.c.l.s4 1966171168
  %v6757 = vunpack.c.0.s8 %v6756
  %v6758 = vlaneseq
  %v6759 = vshrl.u32 %v6758, 7
  %v6760 = vsub.s32 %v6757, %v6759
  %v6761 = vrot.slane %v6745, %v6760
  %v6763 = vunpack.c.l.s4 1966171168
  %v6764 = vunpack.c.0.s8 %v6763
  %v6765 = vlaneseq
  %v6766 = vshrl.u32 %v6765, 7
  %v6767 = vsub.s32 %v6764, %v6766
  %v6768 = vrot.slane %v6746, %v6767
  %v6770 = vunpack.c.l.s4 1966171168
  %v6771 = vunpack.c.0.s8 %v6770
  %v6772 = vlaneseq
  %v6773 = vshrl.u32 %v6772, 7
  %v6774 = vsub.s32 %v6771, %v6773
  %v6775 = vrot.slane %v6747, %v6774
  %v6776 = vcombine.low %v6754, %v6761
  %v6777 = vcombine.low %v6768, %v6775
  %v6779 = vunpack.c.l.s4 1966171168
  %v6780 = vunpack.c.0.s8 %v6779
  %v6781 = vlaneseq
  %v6782 = vshrl.u32 %v6781, 7
  %v6783 = vsub.s32 %v6780, %v6782
  %v6784 = vrot.slane %v6776, %v6783
  %v6786 = vunpack.c.l.s4 1966171168
  %v6787 = vunpack.c.0.s8 %v6786
  %v6788 = vlaneseq
  %v6789 = vshrl.u32 %v6788, 7
  %v6790 = vsub.s32 %v6787, %v6789
  %v6791 = vrot.slane %v6777, %v6790
  %v6792 = vcombine.low %v6784, %v6791
  %v6793 = vcombine.low %v3653, %v3654
  %v6794 = vcombine.low %v3655, %v3656
  %v6796 = vunpack.c.l.s4 1966171168
  %v6797 = vunpack.c.0.s8 %v6796
  %v6798 = vlaneseq
  %v6799 = vshrl.u32 %v6798, 7
  %v6800 = vsub.s32 %v6797, %v6799
  %v6801 = vrot.slane %v6793, %v6800
  %v6803 = vunpack.c.l.s4 1966171168
  %v6804 = vunpack.c.0.s8 %v6803
  %v6805 = vlaneseq
  %v6806 = vshrl.u32 %v6805, 7
  %v6807 = vsub.s32 %v6804, %v6806
  %v6808 = vrot.slane %v6794, %v6807
  %v6809 = vcombine.low %v6801, %v6808
  %v6811 = vunpack.c.l.s4 1966171168
  %v6812 = vunpack.c.0.s8 %v6811
  %v6813 = vlaneseq
  %v6814 = vshrl.u32 %v6813, 7
  %v6815 = vsub.s32 %v6812, %v6814
  %v6816 = vrot.slane %v6809, %v6815
  %v6817 = vcombine.low %v3660, %v3661
  %v6818 = vcombine.low %v3662, %v3663
  %v6819 = vcombine.low %v3664, %v3665
  %v6820 = vcombine.low %v3666, %v3667
  %v6822 = vunpack.c.l.s4 1966171168
  %v6823 = vunpack.c.0.s8 %v6822
  %v6824 = vlaneseq
  %v6825 = vshrl.u32 %v6824, 7
  %v6826 = vsub.s32 %v6823, %v6825
  %v6827 = vrot.slane %v6817, %v6826
  %v6829 = vunpack.c.l.s4 1966171168
  %v6830 = vunpack.c.0.s8 %v6829
  %v6831 = vlaneseq
  %v6832 = vshrl.u32 %v6831, 7
  %v6833 = vsub.s32 %v6830, %v6832
  %v6834 = vrot.slane %v6818, %v6833
  %v6836 = vunpack.c.l.s4 1966171168
  %v6837 = vunpack.c.0.s8 %v6836
  %v6838 = vlaneseq
  %v6839 = vshrl.u32 %v6838, 7
  %v6840 = vsub.s32 %v6837, %v6839
  %v6841 = vrot.slane %v6819, %v6840
  %v6843 = vunpack.c.l.s4 1966171168
  %v6844 = vunpack.c.0.s8 %v6843
  %v6845 = vlaneseq
  %v6846 = vshrl.u32 %v6845, 7
  %v6847 = vsub.s32 %v6844, %v6846
  %v6848 = vrot.slane %v6820, %v6847
  %v6849 = vcombine.low %v6827, %v6834
  %v6850 = vcombine.low %v6841, %v6848
  %v6852 = vunpack.c.l.s4 1966171168
  %v6853 = vunpack.c.0.s8 %v6852
  %v6854 = vlaneseq
  %v6855 = vshrl.u32 %v6854, 7
  %v6856 = vsub.s32 %v6853, %v6855
  %v6857 = vrot.slane %v6849, %v6856
  %v6859 = vunpack.c.l.s4 1966171168
  %v6860 = vunpack.c.0.s8 %v6859
  %v6861 = vlaneseq
  %v6862 = vshrl.u32 %v6861, 7
  %v6863 = vsub.s32 %v6860, %v6862
  %v6864 = vrot.slane %v6850, %v6863
  %v6865 = vcombine.low %v6857, %v6864
  %v6866 = vcombine.low %v3668, %v3669
  %v6867 = vcombine.low %v3670, %v3671
  %v6868 = vcombine.low %v3672, %v3673
  %v6869 = vcombine.low %v3674, %v3675
  %v6871 = vunpack.c.l.s4 1966171168
  %v6872 = vunpack.c.0.s8 %v6871
  %v6873 = vlaneseq
  %v6874 = vshrl.u32 %v6873, 7
  %v6875 = vsub.s32 %v6872, %v6874
  %v6876 = vrot.slane %v6866, %v6875
  %v6878 = vunpack.c.l.s4 1966171168
  %v6879 = vunpack.c.0.s8 %v6878
  %v6880 = vlaneseq
  %v6881 = vshrl.u32 %v6880, 7
  %v6882 = vsub.s32 %v6879, %v6881
  %v6883 = vrot.slane %v6867, %v6882
  %v6885 = vunpack.c.l.s4 1966171168
  %v6886 = vunpack.c.0.s8 %v6885
  %v6887 = vlaneseq
  %v6888 = vshrl.u32 %v6887, 7
  %v6889 = vsub.s32 %v6886, %v6888
  %v6890 = vrot.slane %v6868, %v6889
  %v6892 = vunpack.c.l.s4 1966171168
  %v6893 = vunpack.c.0.s8 %v6892
  %v6894 = vlaneseq
  %v6895 = vshrl.u32 %v6894, 7
  %v6896 = vsub.s32 %v6893, %v6895
  %v6897 = vrot.slane %v6869, %v6896
  %v6898 = vcombine.low %v6876, %v6883
  %v6899 = vcombine.low %v6890, %v6897
  %v6901 = vunpack.c.l.s4 1966171168
  %v6902 = vunpack.c.0.s8 %v6901
  %v6903 = vlaneseq
  %v6904 = vshrl.u32 %v6903, 7
  %v6905 = vsub.s32 %v6902, %v6904
  %v6906 = vrot.slane %v6898, %v6905
  %v6908 = vunpack.c.l.s4 1966171168
  %v6909 = vunpack.c.0.s8 %v6908
  %v6910 = vlaneseq
  %v6911 = vshrl.u32 %v6910, 7
  %v6912 = vsub.s32 %v6909, %v6911
  %v6913 = vrot.slane %v6899, %v6912
  %v6914 = vcombine.low %v6906, %v6913
  %v6915 = vcombine.low %v3676, %v3677
  %v6916 = vcombine.low %v3678, %v3679
  %v6917 = vcombine.low %v3680, %v3681
  %v6918 = vcombine.low %v3682, %v3683
  %v6920 = vunpack.c.l.s4 1966171168
  %v6921 = vunpack.c.0.s8 %v6920
  %v6922 = vlaneseq
  %v6923 = vshrl.u32 %v6922, 7
  %v6924 = vsub.s32 %v6921, %v6923
  %v6925 = vrot.slane %v6915, %v6924
  %v6927 = vunpack.c.l.s4 1966171168
  %v6928 = vunpack.c.0.s8 %v6927
  %v6929 = vlaneseq
  %v6930 = vshrl.u32 %v6929, 7
  %v6931 = vsub.s32 %v6928, %v6930
  %v6932 = vrot.slane %v6916, %v6931
  %v6934 = vunpack.c.l.s4 1966171168
  %v6935 = vunpack.c.0.s8 %v6934
  %v6936 = vlaneseq
  %v6937 = vshrl.u32 %v6936, 7
  %v6938 = vsub.s32 %v6935, %v6937
  %v6939 = vrot.slane %v6917, %v6938
  %v6941 = vunpack.c.l.s4 1966171168
  %v6942 = vunpack.c.0.s8 %v6941
  %v6943 = vlaneseq
  %v6944 = vshrl.u32 %v6943, 7
  %v6945 = vsub.s32 %v6942, %v6944
  %v6946 = vrot.slane %v6918, %v6945
  %v6947 = vcombine.low %v6925, %v6932
  %v6948 = vcombine.low %v6939, %v6946
  %v6950 = vunpack.c.l.s4 1966171168
  %v6951 = vunpack.c.0.s8 %v6950
  %v6952 = vlaneseq
  %v6953 = vshrl.u32 %v6952, 7
  %v6954 = vsub.s32 %v6951, %v6953
  %v6955 = vrot.slane %v6947, %v6954
  %v6957 = vunpack.c.l.s4 1966171168
  %v6958 = vunpack.c.0.s8 %v6957
  %v6959 = vlaneseq
  %v6960 = vshrl.u32 %v6959, 7
  %v6961 = vsub.s32 %v6958, %v6960
  %v6962 = vrot.slane %v6948, %v6961
  %v6963 = vcombine.low %v6955, %v6962
  %v6964 = vcombine.low %v3684, %v3685
  %v6965 = vcombine.low %v3686, %v3687
  %v6966 = vcombine.low %v3688, %v3689
  %v6967 = vcombine.low %v3690, %v3691
  %v6969 = vunpack.c.l.s4 1966171168
  %v6970 = vunpack.c.0.s8 %v6969
  %v6971 = vlaneseq
  %v6972 = vshrl.u32 %v6971, 7
  %v6973 = vsub.s32 %v6970, %v6972
  %v6974 = vrot.slane %v6964, %v6973
  %v6976 = vunpack.c.l.s4 1966171168
  %v6977 = vunpack.c.0.s8 %v6976
  %v6978 = vlaneseq
  %v6979 = vshrl.u32 %v6978, 7
  %v6980 = vsub.s32 %v6977, %v6979
  %v6981 = vrot.slane %v6965, %v6980
  %v6983 = vunpack.c.l.s4 1966171168
  %v6984 = vunpack.c.0.s8 %v6983
  %v6985 = vlaneseq
  %v6986 = vshrl.u32 %v6985, 7
  %v6987 = vsub.s32 %v6984, %v6986
  %v6988 = vrot.slane %v6966, %v6987
  %v6990 = vunpack.c.l.s4 1966171168
  %v6991 = vunpack.c.0.s8 %v6990
  %v6992 = vlaneseq
  %v6993 = vshrl.u32 %v6992, 7
  %v6994 = vsub.s32 %v6991, %v6993
  %v6995 = vrot.slane %v6967, %v6994
  %v6996 = vcombine.low %v6974, %v6981
  %v6997 = vcombine.low %v6988, %v6995
  %v6999 = vunpack.c.l.s4 1966171168
  %v7000 = vunpack.c.0.s8 %v6999
  %v7001 = vlaneseq
  %v7002 = vshrl.u32 %v7001, 7
  %v7003 = vsub.s32 %v7000, %v7002
  %v7004 = vrot.slane %v6996, %v7003
  %v7006 = vunpack.c.l.s4 1966171168
  %v7007 = vunpack.c.0.s8 %v7006
  %v7008 = vlaneseq
  %v7009 = vshrl.u32 %v7008, 7
  %v7010 = vsub.s32 %v7007, %v7009
  %v7011 = vrot.slane %v6997, %v7010
  %v7012 = vcombine.low %v7004, %v7011
  %v7013 = vcombine.low %v3692, %v3693
  %v7014 = vcombine.low %v3694, %v3695
  %v7015 = vcombine.low %v3696, %v3697
  %v7016 = vcombine.low %v3698, %v3699
  %v7018 = vunpack.c.l.s4 1966171168
  %v7019 = vunpack.c.0.s8 %v7018
  %v7020 = vlaneseq
  %v7021 = vshrl.u32 %v7020, 7
  %v7022 = vsub.s32 %v7019, %v7021
  %v7023 = vrot.slane %v7013, %v7022
  %v7025 = vunpack.c.l.s4 1966171168
  %v7026 = vunpack.c.0.s8 %v7025
  %v7027 = vlaneseq
  %v7028 = vshrl.u32 %v7027, 7
  %v7029 = vsub.s32 %v7026, %v7028
  %v7030 = vrot.slane %v7014, %v7029
  %v7032 = vunpack.c.l.s4 1966171168
  %v7033 = vunpack.c.0.s8 %v7032
  %v7034 = vlaneseq
  %v7035 = vshrl.u32 %v7034, 7
  %v7036 = vsub.s32 %v7033, %v7035
  %v7037 = vrot.slane %v7015, %v7036
  %v7039 = vunpack.c.l.s4 1966171168
  %v7040 = vunpack.c.0.s8 %v7039
  %v7041 = vlaneseq
  %v7042 = vshrl.u32 %v7041, 7
  %v7043 = vsub.s32 %v7040, %v7042
  %v7044 = vrot.slane %v7016, %v7043
  %v7045 = vcombine.low %v7023, %v7030
  %v7046 = vcombine.low %v7037, %v7044
  %v7048 = vunpack.c.l.s4 1966171168
  %v7049 = vunpack.c.0.s8 %v7048
  %v7050 = vlaneseq
  %v7051 = vshrl.u32 %v7050, 7
  %v7052 = vsub.s32 %v7049, %v7051
  %v7053 = vrot.slane %v7045, %v7052
  %v7055 = vunpack.c.l.s4 1966171168
  %v7056 = vunpack.c.0.s8 %v7055
  %v7057 = vlaneseq
  %v7058 = vshrl.u32 %v7057, 7
  %v7059 = vsub.s32 %v7056, %v7058
  %v7060 = vrot.slane %v7046, %v7059
  %v7061 = vcombine.low %v7053, %v7060
  %v7062 = vcombine.low %v3700, %v3701
  %v7063 = vcombine.low %v3702, %v3703
  %v7065 = vunpack.c.l.s4 1966171168
  %v7066 = vunpack.c.0.s8 %v7065
  %v7067 = vlaneseq
  %v7068 = vshrl.u32 %v7067, 7
  %v7069 = vsub.s32 %v7066, %v7068
  %v7070 = vrot.slane %v7062, %v7069
  %v7072 = vunpack.c.l.s4 1966171168
  %v7073 = vunpack.c.0.s8 %v7072
  %v7074 = vlaneseq
  %v7075 = vshrl.u32 %v7074, 7
  %v7076 = vsub.s32 %v7073, %v7075
  %v7077 = vrot.slane %v7063, %v7076
  %v7078 = vcombine.low %v7070, %v7077
  %v7080 = vunpack.c.l.s4 1966171168
  %v7081 = vunpack.c.0.s8 %v7080
  %v7082 = vlaneseq
  %v7083 = vshrl.u32 %v7082, 7
  %v7084 = vsub.s32 %v7081, %v7083
  %v7085 = vrot.slane %v7078, %v7084
  %v7086 = vcombine.low %v3707, %v3708
  %v7087 = vcombine.low %v3709, %v3710
  %v7088 = vcombine.low %v3711, %v3712
  %v7089 = vcombine.low %v3713, %v3714
  %v7091 = vunpack.c.l.s4 1966171168
  %v7092 = vunpack.c.0.s8 %v7091
  %v7093 = vlaneseq
  %v7094 = vshrl.u32 %v7093, 7
  %v7095 = vsub.s32 %v7092, %v7094
  %v7096 = vrot.slane %v7086, %v7095
  %v7098 = vunpack.c.l.s4 1966171168
  %v7099 = vunpack.c.0.s8 %v7098
  %v7100 = vlaneseq
  %v7101 = vshrl.u32 %v7100, 7
  %v7102 = vsub.s32 %v7099, %v7101
  %v7103 = vrot.slane %v7087, %v7102
  %v7105 = vunpack.c.l.s4 1966171168
  %v7106 = vunpack.c.0.s8 %v7105
  %v7107 = vlaneseq
  %v7108 = vshrl.u32 %v7107, 7
  %v7109 = vsub.s32 %v7106, %v7108
  %v7110 = vrot.slane %v7088, %v7109
  %v7112 = vunpack.c.l.s4 1966171168
  %v7113 = vunpack.c.0.s8 %v7112
  %v7114 = vlaneseq
  %v7115 = vshrl.u32 %v7114, 7
  %v7116 = vsub.s32 %v7113, %v7115
  %v7117 = vrot.slane %v7089, %v7116
  %v7118 = vcombine.low %v7096, %v7103
  %v7119 = vcombine.low %v7110, %v7117
  %v7121 = vunpack.c.l.s4 1966171168
  %v7122 = vunpack.c.0.s8 %v7121
  %v7123 = vlaneseq
  %v7124 = vshrl.u32 %v7123, 7
  %v7125 = vsub.s32 %v7122, %v7124
  %v7126 = vrot.slane %v7118, %v7125
  %v7128 = vunpack.c.l.s4 1966171168
  %v7129 = vunpack.c.0.s8 %v7128
  %v7130 = vlaneseq
  %v7131 = vshrl.u32 %v7130, 7
  %v7132 = vsub.s32 %v7129, %v7131
  %v7133 = vrot.slane %v7119, %v7132
  %v7134 = vcombine.low %v7126, %v7133
  %v7135 = vcombine.low %v3715, %v3716
  %v7136 = vcombine.low %v3717, %v3718
  %v7137 = vcombine.low %v3719, %v3720
  %v7138 = vcombine.low %v3721, %v3722
  %v7140 = vunpack.c.l.s4 1966171168
  %v7141 = vunpack.c.0.s8 %v7140
  %v7142 = vlaneseq
  %v7143 = vshrl.u32 %v7142, 7
  %v7144 = vsub.s32 %v7141, %v7143
  %v7145 = vrot.slane %v7135, %v7144
  %v7147 = vunpack.c.l.s4 1966171168
  %v7148 = vunpack.c.0.s8 %v7147
  %v7149 = vlaneseq
  %v7150 = vshrl.u32 %v7149, 7
  %v7151 = vsub.s32 %v7148, %v7150
  %v7152 = vrot.slane %v7136, %v7151
  %v7154 = vunpack.c.l.s4 1966171168
  %v7155 = vunpack.c.0.s8 %v7154
  %v7156 = vlaneseq
  %v7157 = vshrl.u32 %v7156, 7
  %v7158 = vsub.s32 %v7155, %v7157
  %v7159 = vrot.slane %v7137, %v7158
  %v7161 = vunpack.c.l.s4 1966171168
  %v7162 = vunpack.c.0.s8 %v7161
  %v7163 = vlaneseq
  %v7164 = vshrl.u32 %v7163, 7
  %v7165 = vsub.s32 %v7162, %v7164
  %v7166 = vrot.slane %v7138, %v7165
  %v7167 = vcombine.low %v7145, %v7152
  %v7168 = vcombine.low %v7159, %v7166
  %v7170 = vunpack.c.l.s4 1966171168
  %v7171 = vunpack.c.0.s8 %v7170
  %v7172 = vlaneseq
  %v7173 = vshrl.u32 %v7172, 7
  %v7174 = vsub.s32 %v7171, %v7173
  %v7175 = vrot.slane %v7167, %v7174
  %v7177 = vunpack.c.l.s4 1966171168
  %v7178 = vunpack.c.0.s8 %v7177
  %v7179 = vlaneseq
  %v7180 = vshrl.u32 %v7179, 7
  %v7181 = vsub.s32 %v7178, %v7180
  %v7182 = vrot.slane %v7168, %v7181
  %v7183 = vcombine.low %v7175, %v7182
  %v7184 = vcombine.low %v3723, %v3724
  %v7185 = vcombine.low %v3725, %v3726
  %v7186 = vcombine.low %v3727, %v3728
  %v7187 = vcombine.low %v3729, %v3730
  %v7189 = vunpack.c.l.s4 1966171168
  %v7190 = vunpack.c.0.s8 %v7189
  %v7191 = vlaneseq
  %v7192 = vshrl.u32 %v7191, 7
  %v7193 = vsub.s32 %v7190, %v7192
  %v7194 = vrot.slane %v7184, %v7193
  %v7196 = vunpack.c.l.s4 1966171168
  %v7197 = vunpack.c.0.s8 %v7196
  %v7198 = vlaneseq
  %v7199 = vshrl.u32 %v7198, 7
  %v7200 = vsub.s32 %v7197, %v7199
  %v7201 = vrot.slane %v7185, %v7200
  %v7203 = vunpack.c.l.s4 1966171168
  %v7204 = vunpack.c.0.s8 %v7203
  %v7205 = vlaneseq
  %v7206 = vshrl.u32 %v7205, 7
  %v7207 = vsub.s32 %v7204, %v7206
  %v7208 = vrot.slane %v7186, %v7207
  %v7210 = vunpack.c.l.s4 1966171168
  %v7211 = vunpack.c.0.s8 %v7210
  %v7212 = vlaneseq
  %v7213 = vshrl.u32 %v7212, 7
  %v7214 = vsub.s32 %v7211, %v7213
  %v7215 = vrot.slane %v7187, %v7214
  %v7216 = vcombine.low %v7194, %v7201
  %v7217 = vcombine.low %v7208, %v7215
  %v7219 = vunpack.c.l.s4 1966171168
  %v7220 = vunpack.c.0.s8 %v7219
  %v7221 = vlaneseq
  %v7222 = vshrl.u32 %v7221, 7
  %v7223 = vsub.s32 %v7220, %v7222
  %v7224 = vrot.slane %v7216, %v7223
  %v7226 = vunpack.c.l.s4 1966171168
  %v7227 = vunpack.c.0.s8 %v7226
  %v7228 = vlaneseq
  %v7229 = vshrl.u32 %v7228, 7
  %v7230 = vsub.s32 %v7227, %v7229
  %v7231 = vrot.slane %v7217, %v7230
  %v7232 = vcombine.low %v7224, %v7231
  %v7233 = vcombine.low %v3731, %v3732
  %v7234 = vcombine.low %v3733, %v3734
  %v7235 = vcombine.low %v3735, %v3736
  %v7236 = vcombine.low %v3737, %v3738
  %v7238 = vunpack.c.l.s4 1966171168
  %v7239 = vunpack.c.0.s8 %v7238
  %v7240 = vlaneseq
  %v7241 = vshrl.u32 %v7240, 7
  %v7242 = vsub.s32 %v7239, %v7241
  %v7243 = vrot.slane %v7233, %v7242
  %v7245 = vunpack.c.l.s4 1966171168
  %v7246 = vunpack.c.0.s8 %v7245
  %v7247 = vlaneseq
  %v7248 = vshrl.u32 %v7247, 7
  %v7249 = vsub.s32 %v7246, %v7248
  %v7250 = vrot.slane %v7234, %v7249
  %v7252 = vunpack.c.l.s4 1966171168
  %v7253 = vunpack.c.0.s8 %v7252
  %v7254 = vlaneseq
  %v7255 = vshrl.u32 %v7254, 7
  %v7256 = vsub.s32 %v7253, %v7255
  %v7257 = vrot.slane %v7235, %v7256
  %v7259 = vunpack.c.l.s4 1966171168
  %v7260 = vunpack.c.0.s8 %v7259
  %v7261 = vlaneseq
  %v7262 = vshrl.u32 %v7261, 7
  %v7263 = vsub.s32 %v7260, %v7262
  %v7264 = vrot.slane %v7236, %v7263
  %v7265 = vcombine.low %v7243, %v7250
  %v7266 = vcombine.low %v7257, %v7264
  %v7268 = vunpack.c.l.s4 1966171168
  %v7269 = vunpack.c.0.s8 %v7268
  %v7270 = vlaneseq
  %v7271 = vshrl.u32 %v7270, 7
  %v7272 = vsub.s32 %v7269, %v7271
  %v7273 = vrot.slane %v7265, %v7272
  %v7275 = vunpack.c.l.s4 1966171168
  %v7276 = vunpack.c.0.s8 %v7275
  %v7277 = vlaneseq
  %v7278 = vshrl.u32 %v7277, 7
  %v7279 = vsub.s32 %v7276, %v7278
  %v7280 = vrot.slane %v7266, %v7279
  %v7281 = vcombine.low %v7273, %v7280
  %v7282 = vcombine.low %v3739, %v3740
  %v7283 = vcombine.low %v3741, %v3742
  %v7284 = vcombine.low %v3743, %v3744
  %v7285 = vcombine.low %v3745, %v3746
  %v7287 = vunpack.c.l.s4 1966171168
  %v7288 = vunpack.c.0.s8 %v7287
  %v7289 = vlaneseq
  %v7290 = vshrl.u32 %v7289, 7
  %v7291 = vsub.s32 %v7288, %v7290
  %v7292 = vrot.slane %v7282, %v7291
  %v7294 = vunpack.c.l.s4 1966171168
  %v7295 = vunpack.c.0.s8 %v7294
  %v7296 = vlaneseq
  %v7297 = vshrl.u32 %v7296, 7
  %v7298 = vsub.s32 %v7295, %v7297
  %v7299 = vrot.slane %v7283, %v7298
  %v7301 = vunpack.c.l.s4 1966171168
  %v7302 = vunpack.c.0.s8 %v7301
  %v7303 = vlaneseq
  %v7304 = vshrl.u32 %v7303, 7
  %v7305 = vsub.s32 %v7302, %v7304
  %v7306 = vrot.slane %v7284, %v7305
  %v7308 = vunpack.c.l.s4 1966171168
  %v7309 = vunpack.c.0.s8 %v7308
  %v7310 = vlaneseq
  %v7311 = vshrl.u32 %v7310, 7
  %v7312 = vsub.s32 %v7309, %v7311
  %v7313 = vrot.slane %v7285, %v7312
  %v7314 = vcombine.low %v7292, %v7299
  %v7315 = vcombine.low %v7306, %v7313
  %v7317 = vunpack.c.l.s4 1966171168
  %v7318 = vunpack.c.0.s8 %v7317
  %v7319 = vlaneseq
  %v7320 = vshrl.u32 %v7319, 7
  %v7321 = vsub.s32 %v7318, %v7320
  %v7322 = vrot.slane %v7314, %v7321
  %v7324 = vunpack.c.l.s4 1966171168
  %v7325 = vunpack.c.0.s8 %v7324
  %v7326 = vlaneseq
  %v7327 = vshrl.u32 %v7326, 7
  %v7328 = vsub.s32 %v7325, %v7327
  %v7329 = vrot.slane %v7315, %v7328
  %v7330 = vcombine.low %v7322, %v7329
  %v7331 = vcombine.low %v3747, %v3748
  %v7332 = vcombine.low %v3749, %v3750
  %v7334 = vunpack.c.l.s4 1966171168
  %v7335 = vunpack.c.0.s8 %v7334
  %v7336 = vlaneseq
  %v7337 = vshrl.u32 %v7336, 7
  %v7338 = vsub.s32 %v7335, %v7337
  %v7339 = vrot.slane %v7331, %v7338
  %v7341 = vunpack.c.l.s4 1966171168
  %v7342 = vunpack.c.0.s8 %v7341
  %v7343 = vlaneseq
  %v7344 = vshrl.u32 %v7343, 7
  %v7345 = vsub.s32 %v7342, %v7344
  %v7346 = vrot.slane %v7332, %v7345
  %v7347 = vcombine.low %v7339, %v7346
  %v7349 = vunpack.c.l.s4 1966171168
  %v7350 = vunpack.c.0.s8 %v7349
  %v7351 = vlaneseq
  %v7352 = vshrl.u32 %v7351, 7
  %v7353 = vsub.s32 %v7350, %v7352
  %v7354 = vrot.slane %v7347, %v7353
  %v7355 = vcombine.low %v3754, %v3755
  %v7356 = vcombine.low %v3756, %v3757
  %v7357 = vcombine.low %v3758, %v3759
  %v7358 = vcombine.low %v3760, %v3761
  %v7360 = vunpack.c.l.s4 1966171168
  %v7361 = vunpack.c.0.s8 %v7360
  %v7362 = vlaneseq
  %v7363 = vshrl.u32 %v7362, 7
  %v7364 = vsub.s32 %v7361, %v7363
  %v7365 = vrot.slane %v7355, %v7364
  %v7367 = vunpack.c.l.s4 1966171168
  %v7368 = vunpack.c.0.s8 %v7367
  %v7369 = vlaneseq
  %v7370 = vshrl.u32 %v7369, 7
  %v7371 = vsub.s32 %v7368, %v7370
  %v7372 = vrot.slane %v7356, %v7371
  %v7374 = vunpack.c.l.s4 1966171168
  %v7375 = vunpack.c.0.s8 %v7374
  %v7376 = vlaneseq
  %v7377 = vshrl.u32 %v7376, 7
  %v7378 = vsub.s32 %v7375, %v7377
  %v7379 = vrot.slane %v7357, %v7378
  %v7381 = vunpack.c.l.s4 1966171168
  %v7382 = vunpack.c.0.s8 %v7381
  %v7383 = vlaneseq
  %v7384 = vshrl.u32 %v7383, 7
  %v7385 = vsub.s32 %v7382, %v7384
  %v7386 = vrot.slane %v7358, %v7385
  %v7387 = vcombine.low %v7365, %v7372
  %v7388 = vcombine.low %v7379, %v7386
  %v7390 = vunpack.c.l.s4 1966171168
  %v7391 = vunpack.c.0.s8 %v7390
  %v7392 = vlaneseq
  %v7393 = vshrl.u32 %v7392, 7
  %v7394 = vsub.s32 %v7391, %v7393
  %v7395 = vrot.slane %v7387, %v7394
  %v7397 = vunpack.c.l.s4 1966171168
  %v7398 = vunpack.c.0.s8 %v7397
  %v7399 = vlaneseq
  %v7400 = vshrl.u32 %v7399, 7
  %v7401 = vsub.s32 %v7398, %v7400
  %v7402 = vrot.slane %v7388, %v7401
  %v7403 = vcombine.low %v7395, %v7402
  %v7404 = vcombine.low %v3762, %v3763
  %v7405 = vcombine.low %v3764, %v3765
  %v7406 = vcombine.low %v3766, %v3767
  %v7407 = vcombine.low %v3768, %v3769
  %v7409 = vunpack.c.l.s4 1966171168
  %v7410 = vunpack.c.0.s8 %v7409
  %v7411 = vlaneseq
  %v7412 = vshrl.u32 %v7411, 7
  %v7413 = vsub.s32 %v7410, %v7412
  %v7414 = vrot.slane %v7404, %v7413
  %v7416 = vunpack.c.l.s4 1966171168
  %v7417 = vunpack.c.0.s8 %v7416
  %v7418 = vlaneseq
  %v7419 = vshrl.u32 %v7418, 7
  %v7420 = vsub.s32 %v7417, %v7419
  %v7421 = vrot.slane %v7405, %v7420
  %v7423 = vunpack.c.l.s4 1966171168
  %v7424 = vunpack.c.0.s8 %v7423
  %v7425 = vlaneseq
  %v7426 = vshrl.u32 %v7425, 7
  %v7427 = vsub.s32 %v7424, %v7426
  %v7428 = vrot.slane %v7406, %v7427
  %v7430 = vunpack.c.l.s4 1966171168
  %v7431 = vunpack.c.0.s8 %v7430
  %v7432 = vlaneseq
  %v7433 = vshrl.u32 %v7432, 7
  %v7434 = vsub.s32 %v7431, %v7433
  %v7435 = vrot.slane %v7407, %v7434
  %v7436 = vcombine.low %v7414, %v7421
  %v7437 = vcombine.low %v7428, %v7435
  %v7439 = vunpack.c.l.s4 1966171168
  %v7440 = vunpack.c.0.s8 %v7439
  %v7441 = vlaneseq
  %v7442 = vshrl.u32 %v7441, 7
  %v7443 = vsub.s32 %v7440, %v7442
  %v7444 = vrot.slane %v7436, %v7443
  %v7446 = vunpack.c.l.s4 1966171168
  %v7447 = vunpack.c.0.s8 %v7446
  %v7448 = vlaneseq
  %v7449 = vshrl.u32 %v7448, 7
  %v7450 = vsub.s32 %v7447, %v7449
  %v7451 = vrot.slane %v7437, %v7450
  %v7452 = vcombine.low %v7444, %v7451
  %v7453 = vcombine.low %v3770, %v3771
  %v7454 = vcombine.low %v3772, %v3773
  %v7455 = vcombine.low %v3774, %v3775
  %v7456 = vcombine.low %v3776, %v3777
  %v7458 = vunpack.c.l.s4 1966171168
  %v7459 = vunpack.c.0.s8 %v7458
  %v7460 = vlaneseq
  %v7461 = vshrl.u32 %v7460, 7
  %v7462 = vsub.s32 %v7459, %v7461
  %v7463 = vrot.slane %v7453, %v7462
  %v7465 = vunpack.c.l.s4 1966171168
  %v7466 = vunpack.c.0.s8 %v7465
  %v7467 = vlaneseq
  %v7468 = vshrl.u32 %v7467, 7
  %v7469 = vsub.s32 %v7466, %v7468
  %v7470 = vrot.slane %v7454, %v7469
  %v7472 = vunpack.c.l.s4 1966171168
  %v7473 = vunpack.c.0.s8 %v7472
  %v7474 = vlaneseq
  %v7475 = vshrl.u32 %v7474, 7
  %v7476 = vsub.s32 %v7473, %v7475
  %v7477 = vrot.slane %v7455, %v7476
  %v7479 = vunpack.c.l.s4 1966171168
  %v7480 = vunpack.c.0.s8 %v7479
  %v7481 = vlaneseq
  %v7482 = vshrl.u32 %v7481, 7
  %v7483 = vsub.s32 %v7480, %v7482
  %v7484 = vrot.slane %v7456, %v7483
  %v7485 = vcombine.low %v7463, %v7470
  %v7486 = vcombine.low %v7477, %v7484
  %v7488 = vunpack.c.l.s4 1966171168
  %v7489 = vunpack.c.0.s8 %v7488
  %v7490 = vlaneseq
  %v7491 = vshrl.u32 %v7490, 7
  %v7492 = vsub.s32 %v7489, %v7491
  %v7493 = vrot.slane %v7485, %v7492
  %v7495 = vunpack.c.l.s4 1966171168
  %v7496 = vunpack.c.0.s8 %v7495
  %v7497 = vlaneseq
  %v7498 = vshrl.u32 %v7497, 7
  %v7499 = vsub.s32 %v7496, %v7498
  %v7500 = vrot.slane %v7486, %v7499
  %v7501 = vcombine.low %v7493, %v7500
  %v7502 = vcombine.low %v3778, %v3779
  %v7503 = vcombine.low %v3780, %v3781
  %v7504 = vcombine.low %v3782, %v3783
  %v7505 = vcombine.low %v3784, %v3785
  %v7507 = vunpack.c.l.s4 1966171168
  %v7508 = vunpack.c.0.s8 %v7507
  %v7509 = vlaneseq
  %v7510 = vshrl.u32 %v7509, 7
  %v7511 = vsub.s32 %v7508, %v7510
  %v7512 = vrot.slane %v7502, %v7511
  %v7514 = vunpack.c.l.s4 1966171168
  %v7515 = vunpack.c.0.s8 %v7514
  %v7516 = vlaneseq
  %v7517 = vshrl.u32 %v7516, 7
  %v7518 = vsub.s32 %v7515, %v7517
  %v7519 = vrot.slane %v7503, %v7518
  %v7521 = vunpack.c.l.s4 1966171168
  %v7522 = vunpack.c.0.s8 %v7521
  %v7523 = vlaneseq
  %v7524 = vshrl.u32 %v7523, 7
  %v7525 = vsub.s32 %v7522, %v7524
  %v7526 = vrot.slane %v7504, %v7525
  %v7528 = vunpack.c.l.s4 1966171168
  %v7529 = vunpack.c.0.s8 %v7528
  %v7530 = vlaneseq
  %v7531 = vshrl.u32 %v7530, 7
  %v7532 = vsub.s32 %v7529, %v7531
  %v7533 = vrot.slane %v7505, %v7532
  %v7534 = vcombine.low %v7512, %v7519
  %v7535 = vcombine.low %v7526, %v7533
  %v7537 = vunpack.c.l.s4 1966171168
  %v7538 = vunpack.c.0.s8 %v7537
  %v7539 = vlaneseq
  %v7540 = vshrl.u32 %v7539, 7
  %v7541 = vsub.s32 %v7538, %v7540
  %v7542 = vrot.slane %v7534, %v7541
  %v7544 = vunpack.c.l.s4 1966171168
  %v7545 = vunpack.c.0.s8 %v7544
  %v7546 = vlaneseq
  %v7547 = vshrl.u32 %v7546, 7
  %v7548 = vsub.s32 %v7545, %v7547
  %v7549 = vrot.slane %v7535, %v7548
  %v7550 = vcombine.low %v7542, %v7549
  %v7551 = vcombine.low %v3786, %v3787
  %v7552 = vcombine.low %v3788, %v3789
  %v7553 = vcombine.low %v3790, %v3791
  %v7554 = vcombine.low %v3792, %v3793
  %v7556 = vunpack.c.l.s4 1966171168
  %v7557 = vunpack.c.0.s8 %v7556
  %v7558 = vlaneseq
  %v7559 = vshrl.u32 %v7558, 7
  %v7560 = vsub.s32 %v7557, %v7559
  %v7561 = vrot.slane %v7551, %v7560
  %v7563 = vunpack.c.l.s4 1966171168
  %v7564 = vunpack.c.0.s8 %v7563
  %v7565 = vlaneseq
  %v7566 = vshrl.u32 %v7565, 7
  %v7567 = vsub.s32 %v7564, %v7566
  %v7568 = vrot.slane %v7552, %v7567
  %v7570 = vunpack.c.l.s4 1966171168
  %v7571 = vunpack.c.0.s8 %v7570
  %v7572 = vlaneseq
  %v7573 = vshrl.u32 %v7572, 7
  %v7574 = vsub.s32 %v7571, %v7573
  %v7575 = vrot.slane %v7553, %v7574
  %v7577 = vunpack.c.l.s4 1966171168
  %v7578 = vunpack.c.0.s8 %v7577
  %v7579 = vlaneseq
  %v7580 = vshrl.u32 %v7579, 7
  %v7581 = vsub.s32 %v7578, %v7580
  %v7582 = vrot.slane %v7554, %v7581
  %v7583 = vcombine.low %v7561, %v7568
  %v7584 = vcombine.low %v7575, %v7582
  %v7586 = vunpack.c.l.s4 1966171168
  %v7587 = vunpack.c.0.s8 %v7586
  %v7588 = vlaneseq
  %v7589 = vshrl.u32 %v7588, 7
  %v7590 = vsub.s32 %v7587, %v7589
  %v7591 = vrot.slane %v7583, %v7590
  %v7593 = vunpack.c.l.s4 1966171168
  %v7594 = vunpack.c.0.s8 %v7593
  %v7595 = vlaneseq
  %v7596 = vshrl.u32 %v7595, 7
  %v7597 = vsub.s32 %v7594, %v7596
  %v7598 = vrot.slane %v7584, %v7597
  %v7599 = vcombine.low %v7591, %v7598
  %v7600 = vcombine.low %v3794, %v3795
  %v7601 = vcombine.low %v3796, %v3797
  %v7603 = vunpack.c.l.s4 1966171168
  %v7604 = vunpack.c.0.s8 %v7603
  %v7605 = vlaneseq
  %v7606 = vshrl.u32 %v7605, 7
  %v7607 = vsub.s32 %v7604, %v7606
  %v7608 = vrot.slane %v7600, %v7607
  %v7610 = vunpack.c.l.s4 1966171168
  %v7611 = vunpack.c.0.s8 %v7610
  %v7612 = vlaneseq
  %v7613 = vshrl.u32 %v7612, 7
  %v7614 = vsub.s32 %v7611, %v7613
  %v7615 = vrot.slane %v7601, %v7614
  %v7616 = vcombine.low %v7608, %v7615
  %v7618 = vunpack.c.l.s4 1966171168
  %v7619 = vunpack.c.0.s8 %v7618
  %v7620 = vlaneseq
  %v7621 = vshrl.u32 %v7620, 7
  %v7622 = vsub.s32 %v7619, %v7621
  %v7623 = vrot.slane %v7616, %v7622
  %v7624 = vcombine.low %v3801, %v3802
  %v7625 = vcombine.low %v3803, %v3804
  %v7626 = vcombine.low %v3805, %v3806
  %v7627 = vcombine.low %v3807, %v3808
  %v7629 = vunpack.c.l.s4 1966171168
  %v7630 = vunpack.c.0.s8 %v7629
  %v7631 = vlaneseq
  %v7632 = vshrl.u32 %v7631, 7
  %v7633 = vsub.s32 %v7630, %v7632
  %v7634 = vrot.slane %v7624, %v7633
  %v7636 = vunpack.c.l.s4 1966171168
  %v7637 = vunpack.c.0.s8 %v7636
  %v7638 = vlaneseq
  %v7639 = vshrl.u32 %v7638, 7
  %v7640 = vsub.s32 %v7637, %v7639
  %v7641 = vrot.slane %v7625, %v7640
  %v7643 = vunpack.c.l.s4 1966171168
  %v7644 = vunpack.c.0.s8 %v7643
  %v7645 = vlaneseq
  %v7646 = vshrl.u32 %v7645, 7
  %v7647 = vsub.s32 %v7644, %v7646
  %v7648 = vrot.slane %v7626, %v7647
  %v7650 = vunpack.c.l.s4 1966171168
  %v7651 = vunpack.c.0.s8 %v7650
  %v7652 = vlaneseq
  %v7653 = vshrl.u32 %v7652, 7
  %v7654 = vsub.s32 %v7651, %v7653
  %v7655 = vrot.slane %v7627, %v7654
  %v7656 = vcombine.low %v7634, %v7641
  %v7657 = vcombine.low %v7648, %v7655
  %v7659 = vunpack.c.l.s4 1966171168
  %v7660 = vunpack.c.0.s8 %v7659
  %v7661 = vlaneseq
  %v7662 = vshrl.u32 %v7661, 7
  %v7663 = vsub.s32 %v7660, %v7662
  %v7664 = vrot.slane %v7656, %v7663
  %v7666 = vunpack.c.l.s4 1966171168
  %v7667 = vunpack.c.0.s8 %v7666
  %v7668 = vlaneseq
  %v7669 = vshrl.u32 %v7668, 7
  %v7670 = vsub.s32 %v7667, %v7669
  %v7671 = vrot.slane %v7657, %v7670
  %v7672 = vcombine.low %v7664, %v7671
  %v7673 = vcombine.low %v3809, %v3810
  %v7674 = vcombine.low %v3811, %v3812
  %v7675 = vcombine.low %v3813, %v3814
  %v7676 = vcombine.low %v3815, %v3816
  %v7678 = vunpack.c.l.s4 1966171168
  %v7679 = vunpack.c.0.s8 %v7678
  %v7680 = vlaneseq
  %v7681 = vshrl.u32 %v7680, 7
  %v7682 = vsub.s32 %v7679, %v7681
  %v7683 = vrot.slane %v7673, %v7682
  %v7685 = vunpack.c.l.s4 1966171168
  %v7686 = vunpack.c.0.s8 %v7685
  %v7687 = vlaneseq
  %v7688 = vshrl.u32 %v7687, 7
  %v7689 = vsub.s32 %v7686, %v7688
  %v7690 = vrot.slane %v7674, %v7689
  %v7692 = vunpack.c.l.s4 1966171168
  %v7693 = vunpack.c.0.s8 %v7692
  %v7694 = vlaneseq
  %v7695 = vshrl.u32 %v7694, 7
  %v7696 = vsub.s32 %v7693, %v7695
  %v7697 = vrot.slane %v7675, %v7696
  %v7699 = vunpack.c.l.s4 1966171168
  %v7700 = vunpack.c.0.s8 %v7699
  %v7701 = vlaneseq
  %v7702 = vshrl.u32 %v7701, 7
  %v7703 = vsub.s32 %v7700, %v7702
  %v7704 = vrot.slane %v7676, %v7703
  %v7705 = vcombine.low %v7683, %v7690
  %v7706 = vcombine.low %v7697, %v7704
  %v7708 = vunpack.c.l.s4 1966171168
  %v7709 = vunpack.c.0.s8 %v7708
  %v7710 = vlaneseq
  %v7711 = vshrl.u32 %v7710, 7
  %v7712 = vsub.s32 %v7709, %v7711
  %v7713 = vrot.slane %v7705, %v7712
  %v7715 = vunpack.c.l.s4 1966171168
  %v7716 = vunpack.c.0.s8 %v7715
  %v7717 = vlaneseq
  %v7718 = vshrl.u32 %v7717, 7
  %v7719 = vsub.s32 %v7716, %v7718
  %v7720 = vrot.slane %v7706, %v7719
  %v7721 = vcombine.low %v7713, %v7720
  %v7722 = vcombine.low %v3817, %v3818
  %v7723 = vcombine.low %v3819, %v3820
  %v7724 = vcombine.low %v3821, %v3822
  %v7725 = vcombine.low %v3823, %v3824
  %v7727 = vunpack.c.l.s4 1966171168
  %v7728 = vunpack.c.0.s8 %v7727
  %v7729 = vlaneseq
  %v7730 = vshrl.u32 %v7729, 7
  %v7731 = vsub.s32 %v7728, %v7730
  %v7732 = vrot.slane %v7722, %v7731
  %v7734 = vunpack.c.l.s4 1966171168
  %v7735 = vunpack.c.0.s8 %v7734
  %v7736 = vlaneseq
  %v7737 = vshrl.u32 %v7736, 7
  %v7738 = vsub.s32 %v7735, %v7737
  %v7739 = vrot.slane %v7723, %v7738
  %v7741 = vunpack.c.l.s4 1966171168
  %v7742 = vunpack.c.0.s8 %v7741
  %v7743 = vlaneseq
  %v7744 = vshrl.u32 %v7743, 7
  %v7745 = vsub.s32 %v7742, %v7744
  %v7746 = vrot.slane %v7724, %v7745
  %v7748 = vunpack.c.l.s4 1966171168
  %v7749 = vunpack.c.0.s8 %v7748
  %v7750 = vlaneseq
  %v7751 = vshrl.u32 %v7750, 7
  %v7752 = vsub.s32 %v7749, %v7751
  %v7753 = vrot.slane %v7725, %v7752
  %v7754 = vcombine.low %v7732, %v7739
  %v7755 = vcombine.low %v7746, %v7753
  %v7757 = vunpack.c.l.s4 1966171168
  %v7758 = vunpack.c.0.s8 %v7757
  %v7759 = vlaneseq
  %v7760 = vshrl.u32 %v7759, 7
  %v7761 = vsub.s32 %v7758, %v7760
  %v7762 = vrot.slane %v7754, %v7761
  %v7764 = vunpack.c.l.s4 1966171168
  %v7765 = vunpack.c.0.s8 %v7764
  %v7766 = vlaneseq
  %v7767 = vshrl.u32 %v7766, 7
  %v7768 = vsub.s32 %v7765, %v7767
  %v7769 = vrot.slane %v7755, %v7768
  %v7770 = vcombine.low %v7762, %v7769
  %v7771 = vcombine.low %v3825, %v3826
  %v7772 = vcombine.low %v3827, %v3828
  %v7773 = vcombine.low %v3829, %v3830
  %v7774 = vcombine.low %v3831, %v3832
  %v7776 = vunpack.c.l.s4 1966171168
  %v7777 = vunpack.c.0.s8 %v7776
  %v7778 = vlaneseq
  %v7779 = vshrl.u32 %v7778, 7
  %v7780 = vsub.s32 %v7777, %v7779
  %v7781 = vrot.slane %v7771, %v7780
  %v7783 = vunpack.c.l.s4 1966171168
  %v7784 = vunpack.c.0.s8 %v7783
  %v7785 = vlaneseq
  %v7786 = vshrl.u32 %v7785, 7
  %v7787 = vsub.s32 %v7784, %v7786
  %v7788 = vrot.slane %v7772, %v7787
  %v7790 = vunpack.c.l.s4 1966171168
  %v7791 = vunpack.c.0.s8 %v7790
  %v7792 = vlaneseq
  %v7793 = vshrl.u32 %v7792, 7
  %v7794 = vsub.s32 %v7791, %v7793
  %v7795 = vrot.slane %v7773, %v7794
  %v7797 = vunpack.c.l.s4 1966171168
  %v7798 = vunpack.c.0.s8 %v7797
  %v7799 = vlaneseq
  %v7800 = vshrl.u32 %v7799, 7
  %v7801 = vsub.s32 %v7798, %v7800
  %v7802 = vrot.slane %v7774, %v7801
  %v7803 = vcombine.low %v7781, %v7788
  %v7804 = vcombine.low %v7795, %v7802
  %v7806 = vunpack.c.l.s4 1966171168
  %v7807 = vunpack.c.0.s8 %v7806
  %v7808 = vlaneseq
  %v7809 = vshrl.u32 %v7808, 7
  %v7810 = vsub.s32 %v7807, %v7809
  %v7811 = vrot.slane %v7803, %v7810
  %v7813 = vunpack.c.l.s4 1966171168
  %v7814 = vunpack.c.0.s8 %v7813
  %v7815 = vlaneseq
  %v7816 = vshrl.u32 %v7815, 7
  %v7817 = vsub.s32 %v7814, %v7816
  %v7818 = vrot.slane %v7804, %v7817
  %v7819 = vcombine.low %v7811, %v7818
  %v7820 = vcombine.low %v3833, %v3834
  %v7821 = vcombine.low %v3835, %v3836
  %v7822 = vcombine.low %v3837, %v3838
  %v7823 = vcombine.low %v3839, %v3840
  %v7825 = vunpack.c.l.s4 1966171168
  %v7826 = vunpack.c.0.s8 %v7825
  %v7827 = vlaneseq
  %v7828 = vshrl.u32 %v7827, 7
  %v7829 = vsub.s32 %v7826, %v7828
  %v7830 = vrot.slane %v7820, %v7829
  %v7832 = vunpack.c.l.s4 1966171168
  %v7833 = vunpack.c.0.s8 %v7832
  %v7834 = vlaneseq
  %v7835 = vshrl.u32 %v7834, 7
  %v7836 = vsub.s32 %v7833, %v7835
  %v7837 = vrot.slane %v7821, %v7836
  %v7839 = vunpack.c.l.s4 1966171168
  %v7840 = vunpack.c.0.s8 %v7839
  %v7841 = vlaneseq
  %v7842 = vshrl.u32 %v7841, 7
  %v7843 = vsub.s32 %v7840, %v7842
  %v7844 = vrot.slane %v7822, %v7843
  %v7846 = vunpack.c.l.s4 1966171168
  %v7847 = vunpack.c.0.s8 %v7846
  %v7848 = vlaneseq
  %v7849 = vshrl.u32 %v7848, 7
  %v7850 = vsub.s32 %v7847, %v7849
  %v7851 = vrot.slane %v7823, %v7850
  %v7852 = vcombine.low %v7830, %v7837
  %v7853 = vcombine.low %v7844, %v7851
  %v7855 = vunpack.c.l.s4 1966171168
  %v7856 = vunpack.c.0.s8 %v7855
  %v7857 = vlaneseq
  %v7858 = vshrl.u32 %v7857, 7
  %v7859 = vsub.s32 %v7856, %v7858
  %v7860 = vrot.slane %v7852, %v7859
  %v7862 = vunpack.c.l.s4 1966171168
  %v7863 = vunpack.c.0.s8 %v7862
  %v7864 = vlaneseq
  %v7865 = vshrl.u32 %v7864, 7
  %v7866 = vsub.s32 %v7863, %v7865
  %v7867 = vrot.slane %v7853, %v7866
  %v7868 = vcombine.low %v7860, %v7867
  %v7869 = vcombine.low %v3841, %v3842
  %v7870 = vcombine.low %v3843, %v3844
  %v7872 = vunpack.c.l.s4 1966171168
  %v7873 = vunpack.c.0.s8 %v7872
  %v7874 = vlaneseq
  %v7875 = vshrl.u32 %v7874, 7
  %v7876 = vsub.s32 %v7873, %v7875
  %v7877 = vrot.slane %v7869, %v7876
  %v7879 = vunpack.c.l.s4 1966171168
  %v7880 = vunpack.c.0.s8 %v7879
  %v7881 = vlaneseq
  %v7882 = vshrl.u32 %v7881, 7
  %v7883 = vsub.s32 %v7880, %v7882
  %v7884 = vrot.slane %v7870, %v7883
  %v7885 = vcombine.low %v7877, %v7884
  %v7887 = vunpack.c.l.s4 1966171168
  %v7888 = vunpack.c.0.s8 %v7887
  %v7889 = vlaneseq
  %v7890 = vshrl.u32 %v7889, 7
  %v7891 = vsub.s32 %v7888, %v7890
  %v7892 = vrot.slane %v7885, %v7891
  %v7893 = vcombine.low %v3848, %v3849
  %v7894 = vcombine.low %v3850, %v3851
  %v7895 = vcombine.low %v3852, %v3853
  %v7896 = vcombine.low %v3854, %v3855
  %v7898 = vunpack.c.l.s4 1966171168
  %v7899 = vunpack.c.0.s8 %v7898
  %v7900 = vlaneseq
  %v7901 = vshrl.u32 %v7900, 7
  %v7902 = vsub.s32 %v7899, %v7901
  %v7903 = vrot.slane %v7893, %v7902
  %v7905 = vunpack.c.l.s4 1966171168
  %v7906 = vunpack.c.0.s8 %v7905
  %v7907 = vlaneseq
  %v7908 = vshrl.u32 %v7907, 7
  %v7909 = vsub.s32 %v7906, %v7908
  %v7910 = vrot.slane %v7894, %v7909
  %v7912 = vunpack.c.l.s4 1966171168
  %v7913 = vunpack.c.0.s8 %v7912
  %v7914 = vlaneseq
  %v7915 = vshrl.u32 %v7914, 7
  %v7916 = vsub.s32 %v7913, %v7915
  %v7917 = vrot.slane %v7895, %v7916
  %v7919 = vunpack.c.l.s4 1966171168
  %v7920 = vunpack.c.0.s8 %v7919
  %v7921 = vlaneseq
  %v7922 = vshrl.u32 %v7921, 7
  %v7923 = vsub.s32 %v7920, %v7922
  %v7924 = vrot.slane %v7896, %v7923
  %v7925 = vcombine.low %v7903, %v7910
  %v7926 = vcombine.low %v7917, %v7924
  %v7928 = vunpack.c.l.s4 1966171168
  %v7929 = vunpack.c.0.s8 %v7928
  %v7930 = vlaneseq
  %v7931 = vshrl.u32 %v7930, 7
  %v7932 = vsub.s32 %v7929, %v7931
  %v7933 = vrot.slane %v7925, %v7932
  %v7935 = vunpack.c.l.s4 1966171168
  %v7936 = vunpack.c.0.s8 %v7935
  %v7937 = vlaneseq
  %v7938 = vshrl.u32 %v7937, 7
  %v7939 = vsub.s32 %v7936, %v7938
  %v7940 = vrot.slane %v7926, %v7939
  %v7941 = vcombine.low %v7933, %v7940
  %v7942 = vcombine.low %v3856, %v3857
  %v7943 = vcombine.low %v3858, %v3859
  %v7944 = vcombine.low %v3860, %v3861
  %v7945 = vcombine.low %v3862, %v3863
  %v7947 = vunpack.c.l.s4 1966171168
  %v7948 = vunpack.c.0.s8 %v7947
  %v7949 = vlaneseq
  %v7950 = vshrl.u32 %v7949, 7
  %v7951 = vsub.s32 %v7948, %v7950
  %v7952 = vrot.slane %v7942, %v7951
  %v7954 = vunpack.c.l.s4 1966171168
  %v7955 = vunpack.c.0.s8 %v7954
  %v7956 = vlaneseq
  %v7957 = vshrl.u32 %v7956, 7
  %v7958 = vsub.s32 %v7955, %v7957
  %v7959 = vrot.slane %v7943, %v7958
  %v7961 = vunpack.c.l.s4 1966171168
  %v7962 = vunpack.c.0.s8 %v7961
  %v7963 = vlaneseq
  %v7964 = vshrl.u32 %v7963, 7
  %v7965 = vsub.s32 %v7962, %v7964
  %v7966 = vrot.slane %v7944, %v7965
  %v7968 = vunpack.c.l.s4 1966171168
  %v7969 = vunpack.c.0.s8 %v7968
  %v7970 = vlaneseq
  %v7971 = vshrl.u32 %v7970, 7
  %v7972 = vsub.s32 %v7969, %v7971
  %v7973 = vrot.slane %v7945, %v7972
  %v7974 = vcombine.low %v7952, %v7959
  %v7975 = vcombine.low %v7966, %v7973
  %v7977 = vunpack.c.l.s4 1966171168
  %v7978 = vunpack.c.0.s8 %v7977
  %v7979 = vlaneseq
  %v7980 = vshrl.u32 %v7979, 7
  %v7981 = vsub.s32 %v7978, %v7980
  %v7982 = vrot.slane %v7974, %v7981
  %v7984 = vunpack.c.l.s4 1966171168
  %v7985 = vunpack.c.0.s8 %v7984
  %v7986 = vlaneseq
  %v7987 = vshrl.u32 %v7986, 7
  %v7988 = vsub.s32 %v7985, %v7987
  %v7989 = vrot.slane %v7975, %v7988
  %v7990 = vcombine.low %v7982, %v7989
  %v7991 = vcombine.low %v3864, %v3865
  %v7992 = vcombine.low %v3866, %v3867
  %v7993 = vcombine.low %v3868, %v3869
  %v7994 = vcombine.low %v3870, %v3871
  %v7996 = vunpack.c.l.s4 1966171168
  %v7997 = vunpack.c.0.s8 %v7996
  %v7998 = vlaneseq
  %v7999 = vshrl.u32 %v7998, 7
  %v8000 = vsub.s32 %v7997, %v7999
  %v8001 = vrot.slane %v7991, %v8000
  %v8003 = vunpack.c.l.s4 1966171168
  %v8004 = vunpack.c.0.s8 %v8003
  %v8005 = vlaneseq
  %v8006 = vshrl.u32 %v8005, 7
  %v8007 = vsub.s32 %v8004, %v8006
  %v8008 = vrot.slane %v7992, %v8007
  %v8010 = vunpack.c.l.s4 1966171168
  %v8011 = vunpack.c.0.s8 %v8010
  %v8012 = vlaneseq
  %v8013 = vshrl.u32 %v8012, 7
  %v8014 = vsub.s32 %v8011, %v8013
  %v8015 = vrot.slane %v7993, %v8014
  %v8017 = vunpack.c.l.s4 1966171168
  %v8018 = vunpack.c.0.s8 %v8017
  %v8019 = vlaneseq
  %v8020 = vshrl.u32 %v8019, 7
  %v8021 = vsub.s32 %v8018, %v8020
  %v8022 = vrot.slane %v7994, %v8021
  %v8023 = vcombine.low %v8001, %v8008
  %v8024 = vcombine.low %v8015, %v8022
  %v8026 = vunpack.c.l.s4 1966171168
  %v8027 = vunpack.c.0.s8 %v8026
  %v8028 = vlaneseq
  %v8029 = vshrl.u32 %v8028, 7
  %v8030 = vsub.s32 %v8027, %v8029
  %v8031 = vrot.slane %v8023, %v8030
  %v8033 = vunpack.c.l.s4 1966171168
  %v8034 = vunpack.c.0.s8 %v8033
  %v8035 = vlaneseq
  %v8036 = vshrl.u32 %v8035, 7
  %v8037 = vsub.s32 %v8034, %v8036
  %v8038 = vrot.slane %v8024, %v8037
  %v8039 = vcombine.low %v8031, %v8038
  %v8040 = vcombine.low %v3872, %v3873
  %v8041 = vcombine.low %v3874, %v3875
  %v8042 = vcombine.low %v3876, %v3877
  %v8043 = vcombine.low %v3878, %v3879
  %v8045 = vunpack.c.l.s4 1966171168
  %v8046 = vunpack.c.0.s8 %v8045
  %v8047 = vlaneseq
  %v8048 = vshrl.u32 %v8047, 7
  %v8049 = vsub.s32 %v8046, %v8048
  %v8050 = vrot.slane %v8040, %v8049
  %v8052 = vunpack.c.l.s4 1966171168
  %v8053 = vunpack.c.0.s8 %v8052
  %v8054 = vlaneseq
  %v8055 = vshrl.u32 %v8054, 7
  %v8056 = vsub.s32 %v8053, %v8055
  %v8057 = vrot.slane %v8041, %v8056
  %v8059 = vunpack.c.l.s4 1966171168
  %v8060 = vunpack.c.0.s8 %v8059
  %v8061 = vlaneseq
  %v8062 = vshrl.u32 %v8061, 7
  %v8063 = vsub.s32 %v8060, %v8062
  %v8064 = vrot.slane %v8042, %v8063
  %v8066 = vunpack.c.l.s4 1966171168
  %v8067 = vunpack.c.0.s8 %v8066
  %v8068 = vlaneseq
  %v8069 = vshrl.u32 %v8068, 7
  %v8070 = vsub.s32 %v8067, %v8069
  %v8071 = vrot.slane %v8043, %v8070
  %v8072 = vcombine.low %v8050, %v8057
  %v8073 = vcombine.low %v8064, %v8071
  %v8075 = vunpack.c.l.s4 1966171168
  %v8076 = vunpack.c.0.s8 %v8075
  %v8077 = vlaneseq
  %v8078 = vshrl.u32 %v8077, 7
  %v8079 = vsub.s32 %v8076, %v8078
  %v8080 = vrot.slane %v8072, %v8079
  %v8082 = vunpack.c.l.s4 1966171168
  %v8083 = vunpack.c.0.s8 %v8082
  %v8084 = vlaneseq
  %v8085 = vshrl.u32 %v8084, 7
  %v8086 = vsub.s32 %v8083, %v8085
  %v8087 = vrot.slane %v8073, %v8086
  %v8088 = vcombine.low %v8080, %v8087
  %v8089 = vcombine.low %v3880, %v3881
  %v8090 = vcombine.low %v3882, %v3883
  %v8091 = vcombine.low %v3884, %v3885
  %v8092 = vcombine.low %v3886, %v3887
  %v8094 = vunpack.c.l.s4 1966171168
  %v8095 = vunpack.c.0.s8 %v8094
  %v8096 = vlaneseq
  %v8097 = vshrl.u32 %v8096, 7
  %v8098 = vsub.s32 %v8095, %v8097
  %v8099 = vrot.slane %v8089, %v8098
  %v8101 = vunpack.c.l.s4 1966171168
  %v8102 = vunpack.c.0.s8 %v8101
  %v8103 = vlaneseq
  %v8104 = vshrl.u32 %v8103, 7
  %v8105 = vsub.s32 %v8102, %v8104
  %v8106 = vrot.slane %v8090, %v8105
  %v8108 = vunpack.c.l.s4 1966171168
  %v8109 = vunpack.c.0.s8 %v8108
  %v8110 = vlaneseq
  %v8111 = vshrl.u32 %v8110, 7
  %v8112 = vsub.s32 %v8109, %v8111
  %v8113 = vrot.slane %v8091, %v8112
  %v8115 = vunpack.c.l.s4 1966171168
  %v8116 = vunpack.c.0.s8 %v8115
  %v8117 = vlaneseq
  %v8118 = vshrl.u32 %v8117, 7
  %v8119 = vsub.s32 %v8116, %v8118
  %v8120 = vrot.slane %v8092, %v8119
  %v8121 = vcombine.low %v8099, %v8106
  %v8122 = vcombine.low %v8113, %v8120
  %v8124 = vunpack.c.l.s4 1966171168
  %v8125 = vunpack.c.0.s8 %v8124
  %v8126 = vlaneseq
  %v8127 = vshrl.u32 %v8126, 7
  %v8128 = vsub.s32 %v8125, %v8127
  %v8129 = vrot.slane %v8121, %v8128
  %v8131 = vunpack.c.l.s4 1966171168
  %v8132 = vunpack.c.0.s8 %v8131
  %v8133 = vlaneseq
  %v8134 = vshrl.u32 %v8133, 7
  %v8135 = vsub.s32 %v8132, %v8134
  %v8136 = vrot.slane %v8122, %v8135
  %v8137 = vcombine.low %v8129, %v8136
  %v8138 = vcombine.low %v3888, %v3889
  %v8139 = vcombine.low %v3890, %v3891
  %v8141 = vunpack.c.l.s4 1966171168
  %v8142 = vunpack.c.0.s8 %v8141
  %v8143 = vlaneseq
  %v8144 = vshrl.u32 %v8143, 7
  %v8145 = vsub.s32 %v8142, %v8144
  %v8146 = vrot.slane %v8138, %v8145
  %v8148 = vunpack.c.l.s4 1966171168
  %v8149 = vunpack.c.0.s8 %v8148
  %v8150 = vlaneseq
  %v8151 = vshrl.u32 %v8150, 7
  %v8152 = vsub.s32 %v8149, %v8151
  %v8153 = vrot.slane %v8139, %v8152
  %v8154 = vcombine.low %v8146, %v8153
  %v8156 = vunpack.c.l.s4 1966171168
  %v8157 = vunpack.c.0.s8 %v8156
  %v8158 = vlaneseq
  %v8159 = vshrl.u32 %v8158, 7
  %v8160 = vsub.s32 %v8157, %v8159
  %v8161 = vrot.slane %v8154, %v8160
  %v8162 = vcombine.low %v3895, %v3896
  %v8163 = vcombine.low %v3897, %v3898
  %v8164 = vcombine.low %v3899, %v3900
  %v8165 = vcombine.low %v3901, %v3902
  %v8167 = vunpack.c.l.s4 1966171168
  %v8168 = vunpack.c.0.s8 %v8167
  %v8169 = vlaneseq
  %v8170 = vshrl.u32 %v8169, 7
  %v8171 = vsub.s32 %v8168, %v8170
  %v8172 = vrot.slane %v8162, %v8171
  %v8174 = vunpack.c.l.s4 1966171168
  %v8175 = vunpack.c.0.s8 %v8174
  %v8176 = vlaneseq
  %v8177 = vshrl.u32 %v8176, 7
  %v8178 = vsub.s32 %v8175, %v8177
  %v8179 = vrot.slane %v8163, %v8178
  %v8181 = vunpack.c.l.s4 1966171168
  %v8182 = vunpack.c.0.s8 %v8181
  %v8183 = vlaneseq
  %v8184 = vshrl.u32 %v8183, 7
  %v8185 = vsub.s32 %v8182, %v8184
  %v8186 = vrot.slane %v8164, %v8185
  %v8188 = vunpack.c.l.s4 1966171168
  %v8189 = vunpack.c.0.s8 %v8188
  %v8190 = vlaneseq
  %v8191 = vshrl.u32 %v8190, 7
  %v8192 = vsub.s32 %v8189, %v8191
  %v8193 = vrot.slane %v8165, %v8192
  %v8194 = vcombine.low %v8172, %v8179
  %v8195 = vcombine.low %v8186, %v8193
  %v8197 = vunpack.c.l.s4 1966171168
  %v8198 = vunpack.c.0.s8 %v8197
  %v8199 = vlaneseq
  %v8200 = vshrl.u32 %v8199, 7
  %v8201 = vsub.s32 %v8198, %v8200
  %v8202 = vrot.slane %v8194, %v8201
  %v8204 = vunpack.c.l.s4 1966171168
  %v8205 = vunpack.c.0.s8 %v8204
  %v8206 = vlaneseq
  %v8207 = vshrl.u32 %v8206, 7
  %v8208 = vsub.s32 %v8205, %v8207
  %v8209 = vrot.slane %v8195, %v8208
  %v8210 = vcombine.low %v8202, %v8209
  %v8211 = vcombine.low %v3903, %v3904
  %v8212 = vcombine.low %v3905, %v3906
  %v8213 = vcombine.low %v3907, %v3908
  %v8214 = vcombine.low %v3909, %v3910
  %v8216 = vunpack.c.l.s4 1966171168
  %v8217 = vunpack.c.0.s8 %v8216
  %v8218 = vlaneseq
  %v8219 = vshrl.u32 %v8218, 7
  %v8220 = vsub.s32 %v8217, %v8219
  %v8221 = vrot.slane %v8211, %v8220
  %v8223 = vunpack.c.l.s4 1966171168
  %v8224 = vunpack.c.0.s8 %v8223
  %v8225 = vlaneseq
  %v8226 = vshrl.u32 %v8225, 7
  %v8227 = vsub.s32 %v8224, %v8226
  %v8228 = vrot.slane %v8212, %v8227
  %v8230 = vunpack.c.l.s4 1966171168
  %v8231 = vunpack.c.0.s8 %v8230
  %v8232 = vlaneseq
  %v8233 = vshrl.u32 %v8232, 7
  %v8234 = vsub.s32 %v8231, %v8233
  %v8235 = vrot.slane %v8213, %v8234
  %v8237 = vunpack.c.l.s4 1966171168
  %v8238 = vunpack.c.0.s8 %v8237
  %v8239 = vlaneseq
  %v8240 = vshrl.u32 %v8239, 7
  %v8241 = vsub.s32 %v8238, %v8240
  %v8242 = vrot.slane %v8214, %v8241
  %v8243 = vcombine.low %v8221, %v8228
  %v8244 = vcombine.low %v8235, %v8242
  %v8246 = vunpack.c.l.s4 1966171168
  %v8247 = vunpack.c.0.s8 %v8246
  %v8248 = vlaneseq
  %v8249 = vshrl.u32 %v8248, 7
  %v8250 = vsub.s32 %v8247, %v8249
  %v8251 = vrot.slane %v8243, %v8250
  %v8253 = vunpack.c.l.s4 1966171168
  %v8254 = vunpack.c.0.s8 %v8253
  %v8255 = vlaneseq
  %v8256 = vshrl.u32 %v8255, 7
  %v8257 = vsub.s32 %v8254, %v8256
  %v8258 = vrot.slane %v8244, %v8257
  %v8259 = vcombine.low %v8251, %v8258
  %v8260 = vcombine.low %v3911, %v3912
  %v8261 = vcombine.low %v3913, %v3914
  %v8262 = vcombine.low %v3915, %v3916
  %v8263 = vcombine.low %v3917, %v3918
  %v8265 = vunpack.c.l.s4 1966171168
  %v8266 = vunpack.c.0.s8 %v8265
  %v8267 = vlaneseq
  %v8268 = vshrl.u32 %v8267, 7
  %v8269 = vsub.s32 %v8266, %v8268
  %v8270 = vrot.slane %v8260, %v8269
  %v8272 = vunpack.c.l.s4 1966171168
  %v8273 = vunpack.c.0.s8 %v8272
  %v8274 = vlaneseq
  %v8275 = vshrl.u32 %v8274, 7
  %v8276 = vsub.s32 %v8273, %v8275
  %v8277 = vrot.slane %v8261, %v8276
  %v8279 = vunpack.c.l.s4 1966171168
  %v8280 = vunpack.c.0.s8 %v8279
  %v8281 = vlaneseq
  %v8282 = vshrl.u32 %v8281, 7
  %v8283 = vsub.s32 %v8280, %v8282
  %v8284 = vrot.slane %v8262, %v8283
  %v8286 = vunpack.c.l.s4 1966171168
  %v8287 = vunpack.c.0.s8 %v8286
  %v8288 = vlaneseq
  %v8289 = vshrl.u32 %v8288, 7
  %v8290 = vsub.s32 %v8287, %v8289
  %v8291 = vrot.slane %v8263, %v8290
  %v8292 = vcombine.low %v8270, %v8277
  %v8293 = vcombine.low %v8284, %v8291
  %v8295 = vunpack.c.l.s4 1966171168
  %v8296 = vunpack.c.0.s8 %v8295
  %v8297 = vlaneseq
  %v8298 = vshrl.u32 %v8297, 7
  %v8299 = vsub.s32 %v8296, %v8298
  %v8300 = vrot.slane %v8292, %v8299
  %v8302 = vunpack.c.l.s4 1966171168
  %v8303 = vunpack.c.0.s8 %v8302
  %v8304 = vlaneseq
  %v8305 = vshrl.u32 %v8304, 7
  %v8306 = vsub.s32 %v8303, %v8305
  %v8307 = vrot.slane %v8293, %v8306
  %v8308 = vcombine.low %v8300, %v8307
  %v8309 = vcombine.low %v3919, %v3920
  %v8310 = vcombine.low %v3921, %v3922
  %v8311 = vcombine.low %v3923, %v3924
  %v8312 = vcombine.low %v3925, %v3926
  %v8314 = vunpack.c.l.s4 1966171168
  %v8315 = vunpack.c.0.s8 %v8314
  %v8316 = vlaneseq
  %v8317 = vshrl.u32 %v8316, 7
  %v8318 = vsub.s32 %v8315, %v8317
  %v8319 = vrot.slane %v8309, %v8318
  %v8321 = vunpack.c.l.s4 1966171168
  %v8322 = vunpack.c.0.s8 %v8321
  %v8323 = vlaneseq
  %v8324 = vshrl.u32 %v8323, 7
  %v8325 = vsub.s32 %v8322, %v8324
  %v8326 = vrot.slane %v8310, %v8325
  %v8328 = vunpack.c.l.s4 1966171168
  %v8329 = vunpack.c.0.s8 %v8328
  %v8330 = vlaneseq
  %v8331 = vshrl.u32 %v8330, 7
  %v8332 = vsub.s32 %v8329, %v8331
  %v8333 = vrot.slane %v8311, %v8332
  %v8335 = vunpack.c.l.s4 1966171168
  %v8336 = vunpack.c.0.s8 %v8335
  %v8337 = vlaneseq
  %v8338 = vshrl.u32 %v8337, 7
  %v8339 = vsub.s32 %v8336, %v8338
  %v8340 = vrot.slane %v8312, %v8339
  %v8341 = vcombine.low %v8319, %v8326
  %v8342 = vcombine.low %v8333, %v8340
  %v8344 = vunpack.c.l.s4 1966171168
  %v8345 = vunpack.c.0.s8 %v8344
  %v8346 = vlaneseq
  %v8347 = vshrl.u32 %v8346, 7
  %v8348 = vsub.s32 %v8345, %v8347
  %v8349 = vrot.slane %v8341, %v8348
  %v8351 = vunpack.c.l.s4 1966171168
  %v8352 = vunpack.c.0.s8 %v8351
  %v8353 = vlaneseq
  %v8354 = vshrl.u32 %v8353, 7
  %v8355 = vsub.s32 %v8352, %v8354
  %v8356 = vrot.slane %v8342, %v8355
  %v8357 = vcombine.low %v8349, %v8356
  %v8358 = vcombine.low %v3927, %v3928
  %v8359 = vcombine.low %v3929, %v3930
  %v8360 = vcombine.low %v3931, %v3932
  %v8361 = vcombine.low %v3933, %v3934
  %v8363 = vunpack.c.l.s4 1966171168
  %v8364 = vunpack.c.0.s8 %v8363
  %v8365 = vlaneseq
  %v8366 = vshrl.u32 %v8365, 7
  %v8367 = vsub.s32 %v8364, %v8366
  %v8368 = vrot.slane %v8358, %v8367
  %v8370 = vunpack.c.l.s4 1966171168
  %v8371 = vunpack.c.0.s8 %v8370
  %v8372 = vlaneseq
  %v8373 = vshrl.u32 %v8372, 7
  %v8374 = vsub.s32 %v8371, %v8373
  %v8375 = vrot.slane %v8359, %v8374
  %v8377 = vunpack.c.l.s4 1966171168
  %v8378 = vunpack.c.0.s8 %v8377
  %v8379 = vlaneseq
  %v8380 = vshrl.u32 %v8379, 7
  %v8381 = vsub.s32 %v8378, %v8380
  %v8382 = vrot.slane %v8360, %v8381
  %v8384 = vunpack.c.l.s4 1966171168
  %v8385 = vunpack.c.0.s8 %v8384
  %v8386 = vlaneseq
  %v8387 = vshrl.u32 %v8386, 7
  %v8388 = vsub.s32 %v8385, %v8387
  %v8389 = vrot.slane %v8361, %v8388
  %v8390 = vcombine.low %v8368, %v8375
  %v8391 = vcombine.low %v8382, %v8389
  %v8393 = vunpack.c.l.s4 1966171168
  %v8394 = vunpack.c.0.s8 %v8393
  %v8395 = vlaneseq
  %v8396 = vshrl.u32 %v8395, 7
  %v8397 = vsub.s32 %v8394, %v8396
  %v8398 = vrot.slane %v8390, %v8397
  %v8400 = vunpack.c.l.s4 1966171168
  %v8401 = vunpack.c.0.s8 %v8400
  %v8402 = vlaneseq
  %v8403 = vshrl.u32 %v8402, 7
  %v8404 = vsub.s32 %v8401, %v8403
  %v8405 = vrot.slane %v8391, %v8404
  %v8406 = vcombine.low %v8398, %v8405
  %v8407 = vcombine.low %v3935, %v3936
  %v8408 = vcombine.low %v3937, %v3938
  %v8410 = vunpack.c.l.s4 1966171168
  %v8411 = vunpack.c.0.s8 %v8410
  %v8412 = vlaneseq
  %v8413 = vshrl.u32 %v8412, 7
  %v8414 = vsub.s32 %v8411, %v8413
  %v8415 = vrot.slane %v8407, %v8414
  %v8417 = vunpack.c.l.s4 1966171168
  %v8418 = vunpack.c.0.s8 %v8417
  %v8419 = vlaneseq
  %v8420 = vshrl.u32 %v8419, 7
  %v8421 = vsub.s32 %v8418, %v8420
  %v8422 = vrot.slane %v8408, %v8421
  %v8423 = vcombine.low %v8415, %v8422
  %v8425 = vunpack.c.l.s4 1966171168
  %v8426 = vunpack.c.0.s8 %v8425
  %v8427 = vlaneseq
  %v8428 = vshrl.u32 %v8427, 7
  %v8429 = vsub.s32 %v8426, %v8428
  %v8430 = vrot.slane %v8423, %v8429
  %v8431 = vcombine.low %v3942, %v3943
  %v8432 = vcombine.low %v3944, %v3945
  %v8433 = vcombine.low %v3946, %v3947
  %v8434 = vcombine.low %v3948, %v3949
  %v8436 = vunpack.c.l.s4 1966171168
  %v8437 = vunpack.c.0.s8 %v8436
  %v8438 = vlaneseq
  %v8439 = vshrl.u32 %v8438, 7
  %v8440 = vsub.s32 %v8437, %v8439
  %v8441 = vrot.slane %v8431, %v8440
  %v8443 = vunpack.c.l.s4 1966171168
  %v8444 = vunpack.c.0.s8 %v8443
  %v8445 = vlaneseq
  %v8446 = vshrl.u32 %v8445, 7
  %v8447 = vsub.s32 %v8444, %v8446
  %v8448 = vrot.slane %v8432, %v8447
  %v8450 = vunpack.c.l.s4 1966171168
  %v8451 = vunpack.c.0.s8 %v8450
  %v8452 = vlaneseq
  %v8453 = vshrl.u32 %v8452, 7
  %v8454 = vsub.s32 %v8451, %v8453
  %v8455 = vrot.slane %v8433, %v8454
  %v8457 = vunpack.c.l.s4 1966171168
  %v8458 = vunpack.c.0.s8 %v8457
  %v8459 = vlaneseq
  %v8460 = vshrl.u32 %v8459, 7
  %v8461 = vsub.s32 %v8458, %v8460
  %v8462 = vrot.slane %v8434, %v8461
  %v8463 = vcombine.low %v8441, %v8448
  %v8464 = vcombine.low %v8455, %v8462
  %v8466 = vunpack.c.l.s4 1966171168
  %v8467 = vunpack.c.0.s8 %v8466
  %v8468 = vlaneseq
  %v8469 = vshrl.u32 %v8468, 7
  %v8470 = vsub.s32 %v8467, %v8469
  %v8471 = vrot.slane %v8463, %v8470
  %v8473 = vunpack.c.l.s4 1966171168
  %v8474 = vunpack.c.0.s8 %v8473
  %v8475 = vlaneseq
  %v8476 = vshrl.u32 %v8475, 7
  %v8477 = vsub.s32 %v8474, %v8476
  %v8478 = vrot.slane %v8464, %v8477
  %v8479 = vcombine.low %v8471, %v8478
  %v8480 = vcombine.low %v3950, %v3951
  %v8481 = vcombine.low %v3952, %v3953
  %v8482 = vcombine.low %v3954, %v3955
  %v8483 = vcombine.low %v3956, %v3957
  %v8485 = vunpack.c.l.s4 1966171168
  %v8486 = vunpack.c.0.s8 %v8485
  %v8487 = vlaneseq
  %v8488 = vshrl.u32 %v8487, 7
  %v8489 = vsub.s32 %v8486, %v8488
  %v8490 = vrot.slane %v8480, %v8489
  %v8492 = vunpack.c.l.s4 1966171168
  %v8493 = vunpack.c.0.s8 %v8492
  %v8494 = vlaneseq
  %v8495 = vshrl.u32 %v8494, 7
  %v8496 = vsub.s32 %v8493, %v8495
  %v8497 = vrot.slane %v8481, %v8496
  %v8499 = vunpack.c.l.s4 1966171168
  %v8500 = vunpack.c.0.s8 %v8499
  %v8501 = vlaneseq
  %v8502 = vshrl.u32 %v8501, 7
  %v8503 = vsub.s32 %v8500, %v8502
  %v8504 = vrot.slane %v8482, %v8503
  %v8506 = vunpack.c.l.s4 1966171168
  %v8507 = vunpack.c.0.s8 %v8506
  %v8508 = vlaneseq
  %v8509 = vshrl.u32 %v8508, 7
  %v8510 = vsub.s32 %v8507, %v8509
  %v8511 = vrot.slane %v8483, %v8510
  %v8512 = vcombine.low %v8490, %v8497
  %v8513 = vcombine.low %v8504, %v8511
  %v8515 = vunpack.c.l.s4 1966171168
  %v8516 = vunpack.c.0.s8 %v8515
  %v8517 = vlaneseq
  %v8518 = vshrl.u32 %v8517, 7
  %v8519 = vsub.s32 %v8516, %v8518
  %v8520 = vrot.slane %v8512, %v8519
  %v8522 = vunpack.c.l.s4 1966171168
  %v8523 = vunpack.c.0.s8 %v8522
  %v8524 = vlaneseq
  %v8525 = vshrl.u32 %v8524, 7
  %v8526 = vsub.s32 %v8523, %v8525
  %v8527 = vrot.slane %v8513, %v8526
  %v8528 = vcombine.low %v8520, %v8527
  %v8529 = vcombine.low %v3958, %v3959
  %v8530 = vcombine.low %v3960, %v3961
  %v8531 = vcombine.low %v3962, %v3963
  %v8532 = vcombine.low %v3964, %v3965
  %v8534 = vunpack.c.l.s4 1966171168
  %v8535 = vunpack.c.0.s8 %v8534
  %v8536 = vlaneseq
  %v8537 = vshrl.u32 %v8536, 7
  %v8538 = vsub.s32 %v8535, %v8537
  %v8539 = vrot.slane %v8529, %v8538
  %v8541 = vunpack.c.l.s4 1966171168
  %v8542 = vunpack.c.0.s8 %v8541
  %v8543 = vlaneseq
  %v8544 = vshrl.u32 %v8543, 7
  %v8545 = vsub.s32 %v8542, %v8544
  %v8546 = vrot.slane %v8530, %v8545
  %v8548 = vunpack.c.l.s4 1966171168
  %v8549 = vunpack.c.0.s8 %v8548
  %v8550 = vlaneseq
  %v8551 = vshrl.u32 %v8550, 7
  %v8552 = vsub.s32 %v8549, %v8551
  %v8553 = vrot.slane %v8531, %v8552
  %v8555 = vunpack.c.l.s4 1966171168
  %v8556 = vunpack.c.0.s8 %v8555
  %v8557 = vlaneseq
  %v8558 = vshrl.u32 %v8557, 7
  %v8559 = vsub.s32 %v8556, %v8558
  %v8560 = vrot.slane %v8532, %v8559
  %v8561 = vcombine.low %v8539, %v8546
  %v8562 = vcombine.low %v8553, %v8560
  %v8564 = vunpack.c.l.s4 1966171168
  %v8565 = vunpack.c.0.s8 %v8564
  %v8566 = vlaneseq
  %v8567 = vshrl.u32 %v8566, 7
  %v8568 = vsub.s32 %v8565, %v8567
  %v8569 = vrot.slane %v8561, %v8568
  %v8571 = vunpack.c.l.s4 1966171168
  %v8572 = vunpack.c.0.s8 %v8571
  %v8573 = vlaneseq
  %v8574 = vshrl.u32 %v8573, 7
  %v8575 = vsub.s32 %v8572, %v8574
  %v8576 = vrot.slane %v8562, %v8575
  %v8577 = vcombine.low %v8569, %v8576
  %v8578 = vcombine.low %v3966, %v3967
  %v8579 = vcombine.low %v3968, %v3969
  %v8580 = vcombine.low %v3970, %v3971
  %v8581 = vcombine.low %v3972, %v3973
  %v8583 = vunpack.c.l.s4 1966171168
  %v8584 = vunpack.c.0.s8 %v8583
  %v8585 = vlaneseq
  %v8586 = vshrl.u32 %v8585, 7
  %v8587 = vsub.s32 %v8584, %v8586
  %v8588 = vrot.slane %v8578, %v8587
  %v8590 = vunpack.c.l.s4 1966171168
  %v8591 = vunpack.c.0.s8 %v8590
  %v8592 = vlaneseq
  %v8593 = vshrl.u32 %v8592, 7
  %v8594 = vsub.s32 %v8591, %v8593
  %v8595 = vrot.slane %v8579, %v8594
  %v8597 = vunpack.c.l.s4 1966171168
  %v8598 = vunpack.c.0.s8 %v8597
  %v8599 = vlaneseq
  %v8600 = vshrl.u32 %v8599, 7
  %v8601 = vsub.s32 %v8598, %v8600
  %v8602 = vrot.slane %v8580, %v8601
  %v8604 = vunpack.c.l.s4 1966171168
  %v8605 = vunpack.c.0.s8 %v8604
  %v8606 = vlaneseq
  %v8607 = vshrl.u32 %v8606, 7
  %v8608 = vsub.s32 %v8605, %v8607
  %v8609 = vrot.slane %v8581, %v8608
  %v8610 = vcombine.low %v8588, %v8595
  %v8611 = vcombine.low %v8602, %v8609
  %v8613 = vunpack.c.l.s4 1966171168
  %v8614 = vunpack.c.0.s8 %v8613
  %v8615 = vlaneseq
  %v8616 = vshrl.u32 %v8615, 7
  %v8617 = vsub.s32 %v8614, %v8616
  %v8618 = vrot.slane %v8610, %v8617
  %v8620 = vunpack.c.l.s4 1966171168
  %v8621 = vunpack.c.0.s8 %v8620
  %v8622 = vlaneseq
  %v8623 = vshrl.u32 %v8622, 7
  %v8624 = vsub.s32 %v8621, %v8623
  %v8625 = vrot.slane %v8611, %v8624
  %v8626 = vcombine.low %v8618, %v8625
  %v8627 = vcombine.low %v3974, %v3975
  %v8628 = vcombine.low %v3976, %v3977
  %v8629 = vcombine.low %v3978, %v3979
  %v8630 = vcombine.low %v3980, %v3981
  %v8632 = vunpack.c.l.s4 1966171168
  %v8633 = vunpack.c.0.s8 %v8632
  %v8634 = vlaneseq
  %v8635 = vshrl.u32 %v8634, 7
  %v8636 = vsub.s32 %v8633, %v8635
  %v8637 = vrot.slane %v8627, %v8636
  %v8639 = vunpack.c.l.s4 1966171168
  %v8640 = vunpack.c.0.s8 %v8639
  %v8641 = vlaneseq
  %v8642 = vshrl.u32 %v8641, 7
  %v8643 = vsub.s32 %v8640, %v8642
  %v8644 = vrot.slane %v8628, %v8643
  %v8646 = vunpack.c.l.s4 1966171168
  %v8647 = vunpack.c.0.s8 %v8646
  %v8648 = vlaneseq
  %v8649 = vshrl.u32 %v8648, 7
  %v8650 = vsub.s32 %v8647, %v8649
  %v8651 = vrot.slane %v8629, %v8650
  %v8653 = vunpack.c.l.s4 1966171168
  %v8654 = vunpack.c.0.s8 %v8653
  %v8655 = vlaneseq
  %v8656 = vshrl.u32 %v8655, 7
  %v8657 = vsub.s32 %v8654, %v8656
  %v8658 = vrot.slane %v8630, %v8657
  %v8659 = vcombine.low %v8637, %v8644
  %v8660 = vcombine.low %v8651, %v8658
  %v8662 = vunpack.c.l.s4 1966171168
  %v8663 = vunpack.c.0.s8 %v8662
  %v8664 = vlaneseq
  %v8665 = vshrl.u32 %v8664, 7
  %v8666 = vsub.s32 %v8663, %v8665
  %v8667 = vrot.slane %v8659, %v8666
  %v8669 = vunpack.c.l.s4 1966171168
  %v8670 = vunpack.c.0.s8 %v8669
  %v8671 = vlaneseq
  %v8672 = vshrl.u32 %v8671, 7
  %v8673 = vsub.s32 %v8670, %v8672
  %v8674 = vrot.slane %v8660, %v8673
  %v8675 = vcombine.low %v8667, %v8674
  %v8676 = vcombine.low %v3982, %v3983
  %v8677 = vcombine.low %v3984, %v3985
  %v8679 = vunpack.c.l.s4 1966171168
  %v8680 = vunpack.c.0.s8 %v8679
  %v8681 = vlaneseq
  %v8682 = vshrl.u32 %v8681, 7
  %v8683 = vsub.s32 %v8680, %v8682
  %v8684 = vrot.slane %v8676, %v8683
  %v8686 = vunpack.c.l.s4 1966171168
  %v8687 = vunpack.c.0.s8 %v8686
  %v8688 = vlaneseq
  %v8689 = vshrl.u32 %v8688, 7
  %v8690 = vsub.s32 %v8687, %v8689
  %v8691 = vrot.slane %v8677, %v8690
  %v8692 = vcombine.low %v8684, %v8691
  %v8694 = vunpack.c.l.s4 1966171168
  %v8695 = vunpack.c.0.s8 %v8694
  %v8696 = vlaneseq
  %v8697 = vshrl.u32 %v8696, 7
  %v8698 = vsub.s32 %v8695, %v8697
  %v8699 = vrot.slane %v8692, %v8698
  %8700 = vrot.lane.b32.xlu0 %v6596, 32
  %v8701 = vpop.permute.xlu0 %8700
  %8702 = vrot.lane.b32.xlu0 %v6645, 32
  %v8703 = vpop.permute.xlu0 %8702
  %8704 = vrot.lane.b32.xlu0 %v6694, 32
  %v8705 = vpop.permute.xlu0 %8704
  %8706 = vrot.lane.b32.xlu0 %v6743, 32
  %v8707 = vpop.permute.xlu0 %8706
  %8708 = vrot.lane.b32.xlu0 %v6792, 32
  %v8709 = vpop.permute.xlu0 %8708
  %8710 = vrot.lane.b32.xlu0 %v6816, 32
  %v8711 = vpop.permute.xlu0 %8710
  %8712 = vrot.lane.b32.xlu0 %v6865, 32
  %v8713 = vpop.permute.xlu0 %8712
  %8714 = vrot.lane.b32.xlu0 %v6914, 32
  %v8715 = vpop.permute.xlu0 %8714
  %8716 = vrot.lane.b32.xlu0 %v6963, 32
  %v8717 = vpop.permute.xlu0 %8716
  %8718 = vrot.lane.b32.xlu0 %v7012, 32
  %v8719 = vpop.permute.xlu0 %8718
  %8720 = vrot.lane.b32.xlu0 %v7061, 32
  %v8721 = vpop.permute.xlu0 %8720
  %8722 = vrot.lane.b32.xlu0 %v7085, 32
  %v8723 = vpop.permute.xlu0 %8722
  %8724 = vrot.lane.b32.xlu0 %v7134, 32
  %v8725 = vpop.permute.xlu0 %8724
  %8726 = vrot.lane.b32.xlu0 %v7183, 32
  %v8727 = vpop.permute.xlu0 %8726
  %8728 = vrot.lane.b32.xlu0 %v7232, 32
  %v8729 = vpop.permute.xlu0 %8728
  %8730 = vrot.lane.b32.xlu0 %v7281, 32
  %v8731 = vpop.permute.xlu0 %8730
  %8732 = vrot.lane.b32.xlu0 %v7330, 32
  %v8733 = vpop.permute.xlu0 %8732
  %8734 = vrot.lane.b32.xlu0 %v7354, 32
  %v8735 = vpop.permute.xlu0 %8734
  %8736 = vrot.lane.b32.xlu0 %v7403, 32
  %v8737 = vpop.permute.xlu0 %8736
  %8738 = vrot.lane.b32.xlu0 %v7452, 32
  %v8739 = vpop.permute.xlu0 %8738
  %8740 = vrot.lane.b32.xlu0 %v7501, 32
  %v8741 = vpop.permute.xlu0 %8740
  %8742 = vrot.lane.b32.xlu0 %v7550, 32
  %v8743 = vpop.permute.xlu0 %8742
  %8744 = vrot.lane.b32.xlu0 %v7599, 32
  %v8745 = vpop.permute.xlu0 %8744
  %8746 = vrot.lane.b32.xlu0 %v7623, 32
  %v8747 = vpop.permute.xlu0 %8746
  %8748 = vrot.lane.b32.xlu0 %v7672, 32
  %v8749 = vpop.permute.xlu0 %8748
  %8750 = vrot.lane.b32.xlu0 %v7721, 32
  %v8751 = vpop.permute.xlu0 %8750
  %8752 = vrot.lane.b32.xlu0 %v7770, 32
  %v8753 = vpop.permute.xlu0 %8752
  %8754 = vrot.lane.b32.xlu0 %v7819, 32
  %v8755 = vpop.permute.xlu0 %8754
  %8756 = vrot.lane.b32.xlu0 %v7868, 32
  %v8757 = vpop.permute.xlu0 %8756
  %8758 = vrot.lane.b32.xlu0 %v7892, 32
  %v8759 = vpop.permute.xlu0 %8758
  %8760 = vrot.lane.b32.xlu0 %v7941, 32
  %v8761 = vpop.permute.xlu0 %8760
  %8762 = vrot.lane.b32.xlu0 %v7990, 32
  %v8763 = vpop.permute.xlu0 %8762
  %8764 = vrot.lane.b32.xlu0 %v8039, 32
  %v8765 = vpop.permute.xlu0 %8764
  %8766 = vrot.lane.b32.xlu0 %v8088, 32
  %v8767 = vpop.permute.xlu0 %8766
  %8768 = vrot.lane.b32.xlu0 %v8137, 32
  %v8769 = vpop.permute.xlu0 %8768
  %8770 = vrot.lane.b32.xlu0 %v8161, 32
  %v8771 = vpop.permute.xlu0 %8770
  %8772 = vrot.lane.b32.xlu0 %v8210, 32
  %v8773 = vpop.permute.xlu0 %8772
  %8774 = vrot.lane.b32.xlu0 %v8259, 32
  %v8775 = vpop.permute.xlu0 %8774
  %8776 = vrot.lane.b32.xlu0 %v8308, 32
  %v8777 = vpop.permute.xlu0 %8776
  %8778 = vrot.lane.b32.xlu0 %v8357, 32
  %v8779 = vpop.permute.xlu0 %8778
  %8780 = vrot.lane.b32.xlu0 %v8406, 32
  %v8781 = vpop.permute.xlu0 %8780
  %8782 = vrot.lane.b32.xlu0 %v8430, 32
  %v8783 = vpop.permute.xlu0 %8782
  %8784 = vrot.lane.b32.xlu0 %v8479, 32
  %v8785 = vpop.permute.xlu0 %8784
  %8786 = vrot.lane.b32.xlu0 %v8528, 32
  %v8787 = vpop.permute.xlu0 %8786
  %8788 = vrot.lane.b32.xlu0 %v8577, 32
  %v8789 = vpop.permute.xlu0 %8788
  %8790 = vrot.lane.b32.xlu0 %v8626, 32
  %v8791 = vpop.permute.xlu0 %8790
  %8792 = vrot.lane.b32.xlu0 %v8675, 32
  %v8793 = vpop.permute.xlu0 %8792
  %8794 = vrot.lane.b32.xlu0 %v8699, 32
  %v8795 = vpop.permute.xlu0 %8794
  %v8852 = vcombine.low %v4357, %v4364
  %v8853 = vcombine.low %v4371, %v4399
  %v8855 = vunpack.c.l.s4 1966171168
  %v8856 = vunpack.c.0.s8 %v8855
  %v8857 = vlaneseq
  %v8858 = vshrl.u32 %v8857, 7
  %v8859 = vsub.s32 %v8856, %v8858
  %v8860 = vrot.slane %v8852, %v8859
  %v8862 = vunpack.c.l.s4 1966171168
  %v8863 = vunpack.c.0.s8 %v8862
  %v8864 = vlaneseq
  %v8865 = vshrl.u32 %v8864, 7
  %v8866 = vsub.s32 %v8863, %v8865
  %v8867 = vrot.slane %v8853, %v8866
  %v8868 = vcombine.low %v8860, %v8867
  %v8869 = vcombine.low %v4406, %v4413
  %v8870 = vcombine.low %v4420, %v4448
  %v8872 = vunpack.c.l.s4 1966171168
  %v8873 = vunpack.c.0.s8 %v8872
  %v8874 = vlaneseq
  %v8875 = vshrl.u32 %v8874, 7
  %v8876 = vsub.s32 %v8873, %v8875
  %v8877 = vrot.slane %v8869, %v8876
  %v8879 = vunpack.c.l.s4 1966171168
  %v8880 = vunpack.c.0.s8 %v8879
  %v8881 = vlaneseq
  %v8882 = vshrl.u32 %v8881, 7
  %v8883 = vsub.s32 %v8880, %v8882
  %v8884 = vrot.slane %v8870, %v8883
  %v8885 = vcombine.low %v8877, %v8884
  %v8886 = vcombine.low %v4455, %v4462
  %v8887 = vcombine.low %v4469, %v4497
  %v8889 = vunpack.c.l.s4 1966171168
  %v8890 = vunpack.c.0.s8 %v8889
  %v8891 = vlaneseq
  %v8892 = vshrl.u32 %v8891, 7
  %v8893 = vsub.s32 %v8890, %v8892
  %v8894 = vrot.slane %v8886, %v8893
  %v8896 = vunpack.c.l.s4 1966171168
  %v8897 = vunpack.c.0.s8 %v8896
  %v8898 = vlaneseq
  %v8899 = vshrl.u32 %v8898, 7
  %v8900 = vsub.s32 %v8897, %v8899
  %v8901 = vrot.slane %v8887, %v8900
  %v8902 = vcombine.low %v8894, %v8901
  %v8903 = vcombine.low %v4504, %v4511
  %v8904 = vcombine.low %v4518, %v4546
  %v8906 = vunpack.c.l.s4 1966171168
  %v8907 = vunpack.c.0.s8 %v8906
  %v8908 = vlaneseq
  %v8909 = vshrl.u32 %v8908, 7
  %v8910 = vsub.s32 %v8907, %v8909
  %v8911 = vrot.slane %v8903, %v8910
  %v8913 = vunpack.c.l.s4 1966171168
  %v8914 = vunpack.c.0.s8 %v8913
  %v8915 = vlaneseq
  %v8916 = vshrl.u32 %v8915, 7
  %v8917 = vsub.s32 %v8914, %v8916
  %v8918 = vrot.slane %v8904, %v8917
  %v8919 = vcombine.low %v8911, %v8918
  %v8920 = vcombine.low %v4553, %v4560
  %v8921 = vcombine.low %v4567, %v4593
  %v8923 = vunpack.c.l.s4 1966171168
  %v8924 = vunpack.c.0.s8 %v8923
  %v8925 = vlaneseq
  %v8926 = vshrl.u32 %v8925, 7
  %v8927 = vsub.s32 %v8924, %v8926
  %v8928 = vrot.slane %v8920, %v8927
  %v8930 = vunpack.c.l.s4 1966171168
  %v8931 = vunpack.c.0.s8 %v8930
  %v8932 = vlaneseq
  %v8933 = vshrl.u32 %v8932, 7
  %v8934 = vsub.s32 %v8931, %v8933
  %v8935 = vrot.slane %v8921, %v8934
  %v8936 = vcombine.low %v8928, %v8935
  %v8937 = vcombine.low %v3656, %v3657
  %v8939 = vunpack.c.l.s4 1966171168
  %v8940 = vunpack.c.0.s8 %v8939
  %v8941 = vlaneseq
  %v8942 = vshrl.u32 %v8941, 7
  %v8943 = vsub.s32 %v8940, %v8942
  %v8944 = vrot.slane %v8937, %v8943
  %v8945 = vcombine.low %v4600, %v8944
  %v8947 = vunpack.c.l.s4 1966171168
  %v8948 = vunpack.c.0.s8 %v8947
  %v8949 = vlaneseq
  %v8950 = vshrl.u32 %v8949, 7
  %v8951 = vsub.s32 %v8948, %v8950
  %v8952 = vrot.slane %v8945, %v8951
  %v8953 = vcombine.low %v4626, %v4633
  %v8954 = vcombine.low %v4640, %v4668
  %v8956 = vunpack.c.l.s4 1966171168
  %v8957 = vunpack.c.0.s8 %v8956
  %v8958 = vlaneseq
  %v8959 = vshrl.u32 %v8958, 7
  %v8960 = vsub.s32 %v8957, %v8959
  %v8961 = vrot.slane %v8953, %v8960
  %v8963 = vunpack.c.l.s4 1966171168
  %v8964 = vunpack.c.0.s8 %v8963
  %v8965 = vlaneseq
  %v8966 = vshrl.u32 %v8965, 7
  %v8967 = vsub.s32 %v8964, %v8966
  %v8968 = vrot.slane %v8954, %v8967
  %v8969 = vcombine.low %v8961, %v8968
  %v8970 = vcombine.low %v4675, %v4682
  %v8971 = vcombine.low %v4689, %v4717
  %v8973 = vunpack.c.l.s4 1966171168
  %v8974 = vunpack.c.0.s8 %v8973
  %v8975 = vlaneseq
  %v8976 = vshrl.u32 %v8975, 7
  %v8977 = vsub.s32 %v8974, %v8976
  %v8978 = vrot.slane %v8970, %v8977
  %v8980 = vunpack.c.l.s4 1966171168
  %v8981 = vunpack.c.0.s8 %v8980
  %v8982 = vlaneseq
  %v8983 = vshrl.u32 %v8982, 7
  %v8984 = vsub.s32 %v8981, %v8983
  %v8985 = vrot.slane %v8971, %v8984
  %v8986 = vcombine.low %v8978, %v8985
  %v8987 = vcombine.low %v4724, %v4731
  %v8988 = vcombine.low %v4738, %v4766
  %v8990 = vunpack.c.l.s4 1966171168
  %v8991 = vunpack.c.0.s8 %v8990
  %v8992 = vlaneseq
  %v8993 = vshrl.u32 %v8992, 7
  %v8994 = vsub.s32 %v8991, %v8993
  %v8995 = vrot.slane %v8987, %v8994
  %v8997 = vunpack.c.l.s4 1966171168
  %v8998 = vunpack.c.0.s8 %v8997
  %v8999 = vlaneseq
  %v9000 = vshrl.u32 %v8999, 7
  %v9001 = vsub.s32 %v8998, %v9000
  %v9002 = vrot.slane %v8988, %v9001
  %v9003 = vcombine.low %v8995, %v9002
  %v9004 = vcombine.low %v4773, %v4780
  %v9005 = vcombine.low %v4787, %v4815
  %v9007 = vunpack.c.l.s4 1966171168
  %v9008 = vunpack.c.0.s8 %v9007
  %v9009 = vlaneseq
  %v9010 = vshrl.u32 %v9009, 7
  %v9011 = vsub.s32 %v9008, %v9010
  %v9012 = vrot.slane %v9004, %v9011
  %v9014 = vunpack.c.l.s4 1966171168
  %v9015 = vunpack.c.0.s8 %v9014
  %v9016 = vlaneseq
  %v9017 = vshrl.u32 %v9016, 7
  %v9018 = vsub.s32 %v9015, %v9017
  %v9019 = vrot.slane %v9005, %v9018
  %v9020 = vcombine.low %v9012, %v9019
  %v9021 = vcombine.low %v4822, %v4829
  %v9022 = vcombine.low %v4836, %v4862
  %v9024 = vunpack.c.l.s4 1966171168
  %v9025 = vunpack.c.0.s8 %v9024
  %v9026 = vlaneseq
  %v9027 = vshrl.u32 %v9026, 7
  %v9028 = vsub.s32 %v9025, %v9027
  %v9029 = vrot.slane %v9021, %v9028
  %v9031 = vunpack.c.l.s4 1966171168
  %v9032 = vunpack.c.0.s8 %v9031
  %v9033 = vlaneseq
  %v9034 = vshrl.u32 %v9033, 7
  %v9035 = vsub.s32 %v9032, %v9034
  %v9036 = vrot.slane %v9022, %v9035
  %v9037 = vcombine.low %v9029, %v9036
  %v9038 = vcombine.low %v3703, %v3704
  %v9040 = vunpack.c.l.s4 1966171168
  %v9041 = vunpack.c.0.s8 %v9040
  %v9042 = vlaneseq
  %v9043 = vshrl.u32 %v9042, 7
  %v9044 = vsub.s32 %v9041, %v9043
  %v9045 = vrot.slane %v9038, %v9044
  %v9046 = vcombine.low %v4869, %v9045
  %v9048 = vunpack.c.l.s4 1966171168
  %v9049 = vunpack.c.0.s8 %v9048
  %v9050 = vlaneseq
  %v9051 = vshrl.u32 %v9050, 7
  %v9052 = vsub.s32 %v9049, %v9051
  %v9053 = vrot.slane %v9046, %v9052
  %v9054 = vcombine.low %v4895, %v4902
  %v9055 = vcombine.low %v4909, %v4937
  %v9057 = vunpack.c.l.s4 1966171168
  %v9058 = vunpack.c.0.s8 %v9057
  %v9059 = vlaneseq
  %v9060 = vshrl.u32 %v9059, 7
  %v9061 = vsub.s32 %v9058, %v9060
  %v9062 = vrot.slane %v9054, %v9061
  %v9064 = vunpack.c.l.s4 1966171168
  %v9065 = vunpack.c.0.s8 %v9064
  %v9066 = vlaneseq
  %v9067 = vshrl.u32 %v9066, 7
  %v9068 = vsub.s32 %v9065, %v9067
  %v9069 = vrot.slane %v9055, %v9068
  %v9070 = vcombine.low %v9062, %v9069
  %v9071 = vcombine.low %v4944, %v4951
  %v9072 = vcombine.low %v4958, %v4986
  %v9074 = vunpack.c.l.s4 1966171168
  %v9075 = vunpack.c.0.s8 %v9074
  %v9076 = vlaneseq
  %v9077 = vshrl.u32 %v9076, 7
  %v9078 = vsub.s32 %v9075, %v9077
  %v9079 = vrot.slane %v9071, %v9078
  %v9081 = vunpack.c.l.s4 1966171168
  %v9082 = vunpack.c.0.s8 %v9081
  %v9083 = vlaneseq
  %v9084 = vshrl.u32 %v9083, 7
  %v9085 = vsub.s32 %v9082, %v9084
  %v9086 = vrot.slane %v9072, %v9085
  %v9087 = vcombine.low %v9079, %v9086
  %v9088 = vcombine.low %v4993, %v5000
  %v9089 = vcombine.low %v5007, %v5035
  %v9091 = vunpack.c.l.s4 1966171168
  %v9092 = vunpack.c.0.s8 %v9091
  %v9093 = vlaneseq
  %v9094 = vshrl.u32 %v9093, 7
  %v9095 = vsub.s32 %v9092, %v9094
  %v9096 = vrot.slane %v9088, %v9095
  %v9098 = vunpack.c.l.s4 1966171168
  %v9099 = vunpack.c.0.s8 %v9098
  %v9100 = vlaneseq
  %v9101 = vshrl.u32 %v9100, 7
  %v9102 = vsub.s32 %v9099, %v9101
  %v9103 = vrot.slane %v9089, %v9102
  %v9104 = vcombine.low %v9096, %v9103
  %v9105 = vcombine.low %v5042, %v5049
  %v9106 = vcombine.low %v5056, %v5084
  %v9108 = vunpack.c.l.s4 1966171168
  %v9109 = vunpack.c.0.s8 %v9108
  %v9110 = vlaneseq
  %v9111 = vshrl.u32 %v9110, 7
  %v9112 = vsub.s32 %v9109, %v9111
  %v9113 = vrot.slane %v9105, %v9112
  %v9115 = vunpack.c.l.s4 1966171168
  %v9116 = vunpack.c.0.s8 %v9115
  %v9117 = vlaneseq
  %v9118 = vshrl.u32 %v9117, 7
  %v9119 = vsub.s32 %v9116, %v9118
  %v9120 = vrot.slane %v9106, %v9119
  %v9121 = vcombine.low %v9113, %v9120
  %v9122 = vcombine.low %v5091, %v5098
  %v9123 = vcombine.low %v5105, %v5131
  %v9125 = vunpack.c.l.s4 1966171168
  %v9126 = vunpack.c.0.s8 %v9125
  %v9127 = vlaneseq
  %v9128 = vshrl.u32 %v9127, 7
  %v9129 = vsub.s32 %v9126, %v9128
  %v9130 = vrot.slane %v9122, %v9129
  %v9132 = vunpack.c.l.s4 1966171168
  %v9133 = vunpack.c.0.s8 %v9132
  %v9134 = vlaneseq
  %v9135 = vshrl.u32 %v9134, 7
  %v9136 = vsub.s32 %v9133, %v9135
  %v9137 = vrot.slane %v9123, %v9136
  %v9138 = vcombine.low %v9130, %v9137
  %v9139 = vcombine.low %v3750, %v3751
  %v9141 = vunpack.c.l.s4 1966171168
  %v9142 = vunpack.c.0.s8 %v9141
  %v9143 = vlaneseq
  %v9144 = vshrl.u32 %v9143, 7
  %v9145 = vsub.s32 %v9142, %v9144
  %v9146 = vrot.slane %v9139, %v9145
  %v9147 = vcombine.low %v5138, %v9146
  %v9149 = vunpack.c.l.s4 1966171168
  %v9150 = vunpack.c.0.s8 %v9149
  %v9151 = vlaneseq
  %v9152 = vshrl.u32 %v9151, 7
  %v9153 = vsub.s32 %v9150, %v9152
  %v9154 = vrot.slane %v9147, %v9153
  %v9155 = vcombine.low %v5164, %v5171
  %v9156 = vcombine.low %v5178, %v5206
  %v9158 = vunpack.c.l.s4 1966171168
  %v9159 = vunpack.c.0.s8 %v9158
  %v9160 = vlaneseq
  %v9161 = vshrl.u32 %v9160, 7
  %v9162 = vsub.s32 %v9159, %v9161
  %v9163 = vrot.slane %v9155, %v9162
  %v9165 = vunpack.c.l.s4 1966171168
  %v9166 = vunpack.c.0.s8 %v9165
  %v9167 = vlaneseq
  %v9168 = vshrl.u32 %v9167, 7
  %v9169 = vsub.s32 %v9166, %v9168
  %v9170 = vrot.slane %v9156, %v9169
  %v9171 = vcombine.low %v9163, %v9170
  %v9172 = vcombine.low %v5213, %v5220
  %v9173 = vcombine.low %v5227, %v5255
  %v9175 = vunpack.c.l.s4 1966171168
  %v9176 = vunpack.c.0.s8 %v9175
  %v9177 = vlaneseq
  %v9178 = vshrl.u32 %v9177, 7
  %v9179 = vsub.s32 %v9176, %v9178
  %v9180 = vrot.slane %v9172, %v9179
  %v9182 = vunpack.c.l.s4 1966171168
  %v9183 = vunpack.c.0.s8 %v9182
  %v9184 = vlaneseq
  %v9185 = vshrl.u32 %v9184, 7
  %v9186 = vsub.s32 %v9183, %v9185
  %v9187 = vrot.slane %v9173, %v9186
  %v9188 = vcombine.low %v9180, %v9187
  %v9189 = vcombine.low %v5262, %v5269
  %v9190 = vcombine.low %v5276, %v5304
  %v9192 = vunpack.c.l.s4 1966171168
  %v9193 = vunpack.c.0.s8 %v9192
  %v9194 = vlaneseq
  %v9195 = vshrl.u32 %v9194, 7
  %v9196 = vsub.s32 %v9193, %v9195
  %v9197 = vrot.slane %v9189, %v9196
  %v9199 = vunpack.c.l.s4 1966171168
  %v9200 = vunpack.c.0.s8 %v9199
  %v9201 = vlaneseq
  %v9202 = vshrl.u32 %v9201, 7
  %v9203 = vsub.s32 %v9200, %v9202
  %v9204 = vrot.slane %v9190, %v9203
  %v9205 = vcombine.low %v9197, %v9204
  %v9206 = vcombine.low %v5311, %v5318
  %v9207 = vcombine.low %v5325, %v5353
  %v9209 = vunpack.c.l.s4 1966171168
  %v9210 = vunpack.c.0.s8 %v9209
  %v9211 = vlaneseq
  %v9212 = vshrl.u32 %v9211, 7
  %v9213 = vsub.s32 %v9210, %v9212
  %v9214 = vrot.slane %v9206, %v9213
  %v9216 = vunpack.c.l.s4 1966171168
  %v9217 = vunpack.c.0.s8 %v9216
  %v9218 = vlaneseq
  %v9219 = vshrl.u32 %v9218, 7
  %v9220 = vsub.s32 %v9217, %v9219
  %v9221 = vrot.slane %v9207, %v9220
  %v9222 = vcombine.low %v9214, %v9221
  %v9223 = vcombine.low %v5360, %v5367
  %v9224 = vcombine.low %v5374, %v5400
  %v9226 = vunpack.c.l.s4 1966171168
  %v9227 = vunpack.c.0.s8 %v9226
  %v9228 = vlaneseq
  %v9229 = vshrl.u32 %v9228, 7
  %v9230 = vsub.s32 %v9227, %v9229
  %v9231 = vrot.slane %v9223, %v9230
  %v9233 = vunpack.c.l.s4 1966171168
  %v9234 = vunpack.c.0.s8 %v9233
  %v9235 = vlaneseq
  %v9236 = vshrl.u32 %v9235, 7
  %v9237 = vsub.s32 %v9234, %v9236
  %v9238 = vrot.slane %v9224, %v9237
  %v9239 = vcombine.low %v9231, %v9238
  %v9240 = vcombine.low %v3797, %v3798
  %v9242 = vunpack.c.l.s4 1966171168
  %v9243 = vunpack.c.0.s8 %v9242
  %v9244 = vlaneseq
  %v9245 = vshrl.u32 %v9244, 7
  %v9246 = vsub.s32 %v9243, %v9245
  %v9247 = vrot.slane %v9240, %v9246
  %v9248 = vcombine.low %v5407, %v9247
  %v9250 = vunpack.c.l.s4 1966171168
  %v9251 = vunpack.c.0.s8 %v9250
  %v9252 = vlaneseq
  %v9253 = vshrl.u32 %v9252, 7
  %v9254 = vsub.s32 %v9251, %v9253
  %v9255 = vrot.slane %v9248, %v9254
  %v9256 = vcombine.low %v5433, %v5440
  %v9257 = vcombine.low %v5447, %v5475
  %v9259 = vunpack.c.l.s4 1966171168
  %v9260 = vunpack.c.0.s8 %v9259
  %v9261 = vlaneseq
  %v9262 = vshrl.u32 %v9261, 7
  %v9263 = vsub.s32 %v9260, %v9262
  %v9264 = vrot.slane %v9256, %v9263
  %v9266 = vunpack.c.l.s4 1966171168
  %v9267 = vunpack.c.0.s8 %v9266
  %v9268 = vlaneseq
  %v9269 = vshrl.u32 %v9268, 7
  %v9270 = vsub.s32 %v9267, %v9269
  %v9271 = vrot.slane %v9257, %v9270
  %v9272 = vcombine.low %v9264, %v9271
  %v9273 = vcombine.low %v5482, %v5489
  %v9274 = vcombine.low %v5496, %v5524
  %v9276 = vunpack.c.l.s4 1966171168
  %v9277 = vunpack.c.0.s8 %v9276
  %v9278 = vlaneseq
  %v9279 = vshrl.u32 %v9278, 7
  %v9280 = vsub.s32 %v9277, %v9279
  %v9281 = vrot.slane %v9273, %v9280
  %v9283 = vunpack.c.l.s4 1966171168
  %v9284 = vunpack.c.0.s8 %v9283
  %v9285 = vlaneseq
  %v9286 = vshrl.u32 %v9285, 7
  %v9287 = vsub.s32 %v9284, %v9286
  %v9288 = vrot.slane %v9274, %v9287
  %v9289 = vcombine.low %v9281, %v9288
  %v9290 = vcombine.low %v5531, %v5538
  %v9291 = vcombine.low %v5545, %v5573
  %v9293 = vunpack.c.l.s4 1966171168
  %v9294 = vunpack.c.0.s8 %v9293
  %v9295 = vlaneseq
  %v9296 = vshrl.u32 %v9295, 7
  %v9297 = vsub.s32 %v9294, %v9296
  %v9298 = vrot.slane %v9290, %v9297
  %v9300 = vunpack.c.l.s4 1966171168
  %v9301 = vunpack.c.0.s8 %v9300
  %v9302 = vlaneseq
  %v9303 = vshrl.u32 %v9302, 7
  %v9304 = vsub.s32 %v9301, %v9303
  %v9305 = vrot.slane %v9291, %v9304
  %v9306 = vcombine.low %v9298, %v9305
  %v9307 = vcombine.low %v5580, %v5587
  %v9308 = vcombine.low %v5594, %v5622
  %v9310 = vunpack.c.l.s4 1966171168
  %v9311 = vunpack.c.0.s8 %v9310
  %v9312 = vlaneseq
  %v9313 = vshrl.u32 %v9312, 7
  %v9314 = vsub.s32 %v9311, %v9313
  %v9315 = vrot.slane %v9307, %v9314
  %v9317 = vunpack.c.l.s4 1966171168
  %v9318 = vunpack.c.0.s8 %v9317
  %v9319 = vlaneseq
  %v9320 = vshrl.u32 %v9319, 7
  %v9321 = vsub.s32 %v9318, %v9320
  %v9322 = vrot.slane %v9308, %v9321
  %v9323 = vcombine.low %v9315, %v9322
  %v9324 = vcombine.low %v5629, %v5636
  %v9325 = vcombine.low %v5643, %v5669
  %v9327 = vunpack.c.l.s4 1966171168
  %v9328 = vunpack.c.0.s8 %v9327
  %v9329 = vlaneseq
  %v9330 = vshrl.u32 %v9329, 7
  %v9331 = vsub.s32 %v9328, %v9330
  %v9332 = vrot.slane %v9324, %v9331
  %v9334 = vunpack.c.l.s4 1966171168
  %v9335 = vunpack.c.0.s8 %v9334
  %v9336 = vlaneseq
  %v9337 = vshrl.u32 %v9336, 7
  %v9338 = vsub.s32 %v9335, %v9337
  %v9339 = vrot.slane %v9325, %v9338
  %v9340 = vcombine.low %v9332, %v9339
  %v9341 = vcombine.low %v3844, %v3845
  %v9343 = vunpack.c.l.s4 1966171168
  %v9344 = vunpack.c.0.s8 %v9343
  %v9345 = vlaneseq
  %v9346 = vshrl.u32 %v9345, 7
  %v9347 = vsub.s32 %v9344, %v9346
  %v9348 = vrot.slane %v9341, %v9347
  %v9349 = vcombine.low %v5676, %v9348
  %v9351 = vunpack.c.l.s4 1966171168
  %v9352 = vunpack.c.0.s8 %v9351
  %v9353 = vlaneseq
  %v9354 = vshrl.u32 %v9353, 7
  %v9355 = vsub.s32 %v9352, %v9354
  %v9356 = vrot.slane %v9349, %v9355
  %v9357 = vcombine.low %v5702, %v5709
  %v9358 = vcombine.low %v5716, %v5744
  %v9360 = vunpack.c.l.s4 1966171168
  %v9361 = vunpack.c.0.s8 %v9360
  %v9362 = vlaneseq
  %v9363 = vshrl.u32 %v9362, 7
  %v9364 = vsub.s32 %v9361, %v9363
  %v9365 = vrot.slane %v9357, %v9364
  %v9367 = vunpack.c.l.s4 1966171168
  %v9368 = vunpack.c.0.s8 %v9367
  %v9369 = vlaneseq
  %v9370 = vshrl.u32 %v9369, 7
  %v9371 = vsub.s32 %v9368, %v9370
  %v9372 = vrot.slane %v9358, %v9371
  %v9373 = vcombine.low %v9365, %v9372
  %v9374 = vcombine.low %v5751, %v5758
  %v9375 = vcombine.low %v5765, %v5793
  %v9377 = vunpack.c.l.s4 1966171168
  %v9378 = vunpack.c.0.s8 %v9377
  %v9379 = vlaneseq
  %v9380 = vshrl.u32 %v9379, 7
  %v9381 = vsub.s32 %v9378, %v9380
  %v9382 = vrot.slane %v9374, %v9381
  %v9384 = vunpack.c.l.s4 1966171168
  %v9385 = vunpack.c.0.s8 %v9384
  %v9386 = vlaneseq
  %v9387 = vshrl.u32 %v9386, 7
  %v9388 = vsub.s32 %v9385, %v9387
  %v9389 = vrot.slane %v9375, %v9388
  %v9390 = vcombine.low %v9382, %v9389
  %v9391 = vcombine.low %v5800, %v5807
  %v9392 = vcombine.low %v5814, %v5842
  %v9394 = vunpack.c.l.s4 1966171168
  %v9395 = vunpack.c.0.s8 %v9394
  %v9396 = vlaneseq
  %v9397 = vshrl.u32 %v9396, 7
  %v9398 = vsub.s32 %v9395, %v9397
  %v9399 = vrot.slane %v9391, %v9398
  %v9401 = vunpack.c.l.s4 1966171168
  %v9402 = vunpack.c.0.s8 %v9401
  %v9403 = vlaneseq
  %v9404 = vshrl.u32 %v9403, 7
  %v9405 = vsub.s32 %v9402, %v9404
  %v9406 = vrot.slane %v9392, %v9405
  %v9407 = vcombine.low %v9399, %v9406
  %v9408 = vcombine.low %v5849, %v5856
  %v9409 = vcombine.low %v5863, %v5891
  %v9411 = vunpack.c.l.s4 1966171168
  %v9412 = vunpack.c.0.s8 %v9411
  %v9413 = vlaneseq
  %v9414 = vshrl.u32 %v9413, 7
  %v9415 = vsub.s32 %v9412, %v9414
  %v9416 = vrot.slane %v9408, %v9415
  %v9418 = vunpack.c.l.s4 1966171168
  %v9419 = vunpack.c.0.s8 %v9418
  %v9420 = vlaneseq
  %v9421 = vshrl.u32 %v9420, 7
  %v9422 = vsub.s32 %v9419, %v9421
  %v9423 = vrot.slane %v9409, %v9422
  %v9424 = vcombine.low %v9416, %v9423
  %v9425 = vcombine.low %v5898, %v5905
  %v9426 = vcombine.low %v5912, %v5938
  %v9428 = vunpack.c.l.s4 1966171168
  %v9429 = vunpack.c.0.s8 %v9428
  %v9430 = vlaneseq
  %v9431 = vshrl.u32 %v9430, 7
  %v9432 = vsub.s32 %v9429, %v9431
  %v9433 = vrot.slane %v9425, %v9432
  %v9435 = vunpack.c.l.s4 1966171168
  %v9436 = vunpack.c.0.s8 %v9435
  %v9437 = vlaneseq
  %v9438 = vshrl.u32 %v9437, 7
  %v9439 = vsub.s32 %v9436, %v9438
  %v9440 = vrot.slane %v9426, %v9439
  %v9441 = vcombine.low %v9433, %v9440
  %v9442 = vcombine.low %v3891, %v3892
  %v9444 = vunpack.c.l.s4 1966171168
  %v9445 = vunpack.c.0.s8 %v9444
  %v9446 = vlaneseq
  %v9447 = vshrl.u32 %v9446, 7
  %v9448 = vsub.s32 %v9445, %v9447
  %v9449 = vrot.slane %v9442, %v9448
  %v9450 = vcombine.low %v5945, %v9449
  %v9452 = vunpack.c.l.s4 1966171168
  %v9453 = vunpack.c.0.s8 %v9452
  %v9454 = vlaneseq
  %v9455 = vshrl.u32 %v9454, 7
  %v9456 = vsub.s32 %v9453, %v9455
  %v9457 = vrot.slane %v9450, %v9456
  %v9458 = vcombine.low %v5971, %v5978
  %v9459 = vcombine.low %v5985, %v6013
  %v9461 = vunpack.c.l.s4 1966171168
  %v9462 = vunpack.c.0.s8 %v9461
  %v9463 = vlaneseq
  %v9464 = vshrl.u32 %v9463, 7
  %v9465 = vsub.s32 %v9462, %v9464
  %v9466 = vrot.slane %v9458, %v9465
  %v9468 = vunpack.c.l.s4 1966171168
  %v9469 = vunpack.c.0.s8 %v9468
  %v9470 = vlaneseq
  %v9471 = vshrl.u32 %v9470, 7
  %v9472 = vsub.s32 %v9469, %v9471
  %v9473 = vrot.slane %v9459, %v9472
  %v9474 = vcombine.low %v9466, %v9473
  %v9475 = vcombine.low %v6020, %v6027
  %v9476 = vcombine.low %v6034, %v6062
  %v9478 = vunpack.c.l.s4 1966171168
  %v9479 = vunpack.c.0.s8 %v9478
  %v9480 = vlaneseq
  %v9481 = vshrl.u32 %v9480, 7
  %v9482 = vsub.s32 %v9479, %v9481
  %v9483 = vrot.slane %v9475, %v9482
  %v9485 = vunpack.c.l.s4 1966171168
  %v9486 = vunpack.c.0.s8 %v9485
  %v9487 = vlaneseq
  %v9488 = vshrl.u32 %v9487, 7
  %v9489 = vsub.s32 %v9486, %v9488
  %v9490 = vrot.slane %v9476, %v9489
  %v9491 = vcombine.low %v9483, %v9490
  %v9492 = vcombine.low %v6069, %v6076
  %v9493 = vcombine.low %v6083, %v6111
  %v9495 = vunpack.c.l.s4 1966171168
  %v9496 = vunpack.c.0.s8 %v9495
  %v9497 = vlaneseq
  %v9498 = vshrl.u32 %v9497, 7
  %v9499 = vsub.s32 %v9496, %v9498
  %v9500 = vrot.slane %v9492, %v9499
  %v9502 = vunpack.c.l.s4 1966171168
  %v9503 = vunpack.c.0.s8 %v9502
  %v9504 = vlaneseq
  %v9505 = vshrl.u32 %v9504, 7
  %v9506 = vsub.s32 %v9503, %v9505
  %v9507 = vrot.slane %v9493, %v9506
  %v9508 = vcombine.low %v9500, %v9507
  %v9509 = vcombine.low %v6118, %v6125
  %v9510 = vcombine.low %v6132, %v6160
  %v9512 = vunpack.c.l.s4 1966171168
  %v9513 = vunpack.c.0.s8 %v9512
  %v9514 = vlaneseq
  %v9515 = vshrl.u32 %v9514, 7
  %v9516 = vsub.s32 %v9513, %v9515
  %v9517 = vrot.slane %v9509, %v9516
  %v9519 = vunpack.c.l.s4 1966171168
  %v9520 = vunpack.c.0.s8 %v9519
  %v9521 = vlaneseq
  %v9522 = vshrl.u32 %v9521, 7
  %v9523 = vsub.s32 %v9520, %v9522
  %v9524 = vrot.slane %v9510, %v9523
  %v9525 = vcombine.low %v9517, %v9524
  %v9526 = vcombine.low %v6167, %v6174
  %v9527 = vcombine.low %v6181, %v6207
  %v9529 = vunpack.c.l.s4 1966171168
  %v9530 = vunpack.c.0.s8 %v9529
  %v9531 = vlaneseq
  %v9532 = vshrl.u32 %v9531, 7
  %v9533 = vsub.s32 %v9530, %v9532
  %v9534 = vrot.slane %v9526, %v9533
  %v9536 = vunpack.c.l.s4 1966171168
  %v9537 = vunpack.c.0.s8 %v9536
  %v9538 = vlaneseq
  %v9539 = vshrl.u32 %v9538, 7
  %v9540 = vsub.s32 %v9537, %v9539
  %v9541 = vrot.slane %v9527, %v9540
  %v9542 = vcombine.low %v9534, %v9541
  %v9543 = vcombine.low %v3938, %v3939
  %v9545 = vunpack.c.l.s4 1966171168
  %v9546 = vunpack.c.0.s8 %v9545
  %v9547 = vlaneseq
  %v9548 = vshrl.u32 %v9547, 7
  %v9549 = vsub.s32 %v9546, %v9548
  %v9550 = vrot.slane %v9543, %v9549
  %v9551 = vcombine.low %v6214, %v9550
  %v9553 = vunpack.c.l.s4 1966171168
  %v9554 = vunpack.c.0.s8 %v9553
  %v9555 = vlaneseq
  %v9556 = vshrl.u32 %v9555, 7
  %v9557 = vsub.s32 %v9554, %v9556
  %v9558 = vrot.slane %v9551, %v9557
  %v9559 = vcombine.low %v6240, %v6247
  %v9560 = vcombine.low %v6254, %v6282
  %v9562 = vunpack.c.l.s4 1966171168
  %v9563 = vunpack.c.0.s8 %v9562
  %v9564 = vlaneseq
  %v9565 = vshrl.u32 %v9564, 7
  %v9566 = vsub.s32 %v9563, %v9565
  %v9567 = vrot.slane %v9559, %v9566
  %v9569 = vunpack.c.l.s4 1966171168
  %v9570 = vunpack.c.0.s8 %v9569
  %v9571 = vlaneseq
  %v9572 = vshrl.u32 %v9571, 7
  %v9573 = vsub.s32 %v9570, %v9572
  %v9574 = vrot.slane %v9560, %v9573
  %v9575 = vcombine.low %v9567, %v9574
  %v9576 = vcombine.low %v6289, %v6296
  %v9577 = vcombine.low %v6303, %v6331
  %v9579 = vunpack.c.l.s4 1966171168
  %v9580 = vunpack.c.0.s8 %v9579
  %v9581 = vlaneseq
  %v9582 = vshrl.u32 %v9581, 7
  %v9583 = vsub.s32 %v9580, %v9582
  %v9584 = vrot.slane %v9576, %v9583
  %v9586 = vunpack.c.l.s4 1966171168
  %v9587 = vunpack.c.0.s8 %v9586
  %v9588 = vlaneseq
  %v9589 = vshrl.u32 %v9588, 7
  %v9590 = vsub.s32 %v9587, %v9589
  %v9591 = vrot.slane %v9577, %v9590
  %v9592 = vcombine.low %v9584, %v9591
  %v9593 = vcombine.low %v6338, %v6345
  %v9594 = vcombine.low %v6352, %v6380
  %v9596 = vunpack.c.l.s4 1966171168
  %v9597 = vunpack.c.0.s8 %v9596
  %v9598 = vlaneseq
  %v9599 = vshrl.u32 %v9598, 7
  %v9600 = vsub.s32 %v9597, %v9599
  %v9601 = vrot.slane %v9593, %v9600
  %v9603 = vunpack.c.l.s4 1966171168
  %v9604 = vunpack.c.0.s8 %v9603
  %v9605 = vlaneseq
  %v9606 = vshrl.u32 %v9605, 7
  %v9607 = vsub.s32 %v9604, %v9606
  %v9608 = vrot.slane %v9594, %v9607
  %v9609 = vcombine.low %v9601, %v9608
  %v9610 = vcombine.low %v6387, %v6394
  %v9611 = vcombine.low %v6401, %v6429
  %v9613 = vunpack.c.l.s4 1966171168
  %v9614 = vunpack.c.0.s8 %v9613
  %v9615 = vlaneseq
  %v9616 = vshrl.u32 %v9615, 7
  %v9617 = vsub.s32 %v9614, %v9616
  %v9618 = vrot.slane %v9610, %v9617
  %v9620 = vunpack.c.l.s4 1966171168
  %v9621 = vunpack.c.0.s8 %v9620
  %v9622 = vlaneseq
  %v9623 = vshrl.u32 %v9622, 7
  %v9624 = vsub.s32 %v9621, %v9623
  %v9625 = vrot.slane %v9611, %v9624
  %v9626 = vcombine.low %v9618, %v9625
  %v9627 = vcombine.low %v6436, %v6443
  %v9628 = vcombine.low %v6450, %v6476
  %v9630 = vunpack.c.l.s4 1966171168
  %v9631 = vunpack.c.0.s8 %v9630
  %v9632 = vlaneseq
  %v9633 = vshrl.u32 %v9632, 7
  %v9634 = vsub.s32 %v9631, %v9633
  %v9635 = vrot.slane %v9627, %v9634
  %v9637 = vunpack.c.l.s4 1966171168
  %v9638 = vunpack.c.0.s8 %v9637
  %v9639 = vlaneseq
  %v9640 = vshrl.u32 %v9639, 7
  %v9641 = vsub.s32 %v9638, %v9640
  %v9642 = vrot.slane %v9628, %v9641
  %v9643 = vcombine.low %v9635, %v9642
  %v9644 = vcombine.low %v3985, %v3986
  %v9646 = vunpack.c.l.s4 1966171168
  %v9647 = vunpack.c.0.s8 %v9646
  %v9648 = vlaneseq
  %v9649 = vshrl.u32 %v9648, 7
  %v9650 = vsub.s32 %v9647, %v9649
  %v9651 = vrot.slane %v9644, %v9650
  %v9652 = vcombine.low %v6483, %v9651
  %v9654 = vunpack.c.l.s4 1966171168
  %v9655 = vunpack.c.0.s8 %v9654
  %v9656 = vlaneseq
  %v9657 = vshrl.u32 %v9656, 7
  %v9658 = vsub.s32 %v9655, %v9657
  %v9659 = vrot.slane %v9652, %v9658
  %9660 = vrot.lane.b32.xlu0 %v8868, 64
  %v9661 = vpop.permute.xlu0 %9660
  %9662 = vrot.lane.b32.xlu0 %v8885, 64
  %v9663 = vpop.permute.xlu0 %9662
  %9664 = vrot.lane.b32.xlu0 %v8902, 64
  %v9665 = vpop.permute.xlu0 %9664
  %9666 = vrot.lane.b32.xlu0 %v8919, 64
  %v9667 = vpop.permute.xlu0 %9666
  %9668 = vrot.lane.b32.xlu0 %v8936, 64
  %v9669 = vpop.permute.xlu0 %9668
  %9670 = vrot.lane.b32.xlu0 %v8952, 64
  %v9671 = vpop.permute.xlu0 %9670
  %9672 = vrot.lane.b32.xlu0 %v8969, 64
  %v9673 = vpop.permute.xlu0 %9672
  %9674 = vrot.lane.b32.xlu0 %v8986, 64
  %v9675 = vpop.permute.xlu0 %9674
  %9676 = vrot.lane.b32.xlu0 %v9003, 64
  %v9677 = vpop.permute.xlu0 %9676
  %9678 = vrot.lane.b32.xlu0 %v9020, 64
  %v9679 = vpop.permute.xlu0 %9678
  %9680 = vrot.lane.b32.xlu0 %v9037, 64
  %v9681 = vpop.permute.xlu0 %9680
  %9682 = vrot.lane.b32.xlu0 %v9053, 64
  %v9683 = vpop.permute.xlu0 %9682
  %9684 = vrot.lane.b32.xlu0 %v9070, 64
  %v9685 = vpop.permute.xlu0 %9684
  %9686 = vrot.lane.b32.xlu0 %v9087, 64
  %v9687 = vpop.permute.xlu0 %9686
  %9688 = vrot.lane.b32.xlu0 %v9104, 64
  %v9689 = vpop.permute.xlu0 %9688
  %9690 = vrot.lane.b32.xlu0 %v9121, 64
  %v9691 = vpop.permute.xlu0 %9690
  %9692 = vrot.lane.b32.xlu0 %v9138, 64
  %v9693 = vpop.permute.xlu0 %9692
  %9694 = vrot.lane.b32.xlu0 %v9154, 64
  %v9695 = vpop.permute.xlu0 %9694
  %9696 = vrot.lane.b32.xlu0 %v9171, 64
  %v9697 = vpop.permute.xlu0 %9696
  %9698 = vrot.lane.b32.xlu0 %v9188, 64
  %v9699 = vpop.permute.xlu0 %9698
  %9700 = vrot.lane.b32.xlu0 %v9205, 64
  %v9701 = vpop.permute.xlu0 %9700
  %9702 = vrot.lane.b32.xlu0 %v9222, 64
  %v9703 = vpop.permute.xlu0 %9702
  %9704 = vrot.lane.b32.xlu0 %v9239, 64
  %v9705 = vpop.permute.xlu0 %9704
  %9706 = vrot.lane.b32.xlu0 %v9255, 64
  %v9707 = vpop.permute.xlu0 %9706
  %9708 = vrot.lane.b32.xlu0 %v9272, 64
  %v9709 = vpop.permute.xlu0 %9708
  %9710 = vrot.lane.b32.xlu0 %v9289, 64
  %v9711 = vpop.permute.xlu0 %9710
  %9712 = vrot.lane.b32.xlu0 %v9306, 64
  %v9713 = vpop.permute.xlu0 %9712
  %9714 = vrot.lane.b32.xlu0 %v9323, 64
  %v9715 = vpop.permute.xlu0 %9714
  %9716 = vrot.lane.b32.xlu0 %v9340, 64
  %v9717 = vpop.permute.xlu0 %9716
  %9718 = vrot.lane.b32.xlu0 %v9356, 64
  %v9719 = vpop.permute.xlu0 %9718
  %9720 = vrot.lane.b32.xlu0 %v9373, 64
  %v9721 = vpop.permute.xlu0 %9720
  %9722 = vrot.lane.b32.xlu0 %v9390, 64
  %v9723 = vpop.permute.xlu0 %9722
  %9724 = vrot.lane.b32.xlu0 %v9407, 64
  %v9725 = vpop.permute.xlu0 %9724
  %9726 = vrot.lane.b32.xlu0 %v9424, 64
  %v9727 = vpop.permute.xlu0 %9726
  %9728 = vrot.lane.b32.xlu0 %v9441, 64
  %v9729 = vpop.permute.xlu0 %9728
  %9730 = vrot.lane.b32.xlu0 %v9457, 64
  %v9731 = vpop.permute.xlu0 %9730
  %9732 = vrot.lane.b32.xlu0 %v9474, 64
  %v9733 = vpop.permute.xlu0 %9732
  %9734 = vrot.lane.b32.xlu0 %v9491, 64
  %v9735 = vpop.permute.xlu0 %9734
  %9736 = vrot.lane.b32.xlu0 %v9508, 64
  %v9737 = vpop.permute.xlu0 %9736
  %9738 = vrot.lane.b32.xlu0 %v9525, 64
  %v9739 = vpop.permute.xlu0 %9738
  %9740 = vrot.lane.b32.xlu0 %v9542, 64
  %v9741 = vpop.permute.xlu0 %9740
  %9742 = vrot.lane.b32.xlu0 %v9558, 64
  %v9743 = vpop.permute.xlu0 %9742
  %9744 = vrot.lane.b32.xlu0 %v9575, 64
  %v9745 = vpop.permute.xlu0 %9744
  %9746 = vrot.lane.b32.xlu0 %v9592, 64
  %v9747 = vpop.permute.xlu0 %9746
  %9748 = vrot.lane.b32.xlu0 %v9609, 64
  %v9749 = vpop.permute.xlu0 %9748
  %9750 = vrot.lane.b32.xlu0 %v9626, 64
  %v9751 = vpop.permute.xlu0 %9750
  %9752 = vrot.lane.b32.xlu0 %v9643, 64
  %v9753 = vpop.permute.xlu0 %9752
  %9754 = vrot.lane.b32.xlu0 %v9659, 64
  %v9755 = vpop.permute.xlu0 %9754
  %v9812 = vcombine.low %v6565, %v6572
  %v9813 = vcombine.low %v6579, %v6607
  %v9815 = vunpack.c.l.s4 1966171168
  %v9816 = vunpack.c.0.s8 %v9815
  %v9817 = vlaneseq
  %v9818 = vshrl.u32 %v9817, 7
  %v9819 = vsub.s32 %v9816, %v9818
  %v9820 = vrot.slane %v9812, %v9819
  %v9822 = vunpack.c.l.s4 1966171168
  %v9823 = vunpack.c.0.s8 %v9822
  %v9824 = vlaneseq
  %v9825 = vshrl.u32 %v9824, 7
  %v9826 = vsub.s32 %v9823, %v9825
  %v9827 = vrot.slane %v9813, %v9826
  %v9828 = vcombine.low %v9820, %v9827
  %v9829 = vcombine.low %v6614, %v6621
  %v9830 = vcombine.low %v6628, %v6656
  %v9832 = vunpack.c.l.s4 1966171168
  %v9833 = vunpack.c.0.s8 %v9832
  %v9834 = vlaneseq
  %v9835 = vshrl.u32 %v9834, 7
  %v9836 = vsub.s32 %v9833, %v9835
  %v9837 = vrot.slane %v9829, %v9836
  %v9839 = vunpack.c.l.s4 1966171168
  %v9840 = vunpack.c.0.s8 %v9839
  %v9841 = vlaneseq
  %v9842 = vshrl.u32 %v9841, 7
  %v9843 = vsub.s32 %v9840, %v9842
  %v9844 = vrot.slane %v9830, %v9843
  %v9845 = vcombine.low %v9837, %v9844
  %v9846 = vcombine.low %v6663, %v6670
  %v9847 = vcombine.low %v6677, %v6705
  %v9849 = vunpack.c.l.s4 1966171168
  %v9850 = vunpack.c.0.s8 %v9849
  %v9851 = vlaneseq
  %v9852 = vshrl.u32 %v9851, 7
  %v9853 = vsub.s32 %v9850, %v9852
  %v9854 = vrot.slane %v9846, %v9853
  %v9856 = vunpack.c.l.s4 1966171168
  %v9857 = vunpack.c.0.s8 %v9856
  %v9858 = vlaneseq
  %v9859 = vshrl.u32 %v9858, 7
  %v9860 = vsub.s32 %v9857, %v9859
  %v9861 = vrot.slane %v9847, %v9860
  %v9862 = vcombine.low %v9854, %v9861
  %v9863 = vcombine.low %v6712, %v6719
  %v9864 = vcombine.low %v6726, %v6754
  %v9866 = vunpack.c.l.s4 1966171168
  %v9867 = vunpack.c.0.s8 %v9866
  %v9868 = vlaneseq
  %v9869 = vshrl.u32 %v9868, 7
  %v9870 = vsub.s32 %v9867, %v9869
  %v9871 = vrot.slane %v9863, %v9870
  %v9873 = vunpack.c.l.s4 1966171168
  %v9874 = vunpack.c.0.s8 %v9873
  %v9875 = vlaneseq
  %v9876 = vshrl.u32 %v9875, 7
  %v9877 = vsub.s32 %v9874, %v9876
  %v9878 = vrot.slane %v9864, %v9877
  %v9879 = vcombine.low %v9871, %v9878
  %v9880 = vcombine.low %v6761, %v6768
  %v9881 = vcombine.low %v6775, %v6801
  %v9883 = vunpack.c.l.s4 1966171168
  %v9884 = vunpack.c.0.s8 %v9883
  %v9885 = vlaneseq
  %v9886 = vshrl.u32 %v9885, 7
  %v9887 = vsub.s32 %v9884, %v9886
  %v9888 = vrot.slane %v9880, %v9887
  %v9890 = vunpack.c.l.s4 1966171168
  %v9891 = vunpack.c.0.s8 %v9890
  %v9892 = vlaneseq
  %v9893 = vshrl.u32 %v9892, 7
  %v9894 = vsub.s32 %v9891, %v9893
  %v9895 = vrot.slane %v9881, %v9894
  %v9896 = vcombine.low %v9888, %v9895
  %v9897 = vcombine.low %v3657, %v3658
  %v9899 = vunpack.c.l.s4 1966171168
  %v9900 = vunpack.c.0.s8 %v9899
  %v9901 = vlaneseq
  %v9902 = vshrl.u32 %v9901, 7
  %v9903 = vsub.s32 %v9900, %v9902
  %v9904 = vrot.slane %v9897, %v9903
  %v9905 = vcombine.low %v6808, %v9904
  %v9907 = vunpack.c.l.s4 1966171168
  %v9908 = vunpack.c.0.s8 %v9907
  %v9909 = vlaneseq
  %v9910 = vshrl.u32 %v9909, 7
  %v9911 = vsub.s32 %v9908, %v9910
  %v9912 = vrot.slane %v9905, %v9911
  %v9913 = vcombine.low %v6834, %v6841
  %v9914 = vcombine.low %v6848, %v6876
  %v9916 = vunpack.c.l.s4 1966171168
  %v9917 = vunpack.c.0.s8 %v9916
  %v9918 = vlaneseq
  %v9919 = vshrl.u32 %v9918, 7
  %v9920 = vsub.s32 %v9917, %v9919
  %v9921 = vrot.slane %v9913, %v9920
  %v9923 = vunpack.c.l.s4 1966171168
  %v9924 = vunpack.c.0.s8 %v9923
  %v9925 = vlaneseq
  %v9926 = vshrl.u32 %v9925, 7
  %v9927 = vsub.s32 %v9924, %v9926
  %v9928 = vrot.slane %v9914, %v9927
  %v9929 = vcombine.low %v9921, %v9928
  %v9930 = vcombine.low %v6883, %v6890
  %v9931 = vcombine.low %v6897, %v6925
  %v9933 = vunpack.c.l.s4 1966171168
  %v9934 = vunpack.c.0.s8 %v9933
  %v9935 = vlaneseq
  %v9936 = vshrl.u32 %v9935, 7
  %v9937 = vsub.s32 %v9934, %v9936
  %v9938 = vrot.slane %v9930, %v9937
  %v9940 = vunpack.c.l.s4 1966171168
  %v9941 = vunpack.c.0.s8 %v9940
  %v9942 = vlaneseq
  %v9943 = vshrl.u32 %v9942, 7
  %v9944 = vsub.s32 %v9941, %v9943
  %v9945 = vrot.slane %v9931, %v9944
  %v9946 = vcombine.low %v9938, %v9945
  %v9947 = vcombine.low %v6932, %v6939
  %v9948 = vcombine.low %v6946, %v6974
  %v9950 = vunpack.c.l.s4 1966171168
  %v9951 = vunpack.c.0.s8 %v9950
  %v9952 = vlaneseq
  %v9953 = vshrl.u32 %v9952, 7
  %v9954 = vsub.s32 %v9951, %v9953
  %v9955 = vrot.slane %v9947, %v9954
  %v9957 = vunpack.c.l.s4 1966171168
  %v9958 = vunpack.c.0.s8 %v9957
  %v9959 = vlaneseq
  %v9960 = vshrl.u32 %v9959, 7
  %v9961 = vsub.s32 %v9958, %v9960
  %v9962 = vrot.slane %v9948, %v9961
  %v9963 = vcombine.low %v9955, %v9962
  %v9964 = vcombine.low %v6981, %v6988
  %v9965 = vcombine.low %v6995, %v7023
  %v9967 = vunpack.c.l.s4 1966171168
  %v9968 = vunpack.c.0.s8 %v9967
  %v9969 = vlaneseq
  %v9970 = vshrl.u32 %v9969, 7
  %v9971 = vsub.s32 %v9968, %v9970
  %v9972 = vrot.slane %v9964, %v9971
  %v9974 = vunpack.c.l.s4 1966171168
  %v9975 = vunpack.c.0.s8 %v9974
  %v9976 = vlaneseq
  %v9977 = vshrl.u32 %v9976, 7
  %v9978 = vsub.s32 %v9975, %v9977
  %v9979 = vrot.slane %v9965, %v9978
  %v9980 = vcombine.low %v9972, %v9979
  %v9981 = vcombine.low %v7030, %v7037
  %v9982 = vcombine.low %v7044, %v7070
  %v9984 = vunpack.c.l.s4 1966171168
  %v9985 = vunpack.c.0.s8 %v9984
  %v9986 = vlaneseq
  %v9987 = vshrl.u32 %v9986, 7
  %v9988 = vsub.s32 %v9985, %v9987
  %v9989 = vrot.slane %v9981, %v9988
  %v9991 = vunpack.c.l.s4 1966171168
  %v9992 = vunpack.c.0.s8 %v9991
  %v9993 = vlaneseq
  %v9994 = vshrl.u32 %v9993, 7
  %v9995 = vsub.s32 %v9992, %v9994
  %v9996 = vrot.slane %v9982, %v9995
  %v9997 = vcombine.low %v9989, %v9996
  %v9998 = vcombine.low %v3704, %v3705
  %v10000 = vunpack.c.l.s4 1966171168
  %v10001 = vunpack.c.0.s8 %v10000
  %v10002 = vlaneseq
  %v10003 = vshrl.u32 %v10002, 7
  %v10004 = vsub.s32 %v10001, %v10003
  %v10005 = vrot.slane %v9998, %v10004
  %v10006 = vcombine.low %v7077, %v10005
  %v10008 = vunpack.c.l.s4 1966171168
  %v10009 = vunpack.c.0.s8 %v10008
  %v10010 = vlaneseq
  %v10011 = vshrl.u32 %v10010, 7
  %v10012 = vsub.s32 %v10009, %v10011
  %v10013 = vrot.slane %v10006, %v10012
  %v10014 = vcombine.low %v7103, %v7110
  %v10015 = vcombine.low %v7117, %v7145
  %v10017 = vunpack.c.l.s4 1966171168
  %v10018 = vunpack.c.0.s8 %v10017
  %v10019 = vlaneseq
  %v10020 = vshrl.u32 %v10019, 7
  %v10021 = vsub.s32 %v10018, %v10020
  %v10022 = vrot.slane %v10014, %v10021
  %v10024 = vunpack.c.l.s4 1966171168
  %v10025 = vunpack.c.0.s8 %v10024
  %v10026 = vlaneseq
  %v10027 = vshrl.u32 %v10026, 7
  %v10028 = vsub.s32 %v10025, %v10027
  %v10029 = vrot.slane %v10015, %v10028
  %v10030 = vcombine.low %v10022, %v10029
  %v10031 = vcombine.low %v7152, %v7159
  %v10032 = vcombine.low %v7166, %v7194
  %v10034 = vunpack.c.l.s4 1966171168
  %v10035 = vunpack.c.0.s8 %v10034
  %v10036 = vlaneseq
  %v10037 = vshrl.u32 %v10036, 7
  %v10038 = vsub.s32 %v10035, %v10037
  %v10039 = vrot.slane %v10031, %v10038
  %v10041 = vunpack.c.l.s4 1966171168
  %v10042 = vunpack.c.0.s8 %v10041
  %v10043 = vlaneseq
  %v10044 = vshrl.u32 %v10043, 7
  %v10045 = vsub.s32 %v10042, %v10044
  %v10046 = vrot.slane %v10032, %v10045
  %v10047 = vcombine.low %v10039, %v10046
  %v10048 = vcombine.low %v7201, %v7208
  %v10049 = vcombine.low %v7215, %v7243
  %v10051 = vunpack.c.l.s4 1966171168
  %v10052 = vunpack.c.0.s8 %v10051
  %v10053 = vlaneseq
  %v10054 = vshrl.u32 %v10053, 7
  %v10055 = vsub.s32 %v10052, %v10054
  %v10056 = vrot.slane %v10048, %v10055
  %v10058 = vunpack.c.l.s4 1966171168
  %v10059 = vunpack.c.0.s8 %v10058
  %v10060 = vlaneseq
  %v10061 = vshrl.u32 %v10060, 7
  %v10062 = vsub.s32 %v10059, %v10061
  %v10063 = vrot.slane %v10049, %v10062
  %v10064 = vcombine.low %v10056, %v10063
  %v10065 = vcombine.low %v7250, %v7257
  %v10066 = vcombine.low %v7264, %v7292
  %v10068 = vunpack.c.l.s4 1966171168
  %v10069 = vunpack.c.0.s8 %v10068
  %v10070 = vlaneseq
  %v10071 = vshrl.u32 %v10070, 7
  %v10072 = vsub.s32 %v10069, %v10071
  %v10073 = vrot.slane %v10065, %v10072
  %v10075 = vunpack.c.l.s4 1966171168
  %v10076 = vunpack.c.0.s8 %v10075
  %v10077 = vlaneseq
  %v10078 = vshrl.u32 %v10077, 7
  %v10079 = vsub.s32 %v10076, %v10078
  %v10080 = vrot.slane %v10066, %v10079
  %v10081 = vcombine.low %v10073, %v10080
  %v10082 = vcombine.low %v7299, %v7306
  %v10083 = vcombine.low %v7313, %v7339
  %v10085 = vunpack.c.l.s4 1966171168
  %v10086 = vunpack.c.0.s8 %v10085
  %v10087 = vlaneseq
  %v10088 = vshrl.u32 %v10087, 7
  %v10089 = vsub.s32 %v10086, %v10088
  %v10090 = vrot.slane %v10082, %v10089
  %v10092 = vunpack.c.l.s4 1966171168
  %v10093 = vunpack.c.0.s8 %v10092
  %v10094 = vlaneseq
  %v10095 = vshrl.u32 %v10094, 7
  %v10096 = vsub.s32 %v10093, %v10095
  %v10097 = vrot.slane %v10083, %v10096
  %v10098 = vcombine.low %v10090, %v10097
  %v10099 = vcombine.low %v3751, %v3752
  %v10101 = vunpack.c.l.s4 1966171168
  %v10102 = vunpack.c.0.s8 %v10101
  %v10103 = vlaneseq
  %v10104 = vshrl.u32 %v10103, 7
  %v10105 = vsub.s32 %v10102, %v10104
  %v10106 = vrot.slane %v10099, %v10105
  %v10107 = vcombine.low %v7346, %v10106
  %v10109 = vunpack.c.l.s4 1966171168
  %v10110 = vunpack.c.0.s8 %v10109
  %v10111 = vlaneseq
  %v10112 = vshrl.u32 %v10111, 7
  %v10113 = vsub.s32 %v10110, %v10112
  %v10114 = vrot.slane %v10107, %v10113
  %v10115 = vcombine.low %v7372, %v7379
  %v10116 = vcombine.low %v7386, %v7414
  %v10118 = vunpack.c.l.s4 1966171168
  %v10119 = vunpack.c.0.s8 %v10118
  %v10120 = vlaneseq
  %v10121 = vshrl.u32 %v10120, 7
  %v10122 = vsub.s32 %v10119, %v10121
  %v10123 = vrot.slane %v10115, %v10122
  %v10125 = vunpack.c.l.s4 1966171168
  %v10126 = vunpack.c.0.s8 %v10125
  %v10127 = vlaneseq
  %v10128 = vshrl.u32 %v10127, 7
  %v10129 = vsub.s32 %v10126, %v10128
  %v10130 = vrot.slane %v10116, %v10129
  %v10131 = vcombine.low %v10123, %v10130
  %v10132 = vcombine.low %v7421, %v7428
  %v10133 = vcombine.low %v7435, %v7463
  %v10135 = vunpack.c.l.s4 1966171168
  %v10136 = vunpack.c.0.s8 %v10135
  %v10137 = vlaneseq
  %v10138 = vshrl.u32 %v10137, 7
  %v10139 = vsub.s32 %v10136, %v10138
  %v10140 = vrot.slane %v10132, %v10139
  %v10142 = vunpack.c.l.s4 1966171168
  %v10143 = vunpack.c.0.s8 %v10142
  %v10144 = vlaneseq
  %v10145 = vshrl.u32 %v10144, 7
  %v10146 = vsub.s32 %v10143, %v10145
  %v10147 = vrot.slane %v10133, %v10146
  %v10148 = vcombine.low %v10140, %v10147
  %v10149 = vcombine.low %v7470, %v7477
  %v10150 = vcombine.low %v7484, %v7512
  %v10152 = vunpack.c.l.s4 1966171168
  %v10153 = vunpack.c.0.s8 %v10152
  %v10154 = vlaneseq
  %v10155 = vshrl.u32 %v10154, 7
  %v10156 = vsub.s32 %v10153, %v10155
  %v10157 = vrot.slane %v10149, %v10156
  %v10159 = vunpack.c.l.s4 1966171168
  %v10160 = vunpack.c.0.s8 %v10159
  %v10161 = vlaneseq
  %v10162 = vshrl.u32 %v10161, 7
  %v10163 = vsub.s32 %v10160, %v10162
  %v10164 = vrot.slane %v10150, %v10163
  %v10165 = vcombine.low %v10157, %v10164
  %v10166 = vcombine.low %v7519, %v7526
  %v10167 = vcombine.low %v7533, %v7561
  %v10169 = vunpack.c.l.s4 1966171168
  %v10170 = vunpack.c.0.s8 %v10169
  %v10171 = vlaneseq
  %v10172 = vshrl.u32 %v10171, 7
  %v10173 = vsub.s32 %v10170, %v10172
  %v10174 = vrot.slane %v10166, %v10173
  %v10176 = vunpack.c.l.s4 1966171168
  %v10177 = vunpack.c.0.s8 %v10176
  %v10178 = vlaneseq
  %v10179 = vshrl.u32 %v10178, 7
  %v10180 = vsub.s32 %v10177, %v10179
  %v10181 = vrot.slane %v10167, %v10180
  %v10182 = vcombine.low %v10174, %v10181
  %v10183 = vcombine.low %v7568, %v7575
  %v10184 = vcombine.low %v7582, %v7608
  %v10186 = vunpack.c.l.s4 1966171168
  %v10187 = vunpack.c.0.s8 %v10186
  %v10188 = vlaneseq
  %v10189 = vshrl.u32 %v10188, 7
  %v10190 = vsub.s32 %v10187, %v10189
  %v10191 = vrot.slane %v10183, %v10190
  %v10193 = vunpack.c.l.s4 1966171168
  %v10194 = vunpack.c.0.s8 %v10193
  %v10195 = vlaneseq
  %v10196 = vshrl.u32 %v10195, 7
  %v10197 = vsub.s32 %v10194, %v10196
  %v10198 = vrot.slane %v10184, %v10197
  %v10199 = vcombine.low %v10191, %v10198
  %v10200 = vcombine.low %v3798, %v3799
  %v10202 = vunpack.c.l.s4 1966171168
  %v10203 = vunpack.c.0.s8 %v10202
  %v10204 = vlaneseq
  %v10205 = vshrl.u32 %v10204, 7
  %v10206 = vsub.s32 %v10203, %v10205
  %v10207 = vrot.slane %v10200, %v10206
  %v10208 = vcombine.low %v7615, %v10207
  %v10210 = vunpack.c.l.s4 1966171168
  %v10211 = vunpack.c.0.s8 %v10210
  %v10212 = vlaneseq
  %v10213 = vshrl.u32 %v10212, 7
  %v10214 = vsub.s32 %v10211, %v10213
  %v10215 = vrot.slane %v10208, %v10214
  %v10216 = vcombine.low %v7641, %v7648
  %v10217 = vcombine.low %v7655, %v7683
  %v10219 = vunpack.c.l.s4 1966171168
  %v10220 = vunpack.c.0.s8 %v10219
  %v10221 = vlaneseq
  %v10222 = vshrl.u32 %v10221, 7
  %v10223 = vsub.s32 %v10220, %v10222
  %v10224 = vrot.slane %v10216, %v10223
  %v10226 = vunpack.c.l.s4 1966171168
  %v10227 = vunpack.c.0.s8 %v10226
  %v10228 = vlaneseq
  %v10229 = vshrl.u32 %v10228, 7
  %v10230 = vsub.s32 %v10227, %v10229
  %v10231 = vrot.slane %v10217, %v10230
  %v10232 = vcombine.low %v10224, %v10231
  %v10233 = vcombine.low %v7690, %v7697
  %v10234 = vcombine.low %v7704, %v7732
  %v10236 = vunpack.c.l.s4 1966171168
  %v10237 = vunpack.c.0.s8 %v10236
  %v10238 = vlaneseq
  %v10239 = vshrl.u32 %v10238, 7
  %v10240 = vsub.s32 %v10237, %v10239
  %v10241 = vrot.slane %v10233, %v10240
  %v10243 = vunpack.c.l.s4 1966171168
  %v10244 = vunpack.c.0.s8 %v10243
  %v10245 = vlaneseq
  %v10246 = vshrl.u32 %v10245, 7
  %v10247 = vsub.s32 %v10244, %v10246
  %v10248 = vrot.slane %v10234, %v10247
  %v10249 = vcombine.low %v10241, %v10248
  %v10250 = vcombine.low %v7739, %v7746
  %v10251 = vcombine.low %v7753, %v7781
  %v10253 = vunpack.c.l.s4 1966171168
  %v10254 = vunpack.c.0.s8 %v10253
  %v10255 = vlaneseq
  %v10256 = vshrl.u32 %v10255, 7
  %v10257 = vsub.s32 %v10254, %v10256
  %v10258 = vrot.slane %v10250, %v10257
  %v10260 = vunpack.c.l.s4 1966171168
  %v10261 = vunpack.c.0.s8 %v10260
  %v10262 = vlaneseq
  %v10263 = vshrl.u32 %v10262, 7
  %v10264 = vsub.s32 %v10261, %v10263
  %v10265 = vrot.slane %v10251, %v10264
  %v10266 = vcombine.low %v10258, %v10265
  %v10267 = vcombine.low %v7788, %v7795
  %v10268 = vcombine.low %v7802, %v7830
  %v10270 = vunpack.c.l.s4 1966171168
  %v10271 = vunpack.c.0.s8 %v10270
  %v10272 = vlaneseq
  %v10273 = vshrl.u32 %v10272, 7
  %v10274 = vsub.s32 %v10271, %v10273
  %v10275 = vrot.slane %v10267, %v10274
  %v10277 = vunpack.c.l.s4 1966171168
  %v10278 = vunpack.c.0.s8 %v10277
  %v10279 = vlaneseq
  %v10280 = vshrl.u32 %v10279, 7
  %v10281 = vsub.s32 %v10278, %v10280
  %v10282 = vrot.slane %v10268, %v10281
  %v10283 = vcombine.low %v10275, %v10282
  %v10284 = vcombine.low %v7837, %v7844
  %v10285 = vcombine.low %v7851, %v7877
  %v10287 = vunpack.c.l.s4 1966171168
  %v10288 = vunpack.c.0.s8 %v10287
  %v10289 = vlaneseq
  %v10290 = vshrl.u32 %v10289, 7
  %v10291 = vsub.s32 %v10288, %v10290
  %v10292 = vrot.slane %v10284, %v10291
  %v10294 = vunpack.c.l.s4 1966171168
  %v10295 = vunpack.c.0.s8 %v10294
  %v10296 = vlaneseq
  %v10297 = vshrl.u32 %v10296, 7
  %v10298 = vsub.s32 %v10295, %v10297
  %v10299 = vrot.slane %v10285, %v10298
  %v10300 = vcombine.low %v10292, %v10299
  %v10301 = vcombine.low %v3845, %v3846
  %v10303 = vunpack.c.l.s4 1966171168
  %v10304 = vunpack.c.0.s8 %v10303
  %v10305 = vlaneseq
  %v10306 = vshrl.u32 %v10305, 7
  %v10307 = vsub.s32 %v10304, %v10306
  %v10308 = vrot.slane %v10301, %v10307
  %v10309 = vcombine.low %v7884, %v10308
  %v10311 = vunpack.c.l.s4 1966171168
  %v10312 = vunpack.c.0.s8 %v10311
  %v10313 = vlaneseq
  %v10314 = vshrl.u32 %v10313, 7
  %v10315 = vsub.s32 %v10312, %v10314
  %v10316 = vrot.slane %v10309, %v10315
  %v10317 = vcombine.low %v7910, %v7917
  %v10318 = vcombine.low %v7924, %v7952
  %v10320 = vunpack.c.l.s4 1966171168
  %v10321 = vunpack.c.0.s8 %v10320
  %v10322 = vlaneseq
  %v10323 = vshrl.u32 %v10322, 7
  %v10324 = vsub.s32 %v10321, %v10323
  %v10325 = vrot.slane %v10317, %v10324
  %v10327 = vunpack.c.l.s4 1966171168
  %v10328 = vunpack.c.0.s8 %v10327
  %v10329 = vlaneseq
  %v10330 = vshrl.u32 %v10329, 7
  %v10331 = vsub.s32 %v10328, %v10330
  %v10332 = vrot.slane %v10318, %v10331
  %v10333 = vcombine.low %v10325, %v10332
  %v10334 = vcombine.low %v7959, %v7966
  %v10335 = vcombine.low %v7973, %v8001
  %v10337 = vunpack.c.l.s4 1966171168
  %v10338 = vunpack.c.0.s8 %v10337
  %v10339 = vlaneseq
  %v10340 = vshrl.u32 %v10339, 7
  %v10341 = vsub.s32 %v10338, %v10340
  %v10342 = vrot.slane %v10334, %v10341
  %v10344 = vunpack.c.l.s4 1966171168
  %v10345 = vunpack.c.0.s8 %v10344
  %v10346 = vlaneseq
  %v10347 = vshrl.u32 %v10346, 7
  %v10348 = vsub.s32 %v10345, %v10347
  %v10349 = vrot.slane %v10335, %v10348
  %v10350 = vcombine.low %v10342, %v10349
  %v10351 = vcombine.low %v8008, %v8015
  %v10352 = vcombine.low %v8022, %v8050
  %v10354 = vunpack.c.l.s4 1966171168
  %v10355 = vunpack.c.0.s8 %v10354
  %v10356 = vlaneseq
  %v10357 = vshrl.u32 %v10356, 7
  %v10358 = vsub.s32 %v10355, %v10357
  %v10359 = vrot.slane %v10351, %v10358
  %v10361 = vunpack.c.l.s4 1966171168
  %v10362 = vunpack.c.0.s8 %v10361
  %v10363 = vlaneseq
  %v10364 = vshrl.u32 %v10363, 7
  %v10365 = vsub.s32 %v10362, %v10364
  %v10366 = vrot.slane %v10352, %v10365
  %v10367 = vcombine.low %v10359, %v10366
  %v10368 = vcombine.low %v8057, %v8064
  %v10369 = vcombine.low %v8071, %v8099
  %v10371 = vunpack.c.l.s4 1966171168
  %v10372 = vunpack.c.0.s8 %v10371
  %v10373 = vlaneseq
  %v10374 = vshrl.u32 %v10373, 7
  %v10375 = vsub.s32 %v10372, %v10374
  %v10376 = vrot.slane %v10368, %v10375
  %v10378 = vunpack.c.l.s4 1966171168
  %v10379 = vunpack.c.0.s8 %v10378
  %v10380 = vlaneseq
  %v10381 = vshrl.u32 %v10380, 7
  %v10382 = vsub.s32 %v10379, %v10381
  %v10383 = vrot.slane %v10369, %v10382
  %v10384 = vcombine.low %v10376, %v10383
  %v10385 = vcombine.low %v8106, %v8113
  %v10386 = vcombine.low %v8120, %v8146
  %v10388 = vunpack.c.l.s4 1966171168
  %v10389 = vunpack.c.0.s8 %v10388
  %v10390 = vlaneseq
  %v10391 = vshrl.u32 %v10390, 7
  %v10392 = vsub.s32 %v10389, %v10391
  %v10393 = vrot.slane %v10385, %v10392
  %v10395 = vunpack.c.l.s4 1966171168
  %v10396 = vunpack.c.0.s8 %v10395
  %v10397 = vlaneseq
  %v10398 = vshrl.u32 %v10397, 7
  %v10399 = vsub.s32 %v10396, %v10398
  %v10400 = vrot.slane %v10386, %v10399
  %v10401 = vcombine.low %v10393, %v10400
  %v10402 = vcombine.low %v3892, %v3893
  %v10404 = vunpack.c.l.s4 1966171168
  %v10405 = vunpack.c.0.s8 %v10404
  %v10406 = vlaneseq
  %v10407 = vshrl.u32 %v10406, 7
  %v10408 = vsub.s32 %v10405, %v10407
  %v10409 = vrot.slane %v10402, %v10408
  %v10410 = vcombine.low %v8153, %v10409
  %v10412 = vunpack.c.l.s4 1966171168
  %v10413 = vunpack.c.0.s8 %v10412
  %v10414 = vlaneseq
  %v10415 = vshrl.u32 %v10414, 7
  %v10416 = vsub.s32 %v10413, %v10415
  %v10417 = vrot.slane %v10410, %v10416
  %v10418 = vcombine.low %v8179, %v8186
  %v10419 = vcombine.low %v8193, %v8221
  %v10421 = vunpack.c.l.s4 1966171168
  %v10422 = vunpack.c.0.s8 %v10421
  %v10423 = vlaneseq
  %v10424 = vshrl.u32 %v10423, 7
  %v10425 = vsub.s32 %v10422, %v10424
  %v10426 = vrot.slane %v10418, %v10425
  %v10428 = vunpack.c.l.s4 1966171168
  %v10429 = vunpack.c.0.s8 %v10428
  %v10430 = vlaneseq
  %v10431 = vshrl.u32 %v10430, 7
  %v10432 = vsub.s32 %v10429, %v10431
  %v10433 = vrot.slane %v10419, %v10432
  %v10434 = vcombine.low %v10426, %v10433
  %v10435 = vcombine.low %v8228, %v8235
  %v10436 = vcombine.low %v8242, %v8270
  %v10438 = vunpack.c.l.s4 1966171168
  %v10439 = vunpack.c.0.s8 %v10438
  %v10440 = vlaneseq
  %v10441 = vshrl.u32 %v10440, 7
  %v10442 = vsub.s32 %v10439, %v10441
  %v10443 = vrot.slane %v10435, %v10442
  %v10445 = vunpack.c.l.s4 1966171168
  %v10446 = vunpack.c.0.s8 %v10445
  %v10447 = vlaneseq
  %v10448 = vshrl.u32 %v10447, 7
  %v10449 = vsub.s32 %v10446, %v10448
  %v10450 = vrot.slane %v10436, %v10449
  %v10451 = vcombine.low %v10443, %v10450
  %v10452 = vcombine.low %v8277, %v8284
  %v10453 = vcombine.low %v8291, %v8319
  %v10455 = vunpack.c.l.s4 1966171168
  %v10456 = vunpack.c.0.s8 %v10455
  %v10457 = vlaneseq
  %v10458 = vshrl.u32 %v10457, 7
  %v10459 = vsub.s32 %v10456, %v10458
  %v10460 = vrot.slane %v10452, %v10459
  %v10462 = vunpack.c.l.s4 1966171168
  %v10463 = vunpack.c.0.s8 %v10462
  %v10464 = vlaneseq
  %v10465 = vshrl.u32 %v10464, 7
  %v10466 = vsub.s32 %v10463, %v10465
  %v10467 = vrot.slane %v10453, %v10466
  %v10468 = vcombine.low %v10460, %v10467
  %v10469 = vcombine.low %v8326, %v8333
  %v10470 = vcombine.low %v8340, %v8368
  %v10472 = vunpack.c.l.s4 1966171168
  %v10473 = vunpack.c.0.s8 %v10472
  %v10474 = vlaneseq
  %v10475 = vshrl.u32 %v10474, 7
  %v10476 = vsub.s32 %v10473, %v10475
  %v10477 = vrot.slane %v10469, %v10476
  %v10479 = vunpack.c.l.s4 1966171168
  %v10480 = vunpack.c.0.s8 %v10479
  %v10481 = vlaneseq
  %v10482 = vshrl.u32 %v10481, 7
  %v10483 = vsub.s32 %v10480, %v10482
  %v10484 = vrot.slane %v10470, %v10483
  %v10485 = vcombine.low %v10477, %v10484
  %v10486 = vcombine.low %v8375, %v8382
  %v10487 = vcombine.low %v8389, %v8415
  %v10489 = vunpack.c.l.s4 1966171168
  %v10490 = vunpack.c.0.s8 %v10489
  %v10491 = vlaneseq
  %v10492 = vshrl.u32 %v10491, 7
  %v10493 = vsub.s32 %v10490, %v10492
  %v10494 = vrot.slane %v10486, %v10493
  %v10496 = vunpack.c.l.s4 1966171168
  %v10497 = vunpack.c.0.s8 %v10496
  %v10498 = vlaneseq
  %v10499 = vshrl.u32 %v10498, 7
  %v10500 = vsub.s32 %v10497, %v10499
  %v10501 = vrot.slane %v10487, %v10500
  %v10502 = vcombine.low %v10494, %v10501
  %v10503 = vcombine.low %v3939, %v3940
  %v10505 = vunpack.c.l.s4 1966171168
  %v10506 = vunpack.c.0.s8 %v10505
  %v10507 = vlaneseq
  %v10508 = vshrl.u32 %v10507, 7
  %v10509 = vsub.s32 %v10506, %v10508
  %v10510 = vrot.slane %v10503, %v10509
  %v10511 = vcombine.low %v8422, %v10510
  %v10513 = vunpack.c.l.s4 1966171168
  %v10514 = vunpack.c.0.s8 %v10513
  %v10515 = vlaneseq
  %v10516 = vshrl.u32 %v10515, 7
  %v10517 = vsub.s32 %v10514, %v10516
  %v10518 = vrot.slane %v10511, %v10517
  %v10519 = vcombine.low %v8448, %v8455
  %v10520 = vcombine.low %v8462, %v8490
  %v10522 = vunpack.c.l.s4 1966171168
  %v10523 = vunpack.c.0.s8 %v10522
  %v10524 = vlaneseq
  %v10525 = vshrl.u32 %v10524, 7
  %v10526 = vsub.s32 %v10523, %v10525
  %v10527 = vrot.slane %v10519, %v10526
  %v10529 = vunpack.c.l.s4 1966171168
  %v10530 = vunpack.c.0.s8 %v10529
  %v10531 = vlaneseq
  %v10532 = vshrl.u32 %v10531, 7
  %v10533 = vsub.s32 %v10530, %v10532
  %v10534 = vrot.slane %v10520, %v10533
  %v10535 = vcombine.low %v10527, %v10534
  %v10536 = vcombine.low %v8497, %v8504
  %v10537 = vcombine.low %v8511, %v8539
  %v10539 = vunpack.c.l.s4 1966171168
  %v10540 = vunpack.c.0.s8 %v10539
  %v10541 = vlaneseq
  %v10542 = vshrl.u32 %v10541, 7
  %v10543 = vsub.s32 %v10540, %v10542
  %v10544 = vrot.slane %v10536, %v10543
  %v10546 = vunpack.c.l.s4 1966171168
  %v10547 = vunpack.c.0.s8 %v10546
  %v10548 = vlaneseq
  %v10549 = vshrl.u32 %v10548, 7
  %v10550 = vsub.s32 %v10547, %v10549
  %v10551 = vrot.slane %v10537, %v10550
  %v10552 = vcombine.low %v10544, %v10551
  %v10553 = vcombine.low %v8546, %v8553
  %v10554 = vcombine.low %v8560, %v8588
  %v10556 = vunpack.c.l.s4 1966171168
  %v10557 = vunpack.c.0.s8 %v10556
  %v10558 = vlaneseq
  %v10559 = vshrl.u32 %v10558, 7
  %v10560 = vsub.s32 %v10557, %v10559
  %v10561 = vrot.slane %v10553, %v10560
  %v10563 = vunpack.c.l.s4 1966171168
  %v10564 = vunpack.c.0.s8 %v10563
  %v10565 = vlaneseq
  %v10566 = vshrl.u32 %v10565, 7
  %v10567 = vsub.s32 %v10564, %v10566
  %v10568 = vrot.slane %v10554, %v10567
  %v10569 = vcombine.low %v10561, %v10568
  %v10570 = vcombine.low %v8595, %v8602
  %v10571 = vcombine.low %v8609, %v8637
  %v10573 = vunpack.c.l.s4 1966171168
  %v10574 = vunpack.c.0.s8 %v10573
  %v10575 = vlaneseq
  %v10576 = vshrl.u32 %v10575, 7
  %v10577 = vsub.s32 %v10574, %v10576
  %v10578 = vrot.slane %v10570, %v10577
  %v10580 = vunpack.c.l.s4 1966171168
  %v10581 = vunpack.c.0.s8 %v10580
  %v10582 = vlaneseq
  %v10583 = vshrl.u32 %v10582, 7
  %v10584 = vsub.s32 %v10581, %v10583
  %v10585 = vrot.slane %v10571, %v10584
  %v10586 = vcombine.low %v10578, %v10585
  %v10587 = vcombine.low %v8644, %v8651
  %v10588 = vcombine.low %v8658, %v8684
  %v10590 = vunpack.c.l.s4 1966171168
  %v10591 = vunpack.c.0.s8 %v10590
  %v10592 = vlaneseq
  %v10593 = vshrl.u32 %v10592, 7
  %v10594 = vsub.s32 %v10591, %v10593
  %v10595 = vrot.slane %v10587, %v10594
  %v10597 = vunpack.c.l.s4 1966171168
  %v10598 = vunpack.c.0.s8 %v10597
  %v10599 = vlaneseq
  %v10600 = vshrl.u32 %v10599, 7
  %v10601 = vsub.s32 %v10598, %v10600
  %v10602 = vrot.slane %v10588, %v10601
  %v10603 = vcombine.low %v10595, %v10602
  %v10604 = vcombine.low %v3986, %v3987
  %v10606 = vunpack.c.l.s4 1966171168
  %v10607 = vunpack.c.0.s8 %v10606
  %v10608 = vlaneseq
  %v10609 = vshrl.u32 %v10608, 7
  %v10610 = vsub.s32 %v10607, %v10609
  %v10611 = vrot.slane %v10604, %v10610
  %v10612 = vcombine.low %v8691, %v10611
  %v10614 = vunpack.c.l.s4 1966171168
  %v10615 = vunpack.c.0.s8 %v10614
  %v10616 = vlaneseq
  %v10617 = vshrl.u32 %v10616, 7
  %v10618 = vsub.s32 %v10615, %v10617
  %v10619 = vrot.slane %v10612, %v10618
  %10620 = vrot.lane.b32.xlu0 %v9828, 96
  %v10621 = vpop.permute.xlu0 %10620
  %10622 = vrot.lane.b32.xlu0 %v9845, 96
  %v10623 = vpop.permute.xlu0 %10622
  %10624 = vrot.lane.b32.xlu0 %v9862, 96
  %v10625 = vpop.permute.xlu0 %10624
  %10626 = vrot.lane.b32.xlu0 %v9879, 96
  %v10627 = vpop.permute.xlu0 %10626
  %10628 = vrot.lane.b32.xlu0 %v9896, 96
  %v10629 = vpop.permute.xlu0 %10628
  %10630 = vrot.lane.b32.xlu0 %v9912, 96
  %v10631 = vpop.permute.xlu0 %10630
  %10632 = vrot.lane.b32.xlu0 %v9929, 96
  %v10633 = vpop.permute.xlu0 %10632
  %10634 = vrot.lane.b32.xlu0 %v9946, 96
  %v10635 = vpop.permute.xlu0 %10634
  %10636 = vrot.lane.b32.xlu0 %v9963, 96
  %v10637 = vpop.permute.xlu0 %10636
  %10638 = vrot.lane.b32.xlu0 %v9980, 96
  %v10639 = vpop.permute.xlu0 %10638
  %10640 = vrot.lane.b32.xlu0 %v9997, 96
  %v10641 = vpop.permute.xlu0 %10640
  %10642 = vrot.lane.b32.xlu0 %v10013, 96
  %v10643 = vpop.permute.xlu0 %10642
  %10644 = vrot.lane.b32.xlu0 %v10030, 96
  %v10645 = vpop.permute.xlu0 %10644
  %10646 = vrot.lane.b32.xlu0 %v10047, 96
  %v10647 = vpop.permute.xlu0 %10646
  %10648 = vrot.lane.b32.xlu0 %v10064, 96
  %v10649 = vpop.permute.xlu0 %10648
  %10650 = vrot.lane.b32.xlu0 %v10081, 96
  %v10651 = vpop.permute.xlu0 %10650
  %10652 = vrot.lane.b32.xlu0 %v10098, 96
  %v10653 = vpop.permute.xlu0 %10652
  %10654 = vrot.lane.b32.xlu0 %v10114, 96
  %v10655 = vpop.permute.xlu0 %10654
  %10656 = vrot.lane.b32.xlu0 %v10131, 96
  %v10657 = vpop.permute.xlu0 %10656
  %10658 = vrot.lane.b32.xlu0 %v10148, 96
  %v10659 = vpop.permute.xlu0 %10658
  %10660 = vrot.lane.b32.xlu0 %v10165, 96
  %v10661 = vpop.permute.xlu0 %10660
  %10662 = vrot.lane.b32.xlu0 %v10182, 96
  %v10663 = vpop.permute.xlu0 %10662
  %10664 = vrot.lane.b32.xlu0 %v10199, 96
  %v10665 = vpop.permute.xlu0 %10664
  %10666 = vrot.lane.b32.xlu0 %v10215, 96
  %v10667 = vpop.permute.xlu0 %10666
  %10668 = vrot.lane.b32.xlu0 %v10232, 96
  %v10669 = vpop.permute.xlu0 %10668
  %10670 = vrot.lane.b32.xlu0 %v10249, 96
  %v10671 = vpop.permute.xlu0 %10670
  %10672 = vrot.lane.b32.xlu0 %v10266, 96
  %v10673 = vpop.permute.xlu0 %10672
  %10674 = vrot.lane.b32.xlu0 %v10283, 96
  %v10675 = vpop.permute.xlu0 %10674
  %10676 = vrot.lane.b32.xlu0 %v10300, 96
  %v10677 = vpop.permute.xlu0 %10676
  %10678 = vrot.lane.b32.xlu0 %v10316, 96
  %v10679 = vpop.permute.xlu0 %10678
  %10680 = vrot.lane.b32.xlu0 %v10333, 96
  %v10681 = vpop.permute.xlu0 %10680
  %10682 = vrot.lane.b32.xlu0 %v10350, 96
  %v10683 = vpop.permute.xlu0 %10682
  %10684 = vrot.lane.b32.xlu0 %v10367, 96
  %v10685 = vpop.permute.xlu0 %10684
  %10686 = vrot.lane.b32.xlu0 %v10384, 96
  %v10687 = vpop.permute.xlu0 %10686
  %10688 = vrot.lane.b32.xlu0 %v10401, 96
  %v10689 = vpop.permute.xlu0 %10688
  %10690 = vrot.lane.b32.xlu0 %v10417, 96
  %v10691 = vpop.permute.xlu0 %10690
  %10692 = vrot.lane.b32.xlu0 %v10434, 96
  %v10693 = vpop.permute.xlu0 %10692
  %10694 = vrot.lane.b32.xlu0 %v10451, 96
  %v10695 = vpop.permute.xlu0 %10694
  %10696 = vrot.lane.b32.xlu0 %v10468, 96
  %v10697 = vpop.permute.xlu0 %10696
  %10698 = vrot.lane.b32.xlu0 %v10485, 96
  %v10699 = vpop.permute.xlu0 %10698
  %10700 = vrot.lane.b32.xlu0 %v10502, 96
  %v10701 = vpop.permute.xlu0 %10700
  %10702 = vrot.lane.b32.xlu0 %v10518, 96
  %v10703 = vpop.permute.xlu0 %10702
  %10704 = vrot.lane.b32.xlu0 %v10535, 96
  %v10705 = vpop.permute.xlu0 %10704
  %10706 = vrot.lane.b32.xlu0 %v10552, 96
  %v10707 = vpop.permute.xlu0 %10706
  %10708 = vrot.lane.b32.xlu0 %v10569, 96
  %v10709 = vpop.permute.xlu0 %10708
  %10710 = vrot.lane.b32.xlu0 %v10586, 96
  %v10711 = vpop.permute.xlu0 %10710
  %10712 = vrot.lane.b32.xlu0 %v10603, 96
  %v10713 = vpop.permute.xlu0 %10712
  %10714 = vrot.lane.b32.xlu0 %v10619, 96
  %v10715 = vpop.permute.xlu0 %10714
  %vm10764 = vcmask 261120
  %v10765 = vsel %vm10764, %v4388, %v8701
  %v10766 = vsel %vm10764, %v4437, %v8703
  %v10767 = vsel %vm10764, %v4486, %v8705
  %v10768 = vsel %vm10764, %v4535, %v8707
  %v10769 = vsel %vm10764, %v4584, %v8709
  %v10770 = vsel %vm10764, %v4608, %v8711
  %v10771 = vsel %vm10764, %v4657, %v8713
  %v10772 = vsel %vm10764, %v4706, %v8715
  %v10773 = vsel %vm10764, %v4755, %v8717
  %v10774 = vsel %vm10764, %v4804, %v8719
  %v10775 = vsel %vm10764, %v4853, %v8721
  %v10776 = vsel %vm10764, %v4877, %v8723
  %v10777 = vsel %vm10764, %v4926, %v8725
  %v10778 = vsel %vm10764, %v4975, %v8727
  %v10779 = vsel %vm10764, %v5024, %v8729
  %v10780 = vsel %vm10764, %v5073, %v8731
  %v10781 = vsel %vm10764, %v5122, %v8733
  %v10782 = vsel %vm10764, %v5146, %v8735
  %v10783 = vsel %vm10764, %v5195, %v8737
  %v10784 = vsel %vm10764, %v5244, %v8739
  %v10785 = vsel %vm10764, %v5293, %v8741
  %v10786 = vsel %vm10764, %v5342, %v8743
  %v10787 = vsel %vm10764, %v5391, %v8745
  %v10788 = vsel %vm10764, %v5415, %v8747
  %v10789 = vsel %vm10764, %v5464, %v8749
  %v10790 = vsel %vm10764, %v5513, %v8751
  %v10791 = vsel %vm10764, %v5562, %v8753
  %v10792 = vsel %vm10764, %v5611, %v8755
  %v10793 = vsel %vm10764, %v5660, %v8757
  %v10794 = vsel %vm10764, %v5684, %v8759
  %v10795 = vsel %vm10764, %v5733, %v8761
  %v10796 = vsel %vm10764, %v5782, %v8763
  %v10797 = vsel %vm10764, %v5831, %v8765
  %v10798 = vsel %vm10764, %v5880, %v8767
  %v10799 = vsel %vm10764, %v5929, %v8769
  %v10800 = vsel %vm10764, %v5953, %v8771
  %v10801 = vsel %vm10764, %v6002, %v8773
  %v10802 = vsel %vm10764, %v6051, %v8775
  %v10803 = vsel %vm10764, %v6100, %v8777
  %v10804 = vsel %vm10764, %v6149, %v8779
  %v10805 = vsel %vm10764, %v6198, %v8781
  %v10806 = vsel %vm10764, %v6222, %v8783
  %v10807 = vsel %vm10764, %v6271, %v8785
  %v10808 = vsel %vm10764, %v6320, %v8787
  %v10809 = vsel %vm10764, %v6369, %v8789
  %v10810 = vsel %vm10764, %v6418, %v8791
  %v10811 = vsel %vm10764, %v6467, %v8793
  %v10812 = vsel %vm10764, %v6491, %v8795
  %vm10813 = vcmask 523264
  %v10814 = vsel %vm10813, %v10765, %v9661
  %v10815 = vsel %vm10813, %v10766, %v9663
  %v10816 = vsel %vm10813, %v10767, %v9665
  %v10817 = vsel %vm10813, %v10768, %v9667
  %v10818 = vsel %vm10813, %v10769, %v9669
  %v10819 = vsel %vm10813, %v10770, %v9671
  %v10820 = vsel %vm10813, %v10771, %v9673
  %v10821 = vsel %vm10813, %v10772, %v9675
  %v10822 = vsel %vm10813, %v10773, %v9677
  %v10823 = vsel %vm10813, %v10774, %v9679
  %v10824 = vsel %vm10813, %v10775, %v9681
  %v10825 = vsel %vm10813, %v10776, %v9683
  %v10826 = vsel %vm10813, %v10777, %v9685
  %v10827 = vsel %vm10813, %v10778, %v9687
  %v10828 = vsel %vm10813, %v10779, %v9689
  %v10829 = vsel %vm10813, %v10780, %v9691
  %v10830 = vsel %vm10813, %v10781, %v9693
  %v10831 = vsel %vm10813, %v10782, %v9695
  %v10832 = vsel %vm10813, %v10783, %v9697
  %v10833 = vsel %vm10813, %v10784, %v9699
  %v10834 = vsel %vm10813, %v10785, %v9701
  %v10835 = vsel %vm10813, %v10786, %v9703
  %v10836 = vsel %vm10813, %v10787, %v9705
  %v10837 = vsel %vm10813, %v10788, %v9707
  %v10838 = vsel %vm10813, %v10789, %v9709
  %v10839 = vsel %vm10813, %v10790, %v9711
  %v10840 = vsel %vm10813, %v10791, %v9713
  %v10841 = vsel %vm10813, %v10792, %v9715
  %v10842 = vsel %vm10813, %v10793, %v9717
  %v10843 = vsel %vm10813, %v10794, %v9719
  %v10844 = vsel %vm10813, %v10795, %v9721
  %v10845 = vsel %vm10813, %v10796, %v9723
  %v10846 = vsel %vm10813, %v10797, %v9725
  %v10847 = vsel %vm10813, %v10798, %v9727
  %v10848 = vsel %vm10813, %v10799, %v9729
  %v10849 = vsel %vm10813, %v10800, %v9731
  %v10850 = vsel %vm10813, %v10801, %v9733
  %v10851 = vsel %vm10813, %v10802, %v9735
  %v10852 = vsel %vm10813, %v10803, %v9737
  %v10853 = vsel %vm10813, %v10804, %v9739
  %v10854 = vsel %vm10813, %v10805, %v9741
  %v10855 = vsel %vm10813, %v10806, %v9743
  %v10856 = vsel %vm10813, %v10807, %v9745
  %v10857 = vsel %vm10813, %v10808, %v9747
  %v10858 = vsel %vm10813, %v10809, %v9749
  %v10859 = vsel %vm10813, %v10810, %v9751
  %v10860 = vsel %vm10813, %v10811, %v9753
  %v10861 = vsel %vm10813, %v10812, %v9755
  %vm10862 = vcmask 785408
  %v10863 = vsel %vm10862, %v10814, %v10621
  %v10864 = vsel %vm10862, %v10815, %v10623
  %v10865 = vsel %vm10862, %v10816, %v10625
  %v10866 = vsel %vm10862, %v10817, %v10627
  %v10867 = vsel %vm10862, %v10818, %v10629
  %v10868 = vsel %vm10862, %v10819, %v10631
  %v10869 = vsel %vm10862, %v10820, %v10633
  %v10870 = vsel %vm10862, %v10821, %v10635
  %v10871 = vsel %vm10862, %v10822, %v10637
  %v10872 = vsel %vm10862, %v10823, %v10639
  %v10873 = vsel %vm10862, %v10824, %v10641
  %v10874 = vsel %vm10862, %v10825, %v10643
  %v10875 = vsel %vm10862, %v10826, %v10645
  %v10876 = vsel %vm10862, %v10827, %v10647
  %v10877 = vsel %vm10862, %v10828, %v10649
  %v10878 = vsel %vm10862, %v10829, %v10651
  %v10879 = vsel %vm10862, %v10830, %v10653
  %v10880 = vsel %vm10862, %v10831, %v10655
  %v10881 = vsel %vm10862, %v10832, %v10657
  %v10882 = vsel %vm10862, %v10833, %v10659
  %v10883 = vsel %vm10862, %v10834, %v10661
  %v10884 = vsel %vm10862, %v10835, %v10663
  %v10885 = vsel %vm10862, %v10836, %v10665
  %v10886 = vsel %vm10862, %v10837, %v10667
  %v10887 = vsel %vm10862, %v10838, %v10669
  %v10888 = vsel %vm10862, %v10839, %v10671
  %v10889 = vsel %vm10862, %v10840, %v10673
  %v10890 = vsel %vm10862, %v10841, %v10675
  %v10891 = vsel %vm10862, %v10842, %v10677
  %v10892 = vsel %vm10862, %v10843, %v10679
  %v10893 = vsel %vm10862, %v10844, %v10681
  %v10894 = vsel %vm10862, %v10845, %v10683
  %v10895 = vsel %vm10862, %v10846, %v10685
  %v10896 = vsel %vm10862, %v10847, %v10687
  %v10897 = vsel %vm10862, %v10848, %v10689
  %v10898 = vsel %vm10862, %v10849, %v10691
  %v10899 = vsel %vm10862, %v10850, %v10693
  %v10900 = vsel %vm10862, %v10851, %v10695
  %v10901 = vsel %vm10862, %v10852, %v10697
  %v10902 = vsel %vm10862, %v10853, %v10699
  %v10903 = vsel %vm10862, %v10854, %v10701
  %v10904 = vsel %vm10862, %v10855, %v10703
  %v10905 = vsel %vm10862, %v10856, %v10705
  %v10906 = vsel %vm10862, %v10857, %v10707
  %v10907 = vsel %vm10862, %v10858, %v10709
  %v10908 = vsel %vm10862, %v10859, %v10711
  %v10909 = vsel %vm10862, %v10860, %v10713
  %v10910 = vsel %vm10862, %v10861, %v10715
  %v10959 = vcombine.high %v10863, %v10863
  %v10960 = vcombine.high %v10864, %v10864
  %v10961 = vcombine.high %v10865, %v10865
  %v10962 = vcombine.high %v10866, %v10866
  %v10963 = vcombine.high %v10867, %v10867
  %v10964 = vcombine.high %v10869, %v10869
  %v10965 = vcombine.high %v10870, %v10870
  %v10966 = vcombine.high %v10871, %v10871
  %v10967 = vcombine.high %v10872, %v10872
  %v10968 = vcombine.high %v10873, %v10873
  %v10969 = vcombine.high %v10875, %v10875
  %v10970 = vcombine.high %v10876, %v10876
  %v10971 = vcombine.high %v10877, %v10877
  %v10972 = vcombine.high %v10878, %v10878
  %v10973 = vcombine.high %v10879, %v10879
  %v10974 = vcombine.high %v10881, %v10881
  %v10975 = vcombine.high %v10882, %v10882
  %v10976 = vcombine.high %v10883, %v10883
  %v10977 = vcombine.high %v10884, %v10884
  %v10978 = vcombine.high %v10885, %v10885
  %v10979 = vcombine.high %v10887, %v10887
  %v10980 = vcombine.high %v10888, %v10888
  %v10981 = vcombine.high %v10889, %v10889
  %v10982 = vcombine.high %v10890, %v10890
  %v10983 = vcombine.high %v10891, %v10891
  %v10984 = vcombine.high %v10893, %v10893
  %v10985 = vcombine.high %v10894, %v10894
  %v10986 = vcombine.high %v10895, %v10895
  %v10987 = vcombine.high %v10896, %v10896
  %v10988 = vcombine.high %v10897, %v10897
  %v10989 = vcombine.high %v10899, %v10899
  %v10990 = vcombine.high %v10900, %v10900
  %v10991 = vcombine.high %v10901, %v10901
  %v10992 = vcombine.high %v10902, %v10902
  %v10993 = vcombine.high %v10903, %v10903
  %v10994 = vcombine.high %v10905, %v10905
  %v10995 = vcombine.high %v10906, %v10906
  %v10996 = vcombine.high %v10907, %v10907
  %v10997 = vcombine.high %v10908, %v10908
  %v10998 = vcombine.high %v10909, %v10909
  %v10999 = vld [vmem:[%s3] sm:$0xff]
  %v11000 = vld [vmem:[%s3 + $0x8] sm:$0xff]
  %v11001 = vld [vmem:[%s3 + $0x10] sm:$0xff]
  %v11002 = vld [vmem:[%s3 + $0x18] sm:$0xff]
  %v11003 = vld [vmem:[%s3 + $0x20] sm:$0xff]
  %v11004 = vld [vmem:[%s3 + $0x28] sm:$0xff]
  %v11005 = vld [vmem:[%s3 + $0x30] sm:$0xff]
  %v11006 = vld [vmem:[%s3 + $0x38] sm:$0xff]
  %v11007 = vld [vmem:[%s3 + $0x40] sm:$0xff]
  %v11008 = vld [vmem:[%s3 + $0x48] sm:$0xff]
  %v11009 = vld [vmem:[%s3 + $0x50] sm:$0xff]
  %v11010 = vld [vmem:[%s3 + $0x58] sm:$0xff]
  %v11011 = vld [vmem:[%s3 + $0x60] sm:$0xff]
  %v11012 = vld [vmem:[%s3 + $0x68] sm:$0xff]
  %v11013 = vld [vmem:[%s3 + $0x70] sm:$0xff]
  %v11014 = vld [vmem:[%s3 + $0x78] sm:$0xff]
  %v11015 = vld [vmem:[%s4] sm:$0x1]
  %v11017 = vlaneseq
  %v11018 = vshrl.u32 %v11017, 7
  %v11019 = vsub.s32 0, %v11018
  %v11020 = vrot.slane %v11015, %v11019
  %v11022 = vcombine.low %v10863, %v10959
  %v11023 = vcombine.low %v10864, %v10960
  %v11024 = vcombine.low %v10865, %v10961
  %v11025 = vcombine.low %v10866, %v10962
  %v11026 = vcombine.low %v10867, %v10963
  %v11027 = vcombine.low %v10868, %v10869
  %v11028 = vcombine.low %v10964, %v10870
  %v11029 = vcombine.low %v10965, %v10871
  %v11030 = vcombine.low %v10966, %v10872
  %v11031 = vcombine.low %v10967, %v10873
  %v11032 = vcombine.low %v10968, %v10874
  %v11033 = vcombine.low %v10875, %v10969
  %v11034 = vcombine.low %v10876, %v10970
  %v11035 = vcombine.low %v10877, %v10971
  %v11036 = vcombine.low %v10878, %v10972
  %v11037 = vcombine.low %v10879, %v10973
  %v11038 = vcombine.low %v10880, %v10881
  %v11039 = vcombine.low %v10974, %v10882
  %v11040 = vcombine.low %v10975, %v10883
  %v11041 = vcombine.low %v10976, %v10884
  %v11042 = vcombine.low %v10977, %v10885
  %v11043 = vcombine.low %v10978, %v10886
  %v11044 = vcombine.low %v10887, %v10979
  %v11045 = vcombine.low %v10888, %v10980
  %v11046 = vcombine.low %v10889, %v10981
  %v11047 = vcombine.low %v10890, %v10982
  %v11048 = vcombine.low %v10891, %v10983
  %v11049 = vcombine.low %v10892, %v10893
  %v11050 = vcombine.low %v10984, %v10894
  %v11051 = vcombine.low %v10985, %v10895
  %v11052 = vcombine.low %v10986, %v10896
  %v11053 = vcombine.low %v10987, %v10897
  %v11054 = vcombine.low %v10988, %v10898
  %v11055 = vcombine.low %v10899, %v10989
  %v11056 = vcombine.low %v10900, %v10990
  %v11057 = vcombine.low %v10901, %v10991
  %v11058 = vcombine.low %v10902, %v10992
  %v11059 = vcombine.low %v10903, %v10993
  %v11060 = vcombine.low %v10904, %v10905
  %v11061 = vcombine.low %v10994, %v10906
  %v11062 = vcombine.low %v10995, %v10907
  %v11063 = vcombine.low %v10996, %v10908
  %v11064 = vcombine.low %v10997, %v10909
  %v11065 = vcombine.low %v10998, %v10910
  %11110 = vmatprep.subr.mxu0 0.0
  %11111 = vmatpush1.msra.mxu0 %v11014
  %11112 = vmatprep.subr.mxu0 0.0
  %11113 = vmatpush1.msra.mxu0 %v11013
  %11114 = vmatprep.subr.mxu0 0.0
  %11115 = vmatpush1.msra.mxu0 %v11012
  %11116 = vmatprep.subr.mxu0 0.0
  %11117 = vmatpush1.msra.mxu0 %v11011
  %11118 = vmatprep.subr.mxu0 0.0
  %11119 = vmatpush1.msra.mxu0 %v11010
  %11120 = vmatprep.subr.mxu0 0.0
  %11121 = vmatpush1.msra.mxu0 %v11009
  %11122 = vmatprep.subr.mxu0 0.0
  %11123 = vmatpush1.msra.mxu0 %v11008
  %11124 = vmatprep.subr.mxu0 0.0
  %11125 = vmatpush1.msra.mxu0 %v11007
  %11126 = vmatprep.subr.mxu0 0.0
  %11127 = vmatpush1.msra.mxu0 %v11006
  %11128 = vmatprep.subr.mxu0 0.0
  %11129 = vmatpush1.msra.mxu0 %v11005
  %11130 = vmatprep.subr.mxu0 0.0
  %11131 = vmatpush1.msra.mxu0 %v11004
  %11132 = vmatprep.subr.mxu0 0.0
  %11133 = vmatpush1.msra.mxu0 %v11003
  %11134 = vmatprep.subr.mxu0 0.0
  %11135 = vmatpush1.msra.mxu0 %v11002
  %11136 = vmatprep.subr.mxu0 0.0
  %11137 = vmatpush1.msra.mxu0 %v11001
  %11138 = vmatprep.subr.mxu0 0.0
  %11139 = vmatpush1.msra.mxu0 %v11000
  %11140 = vmatprep.subr.mxu0 0.0
  %11141 = vmatpush1.msra.mxu0 %v10999
  %11142 = vmatprep.subr.mxu0 0.0
  %11143 = vmatpush2.msra.mxu0 0.0
  %11144 = vmatprep.subr.mxu0 0.0
  %11145 = vmatpush2.msra.mxu0 0.0
  %11146 = vmatprep.subr.mxu0 0.0
  %11147 = vmatpush2.msra.mxu0 0.0
  %11148 = vmatprep.subr.mxu0 0.0
  %11149 = vmatpush2.msra.mxu0 0.0
  %11150 = vmatprep.subr.mxu0 0.0
  %11151 = vmatpush2.msra.mxu0 0.0
  %11152 = vmatprep.subr.mxu0 0.0
  %11153 = vmatpush2.msra.mxu0 0.0
  %11154 = vmatprep.subr.mxu0 0.0
  %11155 = vmatpush2.msra.mxu0 0.0
  %11156 = vmatprep.subr.mxu0 0.0
  %11157 = vmatpush2.msra.mxu0 0.0
  %11158 = vmatprep.subr.mxu0 0.0
  %11159 = vmatpush2.msra.mxu0 0.0
  %11160 = vmatprep.subr.mxu0 0.0
  %11161 = vmatpush2.msra.mxu0 0.0
  %11162 = vmatprep.subr.mxu0 0.0
  %11163 = vmatpush2.msra.mxu0 0.0
  %11164 = vmatprep.subr.mxu0 0.0
  %11165 = vmatpush2.msra.mxu0 0.0
  %11166 = vmatprep.subr.mxu0 0.0
  %11167 = vmatpush2.msra.mxu0 0.0
  %11168 = vmatprep.subr.mxu0 0.0
  %11169 = vmatpush2.msra.mxu0 0.0
  %11170 = vmatprep.subr.mxu0 0.0
  %11171 = vmatpush2.msra.mxu0 0.0
  %11172 = vmatprep.subr.mxu0 0.0
  %11173 = vmatpush2.msra.mxu0 0.0
  %11174 = vmatprep.mubr.f32.mxu0 0.0
  %11175 = vmatmul.mubr.f32.gmra.mxu0 %v11022
  %v11176 = vpop.f32.mrf.mxu0
  %v11177 = vadd.f32 %v11020, %v11176
  %v11178 = vpop.f32.mrf.mxu0
  %11179 = vmatprep.mubr.f32.mxu0 0.0
  %11180 = vmatmul.mubr.f32.gmra.mxu0 %v11023
  %v11181 = vpop.f32.mrf.mxu0
  %v11182 = vadd.f32 %v11020, %v11181
  %v11183 = vpop.f32.mrf.mxu0
  %11184 = vmatprep.mubr.f32.mxu0 0.0
  %11185 = vmatmul.mubr.f32.gmra.mxu0 %v11024
  %v11186 = vpop.f32.mrf.mxu0
  %v11187 = vadd.f32 %v11020, %v11186
  %v11188 = vpop.f32.mrf.mxu0
  %11189 = vmatprep.mubr.f32.mxu0 0.0
  %11190 = vmatmul.mubr.f32.gmra.mxu0 %v11025
  %v11191 = vpop.f32.mrf.mxu0
  %v11192 = vadd.f32 %v11020, %v11191
  %v11193 = vpop.f32.mrf.mxu0
  %11194 = vmatprep.mubr.f32.mxu0 0.0
  %11195 = vmatmul.mubr.f32.gmra.mxu0 %v11026
  %v11196 = vpop.f32.mrf.mxu0
  %v11197 = vadd.f32 %v11020, %v11196
  %v11198 = vpop.f32.mrf.mxu0
  %11199 = vmatprep.mubr.f32.mxu0 0.0
  %11200 = vmatmul.mubr.f32.gmra.mxu0 %v11027
  %v11201 = vpop.f32.mrf.mxu0
  %v11202 = vadd.f32 %v11020, %v11201
  %v11203 = vpop.f32.mrf.mxu0
  %11204 = vmatprep.mubr.f32.mxu0 0.0
  %11205 = vmatmul.mubr.f32.gmra.mxu0 %v11028
  %v11206 = vpop.f32.mrf.mxu0
  %v11207 = vadd.f32 %v11020, %v11206
  %v11208 = vpop.f32.mrf.mxu0
  %11209 = vmatprep.mubr.f32.mxu0 0.0
  %11210 = vmatmul.mubr.f32.gmra.mxu0 %v11029
  %v11211 = vpop.f32.mrf.mxu0
  %v11212 = vadd.f32 %v11020, %v11211
  %v11213 = vpop.f32.mrf.mxu0
  %11214 = vmatprep.mubr.f32.mxu0 0.0
  %11215 = vmatmul.mubr.f32.gmra.mxu0 %v11030
  %v11216 = vpop.f32.mrf.mxu0
  %v11217 = vadd.f32 %v11020, %v11216
  %v11218 = vpop.f32.mrf.mxu0
  %11219 = vmatprep.mubr.f32.mxu0 0.0
  %11220 = vmatmul.mubr.f32.gmra.mxu0 %v11031
  %v11221 = vpop.f32.mrf.mxu0
  %v11222 = vadd.f32 %v11020, %v11221
  %v11223 = vpop.f32.mrf.mxu0
  %11224 = vmatprep.mubr.f32.mxu0 0.0
  %11225 = vmatmul.mubr.f32.gmra.mxu0 %v11032
  %v11226 = vpop.f32.mrf.mxu0
  %v11227 = vadd.f32 %v11020, %v11226
  %v11228 = vpop.f32.mrf.mxu0
  %11229 = vmatprep.mubr.f32.mxu0 0.0
  %11230 = vmatmul.mubr.f32.gmra.mxu0 %v11033
  %v11231 = vpop.f32.mrf.mxu0
  %v11232 = vadd.f32 %v11020, %v11231
  %v11233 = vpop.f32.mrf.mxu0
  %11234 = vmatprep.mubr.f32.mxu0 0.0
  %11235 = vmatmul.mubr.f32.gmra.mxu0 %v11034
  %v11236 = vpop.f32.mrf.mxu0
  %v11237 = vadd.f32 %v11020, %v11236
  %v11238 = vpop.f32.mrf.mxu0
  %11239 = vmatprep.mubr.f32.mxu0 0.0
  %11240 = vmatmul.mubr.f32.gmra.mxu0 %v11035
  %v11241 = vpop.f32.mrf.mxu0
  %v11242 = vadd.f32 %v11020, %v11241
  %v11243 = vpop.f32.mrf.mxu0
  %11244 = vmatprep.mubr.f32.mxu0 0.0
  %11245 = vmatmul.mubr.f32.gmra.mxu0 %v11036
  %v11246 = vpop.f32.mrf.mxu0
  %v11247 = vadd.f32 %v11020, %v11246
  %v11248 = vpop.f32.mrf.mxu0
  %11249 = vmatprep.mubr.f32.mxu0 0.0
  %11250 = vmatmul.mubr.f32.gmra.mxu0 %v11037
  %v11251 = vpop.f32.mrf.mxu0
  %v11252 = vadd.f32 %v11020, %v11251
  %v11253 = vpop.f32.mrf.mxu0
  %11254 = vmatprep.mubr.f32.mxu0 0.0
  %11255 = vmatmul.mubr.f32.gmra.mxu0 %v11038
  %v11256 = vpop.f32.mrf.mxu0
  %v11257 = vadd.f32 %v11020, %v11256
  %v11258 = vpop.f32.mrf.mxu0
  %11259 = vmatprep.mubr.f32.mxu0 0.0
  %11260 = vmatmul.mubr.f32.gmra.mxu0 %v11039
  %v11261 = vpop.f32.mrf.mxu0
  %v11262 = vadd.f32 %v11020, %v11261
  %v11263 = vpop.f32.mrf.mxu0
  %11264 = vmatprep.mubr.f32.mxu0 0.0
  %11265 = vmatmul.mubr.f32.gmra.mxu0 %v11040
  %v11266 = vpop.f32.mrf.mxu0
  %v11267 = vadd.f32 %v11020, %v11266
  %v11268 = vpop.f32.mrf.mxu0
  %11269 = vmatprep.mubr.f32.mxu0 0.0
  %11270 = vmatmul.mubr.f32.gmra.mxu0 %v11041
  %v11271 = vpop.f32.mrf.mxu0
  %v11272 = vadd.f32 %v11020, %v11271
  %v11273 = vpop.f32.mrf.mxu0
  %11274 = vmatprep.mubr.f32.mxu0 0.0
  %11275 = vmatmul.mubr.f32.gmra.mxu0 %v11042
  %v11276 = vpop.f32.mrf.mxu0
  %v11277 = vadd.f32 %v11020, %v11276
  %v11278 = vpop.f32.mrf.mxu0
  %11279 = vmatprep.mubr.f32.mxu0 0.0
  %11280 = vmatmul.mubr.f32.gmra.mxu0 %v11043
  %v11281 = vpop.f32.mrf.mxu0
  %v11282 = vadd.f32 %v11020, %v11281
  %v11283 = vpop.f32.mrf.mxu0
  %11284 = vmatprep.mubr.f32.mxu0 0.0
  %11285 = vmatmul.mubr.f32.gmra.mxu0 %v11044
  %v11286 = vpop.f32.mrf.mxu0
  %v11287 = vadd.f32 %v11020, %v11286
  %v11288 = vpop.f32.mrf.mxu0
  %11289 = vmatprep.mubr.f32.mxu0 0.0
  %11290 = vmatmul.mubr.f32.gmra.mxu0 %v11045
  %v11291 = vpop.f32.mrf.mxu0
  %v11292 = vadd.f32 %v11020, %v11291
  %v11293 = vpop.f32.mrf.mxu0
  %11294 = vmatprep.mubr.f32.mxu0 0.0
  %11295 = vmatmul.mubr.f32.gmra.mxu0 %v11046
  %v11296 = vpop.f32.mrf.mxu0
  %v11297 = vadd.f32 %v11020, %v11296
  %v11298 = vpop.f32.mrf.mxu0
  %11299 = vmatprep.mubr.f32.mxu0 0.0
  %11300 = vmatmul.mubr.f32.gmra.mxu0 %v11047
  %v11301 = vpop.f32.mrf.mxu0
  %v11302 = vadd.f32 %v11020, %v11301
  %v11303 = vpop.f32.mrf.mxu0
  %11304 = vmatprep.mubr.f32.mxu0 0.0
  %11305 = vmatmul.mubr.f32.gmra.mxu0 %v11048
  %v11306 = vpop.f32.mrf.mxu0
  %v11307 = vadd.f32 %v11020, %v11306
  %v11308 = vpop.f32.mrf.mxu0
  %11309 = vmatprep.mubr.f32.mxu0 0.0
  %11310 = vmatmul.mubr.f32.gmra.mxu0 %v11049
  %v11311 = vpop.f32.mrf.mxu0
  %v11312 = vadd.f32 %v11020, %v11311
  %v11313 = vpop.f32.mrf.mxu0
  %11314 = vmatprep.mubr.f32.mxu0 0.0
  %11315 = vmatmul.mubr.f32.gmra.mxu0 %v11050
  %v11316 = vpop.f32.mrf.mxu0
  %v11317 = vadd.f32 %v11020, %v11316
  %v11318 = vpop.f32.mrf.mxu0
  %11319 = vmatprep.mubr.f32.mxu0 0.0
  %11320 = vmatmul.mubr.f32.gmra.mxu0 %v11051
  %v11321 = vpop.f32.mrf.mxu0
  %v11322 = vadd.f32 %v11020, %v11321
  %v11323 = vpop.f32.mrf.mxu0
  %11324 = vmatprep.mubr.f32.mxu0 0.0
  %11325 = vmatmul.mubr.f32.gmra.mxu0 %v11052
  %v11326 = vpop.f32.mrf.mxu0
  %v11327 = vadd.f32 %v11020, %v11326
  %v11328 = vpop.f32.mrf.mxu0
  %11329 = vmatprep.mubr.f32.mxu0 0.0
  %11330 = vmatmul.mubr.f32.gmra.mxu0 %v11053
  %v11331 = vpop.f32.mrf.mxu0
  %v11332 = vadd.f32 %v11020, %v11331
  %v11333 = vpop.f32.mrf.mxu0
  %11334 = vmatprep.mubr.f32.mxu0 0.0
  %11335 = vmatmul.mubr.f32.gmra.mxu0 %v11054
  %v11336 = vpop.f32.mrf.mxu0
  %v11337 = vadd.f32 %v11020, %v11336
  %v11338 = vpop.f32.mrf.mxu0
  %11339 = vmatprep.mubr.f32.mxu0 0.0
  %11340 = vmatmul.mubr.f32.gmra.mxu0 %v11055
  %v11341 = vpop.f32.mrf.mxu0
  %v11342 = vadd.f32 %v11020, %v11341
  %v11343 = vpop.f32.mrf.mxu0
  %11344 = vmatprep.mubr.f32.mxu0 0.0
  %11345 = vmatmul.mubr.f32.gmra.mxu0 %v11056
  %v11346 = vpop.f32.mrf.mxu0
  %v11347 = vadd.f32 %v11020, %v11346
  %v11348 = vpop.f32.mrf.mxu0
  %11349 = vmatprep.mubr.f32.mxu0 0.0
  %11350 = vmatmul.mubr.f32.gmra.mxu0 %v11057
  %v11351 = vpop.f32.mrf.mxu0
  %v11352 = vadd.f32 %v11020, %v11351
  %v11353 = vpop.f32.mrf.mxu0
  %11354 = vmatprep.mubr.f32.mxu0 0.0
  %11355 = vmatmul.mubr.f32.gmra.mxu0 %v11058
  %v11356 = vpop.f32.mrf.mxu0
  %v11357 = vadd.f32 %v11020, %v11356
  %v11358 = vpop.f32.mrf.mxu0
  %11359 = vmatprep.mubr.f32.mxu0 0.0
  %11360 = vmatmul.mubr.f32.gmra.mxu0 %v11059
  %v11361 = vpop.f32.mrf.mxu0
  %v11362 = vadd.f32 %v11020, %v11361
  %v11363 = vpop.f32.mrf.mxu0
  %11364 = vmatprep.mubr.f32.mxu0 0.0
  %11365 = vmatmul.mubr.f32.gmra.mxu0 %v11060
  %v11366 = vpop.f32.mrf.mxu0
  %v11367 = vadd.f32 %v11020, %v11366
  %v11368 = vpop.f32.mrf.mxu0
  %11369 = vmatprep.mubr.f32.mxu0 0.0
  %11370 = vmatmul.mubr.f32.gmra.mxu0 %v11061
  %v11371 = vpop.f32.mrf.mxu0
  %v11372 = vadd.f32 %v11020, %v11371
  %v11373 = vpop.f32.mrf.mxu0
  %11374 = vmatprep.mubr.f32.mxu0 0.0
  %11375 = vmatmul.mubr.f32.gmra.mxu0 %v11062
  %v11376 = vpop.f32.mrf.mxu0
  %v11377 = vadd.f32 %v11020, %v11376
  %v11378 = vpop.f32.mrf.mxu0
  %11379 = vmatprep.mubr.f32.mxu0 0.0
  %11380 = vmatmul.mubr.f32.gmra.mxu0 %v11063
  %v11381 = vpop.f32.mrf.mxu0
  %v11382 = vadd.f32 %v11020, %v11381
  %v11383 = vpop.f32.mrf.mxu0
  %11384 = vmatprep.mubr.f32.mxu0 0.0
  %11385 = vmatmul.mubr.f32.gmra.mxu0 %v11064
  %v11386 = vpop.f32.mrf.mxu0
  %v11387 = vadd.f32 %v11020, %v11386
  %v11388 = vpop.f32.mrf.mxu0
  %11389 = vmatprep.mubr.f32.mxu0 0.0
  %11390 = vmatmul.mubr.f32.gmra.mxu0 %v11065
  %v11391 = vpop.f32.mrf.mxu0
  %v11392 = vadd.f32 %v11020, %v11391
  %v11393 = vpop.f32.mrf.mxu0
  %11394 = vdwg.mxu0
  %v11395 = vmax.f32 %v11177, 0.0
  %v11396 = vmax.f32 %v11182, 0.0
  %v11397 = vmax.f32 %v11187, 0.0
  %v11398 = vmax.f32 %v11192, 0.0
  %v11399 = vmax.f32 %v11197, 0.0
  %v11400 = vmax.f32 %v11202, 0.0
  %v11401 = vmax.f32 %v11207, 0.0
  %v11402 = vmax.f32 %v11212, 0.0
  %v11403 = vmax.f32 %v11217, 0.0
  %v11404 = vmax.f32 %v11222, 0.0
  %v11405 = vmax.f32 %v11227, 0.0
  %v11406 = vmax.f32 %v11232, 0.0
  %v11407 = vmax.f32 %v11237, 0.0
  %v11408 = vmax.f32 %v11242, 0.0
  %v11409 = vmax.f32 %v11247, 0.0
  %v11410 = vmax.f32 %v11252, 0.0
  %v11411 = vmax.f32 %v11257, 0.0
  %v11412 = vmax.f32 %v11262, 0.0
  %v11413 = vmax.f32 %v11267, 0.0
  %v11414 = vmax.f32 %v11272, 0.0
  %v11415 = vmax.f32 %v11277, 0.0
  %v11416 = vmax.f32 %v11282, 0.0
  %v11417 = vmax.f32 %v11287, 0.0
  %v11418 = vmax.f32 %v11292, 0.0
  %v11419 = vmax.f32 %v11297, 0.0
  %v11420 = vmax.f32 %v11302, 0.0
  %v11421 = vmax.f32 %v11307, 0.0
  %v11422 = vmax.f32 %v11312, 0.0
  %v11423 = vmax.f32 %v11317, 0.0
  %v11424 = vmax.f32 %v11322, 0.0
  %v11425 = vmax.f32 %v11327, 0.0
  %v11426 = vmax.f32 %v11332, 0.0
  %v11427 = vmax.f32 %v11337, 0.0
  %v11428 = vmax.f32 %v11342, 0.0
  %v11429 = vmax.f32 %v11347, 0.0
  %v11430 = vmax.f32 %v11352, 0.0
  %v11431 = vmax.f32 %v11357, 0.0
  %v11432 = vmax.f32 %v11362, 0.0
  %v11433 = vmax.f32 %v11367, 0.0
  %v11434 = vmax.f32 %v11372, 0.0
  %v11435 = vmax.f32 %v11377, 0.0
  %v11436 = vmax.f32 %v11382, 0.0
  %v11437 = vmax.f32 %v11387, 0.0
  %v11438 = vmax.f32 %v11392, 0.0
  %vm11439 = vcmask 130048
  %11440 = vst.msk [vmem:[#allocation2] sm:$0xff] %vm11439, %v11395
  %11441 = vst.msk [vmem:[#allocation2 + $0x8] sm:$0xff] %vm11439, %v11396
  %11442 = vst.msk [vmem:[#allocation2 + $0x10] sm:$0xff] %vm11439, %v11397
  %11443 = vst.msk [vmem:[#allocation2 + $0x18] sm:$0xff] %vm11439, %v11398
  %11444 = vst.msk [vmem:[#allocation2 + $0x20] sm:$0xff] %vm11439, %v11399
  %11445 = vst.msk [vmem:[#allocation2 + $0x28] sm:$0xff] %vm11439, %v11400
  %11446 = vst.msk [vmem:[#allocation2 + $0x30] sm:$0xff] %vm11439, %v11401
  %11447 = vst.msk [vmem:[#allocation2 + $0x38] sm:$0xff] %vm11439, %v11402
  %11448 = vst.msk [vmem:[#allocation2 + $0x40] sm:$0xff] %vm11439, %v11403
  %11449 = vst.msk [vmem:[#allocation2 + $0x48] sm:$0xff] %vm11439, %v11404
  %11450 = vst.msk [vmem:[#allocation2 + $0x50] sm:$0xff] %vm11439, %v11405
  %11451 = vst.msk [vmem:[#allocation2 + $0x58] sm:$0xff] %vm11439, %v11406
  %11452 = vst.msk [vmem:[#allocation2 + $0x60] sm:$0xff] %vm11439, %v11407
  %11453 = vst.msk [vmem:[#allocation2 + $0x68] sm:$0xff] %vm11439, %v11408
  %11454 = vst.msk [vmem:[#allocation2 + $0x70] sm:$0xff] %vm11439, %v11409
  %11455 = vst.msk [vmem:[#allocation2 + $0x78] sm:$0xff] %vm11439, %v11410
  %11456 = vst.msk [vmem:[#allocation2 + $0x80] sm:$0xff] %vm11439, %v11411
  %11457 = vst.msk [vmem:[#allocation2 + $0x88] sm:$0xff] %vm11439, %v11412
  %11458 = vst.msk [vmem:[#allocation2 + $0x90] sm:$0xff] %vm11439, %v11413
  %11459 = vst.msk [vmem:[#allocation2 + $0x98] sm:$0xff] %vm11439, %v11414
  %11460 = vst.msk [vmem:[#allocation2 + $0xa0] sm:$0xff] %vm11439, %v11415
  %11461 = vst.msk [vmem:[#allocation2 + $0xa8] sm:$0xff] %vm11439, %v11416
  %11462 = vst.msk [vmem:[#allocation2 + $0xb0] sm:$0xff] %vm11439, %v11417
  %11463 = vst.msk [vmem:[#allocation2 + $0xb8] sm:$0xff] %vm11439, %v11418
  %11464 = vst.msk [vmem:[#allocation2 + $0xc0] sm:$0xff] %vm11439, %v11419
  %11465 = vst.msk [vmem:[#allocation2 + $0xc8] sm:$0xff] %vm11439, %v11420
  %11466 = vst.msk [vmem:[#allocation2 + $0xd0] sm:$0xff] %vm11439, %v11421
  %11467 = vst.msk [vmem:[#allocation2 + $0xd8] sm:$0xff] %vm11439, %v11422
  %11468 = vst.msk [vmem:[#allocation2 + $0xe0] sm:$0xff] %vm11439, %v11423
  %11469 = vst.msk [vmem:[#allocation2 + $0xe8] sm:$0xff] %vm11439, %v11424
  %11470 = vst.msk [vmem:[#allocation2 + $0xf0] sm:$0xff] %vm11439, %v11425
  %11471 = vst.msk [vmem:[#allocation2 + $0xf8] sm:$0xff] %vm11439, %v11426
  %11472 = vst.msk [vmem:[#allocation2 + $0x100] sm:$0xff] %vm11439, %v11427
  %11473 = vst.msk [vmem:[#allocation2 + $0x108] sm:$0xff] %vm11439, %v11428
  %11474 = vst.msk [vmem:[#allocation2 + $0x110] sm:$0xff] %vm11439, %v11429
  %11475 = vst.msk [vmem:[#allocation2 + $0x118] sm:$0xff] %vm11439, %v11430
  %11476 = vst.msk [vmem:[#allocation2 + $0x120] sm:$0xff] %vm11439, %v11431
  %11477 = vst.msk [vmem:[#allocation2 + $0x128] sm:$0xff] %vm11439, %v11432
  %11478 = vst.msk [vmem:[#allocation2 + $0x130] sm:$0xff] %vm11439, %v11433
  %11479 = vst.msk [vmem:[#allocation2 + $0x138] sm:$0xff] %vm11439, %v11434
  %11480 = vst.msk [vmem:[#allocation2 + $0x140] sm:$0xff] %vm11439, %v11435
  %11481 = vst.msk [vmem:[#allocation2 + $0x148] sm:$0xff] %vm11439, %v11436
  %11482 = vst.msk [vmem:[#allocation2 + $0x150] sm:$0xff] %vm11439, %v11437
  %11483 = vst.msk [vmem:[#allocation2 + $0x158] sm:$0xff] %vm11439, %v11438
  %v11484 = vld [vmem:[#allocation2] ss:$2 sm:$0xff]
  %s11485 = scalar_lea.vmem [#allocation2], 16
  %v11486 = vld [vmem:[%s11485] ss:$2 sm:$0xff]
  %s11487 = scalar_lea.vmem [#allocation2], 32
  %v11488 = vld [vmem:[%s11487] ss:$2 sm:$0xff]
  %s11489 = scalar_lea.vmem [#allocation2], 48
  %v11490 = vld [vmem:[%s11489] ss:$2 sm:$0xff]
  %s11491 = scalar_lea.vmem [#allocation2], 64
  %v11492 = vld [vmem:[%s11491] ss:$2 sm:$0xff]
  %s11493 = scalar_lea.vmem [#allocation2], 80
  %v11494 = vld [vmem:[%s11493] ss:$2 sm:$0xff]
  %s11495 = scalar_lea.vmem [#allocation2], 96
  %v11496 = vld [vmem:[%s11495] ss:$2 sm:$0xff]
  %s11497 = scalar_lea.vmem [#allocation2], 112
  %v11498 = vld [vmem:[%s11497] ss:$2 sm:$0xff]
  %s11499 = scalar_lea.vmem [#allocation2], 128
  %v11500 = vld [vmem:[%s11499] ss:$2 sm:$0xff]
  %s11501 = scalar_lea.vmem [#allocation2], 144
  %v11502 = vld [vmem:[%s11501] ss:$2 sm:$0xff]
  %s11503 = scalar_lea.vmem [#allocation2], 160
  %v11504 = vld [vmem:[%s11503] ss:$2 sm:$0xff]
  %s11505 = scalar_lea.vmem [#allocation2], 176
  %v11506 = vld [vmem:[%s11505] ss:$2 sm:$0xff]
  %s11507 = scalar_lea.vmem [#allocation2], 192
  %v11508 = vld [vmem:[%s11507] ss:$2 sm:$0xff]
  %s11509 = scalar_lea.vmem [#allocation2], 208
  %v11510 = vld [vmem:[%s11509] ss:$2 sm:$0xff]
  %s11511 = scalar_lea.vmem [#allocation2], 224
  %v11512 = vld [vmem:[%s11511] ss:$2 sm:$0xff]
  %s11513 = scalar_lea.vmem [#allocation2], 240
  %v11514 = vld [vmem:[%s11513] ss:$2 sm:$0xff]
  %s11515 = scalar_lea.vmem [#allocation2], 256
  %v11516 = vld [vmem:[%s11515] ss:$2 sm:$0xff]
  %s11517 = scalar_lea.vmem [#allocation2], 272
  %v11518 = vld [vmem:[%s11517] ss:$2 sm:$0xff]
  %s11519 = scalar_lea.vmem [#allocation2], 288
  %v11520 = vld [vmem:[%s11519] ss:$2 sm:$0xff]
  %s11521 = scalar_lea.vmem [#allocation2], 304
  %v11522 = vld [vmem:[%s11521] ss:$2 sm:$0xff]
  %s11523 = scalar_lea.vmem [#allocation2], 320
  %v11524 = vld [vmem:[%s11523] ss:$2 sm:$0xff]
  %s11525 = scalar_lea.vmem [#allocation2], 336
  %v11526 = vld [vmem:[%s11525] ss:$2 sm:$0xff]
  %s11527 = scalar_lea.vmem [#allocation2], 1
  %v11528 = vld [vmem:[%s11527] ss:$2 sm:$0xff]
  %s11529 = scalar_lea.vmem [#allocation2], 17
  %v11530 = vld [vmem:[%s11529] ss:$2 sm:$0xff]
  %s11531 = scalar_lea.vmem [#allocation2], 33
  %v11532 = vld [vmem:[%s11531] ss:$2 sm:$0xff]
  %s11533 = scalar_lea.vmem [#allocation2], 49
  %v11534 = vld [vmem:[%s11533] ss:$2 sm:$0xff]
  %s11535 = scalar_lea.vmem [#allocation2], 65
  %v11536 = vld [vmem:[%s11535] ss:$2 sm:$0xff]
  %s11537 = scalar_lea.vmem [#allocation2], 81
  %v11538 = vld [vmem:[%s11537] ss:$2 sm:$0xff]
  %s11539 = scalar_lea.vmem [#allocation2], 97
  %v11540 = vld [vmem:[%s11539] ss:$2 sm:$0xff]
  %s11541 = scalar_lea.vmem [#allocation2], 113
  %v11542 = vld [vmem:[%s11541] ss:$2 sm:$0xff]
  %s11543 = scalar_lea.vmem [#allocation2], 129
  %v11544 = vld [vmem:[%s11543] ss:$2 sm:$0xff]
  %s11545 = scalar_lea.vmem [#allocation2], 145
  %v11546 = vld [vmem:[%s11545] ss:$2 sm:$0xff]
  %s11547 = scalar_lea.vmem [#allocation2], 161
  %v11548 = vld [vmem:[%s11547] ss:$2 sm:$0xff]
  %s11549 = scalar_lea.vmem [#allocation2], 177
  %v11550 = vld [vmem:[%s11549] ss:$2 sm:$0xff]
  %s11551 = scalar_lea.vmem [#allocation2], 193
  %v11552 = vld [vmem:[%s11551] ss:$2 sm:$0xff]
  %s11553 = scalar_lea.vmem [#allocation2], 209
  %v11554 = vld [vmem:[%s11553] ss:$2 sm:$0xff]
  %s11555 = scalar_lea.vmem [#allocation2], 225
  %v11556 = vld [vmem:[%s11555] ss:$2 sm:$0xff]
  %s11557 = scalar_lea.vmem [#allocation2], 241
  %v11558 = vld [vmem:[%s11557] ss:$2 sm:$0xff]
  %s11559 = scalar_lea.vmem [#allocation2], 257
  %v11560 = vld [vmem:[%s11559] ss:$2 sm:$0xff]
  %s11561 = scalar_lea.vmem [#allocation2], 273
  %v11562 = vld [vmem:[%s11561] ss:$2 sm:$0xff]
  %s11563 = scalar_lea.vmem [#allocation2], 289
  %v11564 = vld [vmem:[%s11563] ss:$2 sm:$0xff]
  %s11565 = scalar_lea.vmem [#allocation2], 305
  %v11566 = vld [vmem:[%s11565] ss:$2 sm:$0xff]
  %s11567 = scalar_lea.vmem [#allocation2], 321
  %v11568 = vld [vmem:[%s11567] ss:$2 sm:$0xff]
  %s11569 = scalar_lea.vmem [#allocation2], 337
  %v11570 = vld [vmem:[%s11569] ss:$2 sm:$0xff]
  %v11571 = vadd.f32 %v11484, %v11528
  %v11572 = vadd.f32 %v11486, %v11530
  %v11573 = vadd.f32 %v11488, %v11532
  %v11574 = vadd.f32 %v11490, %v11534
  %v11575 = vadd.f32 %v11492, %v11536
  %v11576 = vadd.f32 %v11494, %v11538
  %v11577 = vadd.f32 %v11496, %v11540
  %v11578 = vadd.f32 %v11498, %v11542
  %v11579 = vadd.f32 %v11500, %v11544
  %v11580 = vadd.f32 %v11502, %v11546
  %v11581 = vadd.f32 %v11504, %v11548
  %v11582 = vadd.f32 %v11506, %v11550
  %v11583 = vadd.f32 %v11508, %v11552
  %v11584 = vadd.f32 %v11510, %v11554
  %v11585 = vadd.f32 %v11512, %v11556
  %v11586 = vadd.f32 %v11514, %v11558
  %v11587 = vadd.f32 %v11516, %v11560
  %v11588 = vadd.f32 %v11518, %v11562
  %v11589 = vadd.f32 %v11520, %v11564
  %v11590 = vadd.f32 %v11522, %v11566
  %v11591 = vadd.f32 %v11524, %v11568
  %v11592 = vadd.f32 %v11526, %v11570
  %v11593 = vmul.f32 %v11571, 0.5
  %v11594 = vmul.f32 %v11572, 0.5
  %v11595 = vmul.f32 %v11573, 0.5
  %v11596 = vmul.f32 %v11574, 0.5
  %v11597 = vmul.f32 %v11575, 0.5
  %v11598 = vmul.f32 %v11576, 0.5
  %v11599 = vmul.f32 %v11577, 0.5
  %v11600 = vmul.f32 %v11578, 0.5
  %v11601 = vmul.f32 %v11579, 0.5
  %v11602 = vmul.f32 %v11580, 0.5
  %v11603 = vmul.f32 %v11581, 0.5
  %v11604 = vmul.f32 %v11582, 0.5
  %v11605 = vmul.f32 %v11583, 0.5
  %v11606 = vmul.f32 %v11584, 0.5
  %v11607 = vmul.f32 %v11585, 0.5
  %v11608 = vmul.f32 %v11586, 0.5
  %v11609 = vmul.f32 %v11587, 0.5
  %v11610 = vmul.f32 %v11588, 0.5
  %v11611 = vmul.f32 %v11589, 0.5
  %v11612 = vmul.f32 %v11590, 0.5
  %v11613 = vmul.f32 %v11591, 0.5
  %v11614 = vmul.f32 %v11592, 0.5
  %v11637 = vcombine.high %v11593, %v11593
  %v11639 = vunpack.c.l.s4 1983009808
  %v11640 = vunpack.c.0.s8 %v11639
  %v11641 = vlaneseq
  %v11642 = vshrl.u32 %v11641, 7
  %v11643 = vsub.s32 %v11640, %v11642
  %v11644 = vrot.slane %v11593, %v11643
  %v11646 = vunpack.c.l.s4 1983009808
  %v11647 = vunpack.c.0.s8 %v11646
  %v11648 = vlaneseq
  %v11649 = vshrl.u32 %v11648, 7
  %v11650 = vsub.s32 %v11647, %v11649
  %v11651 = vrot.slane %v11637, %v11650
  %v11652 = vcombine.high %v11644, %v11644
  %v11653 = vcombine.high %v11651, %v11651
  %v11654 = vcombine.high %v11594, %v11594
  %v11656 = vunpack.c.l.s4 1983009808
  %v11657 = vunpack.c.0.s8 %v11656
  %v11658 = vlaneseq
  %v11659 = vshrl.u32 %v11658, 7
  %v11660 = vsub.s32 %v11657, %v11659
  %v11661 = vrot.slane %v11594, %v11660
  %v11663 = vunpack.c.l.s4 1983009808
  %v11664 = vunpack.c.0.s8 %v11663
  %v11665 = vlaneseq
  %v11666 = vshrl.u32 %v11665, 7
  %v11667 = vsub.s32 %v11664, %v11666
  %v11668 = vrot.slane %v11654, %v11667
  %v11669 = vcombine.high %v11661, %v11661
  %v11670 = vcombine.high %v11668, %v11668
  %v11671 = vcombine.high %v11595, %v11595
  %v11673 = vunpack.c.l.s4 1983009808
  %v11674 = vunpack.c.0.s8 %v11673
  %v11675 = vlaneseq
  %v11676 = vshrl.u32 %v11675, 7
  %v11677 = vsub.s32 %v11674, %v11676
  %v11678 = vrot.slane %v11595, %v11677
  %v11680 = vunpack.c.l.s4 1983009808
  %v11681 = vunpack.c.0.s8 %v11680
  %v11682 = vlaneseq
  %v11683 = vshrl.u32 %v11682, 7
  %v11684 = vsub.s32 %v11681, %v11683
  %v11685 = vrot.slane %v11671, %v11684
  %v11686 = vcombine.high %v11678, %v11678
  %v11687 = vcombine.high %v11685, %v11685
  %v11688 = vcombine.high %v11596, %v11596
  %v11690 = vunpack.c.l.s4 1983009808
  %v11691 = vunpack.c.0.s8 %v11690
  %v11692 = vlaneseq
  %v11693 = vshrl.u32 %v11692, 7
  %v11694 = vsub.s32 %v11691, %v11693
  %v11695 = vrot.slane %v11596, %v11694
  %v11697 = vunpack.c.l.s4 1983009808
  %v11698 = vunpack.c.0.s8 %v11697
  %v11699 = vlaneseq
  %v11700 = vshrl.u32 %v11699, 7
  %v11701 = vsub.s32 %v11698, %v11700
  %v11702 = vrot.slane %v11688, %v11701
  %v11703 = vcombine.high %v11695, %v11695
  %v11704 = vcombine.high %v11702, %v11702
  %v11705 = vcombine.high %v11597, %v11597
  %v11707 = vunpack.c.l.s4 1983009808
  %v11708 = vunpack.c.0.s8 %v11707
  %v11709 = vlaneseq
  %v11710 = vshrl.u32 %v11709, 7
  %v11711 = vsub.s32 %v11708, %v11710
  %v11712 = vrot.slane %v11597, %v11711
  %v11714 = vunpack.c.l.s4 1983009808
  %v11715 = vunpack.c.0.s8 %v11714
  %v11716 = vlaneseq
  %v11717 = vshrl.u32 %v11716, 7
  %v11718 = vsub.s32 %v11715, %v11717
  %v11719 = vrot.slane %v11705, %v11718
  %v11720 = vcombine.high %v11712, %v11712
  %v11721 = vcombine.high %v11719, %v11719
  %v11722 = vcombine.high %v11598, %v11598
  %v11724 = vunpack.c.l.s4 1983009808
  %v11725 = vunpack.c.0.s8 %v11724
  %v11726 = vlaneseq
  %v11727 = vshrl.u32 %v11726, 7
  %v11728 = vsub.s32 %v11725, %v11727
  %v11729 = vrot.slane %v11598, %v11728
  %v11731 = vunpack.c.l.s4 1983009808
  %v11732 = vunpack.c.0.s8 %v11731
  %v11733 = vlaneseq
  %v11734 = vshrl.u32 %v11733, 7
  %v11735 = vsub.s32 %v11732, %v11734
  %v11736 = vrot.slane %v11722, %v11735
  %v11737 = vcombine.high %v11729, %v11729
  %v11738 = vcombine.high %v11736, %v11736
  %v11739 = vcombine.high %v11599, %v11599
  %v11741 = vunpack.c.l.s4 1983009808
  %v11742 = vunpack.c.0.s8 %v11741
  %v11743 = vlaneseq
  %v11744 = vshrl.u32 %v11743, 7
  %v11745 = vsub.s32 %v11742, %v11744
  %v11746 = vrot.slane %v11599, %v11745
  %v11748 = vunpack.c.l.s4 1983009808
  %v11749 = vunpack.c.0.s8 %v11748
  %v11750 = vlaneseq
  %v11751 = vshrl.u32 %v11750, 7
  %v11752 = vsub.s32 %v11749, %v11751
  %v11753 = vrot.slane %v11739, %v11752
  %v11754 = vcombine.high %v11746, %v11746
  %v11755 = vcombine.high %v11753, %v11753
  %v11756 = vcombine.high %v11600, %v11600
  %v11758 = vunpack.c.l.s4 1983009808
  %v11759 = vunpack.c.0.s8 %v11758
  %v11760 = vlaneseq
  %v11761 = vshrl.u32 %v11760, 7
  %v11762 = vsub.s32 %v11759, %v11761
  %v11763 = vrot.slane %v11600, %v11762
  %v11765 = vunpack.c.l.s4 1983009808
  %v11766 = vunpack.c.0.s8 %v11765
  %v11767 = vlaneseq
  %v11768 = vshrl.u32 %v11767, 7
  %v11769 = vsub.s32 %v11766, %v11768
  %v11770 = vrot.slane %v11756, %v11769
  %v11771 = vcombine.high %v11763, %v11763
  %v11772 = vcombine.high %v11770, %v11770
  %v11773 = vcombine.high %v11601, %v11601
  %v11775 = vunpack.c.l.s4 1983009808
  %v11776 = vunpack.c.0.s8 %v11775
  %v11777 = vlaneseq
  %v11778 = vshrl.u32 %v11777, 7
  %v11779 = vsub.s32 %v11776, %v11778
  %v11780 = vrot.slane %v11601, %v11779
  %v11782 = vunpack.c.l.s4 1983009808
  %v11783 = vunpack.c.0.s8 %v11782
  %v11784 = vlaneseq
  %v11785 = vshrl.u32 %v11784, 7
  %v11786 = vsub.s32 %v11783, %v11785
  %v11787 = vrot.slane %v11773, %v11786
  %v11788 = vcombine.high %v11780, %v11780
  %v11789 = vcombine.high %v11787, %v11787
  %v11790 = vcombine.high %v11602, %v11602
  %v11792 = vunpack.c.l.s4 1983009808
  %v11793 = vunpack.c.0.s8 %v11792
  %v11794 = vlaneseq
  %v11795 = vshrl.u32 %v11794, 7
  %v11796 = vsub.s32 %v11793, %v11795
  %v11797 = vrot.slane %v11602, %v11796
  %v11799 = vunpack.c.l.s4 1983009808
  %v11800 = vunpack.c.0.s8 %v11799
  %v11801 = vlaneseq
  %v11802 = vshrl.u32 %v11801, 7
  %v11803 = vsub.s32 %v11800, %v11802
  %v11804 = vrot.slane %v11790, %v11803
  %v11805 = vcombine.high %v11797, %v11797
  %v11806 = vcombine.high %v11804, %v11804
  %v11807 = vcombine.high %v11603, %v11603
  %v11809 = vunpack.c.l.s4 1983009808
  %v11810 = vunpack.c.0.s8 %v11809
  %v11811 = vlaneseq
  %v11812 = vshrl.u32 %v11811, 7
  %v11813 = vsub.s32 %v11810, %v11812
  %v11814 = vrot.slane %v11603, %v11813
  %v11816 = vunpack.c.l.s4 1983009808
  %v11817 = vunpack.c.0.s8 %v11816
  %v11818 = vlaneseq
  %v11819 = vshrl.u32 %v11818, 7
  %v11820 = vsub.s32 %v11817, %v11819
  %v11821 = vrot.slane %v11807, %v11820
  %v11822 = vcombine.high %v11814, %v11814
  %v11823 = vcombine.high %v11821, %v11821
  %v11824 = vcombine.high %v11604, %v11604
  %v11826 = vunpack.c.l.s4 1983009808
  %v11827 = vunpack.c.0.s8 %v11826
  %v11828 = vlaneseq
  %v11829 = vshrl.u32 %v11828, 7
  %v11830 = vsub.s32 %v11827, %v11829
  %v11831 = vrot.slane %v11604, %v11830
  %v11833 = vunpack.c.l.s4 1983009808
  %v11834 = vunpack.c.0.s8 %v11833
  %v11835 = vlaneseq
  %v11836 = vshrl.u32 %v11835, 7
  %v11837 = vsub.s32 %v11834, %v11836
  %v11838 = vrot.slane %v11824, %v11837
  %v11839 = vcombine.high %v11831, %v11831
  %v11840 = vcombine.high %v11838, %v11838
  %v11841 = vcombine.high %v11605, %v11605
  %v11843 = vunpack.c.l.s4 1983009808
  %v11844 = vunpack.c.0.s8 %v11843
  %v11845 = vlaneseq
  %v11846 = vshrl.u32 %v11845, 7
  %v11847 = vsub.s32 %v11844, %v11846
  %v11848 = vrot.slane %v11605, %v11847
  %v11850 = vunpack.c.l.s4 1983009808
  %v11851 = vunpack.c.0.s8 %v11850
  %v11852 = vlaneseq
  %v11853 = vshrl.u32 %v11852, 7
  %v11854 = vsub.s32 %v11851, %v11853
  %v11855 = vrot.slane %v11841, %v11854
  %v11856 = vcombine.high %v11848, %v11848
  %v11857 = vcombine.high %v11855, %v11855
  %v11858 = vcombine.high %v11606, %v11606
  %v11860 = vunpack.c.l.s4 1983009808
  %v11861 = vunpack.c.0.s8 %v11860
  %v11862 = vlaneseq
  %v11863 = vshrl.u32 %v11862, 7
  %v11864 = vsub.s32 %v11861, %v11863
  %v11865 = vrot.slane %v11606, %v11864
  %v11867 = vunpack.c.l.s4 1983009808
  %v11868 = vunpack.c.0.s8 %v11867
  %v11869 = vlaneseq
  %v11870 = vshrl.u32 %v11869, 7
  %v11871 = vsub.s32 %v11868, %v11870
  %v11872 = vrot.slane %v11858, %v11871
  %v11873 = vcombine.high %v11865, %v11865
  %v11874 = vcombine.high %v11872, %v11872
  %v11875 = vcombine.high %v11607, %v11607
  %v11877 = vunpack.c.l.s4 1983009808
  %v11878 = vunpack.c.0.s8 %v11877
  %v11879 = vlaneseq
  %v11880 = vshrl.u32 %v11879, 7
  %v11881 = vsub.s32 %v11878, %v11880
  %v11882 = vrot.slane %v11607, %v11881
  %v11884 = vunpack.c.l.s4 1983009808
  %v11885 = vunpack.c.0.s8 %v11884
  %v11886 = vlaneseq
  %v11887 = vshrl.u32 %v11886, 7
  %v11888 = vsub.s32 %v11885, %v11887
  %v11889 = vrot.slane %v11875, %v11888
  %v11890 = vcombine.high %v11882, %v11882
  %v11891 = vcombine.high %v11889, %v11889
  %v11892 = vcombine.high %v11608, %v11608
  %v11894 = vunpack.c.l.s4 1983009808
  %v11895 = vunpack.c.0.s8 %v11894
  %v11896 = vlaneseq
  %v11897 = vshrl.u32 %v11896, 7
  %v11898 = vsub.s32 %v11895, %v11897
  %v11899 = vrot.slane %v11608, %v11898
  %v11901 = vunpack.c.l.s4 1983009808
  %v11902 = vunpack.c.0.s8 %v11901
  %v11903 = vlaneseq
  %v11904 = vshrl.u32 %v11903, 7
  %v11905 = vsub.s32 %v11902, %v11904
  %v11906 = vrot.slane %v11892, %v11905
  %v11907 = vcombine.high %v11899, %v11899
  %v11908 = vcombine.high %v11906, %v11906
  %v11909 = vcombine.high %v11609, %v11609
  %v11911 = vunpack.c.l.s4 1983009808
  %v11912 = vunpack.c.0.s8 %v11911
  %v11913 = vlaneseq
  %v11914 = vshrl.u32 %v11913, 7
  %v11915 = vsub.s32 %v11912, %v11914
  %v11916 = vrot.slane %v11609, %v11915
  %v11918 = vunpack.c.l.s4 1983009808
  %v11919 = vunpack.c.0.s8 %v11918
  %v11920 = vlaneseq
  %v11921 = vshrl.u32 %v11920, 7
  %v11922 = vsub.s32 %v11919, %v11921
  %v11923 = vrot.slane %v11909, %v11922
  %v11924 = vcombine.high %v11916, %v11916
  %v11925 = vcombine.high %v11923, %v11923
  %v11926 = vcombine.high %v11610, %v11610
  %v11928 = vunpack.c.l.s4 1983009808
  %v11929 = vunpack.c.0.s8 %v11928
  %v11930 = vlaneseq
  %v11931 = vshrl.u32 %v11930, 7
  %v11932 = vsub.s32 %v11929, %v11931
  %v11933 = vrot.slane %v11610, %v11932
  %v11935 = vunpack.c.l.s4 1983009808
  %v11936 = vunpack.c.0.s8 %v11935
  %v11937 = vlaneseq
  %v11938 = vshrl.u32 %v11937, 7
  %v11939 = vsub.s32 %v11936, %v11938
  %v11940 = vrot.slane %v11926, %v11939
  %v11941 = vcombine.high %v11933, %v11933
  %v11942 = vcombine.high %v11940, %v11940
  %v11943 = vcombine.high %v11611, %v11611
  %v11945 = vunpack.c.l.s4 1983009808
  %v11946 = vunpack.c.0.s8 %v11945
  %v11947 = vlaneseq
  %v11948 = vshrl.u32 %v11947, 7
  %v11949 = vsub.s32 %v11946, %v11948
  %v11950 = vrot.slane %v11611, %v11949
  %v11952 = vunpack.c.l.s4 1983009808
  %v11953 = vunpack.c.0.s8 %v11952
  %v11954 = vlaneseq
  %v11955 = vshrl.u32 %v11954, 7
  %v11956 = vsub.s32 %v11953, %v11955
  %v11957 = vrot.slane %v11943, %v11956
  %v11958 = vcombine.high %v11950, %v11950
  %v11959 = vcombine.high %v11957, %v11957
  %v11960 = vcombine.high %v11612, %v11612
  %v11962 = vunpack.c.l.s4 1983009808
  %v11963 = vunpack.c.0.s8 %v11962
  %v11964 = vlaneseq
  %v11965 = vshrl.u32 %v11964, 7
  %v11966 = vsub.s32 %v11963, %v11965
  %v11967 = vrot.slane %v11612, %v11966
  %v11969 = vunpack.c.l.s4 1983009808
  %v11970 = vunpack.c.0.s8 %v11969
  %v11971 = vlaneseq
  %v11972 = vshrl.u32 %v11971, 7
  %v11973 = vsub.s32 %v11970, %v11972
  %v11974 = vrot.slane %v11960, %v11973
  %v11975 = vcombine.high %v11967, %v11967
  %v11976 = vcombine.high %v11974, %v11974
  %v11977 = vcombine.high %v11613, %v11613
  %v11979 = vunpack.c.l.s4 1983009808
  %v11980 = vunpack.c.0.s8 %v11979
  %v11981 = vlaneseq
  %v11982 = vshrl.u32 %v11981, 7
  %v11983 = vsub.s32 %v11980, %v11982
  %v11984 = vrot.slane %v11613, %v11983
  %v11986 = vunpack.c.l.s4 1983009808
  %v11987 = vunpack.c.0.s8 %v11986
  %v11988 = vlaneseq
  %v11989 = vshrl.u32 %v11988, 7
  %v11990 = vsub.s32 %v11987, %v11989
  %v11991 = vrot.slane %v11977, %v11990
  %v11992 = vcombine.high %v11984, %v11984
  %v11993 = vcombine.high %v11991, %v11991
  %v11994 = vcombine.high %v11614, %v11614
  %v11996 = vunpack.c.l.s4 1983009808
  %v11997 = vunpack.c.0.s8 %v11996
  %v11998 = vlaneseq
  %v11999 = vshrl.u32 %v11998, 7
  %v12000 = vsub.s32 %v11997, %v11999
  %v12001 = vrot.slane %v11614, %v12000
  %v12003 = vunpack.c.l.s4 1983009808
  %v12004 = vunpack.c.0.s8 %v12003
  %v12005 = vlaneseq
  %v12006 = vshrl.u32 %v12005, 7
  %v12007 = vsub.s32 %v12004, %v12006
  %v12008 = vrot.slane %v11994, %v12007
  %v12009 = vcombine.high %v12001, %v12001
  %v12010 = vcombine.high %v12008, %v12008
  %v12011 = vcombine.low %v11644, %v11652
  %v12012 = vcombine.low %v11651, %v11653
  %v12014 = vunpack.c.l.s4 1983009808
  %v12015 = vunpack.c.0.s8 %v12014
  %v12016 = vlaneseq
  %v12017 = vshrl.u32 %v12016, 7
  %v12018 = vsub.s32 %v12015, %v12017
  %v12019 = vrot.slane %v12011, %v12018
  %v12021 = vunpack.c.l.s4 1983009808
  %v12022 = vunpack.c.0.s8 %v12021
  %v12023 = vlaneseq
  %v12024 = vshrl.u32 %v12023, 7
  %v12025 = vsub.s32 %v12022, %v12024
  %v12026 = vrot.slane %v12012, %v12025
  %v12027 = vcombine.low %v12019, %v12026
  %v12028 = vcombine.low %v11661, %v11669
  %v12029 = vcombine.low %v11668, %v11670
  %v12031 = vunpack.c.l.s4 1983009808
  %v12032 = vunpack.c.0.s8 %v12031
  %v12033 = vlaneseq
  %v12034 = vshrl.u32 %v12033, 7
  %v12035 = vsub.s32 %v12032, %v12034
  %v12036 = vrot.slane %v12028, %v12035
  %v12038 = vunpack.c.l.s4 1983009808
  %v12039 = vunpack.c.0.s8 %v12038
  %v12040 = vlaneseq
  %v12041 = vshrl.u32 %v12040, 7
  %v12042 = vsub.s32 %v12039, %v12041
  %v12043 = vrot.slane %v12029, %v12042
  %v12044 = vcombine.low %v12036, %v12043
  %v12045 = vcombine.low %v11678, %v11686
  %v12047 = vunpack.c.l.s4 1983009808
  %v12048 = vunpack.c.0.s8 %v12047
  %v12049 = vlaneseq
  %v12050 = vshrl.u32 %v12049, 7
  %v12051 = vsub.s32 %v12048, %v12050
  %v12052 = vrot.slane %v12045, %v12051
  %v12053 = vcombine.low %v11687, %v11695
  %v12054 = vcombine.low %v11703, %v11702
  %v12056 = vunpack.c.l.s4 1983009808
  %v12057 = vunpack.c.0.s8 %v12056
  %v12058 = vlaneseq
  %v12059 = vshrl.u32 %v12058, 7
  %v12060 = vsub.s32 %v12057, %v12059
  %v12061 = vrot.slane %v12053, %v12060
  %v12063 = vunpack.c.l.s4 1983009808
  %v12064 = vunpack.c.0.s8 %v12063
  %v12065 = vlaneseq
  %v12066 = vshrl.u32 %v12065, 7
  %v12067 = vsub.s32 %v12064, %v12066
  %v12068 = vrot.slane %v12054, %v12067
  %v12069 = vcombine.low %v12061, %v12068
  %v12070 = vcombine.low %v11704, %v11712
  %v12071 = vcombine.low %v11720, %v11719
  %v12073 = vunpack.c.l.s4 1983009808
  %v12074 = vunpack.c.0.s8 %v12073
  %v12075 = vlaneseq
  %v12076 = vshrl.u32 %v12075, 7
  %v12077 = vsub.s32 %v12074, %v12076
  %v12078 = vrot.slane %v12070, %v12077
  %v12080 = vunpack.c.l.s4 1983009808
  %v12081 = vunpack.c.0.s8 %v12080
  %v12082 = vlaneseq
  %v12083 = vshrl.u32 %v12082, 7
  %v12084 = vsub.s32 %v12081, %v12083
  %v12085 = vrot.slane %v12071, %v12084
  %v12086 = vcombine.low %v12078, %v12085
  %v12087 = vcombine.low %v11721, %v11729
  %v12089 = vunpack.c.l.s4 1983009808
  %v12090 = vunpack.c.0.s8 %v12089
  %v12091 = vlaneseq
  %v12092 = vshrl.u32 %v12091, 7
  %v12093 = vsub.s32 %v12090, %v12092
  %v12094 = vrot.slane %v12087, %v12093
  %v12095 = vcombine.low %v11736, %v11738
  %v12096 = vcombine.low %v11746, %v11754
  %v12098 = vunpack.c.l.s4 1983009808
  %v12099 = vunpack.c.0.s8 %v12098
  %v12100 = vlaneseq
  %v12101 = vshrl.u32 %v12100, 7
  %v12102 = vsub.s32 %v12099, %v12101
  %v12103 = vrot.slane %v12095, %v12102
  %v12105 = vunpack.c.l.s4 1983009808
  %v12106 = vunpack.c.0.s8 %v12105
  %v12107 = vlaneseq
  %v12108 = vshrl.u32 %v12107, 7
  %v12109 = vsub.s32 %v12106, %v12108
  %v12110 = vrot.slane %v12096, %v12109
  %v12111 = vcombine.low %v12103, %v12110
  %v12112 = vcombine.low %v11753, %v11755
  %v12113 = vcombine.low %v11763, %v11771
  %v12115 = vunpack.c.l.s4 1983009808
  %v12116 = vunpack.c.0.s8 %v12115
  %v12117 = vlaneseq
  %v12118 = vshrl.u32 %v12117, 7
  %v12119 = vsub.s32 %v12116, %v12118
  %v12120 = vrot.slane %v12112, %v12119
  %v12122 = vunpack.c.l.s4 1983009808
  %v12123 = vunpack.c.0.s8 %v12122
  %v12124 = vlaneseq
  %v12125 = vshrl.u32 %v12124, 7
  %v12126 = vsub.s32 %v12123, %v12125
  %v12127 = vrot.slane %v12113, %v12126
  %v12128 = vcombine.low %v12120, %v12127
  %v12129 = vcombine.low %v11770, %v11772
  %v12131 = vunpack.c.l.s4 1983009808
  %v12132 = vunpack.c.0.s8 %v12131
  %v12133 = vlaneseq
  %v12134 = vshrl.u32 %v12133, 7
  %v12135 = vsub.s32 %v12132, %v12134
  %v12136 = vrot.slane %v12129, %v12135
  %v12137 = vcombine.low %v11788, %v11787
  %v12138 = vcombine.low %v11789, %v11797
  %v12140 = vunpack.c.l.s4 1983009808
  %v12141 = vunpack.c.0.s8 %v12140
  %v12142 = vlaneseq
  %v12143 = vshrl.u32 %v12142, 7
  %v12144 = vsub.s32 %v12141, %v12143
  %v12145 = vrot.slane %v12137, %v12144
  %v12147 = vunpack.c.l.s4 1983009808
  %v12148 = vunpack.c.0.s8 %v12147
  %v12149 = vlaneseq
  %v12150 = vshrl.u32 %v12149, 7
  %v12151 = vsub.s32 %v12148, %v12150
  %v12152 = vrot.slane %v12138, %v12151
  %v12153 = vcombine.low %v12145, %v12152
  %v12154 = vcombine.low %v11805, %v11804
  %v12155 = vcombine.low %v11806, %v11814
  %v12157 = vunpack.c.l.s4 1983009808
  %v12158 = vunpack.c.0.s8 %v12157
  %v12159 = vlaneseq
  %v12160 = vshrl.u32 %v12159, 7
  %v12161 = vsub.s32 %v12158, %v12160
  %v12162 = vrot.slane %v12154, %v12161
  %v12164 = vunpack.c.l.s4 1983009808
  %v12165 = vunpack.c.0.s8 %v12164
  %v12166 = vlaneseq
  %v12167 = vshrl.u32 %v12166, 7
  %v12168 = vsub.s32 %v12165, %v12167
  %v12169 = vrot.slane %v12155, %v12168
  %v12170 = vcombine.low %v12162, %v12169
  %v12171 = vcombine.low %v11822, %v11821
  %v12173 = vunpack.c.l.s4 1983009808
  %v12174 = vunpack.c.0.s8 %v12173
  %v12175 = vlaneseq
  %v12176 = vshrl.u32 %v12175, 7
  %v12177 = vsub.s32 %v12174, %v12176
  %v12178 = vrot.slane %v12171, %v12177
  %v12179 = vcombine.low %v11831, %v11839
  %v12180 = vcombine.low %v11838, %v11840
  %v12182 = vunpack.c.l.s4 1983009808
  %v12183 = vunpack.c.0.s8 %v12182
  %v12184 = vlaneseq
  %v12185 = vshrl.u32 %v12184, 7
  %v12186 = vsub.s32 %v12183, %v12185
  %v12187 = vrot.slane %v12179, %v12186
  %v12189 = vunpack.c.l.s4 1983009808
  %v12190 = vunpack.c.0.s8 %v12189
  %v12191 = vlaneseq
  %v12192 = vshrl.u32 %v12191, 7
  %v12193 = vsub.s32 %v12190, %v12192
  %v12194 = vrot.slane %v12180, %v12193
  %v12195 = vcombine.low %v12187, %v12194
  %v12196 = vcombine.low %v11848, %v11856
  %v12197 = vcombine.low %v11855, %v11857
  %v12199 = vunpack.c.l.s4 1983009808
  %v12200 = vunpack.c.0.s8 %v12199
  %v12201 = vlaneseq
  %v12202 = vshrl.u32 %v12201, 7
  %v12203 = vsub.s32 %v12200, %v12202
  %v12204 = vrot.slane %v12196, %v12203
  %v12206 = vunpack.c.l.s4 1983009808
  %v12207 = vunpack.c.0.s8 %v12206
  %v12208 = vlaneseq
  %v12209 = vshrl.u32 %v12208, 7
  %v12210 = vsub.s32 %v12207, %v12209
  %v12211 = vrot.slane %v12197, %v12210
  %v12212 = vcombine.low %v12204, %v12211
  %v12213 = vcombine.low %v11865, %v11873
  %v12215 = vunpack.c.l.s4 1983009808
  %v12216 = vunpack.c.0.s8 %v12215
  %v12217 = vlaneseq
  %v12218 = vshrl.u32 %v12217, 7
  %v12219 = vsub.s32 %v12216, %v12218
  %v12220 = vrot.slane %v12213, %v12219
  %v12221 = vcombine.low %v11874, %v11882
  %v12222 = vcombine.low %v11890, %v11889
  %v12224 = vunpack.c.l.s4 1983009808
  %v12225 = vunpack.c.0.s8 %v12224
  %v12226 = vlaneseq
  %v12227 = vshrl.u32 %v12226, 7
  %v12228 = vsub.s32 %v12225, %v12227
  %v12229 = vrot.slane %v12221, %v12228
  %v12231 = vunpack.c.l.s4 1983009808
  %v12232 = vunpack.c.0.s8 %v12231
  %v12233 = vlaneseq
  %v12234 = vshrl.u32 %v12233, 7
  %v12235 = vsub.s32 %v12232, %v12234
  %v12236 = vrot.slane %v12222, %v12235
  %v12237 = vcombine.low %v12229, %v12236
  %v12238 = vcombine.low %v11891, %v11899
  %v12239 = vcombine.low %v11907, %v11906
  %v12241 = vunpack.c.l.s4 1983009808
  %v12242 = vunpack.c.0.s8 %v12241
  %v12243 = vlaneseq
  %v12244 = vshrl.u32 %v12243, 7
  %v12245 = vsub.s32 %v12242, %v12244
  %v12246 = vrot.slane %v12238, %v12245
  %v12248 = vunpack.c.l.s4 1983009808
  %v12249 = vunpack.c.0.s8 %v12248
  %v12250 = vlaneseq
  %v12251 = vshrl.u32 %v12250, 7
  %v12252 = vsub.s32 %v12249, %v12251
  %v12253 = vrot.slane %v12239, %v12252
  %v12254 = vcombine.low %v12246, %v12253
  %v12255 = vcombine.low %v11908, %v11916
  %v12257 = vunpack.c.l.s4 1983009808
  %v12258 = vunpack.c.0.s8 %v12257
  %v12259 = vlaneseq
  %v12260 = vshrl.u32 %v12259, 7
  %v12261 = vsub.s32 %v12258, %v12260
  %v12262 = vrot.slane %v12255, %v12261
  %v12263 = vcombine.low %v11923, %v11925
  %v12264 = vcombine.low %v11933, %v11941
  %v12266 = vunpack.c.l.s4 1983009808
  %v12267 = vunpack.c.0.s8 %v12266
  %v12268 = vlaneseq
  %v12269 = vshrl.u32 %v12268, 7
  %v12270 = vsub.s32 %v12267, %v12269
  %v12271 = vrot.slane %v12263, %v12270
  %v12273 = vunpack.c.l.s4 1983009808
  %v12274 = vunpack.c.0.s8 %v12273
  %v12275 = vlaneseq
  %v12276 = vshrl.u32 %v12275, 7
  %v12277 = vsub.s32 %v12274, %v12276
  %v12278 = vrot.slane %v12264, %v12277
  %v12279 = vcombine.low %v12271, %v12278
  %v12280 = vcombine.low %v11940, %v11942
  %v12281 = vcombine.low %v11950, %v11958
  %v12283 = vunpack.c.l.s4 1983009808
  %v12284 = vunpack.c.0.s8 %v12283
  %v12285 = vlaneseq
  %v12286 = vshrl.u32 %v12285, 7
  %v12287 = vsub.s32 %v12284, %v12286
  %v12288 = vrot.slane %v12280, %v12287
  %v12290 = vunpack.c.l.s4 1983009808
  %v12291 = vunpack.c.0.s8 %v12290
  %v12292 = vlaneseq
  %v12293 = vshrl.u32 %v12292, 7
  %v12294 = vsub.s32 %v12291, %v12293
  %v12295 = vrot.slane %v12281, %v12294
  %v12296 = vcombine.low %v12288, %v12295
  %v12297 = vcombine.low %v11957, %v11959
  %v12299 = vunpack.c.l.s4 1983009808
  %v12300 = vunpack.c.0.s8 %v12299
  %v12301 = vlaneseq
  %v12302 = vshrl.u32 %v12301, 7
  %v12303 = vsub.s32 %v12300, %v12302
  %v12304 = vrot.slane %v12297, %v12303
  %v12305 = vcombine.low %v11975, %v11974
  %v12306 = vcombine.low %v11976, %v11984
  %v12308 = vunpack.c.l.s4 1983009808
  %v12309 = vunpack.c.0.s8 %v12308
  %v12310 = vlaneseq
  %v12311 = vshrl.u32 %v12310, 7
  %v12312 = vsub.s32 %v12309, %v12311
  %v12313 = vrot.slane %v12305, %v12312
  %v12315 = vunpack.c.l.s4 1983009808
  %v12316 = vunpack.c.0.s8 %v12315
  %v12317 = vlaneseq
  %v12318 = vshrl.u32 %v12317, 7
  %v12319 = vsub.s32 %v12316, %v12318
  %v12320 = vrot.slane %v12306, %v12319
  %v12321 = vcombine.low %v12313, %v12320
  %v12322 = vcombine.low %v11992, %v11991
  %v12323 = vcombine.low %v11993, %v12001
  %v12325 = vunpack.c.l.s4 1983009808
  %v12326 = vunpack.c.0.s8 %v12325
  %v12327 = vlaneseq
  %v12328 = vshrl.u32 %v12327, 7
  %v12329 = vsub.s32 %v12326, %v12328
  %v12330 = vrot.slane %v12322, %v12329
  %v12332 = vunpack.c.l.s4 1983009808
  %v12333 = vunpack.c.0.s8 %v12332
  %v12334 = vlaneseq
  %v12335 = vshrl.u32 %v12334, 7
  %v12336 = vsub.s32 %v12333, %v12335
  %v12337 = vrot.slane %v12323, %v12336
  %v12338 = vcombine.low %v12330, %v12337
  %v12339 = vcombine.low %v12009, %v12008
  %v12341 = vunpack.c.l.s4 1983009808
  %v12342 = vunpack.c.0.s8 %v12341
  %v12343 = vlaneseq
  %v12344 = vshrl.u32 %v12343, 7
  %v12345 = vsub.s32 %v12342, %v12344
  %v12346 = vrot.slane %v12339, %v12345
  %v12372 = vunpack.c.l.s4 1983009808
  %v12373 = vunpack.c.0.s8 %v12372
  %v12374 = vlaneseq
  %v12375 = vshrl.u32 %v12374, 7
  %v12376 = vsub.s32 %v12373, %v12375
  %v12377 = vrot.slane %v11685, %v12376
  %v12378 = vcombine.low %v12052, %v12377
  %v12380 = vunpack.c.l.s4 1983009808
  %v12381 = vunpack.c.0.s8 %v12380
  %v12382 = vlaneseq
  %v12383 = vshrl.u32 %v12382, 7
  %v12384 = vsub.s32 %v12381, %v12383
  %v12385 = vrot.slane %v11737, %v12384
  %v12386 = vcombine.low %v12094, %v12385
  %v12388 = vunpack.c.l.s4 1983009808
  %v12389 = vunpack.c.0.s8 %v12388
  %v12390 = vlaneseq
  %v12391 = vshrl.u32 %v12390, 7
  %v12392 = vsub.s32 %v12389, %v12391
  %v12393 = vrot.slane %v11780, %v12392
  %v12394 = vcombine.low %v12136, %v12393
  %v12396 = vunpack.c.l.s4 1983009808
  %v12397 = vunpack.c.0.s8 %v12396
  %v12398 = vlaneseq
  %v12399 = vshrl.u32 %v12398, 7
  %v12400 = vsub.s32 %v12397, %v12399
  %v12401 = vrot.slane %v11823, %v12400
  %v12402 = vcombine.low %v12178, %v12401
  %v12404 = vunpack.c.l.s4 1983009808
  %v12405 = vunpack.c.0.s8 %v12404
  %v12406 = vlaneseq
  %v12407 = vshrl.u32 %v12406, 7
  %v12408 = vsub.s32 %v12405, %v12407
  %v12409 = vrot.slane %v11872, %v12408
  %v12410 = vcombine.low %v12220, %v12409
  %v12412 = vunpack.c.l.s4 1983009808
  %v12413 = vunpack.c.0.s8 %v12412
  %v12414 = vlaneseq
  %v12415 = vshrl.u32 %v12414, 7
  %v12416 = vsub.s32 %v12413, %v12415
  %v12417 = vrot.slane %v11924, %v12416
  %v12418 = vcombine.low %v12262, %v12417
  %v12420 = vunpack.c.l.s4 1983009808
  %v12421 = vunpack.c.0.s8 %v12420
  %v12422 = vlaneseq
  %v12423 = vshrl.u32 %v12422, 7
  %v12424 = vsub.s32 %v12421, %v12423
  %v12425 = vrot.slane %v11967, %v12424
  %v12426 = vcombine.low %v12304, %v12425
  %v12428 = vunpack.c.l.s4 1983009808
  %v12429 = vunpack.c.0.s8 %v12428
  %v12430 = vlaneseq
  %v12431 = vshrl.u32 %v12430, 7
  %v12432 = vsub.s32 %v12429, %v12431
  %v12433 = vrot.slane %v12010, %v12432
  %v12434 = vcombine.low %v12346, %v12433
  %vm12435 = vcmask 1046528
  %v12436 = vrot.slane %v12027, 1
  %v12437 = vrot.slane %v12044, 1
  %v12438 = vsel %vm12435, %v12436, %v12437
  %v12439 = vrot.slane %v12378, 1
  %v12440 = vsel %vm12435, %v12437, %v12439
  %v12441 = vrot.slane %v12069, 1
  %v12442 = vrot.slane %v12086, 1
  %v12443 = vsel %vm12435, %v12441, %v12442
  %v12444 = vrot.slane %v12386, 1
  %v12445 = vsel %vm12435, %v12442, %v12444
  %v12446 = vrot.slane %v12111, 1
  %v12447 = vrot.slane %v12128, 1
  %v12448 = vsel %vm12435, %v12446, %v12447
  %v12449 = vrot.slane %v12394, 1
  %v12450 = vsel %vm12435, %v12447, %v12449
  %v12451 = vrot.slane %v12153, 1
  %v12452 = vrot.slane %v12170, 1
  %v12453 = vsel %vm12435, %v12451, %v12452
  %v12454 = vrot.slane %v12402, 1
  %v12455 = vsel %vm12435, %v12452, %v12454
  %v12456 = vrot.slane %v12195, 1
  %v12457 = vrot.slane %v12212, 1
  %v12458 = vsel %vm12435, %v12456, %v12457
  %v12459 = vrot.slane %v12410, 1
  %v12460 = vsel %vm12435, %v12457, %v12459
  %v12461 = vrot.slane %v12237, 1
  %v12462 = vrot.slane %v12254, 1
  %v12463 = vsel %vm12435, %v12461, %v12462
  %v12464 = vrot.slane %v12418, 1
  %v12465 = vsel %vm12435, %v12462, %v12464
  %v12466 = vrot.slane %v12279, 1
  %v12467 = vrot.slane %v12296, 1
  %v12468 = vsel %vm12435, %v12466, %v12467
  %v12469 = vrot.slane %v12426, 1
  %v12470 = vsel %vm12435, %v12467, %v12469
  %v12471 = vrot.slane %v12321, 1
  %v12472 = vrot.slane %v12338, 1
  %v12473 = vsel %vm12435, %v12471, %v12472
  %v12474 = vrot.slane %v12434, 1
  %v12475 = vsel %vm12435, %v12472, %v12474
  %12476 = vrot.lane.b32.xlu0 %v12438, 16
  %v12477 = vpop.permute.xlu0 %12476
  %12478 = vrot.lane.b32.xlu0 %v12440, 16
  %v12479 = vpop.permute.xlu0 %12478
  %12480 = vrot.lane.b32.xlu0 %v12439, 16
  %v12481 = vpop.permute.xlu0 %12480
  %12482 = vrot.lane.b32.xlu0 %v12443, 16
  %v12483 = vpop.permute.xlu0 %12482
  %12484 = vrot.lane.b32.xlu0 %v12445, 16
  %v12485 = vpop.permute.xlu0 %12484
  %12486 = vrot.lane.b32.xlu0 %v12444, 16
  %v12487 = vpop.permute.xlu0 %12486
  %12488 = vrot.lane.b32.xlu0 %v12448, 16
  %v12489 = vpop.permute.xlu0 %12488
  %12490 = vrot.lane.b32.xlu0 %v12450, 16
  %v12491 = vpop.permute.xlu0 %12490
  %12492 = vrot.lane.b32.xlu0 %v12449, 16
  %v12493 = vpop.permute.xlu0 %12492
  %12494 = vrot.lane.b32.xlu0 %v12453, 16
  %v12495 = vpop.permute.xlu0 %12494
  %12496 = vrot.lane.b32.xlu0 %v12455, 16
  %v12497 = vpop.permute.xlu0 %12496
  %12498 = vrot.lane.b32.xlu0 %v12454, 16
  %v12499 = vpop.permute.xlu0 %12498
  %12500 = vrot.lane.b32.xlu0 %v12458, 16
  %v12501 = vpop.permute.xlu0 %12500
  %12502 = vrot.lane.b32.xlu0 %v12460, 16
  %v12503 = vpop.permute.xlu0 %12502
  %12504 = vrot.lane.b32.xlu0 %v12459, 16
  %v12505 = vpop.permute.xlu0 %12504
  %12506 = vrot.lane.b32.xlu0 %v12463, 16
  %v12507 = vpop.permute.xlu0 %12506
  %12508 = vrot.lane.b32.xlu0 %v12465, 16
  %v12509 = vpop.permute.xlu0 %12508
  %12510 = vrot.lane.b32.xlu0 %v12464, 16
  %v12511 = vpop.permute.xlu0 %12510
  %12512 = vrot.lane.b32.xlu0 %v12468, 16
  %v12513 = vpop.permute.xlu0 %12512
  %12514 = vrot.lane.b32.xlu0 %v12470, 16
  %v12515 = vpop.permute.xlu0 %12514
  %12516 = vrot.lane.b32.xlu0 %v12469, 16
  %v12517 = vpop.permute.xlu0 %12516
  %12518 = vrot.lane.b32.xlu0 %v12473, 16
  %v12519 = vpop.permute.xlu0 %12518
  %12520 = vrot.lane.b32.xlu0 %v12475, 16
  %v12521 = vpop.permute.xlu0 %12520
  %12522 = vrot.lane.b32.xlu0 %v12474, 16
  %v12523 = vpop.permute.xlu0 %12522
  %v12548 = vcombine.low %v11652, %v11651
  %v12549 = vcombine.low %v11653, %v11661
  %v12551 = vunpack.c.l.s4 1983009808
  %v12552 = vunpack.c.0.s8 %v12551
  %v12553 = vlaneseq
  %v12554 = vshrl.u32 %v12553, 7
  %v12555 = vsub.s32 %v12552, %v12554
  %v12556 = vrot.slane %v12548, %v12555
  %v12558 = vunpack.c.l.s4 1983009808
  %v12559 = vunpack.c.0.s8 %v12558
  %v12560 = vlaneseq
  %v12561 = vshrl.u32 %v12560, 7
  %v12562 = vsub.s32 %v12559, %v12561
  %v12563 = vrot.slane %v12549, %v12562
  %v12564 = vcombine.low %v12556, %v12563
  %v12565 = vcombine.low %v11669, %v11668
  %v12566 = vcombine.low %v11670, %v11678
  %v12568 = vunpack.c.l.s4 1983009808
  %v12569 = vunpack.c.0.s8 %v12568
  %v12570 = vlaneseq
  %v12571 = vshrl.u32 %v12570, 7
  %v12572 = vsub.s32 %v12569, %v12571
  %v12573 = vrot.slane %v12565, %v12572
  %v12575 = vunpack.c.l.s4 1983009808
  %v12576 = vunpack.c.0.s8 %v12575
  %v12577 = vlaneseq
  %v12578 = vshrl.u32 %v12577, 7
  %v12579 = vsub.s32 %v12576, %v12578
  %v12580 = vrot.slane %v12566, %v12579
  %v12581 = vcombine.low %v12573, %v12580
  %v12582 = vcombine.low %v11686, %v11685
  %v12584 = vunpack.c.l.s4 1983009808
  %v12585 = vunpack.c.0.s8 %v12584
  %v12586 = vlaneseq
  %v12587 = vshrl.u32 %v12586, 7
  %v12588 = vsub.s32 %v12585, %v12587
  %v12589 = vrot.slane %v12582, %v12588
  %v12590 = vcombine.low %v11695, %v11703
  %v12591 = vcombine.low %v11702, %v11704
  %v12593 = vunpack.c.l.s4 1983009808
  %v12594 = vunpack.c.0.s8 %v12593
  %v12595 = vlaneseq
  %v12596 = vshrl.u32 %v12595, 7
  %v12597 = vsub.s32 %v12594, %v12596
  %v12598 = vrot.slane %v12590, %v12597
  %v12600 = vunpack.c.l.s4 1983009808
  %v12601 = vunpack.c.0.s8 %v12600
  %v12602 = vlaneseq
  %v12603 = vshrl.u32 %v12602, 7
  %v12604 = vsub.s32 %v12601, %v12603
  %v12605 = vrot.slane %v12591, %v12604
  %v12606 = vcombine.low %v12598, %v12605
  %v12607 = vcombine.low %v11712, %v11720
  %v12608 = vcombine.low %v11719, %v11721
  %v12610 = vunpack.c.l.s4 1983009808
  %v12611 = vunpack.c.0.s8 %v12610
  %v12612 = vlaneseq
  %v12613 = vshrl.u32 %v12612, 7
  %v12614 = vsub.s32 %v12611, %v12613
  %v12615 = vrot.slane %v12607, %v12614
  %v12617 = vunpack.c.l.s4 1983009808
  %v12618 = vunpack.c.0.s8 %v12617
  %v12619 = vlaneseq
  %v12620 = vshrl.u32 %v12619, 7
  %v12621 = vsub.s32 %v12618, %v12620
  %v12622 = vrot.slane %v12608, %v12621
  %v12623 = vcombine.low %v12615, %v12622
  %v12624 = vcombine.low %v11729, %v11737
  %v12626 = vunpack.c.l.s4 1983009808
  %v12627 = vunpack.c.0.s8 %v12626
  %v12628 = vlaneseq
  %v12629 = vshrl.u32 %v12628, 7
  %v12630 = vsub.s32 %v12627, %v12629
  %v12631 = vrot.slane %v12624, %v12630
  %v12632 = vcombine.low %v11738, %v11746
  %v12633 = vcombine.low %v11754, %v11753
  %v12635 = vunpack.c.l.s4 1983009808
  %v12636 = vunpack.c.0.s8 %v12635
  %v12637 = vlaneseq
  %v12638 = vshrl.u32 %v12637, 7
  %v12639 = vsub.s32 %v12636, %v12638
  %v12640 = vrot.slane %v12632, %v12639
  %v12642 = vunpack.c.l.s4 1983009808
  %v12643 = vunpack.c.0.s8 %v12642
  %v12644 = vlaneseq
  %v12645 = vshrl.u32 %v12644, 7
  %v12646 = vsub.s32 %v12643, %v12645
  %v12647 = vrot.slane %v12633, %v12646
  %v12648 = vcombine.low %v12640, %v12647
  %v12649 = vcombine.low %v11755, %v11763
  %v12650 = vcombine.low %v11771, %v11770
  %v12652 = vunpack.c.l.s4 1983009808
  %v12653 = vunpack.c.0.s8 %v12652
  %v12654 = vlaneseq
  %v12655 = vshrl.u32 %v12654, 7
  %v12656 = vsub.s32 %v12653, %v12655
  %v12657 = vrot.slane %v12649, %v12656
  %v12659 = vunpack.c.l.s4 1983009808
  %v12660 = vunpack.c.0.s8 %v12659
  %v12661 = vlaneseq
  %v12662 = vshrl.u32 %v12661, 7
  %v12663 = vsub.s32 %v12660, %v12662
  %v12664 = vrot.slane %v12650, %v12663
  %v12665 = vcombine.low %v12657, %v12664
  %v12666 = vcombine.low %v11772, %v11780
  %v12668 = vunpack.c.l.s4 1983009808
  %v12669 = vunpack.c.0.s8 %v12668
  %v12670 = vlaneseq
  %v12671 = vshrl.u32 %v12670, 7
  %v12672 = vsub.s32 %v12669, %v12671
  %v12673 = vrot.slane %v12666, %v12672
  %v12674 = vcombine.low %v11787, %v11789
  %v12675 = vcombine.low %v11797, %v11805
  %v12677 = vunpack.c.l.s4 1983009808
  %v12678 = vunpack.c.0.s8 %v12677
  %v12679 = vlaneseq
  %v12680 = vshrl.u32 %v12679, 7
  %v12681 = vsub.s32 %v12678, %v12680
  %v12682 = vrot.slane %v12674, %v12681
  %v12684 = vunpack.c.l.s4 1983009808
  %v12685 = vunpack.c.0.s8 %v12684
  %v12686 = vlaneseq
  %v12687 = vshrl.u32 %v12686, 7
  %v12688 = vsub.s32 %v12685, %v12687
  %v12689 = vrot.slane %v12675, %v12688
  %v12690 = vcombine.low %v12682, %v12689
  %v12691 = vcombine.low %v11804, %v11806
  %v12692 = vcombine.low %v11814, %v11822
  %v12694 = vunpack.c.l.s4 1983009808
  %v12695 = vunpack.c.0.s8 %v12694
  %v12696 = vlaneseq
  %v12697 = vshrl.u32 %v12696, 7
  %v12698 = vsub.s32 %v12695, %v12697
  %v12699 = vrot.slane %v12691, %v12698
  %v12701 = vunpack.c.l.s4 1983009808
  %v12702 = vunpack.c.0.s8 %v12701
  %v12703 = vlaneseq
  %v12704 = vshrl.u32 %v12703, 7
  %v12705 = vsub.s32 %v12702, %v12704
  %v12706 = vrot.slane %v12692, %v12705
  %v12707 = vcombine.low %v12699, %v12706
  %v12708 = vcombine.low %v11821, %v11823
  %v12710 = vunpack.c.l.s4 1983009808
  %v12711 = vunpack.c.0.s8 %v12710
  %v12712 = vlaneseq
  %v12713 = vshrl.u32 %v12712, 7
  %v12714 = vsub.s32 %v12711, %v12713
  %v12715 = vrot.slane %v12708, %v12714
  %v12716 = vcombine.low %v11839, %v11838
  %v12717 = vcombine.low %v11840, %v11848
  %v12719 = vunpack.c.l.s4 1983009808
  %v12720 = vunpack.c.0.s8 %v12719
  %v12721 = vlaneseq
  %v12722 = vshrl.u32 %v12721, 7
  %v12723 = vsub.s32 %v12720, %v12722
  %v12724 = vrot.slane %v12716, %v12723
  %v12726 = vunpack.c.l.s4 1983009808
  %v12727 = vunpack.c.0.s8 %v12726
  %v12728 = vlaneseq
  %v12729 = vshrl.u32 %v12728, 7
  %v12730 = vsub.s32 %v12727, %v12729
  %v12731 = vrot.slane %v12717, %v12730
  %v12732 = vcombine.low %v12724, %v12731
  %v12733 = vcombine.low %v11856, %v11855
  %v12734 = vcombine.low %v11857, %v11865
  %v12736 = vunpack.c.l.s4 1983009808
  %v12737 = vunpack.c.0.s8 %v12736
  %v12738 = vlaneseq
  %v12739 = vshrl.u32 %v12738, 7
  %v12740 = vsub.s32 %v12737, %v12739
  %v12741 = vrot.slane %v12733, %v12740
  %v12743 = vunpack.c.l.s4 1983009808
  %v12744 = vunpack.c.0.s8 %v12743
  %v12745 = vlaneseq
  %v12746 = vshrl.u32 %v12745, 7
  %v12747 = vsub.s32 %v12744, %v12746
  %v12748 = vrot.slane %v12734, %v12747
  %v12749 = vcombine.low %v12741, %v12748
  %v12750 = vcombine.low %v11873, %v11872
  %v12752 = vunpack.c.l.s4 1983009808
  %v12753 = vunpack.c.0.s8 %v12752
  %v12754 = vlaneseq
  %v12755 = vshrl.u32 %v12754, 7
  %v12756 = vsub.s32 %v12753, %v12755
  %v12757 = vrot.slane %v12750, %v12756
  %v12758 = vcombine.low %v11882, %v11890
  %v12759 = vcombine.low %v11889, %v11891
  %v12761 = vunpack.c.l.s4 1983009808
  %v12762 = vunpack.c.0.s8 %v12761
  %v12763 = vlaneseq
  %v12764 = vshrl.u32 %v12763, 7
  %v12765 = vsub.s32 %v12762, %v12764
  %v12766 = vrot.slane %v12758, %v12765
  %v12768 = vunpack.c.l.s4 1983009808
  %v12769 = vunpack.c.0.s8 %v12768
  %v12770 = vlaneseq
  %v12771 = vshrl.u32 %v12770, 7
  %v12772 = vsub.s32 %v12769, %v12771
  %v12773 = vrot.slane %v12759, %v12772
  %v12774 = vcombine.low %v12766, %v12773
  %v12775 = vcombine.low %v11899, %v11907
  %v12776 = vcombine.low %v11906, %v11908
  %v12778 = vunpack.c.l.s4 1983009808
  %v12779 = vunpack.c.0.s8 %v12778
  %v12780 = vlaneseq
  %v12781 = vshrl.u32 %v12780, 7
  %v12782 = vsub.s32 %v12779, %v12781
  %v12783 = vrot.slane %v12775, %v12782
  %v12785 = vunpack.c.l.s4 1983009808
  %v12786 = vunpack.c.0.s8 %v12785
  %v12787 = vlaneseq
  %v12788 = vshrl.u32 %v12787, 7
  %v12789 = vsub.s32 %v12786, %v12788
  %v12790 = vrot.slane %v12776, %v12789
  %v12791 = vcombine.low %v12783, %v12790
  %v12792 = vcombine.low %v11916, %v11924
  %v12794 = vunpack.c.l.s4 1983009808
  %v12795 = vunpack.c.0.s8 %v12794
  %v12796 = vlaneseq
  %v12797 = vshrl.u32 %v12796, 7
  %v12798 = vsub.s32 %v12795, %v12797
  %v12799 = vrot.slane %v12792, %v12798
  %v12800 = vcombine.low %v11925, %v11933
  %v12801 = vcombine.low %v11941, %v11940
  %v12803 = vunpack.c.l.s4 1983009808
  %v12804 = vunpack.c.0.s8 %v12803
  %v12805 = vlaneseq
  %v12806 = vshrl.u32 %v12805, 7
  %v12807 = vsub.s32 %v12804, %v12806
  %v12808 = vrot.slane %v12800, %v12807
  %v12810 = vunpack.c.l.s4 1983009808
  %v12811 = vunpack.c.0.s8 %v12810
  %v12812 = vlaneseq
  %v12813 = vshrl.u32 %v12812, 7
  %v12814 = vsub.s32 %v12811, %v12813
  %v12815 = vrot.slane %v12801, %v12814
  %v12816 = vcombine.low %v12808, %v12815
  %v12817 = vcombine.low %v11942, %v11950
  %v12818 = vcombine.low %v11958, %v11957
  %v12820 = vunpack.c.l.s4 1983009808
  %v12821 = vunpack.c.0.s8 %v12820
  %v12822 = vlaneseq
  %v12823 = vshrl.u32 %v12822, 7
  %v12824 = vsub.s32 %v12821, %v12823
  %v12825 = vrot.slane %v12817, %v12824
  %v12827 = vunpack.c.l.s4 1983009808
  %v12828 = vunpack.c.0.s8 %v12827
  %v12829 = vlaneseq
  %v12830 = vshrl.u32 %v12829, 7
  %v12831 = vsub.s32 %v12828, %v12830
  %v12832 = vrot.slane %v12818, %v12831
  %v12833 = vcombine.low %v12825, %v12832
  %v12834 = vcombine.low %v11959, %v11967
  %v12836 = vunpack.c.l.s4 1983009808
  %v12837 = vunpack.c.0.s8 %v12836
  %v12838 = vlaneseq
  %v12839 = vshrl.u32 %v12838, 7
  %v12840 = vsub.s32 %v12837, %v12839
  %v12841 = vrot.slane %v12834, %v12840
  %v12842 = vcombine.low %v11974, %v11976
  %v12843 = vcombine.low %v11984, %v11992
  %v12845 = vunpack.c.l.s4 1983009808
  %v12846 = vunpack.c.0.s8 %v12845
  %v12847 = vlaneseq
  %v12848 = vshrl.u32 %v12847, 7
  %v12849 = vsub.s32 %v12846, %v12848
  %v12850 = vrot.slane %v12842, %v12849
  %v12852 = vunpack.c.l.s4 1983009808
  %v12853 = vunpack.c.0.s8 %v12852
  %v12854 = vlaneseq
  %v12855 = vshrl.u32 %v12854, 7
  %v12856 = vsub.s32 %v12853, %v12855
  %v12857 = vrot.slane %v12843, %v12856
  %v12858 = vcombine.low %v12850, %v12857
  %v12859 = vcombine.low %v11991, %v11993
  %v12860 = vcombine.low %v12001, %v12009
  %v12862 = vunpack.c.l.s4 1983009808
  %v12863 = vunpack.c.0.s8 %v12862
  %v12864 = vlaneseq
  %v12865 = vshrl.u32 %v12864, 7
  %v12866 = vsub.s32 %v12863, %v12865
  %v12867 = vrot.slane %v12859, %v12866
  %v12869 = vunpack.c.l.s4 1983009808
  %v12870 = vunpack.c.0.s8 %v12869
  %v12871 = vlaneseq
  %v12872 = vshrl.u32 %v12871, 7
  %v12873 = vsub.s32 %v12870, %v12872
  %v12874 = vrot.slane %v12860, %v12873
  %v12875 = vcombine.low %v12867, %v12874
  %v12876 = vcombine.low %v12008, %v12010
  %v12878 = vunpack.c.l.s4 1983009808
  %v12879 = vunpack.c.0.s8 %v12878
  %v12880 = vlaneseq
  %v12881 = vshrl.u32 %v12880, 7
  %v12882 = vsub.s32 %v12879, %v12881
  %v12883 = vrot.slane %v12876, %v12882
  %12884 = vrot.lane.b32.xlu0 %v12564, 32
  %v12885 = vpop.permute.xlu0 %12884
  %12886 = vrot.lane.b32.xlu0 %v12581, 32
  %v12887 = vpop.permute.xlu0 %12886
  %12888 = vrot.lane.b32.xlu0 %v12589, 32
  %v12889 = vpop.permute.xlu0 %12888
  %12890 = vrot.lane.b32.xlu0 %v12606, 32
  %v12891 = vpop.permute.xlu0 %12890
  %12892 = vrot.lane.b32.xlu0 %v12623, 32
  %v12893 = vpop.permute.xlu0 %12892
  %12894 = vrot.lane.b32.xlu0 %v12631, 32
  %v12895 = vpop.permute.xlu0 %12894
  %12896 = vrot.lane.b32.xlu0 %v12648, 32
  %v12897 = vpop.permute.xlu0 %12896
  %12898 = vrot.lane.b32.xlu0 %v12665, 32
  %v12899 = vpop.permute.xlu0 %12898
  %12900 = vrot.lane.b32.xlu0 %v12673, 32
  %v12901 = vpop.permute.xlu0 %12900
  %12902 = vrot.lane.b32.xlu0 %v12690, 32
  %v12903 = vpop.permute.xlu0 %12902
  %12904 = vrot.lane.b32.xlu0 %v12707, 32
  %v12905 = vpop.permute.xlu0 %12904
  %12906 = vrot.lane.b32.xlu0 %v12715, 32
  %v12907 = vpop.permute.xlu0 %12906
  %12908 = vrot.lane.b32.xlu0 %v12732, 32
  %v12909 = vpop.permute.xlu0 %12908
  %12910 = vrot.lane.b32.xlu0 %v12749, 32
  %v12911 = vpop.permute.xlu0 %12910
  %12912 = vrot.lane.b32.xlu0 %v12757, 32
  %v12913 = vpop.permute.xlu0 %12912
  %12914 = vrot.lane.b32.xlu0 %v12774, 32
  %v12915 = vpop.permute.xlu0 %12914
  %12916 = vrot.lane.b32.xlu0 %v12791, 32
  %v12917 = vpop.permute.xlu0 %12916
  %12918 = vrot.lane.b32.xlu0 %v12799, 32
  %v12919 = vpop.permute.xlu0 %12918
  %12920 = vrot.lane.b32.xlu0 %v12816, 32
  %v12921 = vpop.permute.xlu0 %12920
  %12922 = vrot.lane.b32.xlu0 %v12833, 32
  %v12923 = vpop.permute.xlu0 %12922
  %12924 = vrot.lane.b32.xlu0 %v12841, 32
  %v12925 = vpop.permute.xlu0 %12924
  %12926 = vrot.lane.b32.xlu0 %v12858, 32
  %v12927 = vpop.permute.xlu0 %12926
  %12928 = vrot.lane.b32.xlu0 %v12875, 32
  %v12929 = vpop.permute.xlu0 %12928
  %12930 = vrot.lane.b32.xlu0 %v12883, 32
  %v12931 = vpop.permute.xlu0 %12930
  %v12956 = vsel %vm11439, %v12027, %v12477
  %v12957 = vsel %vm11439, %v12044, %v12479
  %v12958 = vsel %vm11439, %v12052, %v12481
  %v12959 = vsel %vm11439, %v12069, %v12483
  %v12960 = vsel %vm11439, %v12086, %v12485
  %v12961 = vsel %vm11439, %v12094, %v12487
  %v12962 = vsel %vm11439, %v12111, %v12489
  %v12963 = vsel %vm11439, %v12128, %v12491
  %v12964 = vsel %vm11439, %v12136, %v12493
  %v12965 = vsel %vm11439, %v12153, %v12495
  %v12966 = vsel %vm11439, %v12170, %v12497
  %v12967 = vsel %vm11439, %v12178, %v12499
  %v12968 = vsel %vm11439, %v12195, %v12501
  %v12969 = vsel %vm11439, %v12212, %v12503
  %v12970 = vsel %vm11439, %v12220, %v12505
  %v12971 = vsel %vm11439, %v12237, %v12507
  %v12972 = vsel %vm11439, %v12254, %v12509
  %v12973 = vsel %vm11439, %v12262, %v12511
  %v12974 = vsel %vm11439, %v12279, %v12513
  %v12975 = vsel %vm11439, %v12296, %v12515
  %v12976 = vsel %vm11439, %v12304, %v12517
  %v12977 = vsel %vm11439, %v12321, %v12519
  %v12978 = vsel %vm11439, %v12338, %v12521
  %v12979 = vsel %vm11439, %v12346, %v12523
  %v12980 = vsel %vm10764, %v12956, %v12885
  %v12981 = vsel %vm10764, %v12957, %v12887
  %v12982 = vsel %vm10764, %v12958, %v12889
  %v12983 = vsel %vm10764, %v12959, %v12891
  %v12984 = vsel %vm10764, %v12960, %v12893
  %v12985 = vsel %vm10764, %v12961, %v12895
  %v12986 = vsel %vm10764, %v12962, %v12897
  %v12987 = vsel %vm10764, %v12963, %v12899
  %v12988 = vsel %vm10764, %v12964, %v12901
  %v12989 = vsel %vm10764, %v12965, %v12903
  %v12990 = vsel %vm10764, %v12966, %v12905
  %v12991 = vsel %vm10764, %v12967, %v12907
  %v12992 = vsel %vm10764, %v12968, %v12909
  %v12993 = vsel %vm10764, %v12969, %v12911
  %v12994 = vsel %vm10764, %v12970, %v12913
  %v12995 = vsel %vm10764, %v12971, %v12915
  %v12996 = vsel %vm10764, %v12972, %v12917
  %v12997 = vsel %vm10764, %v12973, %v12919
  %v12998 = vsel %vm10764, %v12974, %v12921
  %v12999 = vsel %vm10764, %v12975, %v12923
  %v13000 = vsel %vm10764, %v12976, %v12925
  %v13001 = vsel %vm10764, %v12977, %v12927
  %v13002 = vsel %vm10764, %v12978, %v12929
  %v13003 = vsel %vm10764, %v12979, %v12931
  %v13028 = vcombine.high %v12980, %v12980
  %v13029 = vcombine.high %v12981, %v12981
  %v13030 = vcombine.high %v12983, %v12983
  %v13031 = vcombine.high %v12984, %v12984
  %v13032 = vcombine.high %v12986, %v12986
  %v13033 = vcombine.high %v12987, %v12987
  %v13034 = vcombine.high %v12989, %v12989
  %v13035 = vcombine.high %v12990, %v12990
  %v13036 = vcombine.high %v12992, %v12992
  %v13037 = vcombine.high %v12993, %v12993
  %v13038 = vcombine.high %v12995, %v12995
  %v13039 = vcombine.high %v12996, %v12996
  %v13040 = vcombine.high %v12998, %v12998
  %v13041 = vcombine.high %v12999, %v12999
  %v13042 = vcombine.high %v13001, %v13001
  %v13043 = vcombine.high %v13002, %v13002
  %v13044 = vld [vmem:[%s5] sm:$0xff]
  %v13045 = vld [vmem:[%s5 + $0x8] sm:$0xff]
  %v13046 = vld [vmem:[%s5 + $0x10] sm:$0xff]
  %v13047 = vld [vmem:[%s5 + $0x18] sm:$0xff]
  %v13048 = vld [vmem:[%s5 + $0x20] sm:$0xff]
  %v13049 = vld [vmem:[%s5 + $0x28] sm:$0xff]
  %v13050 = vld [vmem:[%s6] sm:$0x1]
  %v13052 = vlaneseq
  %v13053 = vshrl.u32 %v13052, 7
  %v13054 = vsub.s32 0, %v13053
  %v13055 = vrot.slane %v13050, %v13054
  %v13057 = vcombine.low %v12980, %v13028
  %v13058 = vcombine.low %v12981, %v13029
  %v13059 = vcombine.low %v12982, %v12983
  %v13060 = vcombine.low %v13030, %v12984
  %v13061 = vcombine.low %v13031, %v12985
  %v13062 = vcombine.low %v12986, %v13032
  %v13063 = vcombine.low %v12987, %v13033
  %v13064 = vcombine.low %v12988, %v12989
  %v13065 = vcombine.low %v13034, %v12990
  %v13066 = vcombine.low %v13035, %v12991
  %v13067 = vcombine.low %v12992, %v13036
  %v13068 = vcombine.low %v12993, %v13037
  %v13069 = vcombine.low %v12994, %v12995
  %v13070 = vcombine.low %v13038, %v12996
  %v13071 = vcombine.low %v13039, %v12997
  %v13072 = vcombine.low %v12998, %v13040
  %v13073 = vcombine.low %v12999, %v13041
  %v13074 = vcombine.low %v13000, %v13001
  %v13075 = vcombine.low %v13042, %v13002
  %v13076 = vcombine.low %v13043, %v13003
  %vm13077 = vcmask 392192
  %v13078 = vsel %vm13077, %v13057, 0
  %v13080 = vsel %vm13077, %v13058, 0
  %v13082 = vsel %vm13077, %v13059, 0
  %v13084 = vsel %vm13077, %v13060, 0
  %v13086 = vsel %vm13077, %v13061, 0
  %v13088 = vsel %vm13077, %v13062, 0
  %v13090 = vsel %vm13077, %v13063, 0
  %v13092 = vsel %vm13077, %v13064, 0
  %v13094 = vsel %vm13077, %v13065, 0
  %v13096 = vsel %vm13077, %v13066, 0
  %v13098 = vsel %vm13077, %v13067, 0
  %v13100 = vsel %vm13077, %v13068, 0
  %v13102 = vsel %vm13077, %v13069, 0
  %v13104 = vsel %vm13077, %v13070, 0
  %v13106 = vsel %vm13077, %v13071, 0
  %v13108 = vsel %vm13077, %v13072, 0
  %v13110 = vsel %vm13077, %v13073, 0
  %v13112 = vsel %vm13077, %v13074, 0
  %v13114 = vsel %vm13077, %v13075, 0
  %v13116 = vsel %vm13077, %v13076, 0
  %13118 = vmatprep.subr.mxu0 0.0
  %13119 = vmatpush1.msra.mxu0 0.0
  %13120 = vmatprep.subr.mxu0 0.0
  %13121 = vmatpush1.msra.mxu0 0.0
  %13122 = vmatprep.subr.mxu0 0.0
  %13123 = vmatpush1.msra.mxu0 0.0
  %13124 = vmatprep.subr.mxu0 0.0
  %13125 = vmatpush1.msra.mxu0 0.0
  %13126 = vmatprep.subr.mxu0 0.0
  %13127 = vmatpush1.msra.mxu0 0.0
  %13128 = vmatprep.subr.mxu0 0.0
  %13129 = vmatpush1.msra.mxu0 0.0
  %13130 = vmatprep.subr.mxu0 0.0
  %13131 = vmatpush1.msra.mxu0 0.0
  %13132 = vmatprep.subr.mxu0 0.0
  %13133 = vmatpush1.msra.mxu0 0.0
  %13134 = vmatprep.subr.mxu0 0.0
  %13135 = vmatpush1.msra.mxu0 0.0
  %13136 = vmatprep.subr.mxu0 0.0
  %13137 = vmatpush1.msra.mxu0 0.0
  %13138 = vmatprep.subr.mxu0 0.0
  %13139 = vmatpush1.msra.mxu0 %v13049
  %13140 = vmatprep.subr.mxu0 0.0
  %13141 = vmatpush1.msra.mxu0 %v13048
  %13142 = vmatprep.subr.mxu0 0.0
  %13143 = vmatpush1.msra.mxu0 %v13047
  %13144 = vmatprep.subr.mxu0 0.0
  %13145 = vmatpush1.msra.mxu0 %v13046
  %13146 = vmatprep.subr.mxu0 0.0
  %13147 = vmatpush1.msra.mxu0 %v13045
  %13148 = vmatprep.subr.mxu0 0.0
  %13149 = vmatpush1.msra.mxu0 %v13044
  %13150 = vmatprep.subr.mxu0 0.0
  %13151 = vmatpush2.msra.mxu0 0.0
  %13152 = vmatprep.subr.mxu0 0.0
  %13153 = vmatpush2.msra.mxu0 0.0
  %13154 = vmatprep.subr.mxu0 0.0
  %13155 = vmatpush2.msra.mxu0 0.0
  %13156 = vmatprep.subr.mxu0 0.0
  %13157 = vmatpush2.msra.mxu0 0.0
  %13158 = vmatprep.subr.mxu0 0.0
  %13159 = vmatpush2.msra.mxu0 0.0
  %13160 = vmatprep.subr.mxu0 0.0
  %13161 = vmatpush2.msra.mxu0 0.0
  %13162 = vmatprep.subr.mxu0 0.0
  %13163 = vmatpush2.msra.mxu0 0.0
  %13164 = vmatprep.subr.mxu0 0.0
  %13165 = vmatpush2.msra.mxu0 0.0
  %13166 = vmatprep.subr.mxu0 0.0
  %13167 = vmatpush2.msra.mxu0 0.0
  %13168 = vmatprep.subr.mxu0 0.0
  %13169 = vmatpush2.msra.mxu0 0.0
  %13170 = vmatprep.subr.mxu0 0.0
  %13171 = vmatpush2.msra.mxu0 0.0
  %13172 = vmatprep.subr.mxu0 0.0
  %13173 = vmatpush2.msra.mxu0 0.0
  %13174 = vmatprep.subr.mxu0 0.0
  %13175 = vmatpush2.msra.mxu0 0.0
  %13176 = vmatprep.subr.mxu0 0.0
  %13177 = vmatpush2.msra.mxu0 0.0
  %13178 = vmatprep.subr.mxu0 0.0
  %13179 = vmatpush2.msra.mxu0 0.0
  %13180 = vmatprep.subr.mxu0 0.0
  %13181 = vmatpush2.msra.mxu0 0.0
  %13182 = vmatprep.mubr.f32.mxu0 0.0
  %13183 = vmatmul.mubr.f32.gmra.mxu0 %v13078
  %v13184 = vpop.f32.mrf.mxu0
  %v13185 = vadd.f32 %v13055, %v13184
  %v13186 = vpop.f32.mrf.mxu0
  %13187 = vmatprep.mubr.f32.mxu0 0.0
  %13188 = vmatmul.mubr.f32.gmra.mxu0 %v13080
  %v13189 = vpop.f32.mrf.mxu0
  %v13190 = vadd.f32 %v13055, %v13189
  %v13191 = vpop.f32.mrf.mxu0
  %13192 = vmatprep.mubr.f32.mxu0 0.0
  %13193 = vmatmul.mubr.f32.gmra.mxu0 %v13082
  %v13194 = vpop.f32.mrf.mxu0
  %v13195 = vadd.f32 %v13055, %v13194
  %v13196 = vpop.f32.mrf.mxu0
  %13197 = vmatprep.mubr.f32.mxu0 0.0
  %13198 = vmatmul.mubr.f32.gmra.mxu0 %v13084
  %v13199 = vpop.f32.mrf.mxu0
  %v13200 = vadd.f32 %v13055, %v13199
  %v13201 = vpop.f32.mrf.mxu0
  %13202 = vmatprep.mubr.f32.mxu0 0.0
  %13203 = vmatmul.mubr.f32.gmra.mxu0 %v13086
  %v13204 = vpop.f32.mrf.mxu0
  %v13205 = vadd.f32 %v13055, %v13204
  %v13206 = vpop.f32.mrf.mxu0
  %13207 = vmatprep.mubr.f32.mxu0 0.0
  %13208 = vmatmul.mubr.f32.gmra.mxu0 %v13088
  %v13209 = vpop.f32.mrf.mxu0
  %v13210 = vadd.f32 %v13055, %v13209
  %v13211 = vpop.f32.mrf.mxu0
  %13212 = vmatprep.mubr.f32.mxu0 0.0
  %13213 = vmatmul.mubr.f32.gmra.mxu0 %v13090
  %v13214 = vpop.f32.mrf.mxu0
  %v13215 = vadd.f32 %v13055, %v13214
  %v13216 = vpop.f32.mrf.mxu0
  %13217 = vmatprep.mubr.f32.mxu0 0.0
  %13218 = vmatmul.mubr.f32.gmra.mxu0 %v13092
  %v13219 = vpop.f32.mrf.mxu0
  %v13220 = vadd.f32 %v13055, %v13219
  %v13221 = vpop.f32.mrf.mxu0
  %13222 = vmatprep.mubr.f32.mxu0 0.0
  %13223 = vmatmul.mubr.f32.gmra.mxu0 %v13094
  %v13224 = vpop.f32.mrf.mxu0
  %v13225 = vadd.f32 %v13055, %v13224
  %v13226 = vpop.f32.mrf.mxu0
  %13227 = vmatprep.mubr.f32.mxu0 0.0
  %13228 = vmatmul.mubr.f32.gmra.mxu0 %v13096
  %v13229 = vpop.f32.mrf.mxu0
  %v13230 = vadd.f32 %v13055, %v13229
  %v13231 = vpop.f32.mrf.mxu0
  %13232 = vmatprep.mubr.f32.mxu0 0.0
  %13233 = vmatmul.mubr.f32.gmra.mxu0 %v13098
  %v13234 = vpop.f32.mrf.mxu0
  %v13235 = vadd.f32 %v13055, %v13234
  %v13236 = vpop.f32.mrf.mxu0
  %13237 = vmatprep.mubr.f32.mxu0 0.0
  %13238 = vmatmul.mubr.f32.gmra.mxu0 %v13100
  %v13239 = vpop.f32.mrf.mxu0
  %v13240 = vadd.f32 %v13055, %v13239
  %v13241 = vpop.f32.mrf.mxu0
  %13242 = vmatprep.mubr.f32.mxu0 0.0
  %13243 = vmatmul.mubr.f32.gmra.mxu0 %v13102
  %v13244 = vpop.f32.mrf.mxu0
  %v13245 = vadd.f32 %v13055, %v13244
  %v13246 = vpop.f32.mrf.mxu0
  %13247 = vmatprep.mubr.f32.mxu0 0.0
  %13248 = vmatmul.mubr.f32.gmra.mxu0 %v13104
  %v13249 = vpop.f32.mrf.mxu0
  %v13250 = vadd.f32 %v13055, %v13249
  %v13251 = vpop.f32.mrf.mxu0
  %13252 = vmatprep.mubr.f32.mxu0 0.0
  %13253 = vmatmul.mubr.f32.gmra.mxu0 %v13106
  %v13254 = vpop.f32.mrf.mxu0
  %v13255 = vadd.f32 %v13055, %v13254
  %v13256 = vpop.f32.mrf.mxu0
  %13257 = vmatprep.mubr.f32.mxu0 0.0
  %13258 = vmatmul.mubr.f32.gmra.mxu0 %v13108
  %v13259 = vpop.f32.mrf.mxu0
  %v13260 = vadd.f32 %v13055, %v13259
  %v13261 = vpop.f32.mrf.mxu0
  %13262 = vmatprep.mubr.f32.mxu0 0.0
  %13263 = vmatmul.mubr.f32.gmra.mxu0 %v13110
  %v13264 = vpop.f32.mrf.mxu0
  %v13265 = vadd.f32 %v13055, %v13264
  %v13266 = vpop.f32.mrf.mxu0
  %13267 = vmatprep.mubr.f32.mxu0 0.0
  %13268 = vmatmul.mubr.f32.gmra.mxu0 %v13112
  %v13269 = vpop.f32.mrf.mxu0
  %v13270 = vadd.f32 %v13055, %v13269
  %v13271 = vpop.f32.mrf.mxu0
  %13272 = vmatprep.mubr.f32.mxu0 0.0
  %13273 = vmatmul.mubr.f32.gmra.mxu0 %v13114
  %v13274 = vpop.f32.mrf.mxu0
  %v13275 = vadd.f32 %v13055, %v13274
  %v13276 = vpop.f32.mrf.mxu0
  %13277 = vmatprep.mubr.f32.mxu0 0.0
  %13278 = vmatmul.mubr.f32.gmra.mxu0 %v13116
  %v13279 = vpop.f32.mrf.mxu0
  %v13280 = vadd.f32 %v13055, %v13279
  %v13281 = vpop.f32.mrf.mxu0
  %13282 = vdwg.mxu0
  %v13283 = vmax.f32 %v13185, 0.0
  %v13284 = vmax.f32 %v13190, 0.0
  %v13285 = vmax.f32 %v13195, 0.0
  %v13286 = vmax.f32 %v13200, 0.0
  %v13287 = vmax.f32 %v13205, 0.0
  %v13288 = vmax.f32 %v13210, 0.0
  %v13289 = vmax.f32 %v13215, 0.0
  %v13290 = vmax.f32 %v13220, 0.0
  %v13291 = vmax.f32 %v13225, 0.0
  %v13292 = vmax.f32 %v13230, 0.0
  %v13293 = vmax.f32 %v13235, 0.0
  %v13294 = vmax.f32 %v13240, 0.0
  %v13295 = vmax.f32 %v13245, 0.0
  %v13296 = vmax.f32 %v13250, 0.0
  %v13297 = vmax.f32 %v13255, 0.0
  %v13298 = vmax.f32 %v13260, 0.0
  %v13299 = vmax.f32 %v13265, 0.0
  %v13300 = vmax.f32 %v13270, 0.0
  %v13301 = vmax.f32 %v13275, 0.0
  %v13302 = vmax.f32 %v13280, 0.0
  %vm13303 = vcmask 64512
  %13304 = vst.msk [vmem:[#allocation3] sm:$0xff] %vm13303, %v13283
  %13305 = vst.msk [vmem:[#allocation3 + $0x8] sm:$0xff] %vm13303, %v13284
  %13306 = vst.msk [vmem:[#allocation3 + $0x10] sm:$0xff] %vm13303, %v13285
  %13307 = vst.msk [vmem:[#allocation3 + $0x18] sm:$0xff] %vm13303, %v13286
  %13308 = vst.msk [vmem:[#allocation3 + $0x20] sm:$0xff] %vm13303, %v13287
  %13309 = vst.msk [vmem:[#allocation3 + $0x28] sm:$0xff] %vm13303, %v13288
  %13310 = vst.msk [vmem:[#allocation3 + $0x30] sm:$0xff] %vm13303, %v13289
  %13311 = vst.msk [vmem:[#allocation3 + $0x38] sm:$0xff] %vm13303, %v13290
  %13312 = vst.msk [vmem:[#allocation3 + $0x40] sm:$0xff] %vm13303, %v13291
  %13313 = vst.msk [vmem:[#allocation3 + $0x48] sm:$0xff] %vm13303, %v13292
  %13314 = vst.msk [vmem:[#allocation3 + $0x50] sm:$0xff] %vm13303, %v13293
  %13315 = vst.msk [vmem:[#allocation3 + $0x58] sm:$0xff] %vm13303, %v13294
  %13316 = vst.msk [vmem:[#allocation3 + $0x60] sm:$0xff] %vm13303, %v13295
  %13317 = vst.msk [vmem:[#allocation3 + $0x68] sm:$0xff] %vm13303, %v13296
  %13318 = vst.msk [vmem:[#allocation3 + $0x70] sm:$0xff] %vm13303, %v13297
  %13319 = vst.msk [vmem:[#allocation3 + $0x78] sm:$0xff] %vm13303, %v13298
  %13320 = vst.msk [vmem:[#allocation3 + $0x80] sm:$0xff] %vm13303, %v13299
  %13321 = vst.msk [vmem:[#allocation3 + $0x88] sm:$0xff] %vm13303, %v13300
  %13322 = vst.msk [vmem:[#allocation3 + $0x90] sm:$0xff] %vm13303, %v13301
  %13323 = vst.msk [vmem:[#allocation3 + $0x98] sm:$0xff] %vm13303, %v13302
  %v13324 = vld [vmem:[#allocation3] ss:$2 sm:$0xff]
  %s13325 = scalar_lea.vmem [#allocation3], 16
  %v13326 = vld [vmem:[%s13325] ss:$2 sm:$0xff]
  %s13327 = scalar_lea.vmem [#allocation3], 32
  %v13328 = vld [vmem:[%s13327] ss:$2 sm:$0xff]
  %s13329 = scalar_lea.vmem [#allocation3], 48
  %v13330 = vld [vmem:[%s13329] ss:$2 sm:$0xff]
  %s13331 = scalar_lea.vmem [#allocation3], 64
  %v13332 = vld [vmem:[%s13331] ss:$2 sm:$0xff]
  %s13333 = scalar_lea.vmem [#allocation3], 80
  %v13334 = vld [vmem:[%s13333] ss:$2 sm:$0xff]
  %s13335 = scalar_lea.vmem [#allocation3], 96
  %v13336 = vld [vmem:[%s13335] ss:$2 sm:$0xff]
  %s13337 = scalar_lea.vmem [#allocation3], 112
  %v13338 = vld [vmem:[%s13337] ss:$2 sm:$0xff]
  %s13339 = scalar_lea.vmem [#allocation3], 128
  %v13340 = vld [vmem:[%s13339] ss:$2 sm:$0xff]
  %s13341 = scalar_lea.vmem [#allocation3], 144
  %v13342 = vld [vmem:[%s13341] ss:$2 sm:$0xff]
  %s13343 = scalar_lea.vmem [#allocation3], 1
  %v13344 = vld [vmem:[%s13343] ss:$2 sm:$0xff]
  %s13345 = scalar_lea.vmem [#allocation3], 17
  %v13346 = vld [vmem:[%s13345] ss:$2 sm:$0xff]
  %s13347 = scalar_lea.vmem [#allocation3], 33
  %v13348 = vld [vmem:[%s13347] ss:$2 sm:$0xff]
  %s13349 = scalar_lea.vmem [#allocation3], 49
  %v13350 = vld [vmem:[%s13349] ss:$2 sm:$0xff]
  %s13351 = scalar_lea.vmem [#allocation3], 65
  %v13352 = vld [vmem:[%s13351] ss:$2 sm:$0xff]
  %s13353 = scalar_lea.vmem [#allocation3], 81
  %v13354 = vld [vmem:[%s13353] ss:$2 sm:$0xff]
  %s13355 = scalar_lea.vmem [#allocation3], 97
  %v13356 = vld [vmem:[%s13355] ss:$2 sm:$0xff]
  %s13357 = scalar_lea.vmem [#allocation3], 113
  %v13358 = vld [vmem:[%s13357] ss:$2 sm:$0xff]
  %s13359 = scalar_lea.vmem [#allocation3], 129
  %v13360 = vld [vmem:[%s13359] ss:$2 sm:$0xff]
  %s13361 = scalar_lea.vmem [#allocation3], 145
  %v13362 = vld [vmem:[%s13361] ss:$2 sm:$0xff]
  %v13363 = vadd.f32 %v13324, %v13344
  %v13364 = vadd.f32 %v13326, %v13346
  %v13365 = vadd.f32 %v13328, %v13348
  %v13366 = vadd.f32 %v13330, %v13350
  %v13367 = vadd.f32 %v13332, %v13352
  %v13368 = vadd.f32 %v13334, %v13354
  %v13369 = vadd.f32 %v13336, %v13356
  %v13370 = vadd.f32 %v13338, %v13358
  %v13371 = vadd.f32 %v13340, %v13360
  %v13372 = vadd.f32 %v13342, %v13362
  %v13373 = vmul.f32 %v13363, 0.5
  %v13374 = vmul.f32 %v13364, 0.5
  %v13375 = vmul.f32 %v13365, 0.5
  %v13376 = vmul.f32 %v13366, 0.5
  %v13377 = vmul.f32 %v13367, 0.5
  %v13378 = vmul.f32 %v13368, 0.5
  %v13379 = vmul.f32 %v13369, 0.5
  %v13380 = vmul.f32 %v13370, 0.5
  %v13381 = vmul.f32 %v13371, 0.5
  %v13382 = vmul.f32 %v13372, 0.5
  %v13393 = vcombine.high %v13373, %v13373
  %v13395 = vunpack.c.l.s4 1983009808
  %v13396 = vunpack.c.0.s8 %v13395
  %v13397 = vlaneseq
  %v13398 = vshrl.u32 %v13397, 7
  %v13399 = vsub.s32 %v13396, %v13398
  %v13400 = vrot.slane %v13373, %v13399
  %v13402 = vunpack.c.l.s4 1983009808
  %v13403 = vunpack.c.0.s8 %v13402
  %v13404 = vlaneseq
  %v13405 = vshrl.u32 %v13404, 7
  %v13406 = vsub.s32 %v13403, %v13405
  %v13407 = vrot.slane %v13393, %v13406
  %v13408 = vcombine.high %v13400, %v13400
  %v13409 = vcombine.high %v13407, %v13407
  %v13410 = vcombine.high %v13374, %v13374
  %v13412 = vunpack.c.l.s4 1983009808
  %v13413 = vunpack.c.0.s8 %v13412
  %v13414 = vlaneseq
  %v13415 = vshrl.u32 %v13414, 7
  %v13416 = vsub.s32 %v13413, %v13415
  %v13417 = vrot.slane %v13374, %v13416
  %v13419 = vunpack.c.l.s4 1983009808
  %v13420 = vunpack.c.0.s8 %v13419
  %v13421 = vlaneseq
  %v13422 = vshrl.u32 %v13421, 7
  %v13423 = vsub.s32 %v13420, %v13422
  %v13424 = vrot.slane %v13410, %v13423
  %v13425 = vcombine.high %v13417, %v13417
  %v13426 = vcombine.high %v13424, %v13424
  %v13427 = vcombine.high %v13375, %v13375
  %v13429 = vunpack.c.l.s4 1983009808
  %v13430 = vunpack.c.0.s8 %v13429
  %v13431 = vlaneseq
  %v13432 = vshrl.u32 %v13431, 7
  %v13433 = vsub.s32 %v13430, %v13432
  %v13434 = vrot.slane %v13375, %v13433
  %v13436 = vunpack.c.l.s4 1983009808
  %v13437 = vunpack.c.0.s8 %v13436
  %v13438 = vlaneseq
  %v13439 = vshrl.u32 %v13438, 7
  %v13440 = vsub.s32 %v13437, %v13439
  %v13441 = vrot.slane %v13427, %v13440
  %v13442 = vcombine.high %v13434, %v13434
  %v13443 = vcombine.high %v13441, %v13441
  %v13444 = vcombine.high %v13376, %v13376
  %v13446 = vunpack.c.l.s4 1983009808
  %v13447 = vunpack.c.0.s8 %v13446
  %v13448 = vlaneseq
  %v13449 = vshrl.u32 %v13448, 7
  %v13450 = vsub.s32 %v13447, %v13449
  %v13451 = vrot.slane %v13376, %v13450
  %v13453 = vunpack.c.l.s4 1983009808
  %v13454 = vunpack.c.0.s8 %v13453
  %v13455 = vlaneseq
  %v13456 = vshrl.u32 %v13455, 7
  %v13457 = vsub.s32 %v13454, %v13456
  %v13458 = vrot.slane %v13444, %v13457
  %v13459 = vcombine.high %v13451, %v13451
  %v13460 = vcombine.high %v13458, %v13458
  %v13461 = vcombine.high %v13377, %v13377
  %v13463 = vunpack.c.l.s4 1983009808
  %v13464 = vunpack.c.0.s8 %v13463
  %v13465 = vlaneseq
  %v13466 = vshrl.u32 %v13465, 7
  %v13467 = vsub.s32 %v13464, %v13466
  %v13468 = vrot.slane %v13377, %v13467
  %v13470 = vunpack.c.l.s4 1983009808
  %v13471 = vunpack.c.0.s8 %v13470
  %v13472 = vlaneseq
  %v13473 = vshrl.u32 %v13472, 7
  %v13474 = vsub.s32 %v13471, %v13473
  %v13475 = vrot.slane %v13461, %v13474
  %v13476 = vcombine.high %v13468, %v13468
  %v13477 = vcombine.high %v13475, %v13475
  %v13478 = vcombine.high %v13378, %v13378
  %v13480 = vunpack.c.l.s4 1983009808
  %v13481 = vunpack.c.0.s8 %v13480
  %v13482 = vlaneseq
  %v13483 = vshrl.u32 %v13482, 7
  %v13484 = vsub.s32 %v13481, %v13483
  %v13485 = vrot.slane %v13378, %v13484
  %v13487 = vunpack.c.l.s4 1983009808
  %v13488 = vunpack.c.0.s8 %v13487
  %v13489 = vlaneseq
  %v13490 = vshrl.u32 %v13489, 7
  %v13491 = vsub.s32 %v13488, %v13490
  %v13492 = vrot.slane %v13478, %v13491
  %v13493 = vcombine.high %v13485, %v13485
  %v13494 = vcombine.high %v13492, %v13492
  %v13495 = vcombine.high %v13379, %v13379
  %v13497 = vunpack.c.l.s4 1983009808
  %v13498 = vunpack.c.0.s8 %v13497
  %v13499 = vlaneseq
  %v13500 = vshrl.u32 %v13499, 7
  %v13501 = vsub.s32 %v13498, %v13500
  %v13502 = vrot.slane %v13379, %v13501
  %v13504 = vunpack.c.l.s4 1983009808
  %v13505 = vunpack.c.0.s8 %v13504
  %v13506 = vlaneseq
  %v13507 = vshrl.u32 %v13506, 7
  %v13508 = vsub.s32 %v13505, %v13507
  %v13509 = vrot.slane %v13495, %v13508
  %v13510 = vcombine.high %v13502, %v13502
  %v13511 = vcombine.high %v13509, %v13509
  %v13512 = vcombine.high %v13380, %v13380
  %v13514 = vunpack.c.l.s4 1983009808
  %v13515 = vunpack.c.0.s8 %v13514
  %v13516 = vlaneseq
  %v13517 = vshrl.u32 %v13516, 7
  %v13518 = vsub.s32 %v13515, %v13517
  %v13519 = vrot.slane %v13380, %v13518
  %v13521 = vunpack.c.l.s4 1983009808
  %v13522 = vunpack.c.0.s8 %v13521
  %v13523 = vlaneseq
  %v13524 = vshrl.u32 %v13523, 7
  %v13525 = vsub.s32 %v13522, %v13524
  %v13526 = vrot.slane %v13512, %v13525
  %v13527 = vcombine.high %v13519, %v13519
  %v13528 = vcombine.high %v13526, %v13526
  %v13529 = vcombine.high %v13381, %v13381
  %v13531 = vunpack.c.l.s4 1983009808
  %v13532 = vunpack.c.0.s8 %v13531
  %v13533 = vlaneseq
  %v13534 = vshrl.u32 %v13533, 7
  %v13535 = vsub.s32 %v13532, %v13534
  %v13536 = vrot.slane %v13381, %v13535
  %v13538 = vunpack.c.l.s4 1983009808
  %v13539 = vunpack.c.0.s8 %v13538
  %v13540 = vlaneseq
  %v13541 = vshrl.u32 %v13540, 7
  %v13542 = vsub.s32 %v13539, %v13541
  %v13543 = vrot.slane %v13529, %v13542
  %v13544 = vcombine.high %v13536, %v13536
  %v13545 = vcombine.high %v13543, %v13543
  %v13546 = vcombine.high %v13382, %v13382
  %v13548 = vunpack.c.l.s4 1983009808
  %v13549 = vunpack.c.0.s8 %v13548
  %v13550 = vlaneseq
  %v13551 = vshrl.u32 %v13550, 7
  %v13552 = vsub.s32 %v13549, %v13551
  %v13553 = vrot.slane %v13382, %v13552
  %v13555 = vunpack.c.l.s4 1983009808
  %v13556 = vunpack.c.0.s8 %v13555
  %v13557 = vlaneseq
  %v13558 = vshrl.u32 %v13557, 7
  %v13559 = vsub.s32 %v13556, %v13558
  %v13560 = vrot.slane %v13546, %v13559
  %v13561 = vcombine.high %v13553, %v13553
  %v13562 = vcombine.high %v13560, %v13560
  %v13563 = vld [vmem:[%s7] sm:$0xff]
  %s13564 = scalar_lea.vmem %s7, 8
  %v13565 = vld [vmem:[%s13564] sm:$0xff]
  %v13566 = vlaneseq
  %v13567 = vshrl.u32 %v13566, 7
  %v13568 = vsub.s32 1, %v13567
  %v13569 = vrot.slane %v13400, %v13568
  %v13570 = vlaneseq
  %v13571 = vshrl.u32 %v13570, 7
  %v13572 = vsub.s32 1, %v13571
  %v13573 = vrot.slane %v13425, %v13572
  %v13574 = vlaneseq
  %v13575 = vshrl.u32 %v13574, 7
  %v13576 = vsub.s32 1, %v13575
  %v13577 = vrot.slane %v13441, %v13576
  %v13578 = vlaneseq
  %v13579 = vshrl.u32 %v13578, 7
  %v13580 = vsub.s32 1, %v13579
  %v13581 = vrot.slane %v13460, %v13580
  %v13582 = vlaneseq
  %v13583 = vshrl.u32 %v13582, 7
  %v13584 = vsub.s32 1, %v13583
  %v13585 = vrot.slane %v13485, %v13584
  %v13586 = vlaneseq
  %v13587 = vshrl.u32 %v13586, 7
  %v13588 = vsub.s32 1, %v13587
  %v13589 = vrot.slane %v13510, %v13588
  %v13590 = vlaneseq
  %v13591 = vshrl.u32 %v13590, 7
  %v13592 = vsub.s32 1, %v13591
  %v13593 = vrot.slane %v13526, %v13592
  %v13594 = vlaneseq
  %v13595 = vshrl.u32 %v13594, 7
  %v13596 = vsub.s32 1, %v13595
  %v13597 = vrot.slane %v13545, %v13596
  %vm13598 = vcmask 1041409
  %v13599 = vsel %vm13598, %v13573, %v13569
  %vm13600 = vcmask 1042434
  %v13601 = vsel %vm13600, %v13577, %v13599
  %vm13602 = vcmask 1043459
  %v13603 = vsel %vm13602, %v13581, %v13601
  %vm13604 = vcmask 1044484
  %v13605 = vsel %vm13604, %v13585, %v13603
  %vm13606 = vcmask 1045509
  %v13607 = vsel %vm13606, %v13589, %v13605
  %vm13608 = vcmask 1046534
  %v13609 = vsel %vm13608, %v13593, %v13607
  %vm13610 = vcmask 1047559
  %v13611 = vsel %vm13610, %v13597, %v13609
  %v13612 = vsel %vm13303, %v13611, 0
  %13614 = vmatprep.subr.mxu0 0.0
  %13615 = vmatpush1.msra.mxu0 0.0
  %13616 = vmatprep.subr.mxu0 0.0
  %13617 = vmatpush1.msra.mxu0 0.0
  %13618 = vmatprep.subr.mxu0 0.0
  %13619 = vmatpush1.msra.mxu0 0.0
  %13620 = vmatprep.subr.mxu0 0.0
  %13621 = vmatpush1.msra.mxu0 0.0
  %13622 = vmatprep.subr.mxu0 0.0
  %13623 = vmatpush1.msra.mxu0 0.0
  %13624 = vmatprep.subr.mxu0 0.0
  %13625 = vmatpush1.msra.mxu0 0.0
  %13626 = vmatprep.subr.mxu0 0.0
  %13627 = vmatpush1.msra.mxu0 0.0
  %13628 = vmatprep.subr.mxu0 0.0
  %13629 = vmatpush1.msra.mxu0 0.0
  %13630 = vmatprep.subr.mxu0 0.0
  %13631 = vmatpush1.msra.mxu0 0.0
  %13632 = vmatprep.subr.mxu0 0.0
  %13633 = vmatpush1.msra.mxu0 0.0
  %13634 = vmatprep.subr.mxu0 0.0
  %13635 = vmatpush1.msra.mxu0 0.0
  %13636 = vmatprep.subr.mxu0 0.0
  %13637 = vmatpush1.msra.mxu0 0.0
  %13638 = vmatprep.subr.mxu0 0.0
  %13639 = vmatpush1.msra.mxu0 0.0
  %13640 = vmatprep.subr.mxu0 0.0
  %13641 = vmatpush1.msra.mxu0 0.0
  %13642 = vmatprep.subr.mxu0 0.0
  %13643 = vmatpush1.msra.mxu0 0.0
  %13644 = vmatprep.subr.mxu0 0.0
  %13645 = vmatpush1.msra.mxu0 %v13565
  %13646 = vmatprep.subr.mxu0 0.0
  %13647 = vmatpush2.msra.mxu0 0.0
  %13648 = vmatprep.subr.mxu0 0.0
  %13649 = vmatpush2.msra.mxu0 0.0
  %13650 = vmatprep.subr.mxu0 0.0
  %13651 = vmatpush2.msra.mxu0 0.0
  %13652 = vmatprep.subr.mxu0 0.0
  %13653 = vmatpush2.msra.mxu0 0.0
  %13654 = vmatprep.subr.mxu0 0.0
  %13655 = vmatpush2.msra.mxu0 0.0
  %13656 = vmatprep.subr.mxu0 0.0
  %13657 = vmatpush2.msra.mxu0 0.0
  %13658 = vmatprep.subr.mxu0 0.0
  %13659 = vmatpush2.msra.mxu0 0.0
  %13660 = vmatprep.subr.mxu0 0.0
  %13661 = vmatpush2.msra.mxu0 0.0
  %13662 = vmatprep.subr.mxu0 0.0
  %13663 = vmatpush2.msra.mxu0 0.0
  %13664 = vmatprep.subr.mxu0 0.0
  %13665 = vmatpush2.msra.mxu0 0.0
  %13666 = vmatprep.subr.mxu0 0.0
  %13667 = vmatpush2.msra.mxu0 0.0
  %13668 = vmatprep.subr.mxu0 0.0
  %13669 = vmatpush2.msra.mxu0 0.0
  %13670 = vmatprep.subr.mxu0 0.0
  %13671 = vmatpush2.msra.mxu0 0.0
  %13672 = vmatprep.subr.mxu0 0.0
  %13673 = vmatpush2.msra.mxu0 0.0
  %13674 = vmatprep.subr.mxu0 0.0
  %13675 = vmatpush2.msra.mxu0 0.0
  %13676 = vmatprep.subr.mxu0 0.0
  %13677 = vmatpush2.msra.mxu0 0.0
  %13678 = vmatprep.mubr.f32.mxu0 0.0
  %13679 = vmatmul.mubr.f32.gmra.mxu0 %v13612
  %v13680 = vpop.f32.mrf.mxu0
  %v13681 = vadd.f32 0.0, %v13680
  %v13682 = vpop.f32.mrf.mxu0
  %13683 = vdwg.mxu0
  %v13684 = vlaneseq
  %v13685 = vshrl.u32 %v13684, 7
  %v13686 = vsub.s32 0, %v13685
  %v13687 = vrot.slane %v13400, %v13686
  %v13688 = vlaneseq
  %v13689 = vshrl.u32 %v13688, 7
  %v13690 = vsub.s32 0, %v13689
  %v13691 = vrot.slane %v13425, %v13690
  %v13692 = vlaneseq
  %v13693 = vshrl.u32 %v13692, 7
  %v13694 = vsub.s32 0, %v13693
  %v13695 = vrot.slane %v13441, %v13694
  %v13696 = vlaneseq
  %v13697 = vshrl.u32 %v13696, 7
  %v13698 = vsub.s32 0, %v13697
  %v13699 = vrot.slane %v13460, %v13698
  %v13700 = vlaneseq
  %v13701 = vshrl.u32 %v13700, 7
  %v13702 = vsub.s32 0, %v13701
  %v13703 = vrot.slane %v13485, %v13702
  %v13704 = vlaneseq
  %v13705 = vshrl.u32 %v13704, 7
  %v13706 = vsub.s32 0, %v13705
  %v13707 = vrot.slane %v13510, %v13706
  %v13708 = vlaneseq
  %v13709 = vshrl.u32 %v13708, 7
  %v13710 = vsub.s32 0, %v13709
  %v13711 = vrot.slane %v13526, %v13710
  %v13712 = vlaneseq
  %v13713 = vshrl.u32 %v13712, 7
  %v13714 = vsub.s32 0, %v13713
  %v13715 = vrot.slane %v13545, %v13714
  %v13716 = vsel %vm13598, %v13691, %v13687
  %v13717 = vsel %vm13600, %v13695, %v13716
  %v13718 = vsel %vm13602, %v13699, %v13717
  %v13719 = vsel %vm13604, %v13703, %v13718
  %v13720 = vsel %vm13606, %v13707, %v13719
  %v13721 = vsel %vm13608, %v13711, %v13720
  %v13722 = vsel %vm13610, %v13715, %v13721
  %v13723 = vsel %vm13303, %v13722, 0
  %13725 = vmatprep.subr.mxu0 0.0
  %13726 = vmatpush1.msra.mxu0 0.0
  %13727 = vmatprep.subr.mxu0 0.0
  %13728 = vmatpush1.msra.mxu0 0.0
  %13729 = vmatprep.subr.mxu0 0.0
  %13730 = vmatpush1.msra.mxu0 0.0
  %13731 = vmatprep.subr.mxu0 0.0
  %13732 = vmatpush1.msra.mxu0 0.0
  %13733 = vmatprep.subr.mxu0 0.0
  %13734 = vmatpush1.msra.mxu0 0.0
  %13735 = vmatprep.subr.mxu0 0.0
  %13736 = vmatpush1.msra.mxu0 0.0
  %13737 = vmatprep.subr.mxu0 0.0
  %13738 = vmatpush1.msra.mxu0 0.0
  %13739 = vmatprep.subr.mxu0 0.0
  %13740 = vmatpush1.msra.mxu0 0.0
  %13741 = vmatprep.subr.mxu0 0.0
  %13742 = vmatpush1.msra.mxu0 0.0
  %13743 = vmatprep.subr.mxu0 0.0
  %13744 = vmatpush1.msra.mxu0 0.0
  %13745 = vmatprep.subr.mxu0 0.0
  %13746 = vmatpush1.msra.mxu0 0.0
  %13747 = vmatprep.subr.mxu0 0.0
  %13748 = vmatpush1.msra.mxu0 0.0
  %13749 = vmatprep.subr.mxu0 0.0
  %13750 = vmatpush1.msra.mxu0 0.0
  %13751 = vmatprep.subr.mxu0 0.0
  %13752 = vmatpush1.msra.mxu0 0.0
  %13753 = vmatprep.subr.mxu0 0.0
  %13754 = vmatpush1.msra.mxu0 0.0
  %13755 = vmatprep.subr.mxu0 0.0
  %13756 = vmatpush1.msra.mxu0 %v13563
  %13757 = vmatprep.subr.mxu0 0.0
  %13758 = vmatpush2.msra.mxu0 0.0
  %13759 = vmatprep.subr.mxu0 0.0
  %13760 = vmatpush2.msra.mxu0 0.0
  %13761 = vmatprep.subr.mxu0 0.0
  %13762 = vmatpush2.msra.mxu0 0.0
  %13763 = vmatprep.subr.mxu0 0.0
  %13764 = vmatpush2.msra.mxu0 0.0
  %13765 = vmatprep.subr.mxu0 0.0
  %13766 = vmatpush2.msra.mxu0 0.0
  %13767 = vmatprep.subr.mxu0 0.0
  %13768 = vmatpush2.msra.mxu0 0.0
  %13769 = vmatprep.subr.mxu0 0.0
  %13770 = vmatpush2.msra.mxu0 0.0
  %13771 = vmatprep.subr.mxu0 0.0
  %13772 = vmatpush2.msra.mxu0 0.0
  %13773 = vmatprep.subr.mxu0 0.0
  %13774 = vmatpush2.msra.mxu0 0.0
  %13775 = vmatprep.subr.mxu0 0.0
  %13776 = vmatpush2.msra.mxu0 0.0
  %13777 = vmatprep.subr.mxu0 0.0
  %13778 = vmatpush2.msra.mxu0 0.0
  %13779 = vmatprep.subr.mxu0 0.0
  %13780 = vmatpush2.msra.mxu0 0.0
  %13781 = vmatprep.subr.mxu0 0.0
  %13782 = vmatpush2.msra.mxu0 0.0
  %13783 = vmatprep.subr.mxu0 0.0
  %13784 = vmatpush2.msra.mxu0 0.0
  %13785 = vmatprep.subr.mxu0 0.0
  %13786 = vmatpush2.msra.mxu0 0.0
  %13787 = vmatprep.subr.mxu0 0.0
  %13788 = vmatpush2.msra.mxu0 0.0
  %13789 = vmatprep.mubr.f32.mxu0 0.0
  %13790 = vmatmul.mubr.f32.gmra.mxu0 %v13723
  %v13791 = vpop.f32.mrf.mxu0
  %v13792 = vadd.f32 %v13681, %v13791
  %v13793 = vpop.f32.mrf.mxu0
  %13794 = vdwg.mxu0
  %s13795 = scalar_lea.vmem %s7, 16
  %v13796 = vld [vmem:[%s13795] sm:$0xff]
  %v13797 = vlaneseq
  %v13798 = vshrl.u32 %v13797, 7
  %v13799 = vsub.s32 0, %v13798
  %v13800 = vrot.slane %v13408, %v13799
  %v13801 = vlaneseq
  %v13802 = vshrl.u32 %v13801, 7
  %v13803 = vsub.s32 0, %v13802
  %v13804 = vrot.slane %v13424, %v13803
  %v13805 = vlaneseq
  %v13806 = vshrl.u32 %v13805, 7
  %v13807 = vsub.s32 0, %v13806
  %v13808 = vrot.slane %v13443, %v13807
  %v13809 = vlaneseq
  %v13810 = vshrl.u32 %v13809, 7
  %v13811 = vsub.s32 0, %v13810
  %v13812 = vrot.slane %v13468, %v13811
  %v13813 = vlaneseq
  %v13814 = vshrl.u32 %v13813, 7
  %v13815 = vsub.s32 0, %v13814
  %v13816 = vrot.slane %v13493, %v13815
  %v13817 = vlaneseq
  %v13818 = vshrl.u32 %v13817, 7
  %v13819 = vsub.s32 0, %v13818
  %v13820 = vrot.slane %v13509, %v13819
  %v13821 = vlaneseq
  %v13822 = vshrl.u32 %v13821, 7
  %v13823 = vsub.s32 0, %v13822
  %v13824 = vrot.slane %v13528, %v13823
  %v13825 = vlaneseq
  %v13826 = vshrl.u32 %v13825, 7
  %v13827 = vsub.s32 0, %v13826
  %v13828 = vrot.slane %v13553, %v13827
  %v13829 = vsel %vm13598, %v13804, %v13800
  %v13830 = vsel %vm13600, %v13808, %v13829
  %v13831 = vsel %vm13602, %v13812, %v13830
  %v13832 = vsel %vm13604, %v13816, %v13831
  %v13833 = vsel %vm13606, %v13820, %v13832
  %v13834 = vsel %vm13608, %v13824, %v13833
  %v13835 = vsel %vm13610, %v13828, %v13834
  %v13836 = vsel %vm13303, %v13835, 0
  %13838 = vmatprep.subr.mxu0 0.0
  %13839 = vmatpush1.msra.mxu0 0.0
  %13840 = vmatprep.subr.mxu0 0.0
  %13841 = vmatpush1.msra.mxu0 0.0
  %13842 = vmatprep.subr.mxu0 0.0
  %13843 = vmatpush1.msra.mxu0 0.0
  %13844 = vmatprep.subr.mxu0 0.0
  %13845 = vmatpush1.msra.mxu0 0.0
  %13846 = vmatprep.subr.mxu0 0.0
  %13847 = vmatpush1.msra.mxu0 0.0
  %13848 = vmatprep.subr.mxu0 0.0
  %13849 = vmatpush1.msra.mxu0 0.0
  %13850 = vmatprep.subr.mxu0 0.0
  %13851 = vmatpush1.msra.mxu0 0.0
  %13852 = vmatprep.subr.mxu0 0.0
  %13853 = vmatpush1.msra.mxu0 0.0
  %13854 = vmatprep.subr.mxu0 0.0
  %13855 = vmatpush1.msra.mxu0 0.0
  %13856 = vmatprep.subr.mxu0 0.0
  %13857 = vmatpush1.msra.mxu0 0.0
  %13858 = vmatprep.subr.mxu0 0.0
  %13859 = vmatpush1.msra.mxu0 0.0
  %13860 = vmatprep.subr.mxu0 0.0
  %13861 = vmatpush1.msra.mxu0 0.0
  %13862 = vmatprep.subr.mxu0 0.0
  %13863 = vmatpush1.msra.mxu0 0.0
  %13864 = vmatprep.subr.mxu0 0.0
  %13865 = vmatpush1.msra.mxu0 0.0
  %13866 = vmatprep.subr.mxu0 0.0
  %13867 = vmatpush1.msra.mxu0 0.0
  %13868 = vmatprep.subr.mxu0 0.0
  %13869 = vmatpush1.msra.mxu0 %v13796
  %13870 = vmatprep.subr.mxu0 0.0
  %13871 = vmatpush2.msra.mxu0 0.0
  %13872 = vmatprep.subr.mxu0 0.0
  %13873 = vmatpush2.msra.mxu0 0.0
  %13874 = vmatprep.subr.mxu0 0.0
  %13875 = vmatpush2.msra.mxu0 0.0
  %13876 = vmatprep.subr.mxu0 0.0
  %13877 = vmatpush2.msra.mxu0 0.0
  %13878 = vmatprep.subr.mxu0 0.0
  %13879 = vmatpush2.msra.mxu0 0.0
  %13880 = vmatprep.subr.mxu0 0.0
  %13881 = vmatpush2.msra.mxu0 0.0
  %13882 = vmatprep.subr.mxu0 0.0
  %13883 = vmatpush2.msra.mxu0 0.0
  %13884 = vmatprep.subr.mxu0 0.0
  %13885 = vmatpush2.msra.mxu0 0.0
  %13886 = vmatprep.subr.mxu0 0.0
  %13887 = vmatpush2.msra.mxu0 0.0
  %13888 = vmatprep.subr.mxu0 0.0
  %13889 = vmatpush2.msra.mxu0 0.0
  %13890 = vmatprep.subr.mxu0 0.0
  %13891 = vmatpush2.msra.mxu0 0.0
  %13892 = vmatprep.subr.mxu0 0.0
  %13893 = vmatpush2.msra.mxu0 0.0
  %13894 = vmatprep.subr.mxu0 0.0
  %13895 = vmatpush2.msra.mxu0 0.0
  %13896 = vmatprep.subr.mxu0 0.0
  %13897 = vmatpush2.msra.mxu0 0.0
  %13898 = vmatprep.subr.mxu0 0.0
  %13899 = vmatpush2.msra.mxu0 0.0
  %13900 = vmatprep.subr.mxu0 0.0
  %13901 = vmatpush2.msra.mxu0 0.0
  %13902 = vmatprep.mubr.f32.mxu0 0.0
  %13903 = vmatmul.mubr.f32.gmra.mxu0 %v13836
  %v13904 = vpop.f32.mrf.mxu0
  %v13905 = vadd.f32 0.0, %v13904
  %v13906 = vpop.f32.mrf.mxu0
  %13907 = vdwg.mxu0
  %v13908 = vadd.f32 %v13792, %v13905
  %s13909 = scalar_lea.vmem %s7, 24
  %v13910 = vld [vmem:[%s13909] sm:$0xff]
  %v13911 = vlaneseq
  %v13912 = vshrl.u32 %v13911, 7
  %v13913 = vsub.s32 1, %v13912
  %v13914 = vrot.slane %v13408, %v13913
  %v13915 = vlaneseq
  %v13916 = vshrl.u32 %v13915, 7
  %v13917 = vsub.s32 1, %v13916
  %v13918 = vrot.slane %v13424, %v13917
  %v13919 = vlaneseq
  %v13920 = vshrl.u32 %v13919, 7
  %v13921 = vsub.s32 1, %v13920
  %v13922 = vrot.slane %v13443, %v13921
  %v13923 = vlaneseq
  %v13924 = vshrl.u32 %v13923, 7
  %v13925 = vsub.s32 1, %v13924
  %v13926 = vrot.slane %v13468, %v13925
  %v13927 = vlaneseq
  %v13928 = vshrl.u32 %v13927, 7
  %v13929 = vsub.s32 1, %v13928
  %v13930 = vrot.slane %v13493, %v13929
  %v13931 = vlaneseq
  %v13932 = vshrl.u32 %v13931, 7
  %v13933 = vsub.s32 1, %v13932
  %v13934 = vrot.slane %v13509, %v13933
  %v13935 = vlaneseq
  %v13936 = vshrl.u32 %v13935, 7
  %v13937 = vsub.s32 1, %v13936
  %v13938 = vrot.slane %v13528, %v13937
  %v13939 = vlaneseq
  %v13940 = vshrl.u32 %v13939, 7
  %v13941 = vsub.s32 1, %v13940
  %v13942 = vrot.slane %v13553, %v13941
  %v13943 = vsel %vm13598, %v13918, %v13914
  %v13944 = vsel %vm13600, %v13922, %v13943
  %v13945 = vsel %vm13602, %v13926, %v13944
  %v13946 = vsel %vm13604, %v13930, %v13945
  %v13947 = vsel %vm13606, %v13934, %v13946
  %v13948 = vsel %vm13608, %v13938, %v13947
  %v13949 = vsel %vm13610, %v13942, %v13948
  %v13950 = vsel %vm13303, %v13949, 0
  %13952 = vmatprep.subr.mxu0 0.0
  %13953 = vmatpush1.msra.mxu0 0.0
  %13954 = vmatprep.subr.mxu0 0.0
  %13955 = vmatpush1.msra.mxu0 0.0
  %13956 = vmatprep.subr.mxu0 0.0
  %13957 = vmatpush1.msra.mxu0 0.0
  %13958 = vmatprep.subr.mxu0 0.0
  %13959 = vmatpush1.msra.mxu0 0.0
  %13960 = vmatprep.subr.mxu0 0.0
  %13961 = vmatpush1.msra.mxu0 0.0
  %13962 = vmatprep.subr.mxu0 0.0
  %13963 = vmatpush1.msra.mxu0 0.0
  %13964 = vmatprep.subr.mxu0 0.0
  %13965 = vmatpush1.msra.mxu0 0.0
  %13966 = vmatprep.subr.mxu0 0.0
  %13967 = vmatpush1.msra.mxu0 0.0
  %13968 = vmatprep.subr.mxu0 0.0
  %13969 = vmatpush1.msra.mxu0 0.0
  %13970 = vmatprep.subr.mxu0 0.0
  %13971 = vmatpush1.msra.mxu0 0.0
  %13972 = vmatprep.subr.mxu0 0.0
  %13973 = vmatpush1.msra.mxu0 0.0
  %13974 = vmatprep.subr.mxu0 0.0
  %13975 = vmatpush1.msra.mxu0 0.0
  %13976 = vmatprep.subr.mxu0 0.0
  %13977 = vmatpush1.msra.mxu0 0.0
  %13978 = vmatprep.subr.mxu0 0.0
  %13979 = vmatpush1.msra.mxu0 0.0
  %13980 = vmatprep.subr.mxu0 0.0
  %13981 = vmatpush1.msra.mxu0 0.0
  %13982 = vmatprep.subr.mxu0 0.0
  %13983 = vmatpush1.msra.mxu0 %v13910
  %13984 = vmatprep.subr.mxu0 0.0
  %13985 = vmatpush2.msra.mxu0 0.0
  %13986 = vmatprep.subr.mxu0 0.0
  %13987 = vmatpush2.msra.mxu0 0.0
  %13988 = vmatprep.subr.mxu0 0.0
  %13989 = vmatpush2.msra.mxu0 0.0
  %13990 = vmatprep.subr.mxu0 0.0
  %13991 = vmatpush2.msra.mxu0 0.0
  %13992 = vmatprep.subr.mxu0 0.0
  %13993 = vmatpush2.msra.mxu0 0.0
  %13994 = vmatprep.subr.mxu0 0.0
  %13995 = vmatpush2.msra.mxu0 0.0
  %13996 = vmatprep.subr.mxu0 0.0
  %13997 = vmatpush2.msra.mxu0 0.0
  %13998 = vmatprep.subr.mxu0 0.0
  %13999 = vmatpush2.msra.mxu0 0.0
  %14000 = vmatprep.subr.mxu0 0.0
  %14001 = vmatpush2.msra.mxu0 0.0
  %14002 = vmatprep.subr.mxu0 0.0
  %14003 = vmatpush2.msra.mxu0 0.0
  %14004 = vmatprep.subr.mxu0 0.0
  %14005 = vmatpush2.msra.mxu0 0.0
  %14006 = vmatprep.subr.mxu0 0.0
  %14007 = vmatpush2.msra.mxu0 0.0
  %14008 = vmatprep.subr.mxu0 0.0
  %14009 = vmatpush2.msra.mxu0 0.0
  %14010 = vmatprep.subr.mxu0 0.0
  %14011 = vmatpush2.msra.mxu0 0.0
  %14012 = vmatprep.subr.mxu0 0.0
  %14013 = vmatpush2.msra.mxu0 0.0
  %14014 = vmatprep.subr.mxu0 0.0
  %14015 = vmatpush2.msra.mxu0 0.0
  %14016 = vmatprep.mubr.f32.mxu0 0.0
  %14017 = vmatmul.mubr.f32.gmra.mxu0 %v13950
  %v14018 = vpop.f32.mrf.mxu0
  %v14019 = vadd.f32 0.0, %v14018
  %v14020 = vpop.f32.mrf.mxu0
  %14021 = vdwg.mxu0
  %v14022 = vadd.f32 %v13908, %v14019
  %s14023 = scalar_lea.vmem %s7, 32
  %v14024 = vld [vmem:[%s14023] sm:$0xff]
  %v14025 = vlaneseq
  %v14026 = vshrl.u32 %v14025, 7
  %v14027 = vsub.s32 0, %v14026
  %v14028 = vrot.slane %v13407, %v14027
  %v14029 = vlaneseq
  %v14030 = vshrl.u32 %v14029, 7
  %v14031 = vsub.s32 0, %v14030
  %v14032 = vrot.slane %v13426, %v14031
  %v14033 = vlaneseq
  %v14034 = vshrl.u32 %v14033, 7
  %v14035 = vsub.s32 0, %v14034
  %v14036 = vrot.slane %v13451, %v14035
  %v14037 = vlaneseq
  %v14038 = vshrl.u32 %v14037, 7
  %v14039 = vsub.s32 0, %v14038
  %v14040 = vrot.slane %v13476, %v14039
  %v14041 = vlaneseq
  %v14042 = vshrl.u32 %v14041, 7
  %v14043 = vsub.s32 0, %v14042
  %v14044 = vrot.slane %v13492, %v14043
  %v14045 = vlaneseq
  %v14046 = vshrl.u32 %v14045, 7
  %v14047 = vsub.s32 0, %v14046
  %v14048 = vrot.slane %v13511, %v14047
  %v14049 = vlaneseq
  %v14050 = vshrl.u32 %v14049, 7
  %v14051 = vsub.s32 0, %v14050
  %v14052 = vrot.slane %v13536, %v14051
  %v14053 = vlaneseq
  %v14054 = vshrl.u32 %v14053, 7
  %v14055 = vsub.s32 0, %v14054
  %v14056 = vrot.slane %v13561, %v14055
  %v14057 = vsel %vm13598, %v14032, %v14028
  %v14058 = vsel %vm13600, %v14036, %v14057
  %v14059 = vsel %vm13602, %v14040, %v14058
  %v14060 = vsel %vm13604, %v14044, %v14059
  %v14061 = vsel %vm13606, %v14048, %v14060
  %v14062 = vsel %vm13608, %v14052, %v14061
  %v14063 = vsel %vm13610, %v14056, %v14062
  %v14064 = vsel %vm13303, %v14063, 0
  %14066 = vmatprep.subr.mxu0 0.0
  %14067 = vmatpush1.msra.mxu0 0.0
  %14068 = vmatprep.subr.mxu0 0.0
  %14069 = vmatpush1.msra.mxu0 0.0
  %14070 = vmatprep.subr.mxu0 0.0
  %14071 = vmatpush1.msra.mxu0 0.0
  %14072 = vmatprep.subr.mxu0 0.0
  %14073 = vmatpush1.msra.mxu0 0.0
  %14074 = vmatprep.subr.mxu0 0.0
  %14075 = vmatpush1.msra.mxu0 0.0
  %14076 = vmatprep.subr.mxu0 0.0
  %14077 = vmatpush1.msra.mxu0 0.0
  %14078 = vmatprep.subr.mxu0 0.0
  %14079 = vmatpush1.msra.mxu0 0.0
  %14080 = vmatprep.subr.mxu0 0.0
  %14081 = vmatpush1.msra.mxu0 0.0
  %14082 = vmatprep.subr.mxu0 0.0
  %14083 = vmatpush1.msra.mxu0 0.0
  %14084 = vmatprep.subr.mxu0 0.0
  %14085 = vmatpush1.msra.mxu0 0.0
  %14086 = vmatprep.subr.mxu0 0.0
  %14087 = vmatpush1.msra.mxu0 0.0
  %14088 = vmatprep.subr.mxu0 0.0
  %14089 = vmatpush1.msra.mxu0 0.0
  %14090 = vmatprep.subr.mxu0 0.0
  %14091 = vmatpush1.msra.mxu0 0.0
  %14092 = vmatprep.subr.mxu0 0.0
  %14093 = vmatpush1.msra.mxu0 0.0
  %14094 = vmatprep.subr.mxu0 0.0
  %14095 = vmatpush1.msra.mxu0 0.0
  %14096 = vmatprep.subr.mxu0 0.0
  %14097 = vmatpush1.msra.mxu0 %v14024
  %14098 = vmatprep.subr.mxu0 0.0
  %14099 = vmatpush2.msra.mxu0 0.0
  %14100 = vmatprep.subr.mxu0 0.0
  %14101 = vmatpush2.msra.mxu0 0.0
  %14102 = vmatprep.subr.mxu0 0.0
  %14103 = vmatpush2.msra.mxu0 0.0
  %14104 = vmatprep.subr.mxu0 0.0
  %14105 = vmatpush2.msra.mxu0 0.0
  %14106 = vmatprep.subr.mxu0 0.0
  %14107 = vmatpush2.msra.mxu0 0.0
  %14108 = vmatprep.subr.mxu0 0.0
  %14109 = vmatpush2.msra.mxu0 0.0
  %14110 = vmatprep.subr.mxu0 0.0
  %14111 = vmatpush2.msra.mxu0 0.0
  %14112 = vmatprep.subr.mxu0 0.0
  %14113 = vmatpush2.msra.mxu0 0.0
  %14114 = vmatprep.subr.mxu0 0.0
  %14115 = vmatpush2.msra.mxu0 0.0
  %14116 = vmatprep.subr.mxu0 0.0
  %14117 = vmatpush2.msra.mxu0 0.0
  %14118 = vmatprep.subr.mxu0 0.0
  %14119 = vmatpush2.msra.mxu0 0.0
  %14120 = vmatprep.subr.mxu0 0.0
  %14121 = vmatpush2.msra.mxu0 0.0
  %14122 = vmatprep.subr.mxu0 0.0
  %14123 = vmatpush2.msra.mxu0 0.0
  %14124 = vmatprep.subr.mxu0 0.0
  %14125 = vmatpush2.msra.mxu0 0.0
  %14126 = vmatprep.subr.mxu0 0.0
  %14127 = vmatpush2.msra.mxu0 0.0
  %14128 = vmatprep.subr.mxu0 0.0
  %14129 = vmatpush2.msra.mxu0 0.0
  %14130 = vmatprep.mubr.f32.mxu0 0.0
  %14131 = vmatmul.mubr.f32.gmra.mxu0 %v14064
  %v14132 = vpop.f32.mrf.mxu0
  %v14133 = vadd.f32 0.0, %v14132
  %v14134 = vpop.f32.mrf.mxu0
  %14135 = vdwg.mxu0
  %v14136 = vadd.f32 %v14022, %v14133
  %s14137 = scalar_lea.vmem %s7, 40
  %v14138 = vld [vmem:[%s14137] sm:$0xff]
  %v14139 = vlaneseq
  %v14140 = vshrl.u32 %v14139, 7
  %v14141 = vsub.s32 1, %v14140
  %v14142 = vrot.slane %v13407, %v14141
  %v14143 = vlaneseq
  %v14144 = vshrl.u32 %v14143, 7
  %v14145 = vsub.s32 1, %v14144
  %v14146 = vrot.slane %v13426, %v14145
  %v14147 = vlaneseq
  %v14148 = vshrl.u32 %v14147, 7
  %v14149 = vsub.s32 1, %v14148
  %v14150 = vrot.slane %v13451, %v14149
  %v14151 = vlaneseq
  %v14152 = vshrl.u32 %v14151, 7
  %v14153 = vsub.s32 1, %v14152
  %v14154 = vrot.slane %v13476, %v14153
  %v14155 = vlaneseq
  %v14156 = vshrl.u32 %v14155, 7
  %v14157 = vsub.s32 1, %v14156
  %v14158 = vrot.slane %v13492, %v14157
  %v14159 = vlaneseq
  %v14160 = vshrl.u32 %v14159, 7
  %v14161 = vsub.s32 1, %v14160
  %v14162 = vrot.slane %v13511, %v14161
  %v14163 = vlaneseq
  %v14164 = vshrl.u32 %v14163, 7
  %v14165 = vsub.s32 1, %v14164
  %v14166 = vrot.slane %v13536, %v14165
  %v14167 = vlaneseq
  %v14168 = vshrl.u32 %v14167, 7
  %v14169 = vsub.s32 1, %v14168
  %v14170 = vrot.slane %v13561, %v14169
  %v14171 = vsel %vm13598, %v14146, %v14142
  %v14172 = vsel %vm13600, %v14150, %v14171
  %v14173 = vsel %vm13602, %v14154, %v14172
  %v14174 = vsel %vm13604, %v14158, %v14173
  %v14175 = vsel %vm13606, %v14162, %v14174
  %v14176 = vsel %vm13608, %v14166, %v14175
  %v14177 = vsel %vm13610, %v14170, %v14176
  %v14178 = vsel %vm13303, %v14177, 0
  %14180 = vmatprep.subr.mxu0 0.0
  %14181 = vmatpush1.msra.mxu0 0.0
  %14182 = vmatprep.subr.mxu0 0.0
  %14183 = vmatpush1.msra.mxu0 0.0
  %14184 = vmatprep.subr.mxu0 0.0
  %14185 = vmatpush1.msra.mxu0 0.0
  %14186 = vmatprep.subr.mxu0 0.0
  %14187 = vmatpush1.msra.mxu0 0.0
  %14188 = vmatprep.subr.mxu0 0.0
  %14189 = vmatpush1.msra.mxu0 0.0
  %14190 = vmatprep.subr.mxu0 0.0
  %14191 = vmatpush1.msra.mxu0 0.0
  %14192 = vmatprep.subr.mxu0 0.0
  %14193 = vmatpush1.msra.mxu0 0.0
  %14194 = vmatprep.subr.mxu0 0.0
  %14195 = vmatpush1.msra.mxu0 0.0
  %14196 = vmatprep.subr.mxu0 0.0
  %14197 = vmatpush1.msra.mxu0 0.0
  %14198 = vmatprep.subr.mxu0 0.0
  %14199 = vmatpush1.msra.mxu0 0.0
  %14200 = vmatprep.subr.mxu0 0.0
  %14201 = vmatpush1.msra.mxu0 0.0
  %14202 = vmatprep.subr.mxu0 0.0
  %14203 = vmatpush1.msra.mxu0 0.0
  %14204 = vmatprep.subr.mxu0 0.0
  %14205 = vmatpush1.msra.mxu0 0.0
  %14206 = vmatprep.subr.mxu0 0.0
  %14207 = vmatpush1.msra.mxu0 0.0
  %14208 = vmatprep.subr.mxu0 0.0
  %14209 = vmatpush1.msra.mxu0 0.0
  %14210 = vmatprep.subr.mxu0 0.0
  %14211 = vmatpush1.msra.mxu0 %v14138
  %14212 = vmatprep.subr.mxu0 0.0
  %14213 = vmatpush2.msra.mxu0 0.0
  %14214 = vmatprep.subr.mxu0 0.0
  %14215 = vmatpush2.msra.mxu0 0.0
  %14216 = vmatprep.subr.mxu0 0.0
  %14217 = vmatpush2.msra.mxu0 0.0
  %14218 = vmatprep.subr.mxu0 0.0
  %14219 = vmatpush2.msra.mxu0 0.0
  %14220 = vmatprep.subr.mxu0 0.0
  %14221 = vmatpush2.msra.mxu0 0.0
  %14222 = vmatprep.subr.mxu0 0.0
  %14223 = vmatpush2.msra.mxu0 0.0
  %14224 = vmatprep.subr.mxu0 0.0
  %14225 = vmatpush2.msra.mxu0 0.0
  %14226 = vmatprep.subr.mxu0 0.0
  %14227 = vmatpush2.msra.mxu0 0.0
  %14228 = vmatprep.subr.mxu0 0.0
  %14229 = vmatpush2.msra.mxu0 0.0
  %14230 = vmatprep.subr.mxu0 0.0
  %14231 = vmatpush2.msra.mxu0 0.0
  %14232 = vmatprep.subr.mxu0 0.0
  %14233 = vmatpush2.msra.mxu0 0.0
  %14234 = vmatprep.subr.mxu0 0.0
  %14235 = vmatpush2.msra.mxu0 0.0
  %14236 = vmatprep.subr.mxu0 0.0
  %14237 = vmatpush2.msra.mxu0 0.0
  %14238 = vmatprep.subr.mxu0 0.0
  %14239 = vmatpush2.msra.mxu0 0.0
  %14240 = vmatprep.subr.mxu0 0.0
  %14241 = vmatpush2.msra.mxu0 0.0
  %14242 = vmatprep.subr.mxu0 0.0
  %14243 = vmatpush2.msra.mxu0 0.0
  %14244 = vmatprep.mubr.f32.mxu0 0.0
  %14245 = vmatmul.mubr.f32.gmra.mxu0 %v14178
  %v14246 = vpop.f32.mrf.mxu0
  %v14247 = vadd.f32 0.0, %v14246
  %v14248 = vpop.f32.mrf.mxu0
  %14249 = vdwg.mxu0
  %v14250 = vadd.f32 %v14136, %v14247
  %s14251 = scalar_lea.vmem %s7, 48
  %v14252 = vld [vmem:[%s14251] sm:$0xff]
  %v14253 = vlaneseq
  %v14254 = vshrl.u32 %v14253, 7
  %v14255 = vsub.s32 0, %v14254
  %v14256 = vrot.slane %v13409, %v14255
  %v14257 = vlaneseq
  %v14258 = vshrl.u32 %v14257, 7
  %v14259 = vsub.s32 0, %v14258
  %v14260 = vrot.slane %v13434, %v14259
  %v14261 = vlaneseq
  %v14262 = vshrl.u32 %v14261, 7
  %v14263 = vsub.s32 0, %v14262
  %v14264 = vrot.slane %v13459, %v14263
  %v14265 = vlaneseq
  %v14266 = vshrl.u32 %v14265, 7
  %v14267 = vsub.s32 0, %v14266
  %v14268 = vrot.slane %v13475, %v14267
  %v14269 = vlaneseq
  %v14270 = vshrl.u32 %v14269, 7
  %v14271 = vsub.s32 0, %v14270
  %v14272 = vrot.slane %v13494, %v14271
  %v14273 = vlaneseq
  %v14274 = vshrl.u32 %v14273, 7
  %v14275 = vsub.s32 0, %v14274
  %v14276 = vrot.slane %v13519, %v14275
  %v14277 = vlaneseq
  %v14278 = vshrl.u32 %v14277, 7
  %v14279 = vsub.s32 0, %v14278
  %v14280 = vrot.slane %v13544, %v14279
  %v14281 = vlaneseq
  %v14282 = vshrl.u32 %v14281, 7
  %v14283 = vsub.s32 0, %v14282
  %v14284 = vrot.slane %v13560, %v14283
  %v14285 = vsel %vm13598, %v14260, %v14256
  %v14286 = vsel %vm13600, %v14264, %v14285
  %v14287 = vsel %vm13602, %v14268, %v14286
  %v14288 = vsel %vm13604, %v14272, %v14287
  %v14289 = vsel %vm13606, %v14276, %v14288
  %v14290 = vsel %vm13608, %v14280, %v14289
  %v14291 = vsel %vm13610, %v14284, %v14290
  %v14292 = vsel %vm13303, %v14291, 0
  %14294 = vmatprep.subr.mxu0 0.0
  %14295 = vmatpush1.msra.mxu0 0.0
  %14296 = vmatprep.subr.mxu0 0.0
  %14297 = vmatpush1.msra.mxu0 0.0
  %14298 = vmatprep.subr.mxu0 0.0
  %14299 = vmatpush1.msra.mxu0 0.0
  %14300 = vmatprep.subr.mxu0 0.0
  %14301 = vmatpush1.msra.mxu0 0.0
  %14302 = vmatprep.subr.mxu0 0.0
  %14303 = vmatpush1.msra.mxu0 0.0
  %14304 = vmatprep.subr.mxu0 0.0
  %14305 = vmatpush1.msra.mxu0 0.0
  %14306 = vmatprep.subr.mxu0 0.0
  %14307 = vmatpush1.msra.mxu0 0.0
  %14308 = vmatprep.subr.mxu0 0.0
  %14309 = vmatpush1.msra.mxu0 0.0
  %14310 = vmatprep.subr.mxu0 0.0
  %14311 = vmatpush1.msra.mxu0 0.0
  %14312 = vmatprep.subr.mxu0 0.0
  %14313 = vmatpush1.msra.mxu0 0.0
  %14314 = vmatprep.subr.mxu0 0.0
  %14315 = vmatpush1.msra.mxu0 0.0
  %14316 = vmatprep.subr.mxu0 0.0
  %14317 = vmatpush1.msra.mxu0 0.0
  %14318 = vmatprep.subr.mxu0 0.0
  %14319 = vmatpush1.msra.mxu0 0.0
  %14320 = vmatprep.subr.mxu0 0.0
  %14321 = vmatpush1.msra.mxu0 0.0
  %14322 = vmatprep.subr.mxu0 0.0
  %14323 = vmatpush1.msra.mxu0 0.0
  %14324 = vmatprep.subr.mxu0 0.0
  %14325 = vmatpush1.msra.mxu0 %v14252
  %14326 = vmatprep.subr.mxu0 0.0
  %14327 = vmatpush2.msra.mxu0 0.0
  %14328 = vmatprep.subr.mxu0 0.0
  %14329 = vmatpush2.msra.mxu0 0.0
  %14330 = vmatprep.subr.mxu0 0.0
  %14331 = vmatpush2.msra.mxu0 0.0
  %14332 = vmatprep.subr.mxu0 0.0
  %14333 = vmatpush2.msra.mxu0 0.0
  %14334 = vmatprep.subr.mxu0 0.0
  %14335 = vmatpush2.msra.mxu0 0.0
  %14336 = vmatprep.subr.mxu0 0.0
  %14337 = vmatpush2.msra.mxu0 0.0
  %14338 = vmatprep.subr.mxu0 0.0
  %14339 = vmatpush2.msra.mxu0 0.0
  %14340 = vmatprep.subr.mxu0 0.0
  %14341 = vmatpush2.msra.mxu0 0.0
  %14342 = vmatprep.subr.mxu0 0.0
  %14343 = vmatpush2.msra.mxu0 0.0
  %14344 = vmatprep.subr.mxu0 0.0
  %14345 = vmatpush2.msra.mxu0 0.0
  %14346 = vmatprep.subr.mxu0 0.0
  %14347 = vmatpush2.msra.mxu0 0.0
  %14348 = vmatprep.subr.mxu0 0.0
  %14349 = vmatpush2.msra.mxu0 0.0
  %14350 = vmatprep.subr.mxu0 0.0
  %14351 = vmatpush2.msra.mxu0 0.0
  %14352 = vmatprep.subr.mxu0 0.0
  %14353 = vmatpush2.msra.mxu0 0.0
  %14354 = vmatprep.subr.mxu0 0.0
  %14355 = vmatpush2.msra.mxu0 0.0
  %14356 = vmatprep.subr.mxu0 0.0
  %14357 = vmatpush2.msra.mxu0 0.0
  %14358 = vmatprep.mubr.f32.mxu0 0.0
  %14359 = vmatmul.mubr.f32.gmra.mxu0 %v14292
  %v14360 = vpop.f32.mrf.mxu0
  %v14361 = vadd.f32 0.0, %v14360
  %v14362 = vpop.f32.mrf.mxu0
  %14363 = vdwg.mxu0
  %v14364 = vadd.f32 %v14250, %v14361
  %s14365 = scalar_lea.vmem %s7, 56
  %v14366 = vld [vmem:[%s14365] sm:$0xff]
  %v14367 = vlaneseq
  %v14368 = vshrl.u32 %v14367, 7
  %v14369 = vsub.s32 1, %v14368
  %v14370 = vrot.slane %v13409, %v14369
  %v14371 = vlaneseq
  %v14372 = vshrl.u32 %v14371, 7
  %v14373 = vsub.s32 1, %v14372
  %v14374 = vrot.slane %v13434, %v14373
  %v14375 = vlaneseq
  %v14376 = vshrl.u32 %v14375, 7
  %v14377 = vsub.s32 1, %v14376
  %v14378 = vrot.slane %v13459, %v14377
  %v14379 = vlaneseq
  %v14380 = vshrl.u32 %v14379, 7
  %v14381 = vsub.s32 1, %v14380
  %v14382 = vrot.slane %v13475, %v14381
  %v14383 = vlaneseq
  %v14384 = vshrl.u32 %v14383, 7
  %v14385 = vsub.s32 1, %v14384
  %v14386 = vrot.slane %v13494, %v14385
  %v14387 = vlaneseq
  %v14388 = vshrl.u32 %v14387, 7
  %v14389 = vsub.s32 1, %v14388
  %v14390 = vrot.slane %v13519, %v14389
  %v14391 = vlaneseq
  %v14392 = vshrl.u32 %v14391, 7
  %v14393 = vsub.s32 1, %v14392
  %v14394 = vrot.slane %v13544, %v14393
  %v14395 = vlaneseq
  %v14396 = vshrl.u32 %v14395, 7
  %v14397 = vsub.s32 1, %v14396
  %v14398 = vrot.slane %v13560, %v14397
  %v14399 = vsel %vm13598, %v14374, %v14370
  %v14400 = vsel %vm13600, %v14378, %v14399
  %v14401 = vsel %vm13602, %v14382, %v14400
  %v14402 = vsel %vm13604, %v14386, %v14401
  %v14403 = vsel %vm13606, %v14390, %v14402
  %v14404 = vsel %vm13608, %v14394, %v14403
  %v14405 = vsel %vm13610, %v14398, %v14404
  %v14406 = vsel %vm13303, %v14405, 0
  %14408 = vmatprep.subr.mxu0 0.0
  %14409 = vmatpush1.msra.mxu0 0.0
  %14410 = vmatprep.subr.mxu0 0.0
  %14411 = vmatpush1.msra.mxu0 0.0
  %14412 = vmatprep.subr.mxu0 0.0
  %14413 = vmatpush1.msra.mxu0 0.0
  %14414 = vmatprep.subr.mxu0 0.0
  %14415 = vmatpush1.msra.mxu0 0.0
  %14416 = vmatprep.subr.mxu0 0.0
  %14417 = vmatpush1.msra.mxu0 0.0
  %14418 = vmatprep.subr.mxu0 0.0
  %14419 = vmatpush1.msra.mxu0 0.0
  %14420 = vmatprep.subr.mxu0 0.0
  %14421 = vmatpush1.msra.mxu0 0.0
  %14422 = vmatprep.subr.mxu0 0.0
  %14423 = vmatpush1.msra.mxu0 0.0
  %14424 = vmatprep.subr.mxu0 0.0
  %14425 = vmatpush1.msra.mxu0 0.0
  %14426 = vmatprep.subr.mxu0 0.0
  %14427 = vmatpush1.msra.mxu0 0.0
  %14428 = vmatprep.subr.mxu0 0.0
  %14429 = vmatpush1.msra.mxu0 0.0
  %14430 = vmatprep.subr.mxu0 0.0
  %14431 = vmatpush1.msra.mxu0 0.0
  %14432 = vmatprep.subr.mxu0 0.0
  %14433 = vmatpush1.msra.mxu0 0.0
  %14434 = vmatprep.subr.mxu0 0.0
  %14435 = vmatpush1.msra.mxu0 0.0
  %14436 = vmatprep.subr.mxu0 0.0
  %14437 = vmatpush1.msra.mxu0 0.0
  %14438 = vmatprep.subr.mxu0 0.0
  %14439 = vmatpush1.msra.mxu0 %v14366
  %14440 = vmatprep.subr.mxu0 0.0
  %14441 = vmatpush2.msra.mxu0 0.0
  %14442 = vmatprep.subr.mxu0 0.0
  %14443 = vmatpush2.msra.mxu0 0.0
  %14444 = vmatprep.subr.mxu0 0.0
  %14445 = vmatpush2.msra.mxu0 0.0
  %14446 = vmatprep.subr.mxu0 0.0
  %14447 = vmatpush2.msra.mxu0 0.0
  %14448 = vmatprep.subr.mxu0 0.0
  %14449 = vmatpush2.msra.mxu0 0.0
  %14450 = vmatprep.subr.mxu0 0.0
  %14451 = vmatpush2.msra.mxu0 0.0
  %14452 = vmatprep.subr.mxu0 0.0
  %14453 = vmatpush2.msra.mxu0 0.0
  %14454 = vmatprep.subr.mxu0 0.0
  %14455 = vmatpush2.msra.mxu0 0.0
  %14456 = vmatprep.subr.mxu0 0.0
  %14457 = vmatpush2.msra.mxu0 0.0
  %14458 = vmatprep.subr.mxu0 0.0
  %14459 = vmatpush2.msra.mxu0 0.0
  %14460 = vmatprep.subr.mxu0 0.0
  %14461 = vmatpush2.msra.mxu0 0.0
  %14462 = vmatprep.subr.mxu0 0.0
  %14463 = vmatpush2.msra.mxu0 0.0
  %14464 = vmatprep.subr.mxu0 0.0
  %14465 = vmatpush2.msra.mxu0 0.0
  %14466 = vmatprep.subr.mxu0 0.0
  %14467 = vmatpush2.msra.mxu0 0.0
  %14468 = vmatprep.subr.mxu0 0.0
  %14469 = vmatpush2.msra.mxu0 0.0
  %14470 = vmatprep.subr.mxu0 0.0
  %14471 = vmatpush2.msra.mxu0 0.0
  %14472 = vmatprep.mubr.f32.mxu0 0.0
  %14473 = vmatmul.mubr.f32.gmra.mxu0 %v14406
  %v14474 = vpop.f32.mrf.mxu0
  %v14475 = vadd.f32 0.0, %v14474
  %v14476 = vpop.f32.mrf.mxu0
  %14477 = vdwg.mxu0
  %v14478 = vadd.f32 %v14364, %v14475
  %s14479 = scalar_lea.vmem %s7, 64
  %v14480 = vld [vmem:[%s14479] sm:$0xff]
  %v14481 = vlaneseq
  %v14482 = vshrl.u32 %v14481, 7
  %v14483 = vsub.s32 0, %v14482
  %v14484 = vrot.slane %v13417, %v14483
  %v14485 = vlaneseq
  %v14486 = vshrl.u32 %v14485, 7
  %v14487 = vsub.s32 0, %v14486
  %v14488 = vrot.slane %v13442, %v14487
  %v14489 = vlaneseq
  %v14490 = vshrl.u32 %v14489, 7
  %v14491 = vsub.s32 0, %v14490
  %v14492 = vrot.slane %v13458, %v14491
  %v14493 = vlaneseq
  %v14494 = vshrl.u32 %v14493, 7
  %v14495 = vsub.s32 0, %v14494
  %v14496 = vrot.slane %v13477, %v14495
  %v14497 = vlaneseq
  %v14498 = vshrl.u32 %v14497, 7
  %v14499 = vsub.s32 0, %v14498
  %v14500 = vrot.slane %v13502, %v14499
  %v14501 = vlaneseq
  %v14502 = vshrl.u32 %v14501, 7
  %v14503 = vsub.s32 0, %v14502
  %v14504 = vrot.slane %v13527, %v14503
  %v14505 = vlaneseq
  %v14506 = vshrl.u32 %v14505, 7
  %v14507 = vsub.s32 0, %v14506
  %v14508 = vrot.slane %v13543, %v14507
  %v14509 = vlaneseq
  %v14510 = vshrl.u32 %v14509, 7
  %v14511 = vsub.s32 0, %v14510
  %v14512 = vrot.slane %v13562, %v14511
  %v14513 = vsel %vm13598, %v14488, %v14484
  %v14514 = vsel %vm13600, %v14492, %v14513
  %v14515 = vsel %vm13602, %v14496, %v14514
  %v14516 = vsel %vm13604, %v14500, %v14515
  %v14517 = vsel %vm13606, %v14504, %v14516
  %v14518 = vsel %vm13608, %v14508, %v14517
  %v14519 = vsel %vm13610, %v14512, %v14518
  %v14520 = vsel %vm13303, %v14519, 0
  %14522 = vmatprep.subr.mxu0 0.0
  %14523 = vmatpush1.msra.mxu0 0.0
  %14524 = vmatprep.subr.mxu0 0.0
  %14525 = vmatpush1.msra.mxu0 0.0
  %14526 = vmatprep.subr.mxu0 0.0
  %14527 = vmatpush1.msra.mxu0 0.0
  %14528 = vmatprep.subr.mxu0 0.0
  %14529 = vmatpush1.msra.mxu0 0.0
  %14530 = vmatprep.subr.mxu0 0.0
  %14531 = vmatpush1.msra.mxu0 0.0
  %14532 = vmatprep.subr.mxu0 0.0
  %14533 = vmatpush1.msra.mxu0 0.0
  %14534 = vmatprep.subr.mxu0 0.0
  %14535 = vmatpush1.msra.mxu0 0.0
  %14536 = vmatprep.subr.mxu0 0.0
  %14537 = vmatpush1.msra.mxu0 0.0
  %14538 = vmatprep.subr.mxu0 0.0
  %14539 = vmatpush1.msra.mxu0 0.0
  %14540 = vmatprep.subr.mxu0 0.0
  %14541 = vmatpush1.msra.mxu0 0.0
  %14542 = vmatprep.subr.mxu0 0.0
  %14543 = vmatpush1.msra.mxu0 0.0
  %14544 = vmatprep.subr.mxu0 0.0
  %14545 = vmatpush1.msra.mxu0 0.0
  %14546 = vmatprep.subr.mxu0 0.0
  %14547 = vmatpush1.msra.mxu0 0.0
  %14548 = vmatprep.subr.mxu0 0.0
  %14549 = vmatpush1.msra.mxu0 0.0
  %14550 = vmatprep.subr.mxu0 0.0
  %14551 = vmatpush1.msra.mxu0 0.0
  %14552 = vmatprep.subr.mxu0 0.0
  %14553 = vmatpush1.msra.mxu0 %v14480
  %14554 = vmatprep.subr.mxu0 0.0
  %14555 = vmatpush2.msra.mxu0 0.0
  %14556 = vmatprep.subr.mxu0 0.0
  %14557 = vmatpush2.msra.mxu0 0.0
  %14558 = vmatprep.subr.mxu0 0.0
  %14559 = vmatpush2.msra.mxu0 0.0
  %14560 = vmatprep.subr.mxu0 0.0
  %14561 = vmatpush2.msra.mxu0 0.0
  %14562 = vmatprep.subr.mxu0 0.0
  %14563 = vmatpush2.msra.mxu0 0.0
  %14564 = vmatprep.subr.mxu0 0.0
  %14565 = vmatpush2.msra.mxu0 0.0
  %14566 = vmatprep.subr.mxu0 0.0
  %14567 = vmatpush2.msra.mxu0 0.0
  %14568 = vmatprep.subr.mxu0 0.0
  %14569 = vmatpush2.msra.mxu0 0.0
  %14570 = vmatprep.subr.mxu0 0.0
  %14571 = vmatpush2.msra.mxu0 0.0
  %14572 = vmatprep.subr.mxu0 0.0
  %14573 = vmatpush2.msra.mxu0 0.0
  %14574 = vmatprep.subr.mxu0 0.0
  %14575 = vmatpush2.msra.mxu0 0.0
  %14576 = vmatprep.subr.mxu0 0.0
  %14577 = vmatpush2.msra.mxu0 0.0
  %14578 = vmatprep.subr.mxu0 0.0
  %14579 = vmatpush2.msra.mxu0 0.0
  %14580 = vmatprep.subr.mxu0 0.0
  %14581 = vmatpush2.msra.mxu0 0.0
  %14582 = vmatprep.subr.mxu0 0.0
  %14583 = vmatpush2.msra.mxu0 0.0
  %14584 = vmatprep.subr.mxu0 0.0
  %14585 = vmatpush2.msra.mxu0 0.0
  %14586 = vmatprep.mubr.f32.mxu0 0.0
  %14587 = vmatmul.mubr.f32.gmra.mxu0 %v14520
  %v14588 = vpop.f32.mrf.mxu0
  %v14589 = vadd.f32 0.0, %v14588
  %v14590 = vpop.f32.mrf.mxu0
  %14591 = vdwg.mxu0
  %v14592 = vadd.f32 %v14478, %v14589
  %s14593 = scalar_lea.vmem %s7, 72
  %v14594 = vld [vmem:[%s14593] sm:$0xff]
  %v14595 = vlaneseq
  %v14596 = vshrl.u32 %v14595, 7
  %v14597 = vsub.s32 1, %v14596
  %v14598 = vrot.slane %v13417, %v14597
  %v14599 = vlaneseq
  %v14600 = vshrl.u32 %v14599, 7
  %v14601 = vsub.s32 1, %v14600
  %v14602 = vrot.slane %v13442, %v14601
  %v14603 = vlaneseq
  %v14604 = vshrl.u32 %v14603, 7
  %v14605 = vsub.s32 1, %v14604
  %v14606 = vrot.slane %v13458, %v14605
  %v14607 = vlaneseq
  %v14608 = vshrl.u32 %v14607, 7
  %v14609 = vsub.s32 1, %v14608
  %v14610 = vrot.slane %v13477, %v14609
  %v14611 = vlaneseq
  %v14612 = vshrl.u32 %v14611, 7
  %v14613 = vsub.s32 1, %v14612
  %v14614 = vrot.slane %v13502, %v14613
  %v14615 = vlaneseq
  %v14616 = vshrl.u32 %v14615, 7
  %v14617 = vsub.s32 1, %v14616
  %v14618 = vrot.slane %v13527, %v14617
  %v14619 = vlaneseq
  %v14620 = vshrl.u32 %v14619, 7
  %v14621 = vsub.s32 1, %v14620
  %v14622 = vrot.slane %v13543, %v14621
  %v14623 = vlaneseq
  %v14624 = vshrl.u32 %v14623, 7
  %v14625 = vsub.s32 1, %v14624
  %v14626 = vrot.slane %v13562, %v14625
  %v14627 = vsel %vm13598, %v14602, %v14598
  %v14628 = vsel %vm13600, %v14606, %v14627
  %v14629 = vsel %vm13602, %v14610, %v14628
  %v14630 = vsel %vm13604, %v14614, %v14629
  %v14631 = vsel %vm13606, %v14618, %v14630
  %v14632 = vsel %vm13608, %v14622, %v14631
  %v14633 = vsel %vm13610, %v14626, %v14632
  %v14634 = vsel %vm13303, %v14633, 0
  %14636 = vmatprep.subr.mxu0 0.0
  %14637 = vmatpush1.msra.mxu0 0.0
  %14638 = vmatprep.subr.mxu0 0.0
  %14639 = vmatpush1.msra.mxu0 0.0
  %14640 = vmatprep.subr.mxu0 0.0
  %14641 = vmatpush1.msra.mxu0 0.0
  %14642 = vmatprep.subr.mxu0 0.0
  %14643 = vmatpush1.msra.mxu0 0.0
  %14644 = vmatprep.subr.mxu0 0.0
  %14645 = vmatpush1.msra.mxu0 0.0
  %14646 = vmatprep.subr.mxu0 0.0
  %14647 = vmatpush1.msra.mxu0 0.0
  %14648 = vmatprep.subr.mxu0 0.0
  %14649 = vmatpush1.msra.mxu0 0.0
  %14650 = vmatprep.subr.mxu0 0.0
  %14651 = vmatpush1.msra.mxu0 0.0
  %14652 = vmatprep.subr.mxu0 0.0
  %14653 = vmatpush1.msra.mxu0 0.0
  %14654 = vmatprep.subr.mxu0 0.0
  %14655 = vmatpush1.msra.mxu0 0.0
  %14656 = vmatprep.subr.mxu0 0.0
  %14657 = vmatpush1.msra.mxu0 0.0
  %14658 = vmatprep.subr.mxu0 0.0
  %14659 = vmatpush1.msra.mxu0 0.0
  %14660 = vmatprep.subr.mxu0 0.0
  %14661 = vmatpush1.msra.mxu0 0.0
  %14662 = vmatprep.subr.mxu0 0.0
  %14663 = vmatpush1.msra.mxu0 0.0
  %14664 = vmatprep.subr.mxu0 0.0
  %14665 = vmatpush1.msra.mxu0 0.0
  %14666 = vmatprep.subr.mxu0 0.0
  %14667 = vmatpush1.msra.mxu0 %v14594
  %14668 = vmatprep.subr.mxu0 0.0
  %14669 = vmatpush2.msra.mxu0 0.0
  %14670 = vmatprep.subr.mxu0 0.0
  %14671 = vmatpush2.msra.mxu0 0.0
  %14672 = vmatprep.subr.mxu0 0.0
  %14673 = vmatpush2.msra.mxu0 0.0
  %14674 = vmatprep.subr.mxu0 0.0
  %14675 = vmatpush2.msra.mxu0 0.0
  %14676 = vmatprep.subr.mxu0 0.0
  %14677 = vmatpush2.msra.mxu0 0.0
  %14678 = vmatprep.subr.mxu0 0.0
  %14679 = vmatpush2.msra.mxu0 0.0
  %14680 = vmatprep.subr.mxu0 0.0
  %14681 = vmatpush2.msra.mxu0 0.0
  %14682 = vmatprep.subr.mxu0 0.0
  %14683 = vmatpush2.msra.mxu0 0.0
  %14684 = vmatprep.subr.mxu0 0.0
  %14685 = vmatpush2.msra.mxu0 0.0
  %14686 = vmatprep.subr.mxu0 0.0
  %14687 = vmatpush2.msra.mxu0 0.0
  %14688 = vmatprep.subr.mxu0 0.0
  %14689 = vmatpush2.msra.mxu0 0.0
  %14690 = vmatprep.subr.mxu0 0.0
  %14691 = vmatpush2.msra.mxu0 0.0
  %14692 = vmatprep.subr.mxu0 0.0
  %14693 = vmatpush2.msra.mxu0 0.0
  %14694 = vmatprep.subr.mxu0 0.0
  %14695 = vmatpush2.msra.mxu0 0.0
  %14696 = vmatprep.subr.mxu0 0.0
  %14697 = vmatpush2.msra.mxu0 0.0
  %14698 = vmatprep.subr.mxu0 0.0
  %14699 = vmatpush2.msra.mxu0 0.0
  %14700 = vmatprep.mubr.f32.mxu0 0.0
  %14701 = vmatmul.mubr.f32.gmra.mxu0 %v14634
  %v14702 = vpop.f32.mrf.mxu0
  %v14703 = vadd.f32 0.0, %v14702
  %v14704 = vpop.f32.mrf.mxu0
  %14705 = vdwg.mxu0
  %v14706 = vadd.f32 %v14592, %v14703
  %v14707 = vld [vmem:[%s8] sm:$0x1]
  %v14709 = vlaneseq
  %v14710 = vshrl.u32 %v14709, 7
  %v14711 = vsub.s32 0, %v14710
  %v14712 = vrot.slane %v14707, %v14711
  %v14714 = vadd.f32 %v14706, %v14712
  %v14715 = vmax.f32 %v14714, 0.0
  %v14716 = vld [vmem:[%s9] sm:$0xff]
  %v14717 = vld [vmem:[%s9 + $0x8] sm:$0xff]
  %v14718 = vld [vmem:[%s9 + $0x10] sm:$0xff]
  %v14719 = vld [vmem:[%s9 + $0x18] sm:$0xff]
  %v14720 = vld [vmem:[#allocation4] sm:$0x1]
  %v14722 = vlaneseq
  %v14723 = vshrl.u32 %v14722, 7
  %v14724 = vsub.s32 0, %v14723
  %v14725 = vrot.slane %v14720, %v14724
  %v14728 = vsel %vm10764, %v14715, 0
  %14730 = vmatprep.subr.mxu0 0.0
  %14731 = vmatpush1.msra.mxu0 0.0
  %14732 = vmatprep.subr.mxu0 0.0
  %14733 = vmatpush1.msra.mxu0 0.0
  %14734 = vmatprep.subr.mxu0 0.0
  %14735 = vmatpush1.msra.mxu0 0.0
  %14736 = vmatprep.subr.mxu0 0.0
  %14737 = vmatpush1.msra.mxu0 0.0
  %14738 = vmatprep.subr.mxu0 0.0
  %14739 = vmatpush1.msra.mxu0 0.0
  %14740 = vmatprep.subr.mxu0 0.0
  %14741 = vmatpush1.msra.mxu0 0.0
  %14742 = vmatprep.subr.mxu0 0.0
  %14743 = vmatpush1.msra.mxu0 0.0
  %14744 = vmatprep.subr.mxu0 0.0
  %14745 = vmatpush1.msra.mxu0 0.0
  %14746 = vmatprep.subr.mxu0 0.0
  %14747 = vmatpush1.msra.mxu0 0.0
  %14748 = vmatprep.subr.mxu0 0.0
  %14749 = vmatpush1.msra.mxu0 0.0
  %14750 = vmatprep.subr.mxu0 0.0
  %14751 = vmatpush1.msra.mxu0 0.0
  %14752 = vmatprep.subr.mxu0 0.0
  %14753 = vmatpush1.msra.mxu0 0.0
  %14754 = vmatprep.subr.mxu0 0.0
  %14755 = vmatpush1.msra.mxu0 %v14719
  %14756 = vmatprep.subr.mxu0 0.0
  %14757 = vmatpush1.msra.mxu0 %v14718
  %14758 = vmatprep.subr.mxu0 0.0
  %14759 = vmatpush1.msra.mxu0 %v14717
  %14760 = vmatprep.subr.mxu0 0.0
  %14761 = vmatpush1.msra.mxu0 %v14716
  %14762 = vmatprep.subr.mxu0 0.0
  %14763 = vmatpush2.msra.mxu0 0.0
  %14764 = vmatprep.subr.mxu0 0.0
  %14765 = vmatpush2.msra.mxu0 0.0
  %14766 = vmatprep.subr.mxu0 0.0
  %14767 = vmatpush2.msra.mxu0 0.0
  %14768 = vmatprep.subr.mxu0 0.0
  %14769 = vmatpush2.msra.mxu0 0.0
  %14770 = vmatprep.subr.mxu0 0.0
  %14771 = vmatpush2.msra.mxu0 0.0
  %14772 = vmatprep.subr.mxu0 0.0
  %14773 = vmatpush2.msra.mxu0 0.0
  %14774 = vmatprep.subr.mxu0 0.0
  %14775 = vmatpush2.msra.mxu0 0.0
  %14776 = vmatprep.subr.mxu0 0.0
  %14777 = vmatpush2.msra.mxu0 0.0
  %14778 = vmatprep.subr.mxu0 0.0
  %14779 = vmatpush2.msra.mxu0 0.0
  %14780 = vmatprep.subr.mxu0 0.0
  %14781 = vmatpush2.msra.mxu0 0.0
  %14782 = vmatprep.subr.mxu0 0.0
  %14783 = vmatpush2.msra.mxu0 0.0
  %14784 = vmatprep.subr.mxu0 0.0
  %14785 = vmatpush2.msra.mxu0 0.0
  %14786 = vmatprep.subr.mxu0 0.0
  %14787 = vmatpush2.msra.mxu0 0.0
  %14788 = vmatprep.subr.mxu0 0.0
  %14789 = vmatpush2.msra.mxu0 0.0
  %14790 = vmatprep.subr.mxu0 0.0
  %14791 = vmatpush2.msra.mxu0 0.0
  %14792 = vmatprep.subr.mxu0 0.0
  %14793 = vmatpush2.msra.mxu0 0.0
  %14794 = vmatprep.mubr.f32.mxu0 0.0
  %14795 = vmatmul.mubr.f32.gmra.mxu0 %v14728
  %v14796 = vpop.f32.mrf.mxu0
  %v14797 = vadd.f32 %v14725, %v14796
  %v14798 = vpop.f32.mrf.mxu0
  %14799 = vdwg.mxu0
  %vm14800 = vcmask 7168
  %14801 = vst.msk [vmem:[%s11] sm:$0xff] %vm14800, %v14797
  // Predicated region
  $region46: #{tpu_custom_call.1} parent=0 // pred_check
    _
  $region47: #{tpu_custom_call.1} parent=0 // pred_check_branch
    %14803 = sbr.rel (0) target = $region49
  $region48: #{tpu_custom_call.1} parent=0 // pred_region
    _
  $region49: #{tpu_custom_call.1} parent=0 // pred_fallthru
    _
  // Predicated region
  $region50: #{tpu_custom_call.1} parent=0 // pred_check
    _
  $region51: #{tpu_custom_call.1} parent=0 // pred_check_branch
    %14805 = sbr.rel (0) target = $region53
  $region52: #{tpu_custom_call.1} parent=0 // pred_region
    _
  $region53: #{tpu_custom_call.1} parent=0 // pred_fallthru
    _

</llo_original>
